<compile_context>
chip_gen: v5e
topology: v5e:2x2
jax: 0.10.0
libtpu: 0.0.40
codegen_flags: <defaults>
</compile_context>

<pallas_src>
import functools

import jax
import jax.numpy as jnp
from jax.experimental import pallas as pl
from jax.experimental.pallas import tpu as pltpu

BN_EPS = 1e-5
CH = 256                     # residual trunk channels
N_BLOCKS = 11                # residual blocks
N_LAYERS = 1 + 2 * N_BLOCKS  # 23 conv layers in the trunk
IN_CH = 20                   # input planes
HW = 8                       # board size
PP = HW + 2                  # zero-padded spatial extent (10)
NPP = PP * PP                # padded positions per board (100)
N_POLICY = 76 * 8 * 8        # 4864
POL_TILE_N = 256             # policy-FC N tile (4864 / 256 = 19)
HEAD_CH = 128                # lane-padded packed head-conv output channels
N_PC = 16                    # policy 1x1 conv channels
N_VC = 4                     # value 1x1 conv channels

OFF = 5                      # leading dead rows so the interior slab is 8-aligned
SLAB_OFF = OFF + PP + 1      # = 16, first interior row in the padded layout


def _padded_rows(batch):
    """Rows of the padded activation buffer and the 8-aligned compute slab."""
    mp = batch * NPP
    span = mp - 2 * (PP + 1)                 # first..last interior row count
    slab_len = (span + 7) // 8 * 8
    mpa = max(OFF + mp, SLAB_OFF + slab_len + PP + 1)
    mpa = (mpa + 7) // 8 * 8
    return mpa, slab_len


# ----------------------------------------------------------------------------
# Trunk kernel: 23 x (3x3 conv + BN + [residual] + ReLU) + fused 1x1 head convs
# ----------------------------------------------------------------------------
def _trunk_kernel(x_ref, w_ref, gb_ref, mask_ref, wh_ref, gbh_ref,
                  heads_ref, h_pad, ident_ref, *, n_rows, slab_len):
    l = pl.program_id(0)
    inv_n = 1.0 / float(n_rows)

    @pl.when(l == 0)
    def _init():
        h_pad[...] = x_ref[...]                 # padded input, zeros elsewhere
        ident_ref[...] = jnp.zeros(ident_ref.shape, ident_ref.dtype)

    # Position of this conv inside its BasicBlock (layer 0 is the stem conv).
    in_block = (l - 1) % 2
    is_first_in_block = jnp.logical_and(l >= 1, in_block == 0)
    is_second_in_block = jnp.logical_and(l >= 1, in_block == 1)

    @pl.when(is_first_in_block)
    def _save_identity():
        ident_ref[...] = h_pad[pl.ds(SLAB_OFF, slab_len), :]

    # 3x3 'same' conv == 9 constant-offset slab slices x bf16 MXU matmuls,
    # accumulated in f32.  Zero spatial padding rows in h_pad provide the conv
    # halo; garbage at non-interior slab rows is masked before write-back.
    acc = None
    for t in range(9):
        dy, dx = t // 3, t % 3
        shift = (dy - 1) * PP + (dx - 1)
        x_tap = h_pad[pl.ds(SLAB_OFF + shift, slab_len), :].astype(jnp.bfloat16)
        w_tap = w_ref[pl.ds(t * CH, CH), :]                       # (CH, CH) bf16
        part = jnp.dot(x_tap, w_tap, preferred_element_type=jnp.float32)
        acc = part if acc is None else acc + part

    # Training-mode BatchNorm: batch statistics over the B*H*W interior rows
    # only (masked, biased variance).  Conv bias is omitted (cancelled by BN).
    msk = mask_ref[pl.ds(SLAB_OFF, slab_len), :]                  # (slab, CH)
    acc_m = acc * msk
    mu = jnp.sum(acc_m, axis=0, keepdims=True) * inv_n
    var = jnp.sum(acc_m * acc, axis=0, keepdims=True) * inv_n - mu * mu
    var = jnp.maximum(var, 0.0)
    out = (acc - mu) * jax.lax.rsqrt(var + BN_EPS)
    out = out * gb_ref[0:1, :] + gb_ref[1:2, :]

    # Second conv of a BasicBlock: add the saved identity before the ReLU.
    out = out + is_second_in_block.astype(jnp.float32) * ident_ref[...]
    out = jnp.maximum(out, 0.0) * msk          # ReLU; keep padding rows at zero
    h_pad[pl.ds(SLAB_OFF, slab_len), :] = out

    # Fused policy(16)+value(4) 1x1 head convs + BN + ReLU at the last layer.
    # Output is lane-padded to 128 channels (zero weights/gamma/beta beyond 20)
    # so the HBM write is lane-dense.
    @pl.when(l == pl.num_programs(0) - 1)
    def _head_convs():
        hp = h_pad[...].astype(jnp.bfloat16)                      # (mpa, CH)
        hc = jnp.dot(hp, wh_ref[...], preferred_element_type=jnp.float32)
        mfull = mask_ref[:, 0:HEAD_CH]                            # (mpa, 128)
        hc_m = hc * mfull
        mu_h = jnp.sum(hc_m, axis=0, keepdims=True) * inv_n
        var_h = jnp.sum(hc_m * hc, axis=0, keepdims=True) * inv_n - mu_h * mu_h
        var_h = jnp.maximum(var_h, 0.0)
        y = (hc - mu_h) * jax.lax.rsqrt(var_h + BN_EPS)
        y = y * gbh_ref[0:1, :] + gbh_ref[1:2, :]
        heads_ref[...] = jnp.maximum(y, 0.0) * mfull


def trunk_and_head_convs(x_in, mask, params, batch):
    mpa, slab_len = _padded_rows(batch)
    kernel = functools.partial(_trunk_kernel,
                               n_rows=batch * HW * HW, slab_len=slab_len)
    return pl.pallas_call(
        kernel,
        out_shape=jax.ShapeDtypeStruct((mpa, HEAD_CH), jnp.float32),
        grid=(N_LAYERS,),
        in_specs=[
            pl.BlockSpec((mpa, CH), lambda l: (0, 0)),              # padded input
            pl.BlockSpec((None, 9 * CH, CH), lambda l: (l, 0, 0)),  # streamed W
            pl.BlockSpec((None, 2, CH), lambda l: (l, 0, 0)),       # gamma/beta
            pl.BlockSpec((mpa, CH), lambda l: (0, 0)),              # interior mask
            pl.BlockSpec((CH, HEAD_CH), lambda l: (0, 0)),          # head conv W
            pl.BlockSpec((2, HEAD_CH), lambda l: (0, 0)),           # head gamma/beta
        ],
        out_specs=pl.BlockSpec((mpa, HEAD_CH), lambda l: (0, 0)),
        scratch_shapes=[
            pltpu.VMEM((mpa, CH), jnp.float32),       # activation (padded layout)
            pltpu.VMEM((slab_len, CH), jnp.float32),  # residual identity
        ],
        compiler_params=pltpu.CompilerParams(
            dimension_semantics=("arbitrary",)),
    )(x_in, params["w_stack"], params["gb_stack"], mask,
      params["w_heads"], params["gb_heads"])


# ----------------------------------------------------------------------------
# Policy FC: (B, 1024) @ (1024, 4864) tiled over N, weight streamed / pipelined
# ----------------------------------------------------------------------------
def _fc_kernel(x_ref, w_ref, b_ref, o_ref):
    o_ref[...] = (jnp.dot(x_ref[...], w_ref[...],
                          preferred_element_type=jnp.float32) + b_ref[...])


def policy_fc(x_bf16, w_bf16, bias):
    batch, k = x_bf16.shape
    assert N_POLICY % POL_TILE_N == 0
    n_tiles = N_POLICY // POL_TILE_N
    return pl.pallas_call(
        _fc_kernel,
        out_shape=jax.ShapeDtypeStruct((batch, N_POLICY), jnp.float32),
        grid=(n_tiles,),
        in_specs=[
            pl.BlockSpec((batch, k), lambda j: (0, 0)),
            pl.BlockSpec((k, POL_TILE_N), lambda j: (0, j)),
            pl.BlockSpec((1, POL_TILE_N), lambda j: (0, j)),
        ],
        out_specs=pl.BlockSpec((batch, POL_TILE_N), lambda j: (0, j)),
        compiler_params=pltpu.CompilerParams(
            dimension_semantics=("parallel",)),
    )(x_bf16, w_bf16, bias)


# ----------------------------------------------------------------------------
# Value FC: (B, 256) @ (256, 128 lane-padded) + bias, tanh
# ----------------------------------------------------------------------------
def _value_kernel(x_ref, w_ref, b_ref, o_ref):
    o_ref[...] = jnp.tanh(
        jnp.dot(x_ref[...], w_ref[...], preferred_element_type=jnp.float32)
        + b_ref[...])


def value_fc(x_bf16, w_bf16, bias):
    batch, k = x_bf16.shape
    return pl.pallas_call(
        _value_kernel,
        out_shape=jax.ShapeDtypeStruct((batch, HEAD_CH), jnp.float32),
        grid=(1,),
        in_specs=[
            pl.BlockSpec((batch, k), lambda j: (0, 0)),
            pl.BlockSpec((k, HEAD_CH), lambda j: (0, 0)),
            pl.BlockSpec((1, HEAD_CH), lambda j: (0, 0)),
        ],
        out_specs=pl.BlockSpec((batch, HEAD_CH), lambda j: (0, 0)),
        compiler_params=pltpu.CompilerParams(
            dimension_semantics=("arbitrary",)),
    )(x_bf16, w_bf16, bias)


# ----------------------------------------------------------------------------
# Deterministic synthetic parameters (shapes follow ChessModel.__init__).
# ----------------------------------------------------------------------------
def init_params(key):
    ks = jax.random.split(key, 10)

    def nrm(k, shape, scale):
        return scale * jax.random.normal(k, shape, dtype=jnp.float32)

    # Trunk conv weights, tap-major im2col layout:
    #   w_stack[l, (ky*3+kx)*CH + ci, co]  <->  torch_conv_w[co, ci, ky, kx]
    w_stack = nrm(ks[0], (N_LAYERS, 9 * CH, CH), 0.05)
    ci = jnp.arange(9 * CH) % CH
    w_stack = w_stack.at[0].multiply(
        (ci < IN_CH).astype(jnp.float32)[:, None])   # conv0 only has 20 in-ch
    w_stack = w_stack.astype(jnp.bfloat16)

    gamma = 1.0 + nrm(ks[1], (N_LAYERS, 1, CH), 0.05)
    beta = nrm(ks[2], (N_LAYERS, 1, CH), 0.01)
    gb_stack = jnp.concatenate([gamma, beta], axis=1)       # (N_LAYERS, 2, CH)

    # Packed 1x1 head convs: cols [0:16) policy, [16:20) value, rest zero pad.
    w_heads = jnp.zeros((CH, HEAD_CH), jnp.float32)
    w_heads = w_heads.at[:, :N_PC + N_VC].set(nrm(ks[3], (CH, N_PC + N_VC), 0.05))
    gb_heads = jnp.zeros((2, HEAD_CH), jnp.float32)
    gb_heads = gb_heads.at[0, :N_PC + N_VC].set(1.0 + nrm(ks[4], (N_PC + N_VC,), 0.05))
    gb_heads = gb_heads.at[1, :N_PC + N_VC].set(nrm(ks[5], (N_PC + N_VC,), 0.01))

    # FC weights generated directly in the (y, x, c) flatten row order used by
    # the forward pass (see module TODO about importing real torch weights).
    pol_w = nrm(ks[6], (HW * HW * N_PC, N_POLICY), 0.05).astype(jnp.bfloat16)
    pol_b = nrm(ks[7], (1, N_POLICY), 0.01)

    val_w = jnp.zeros((HW * HW * N_VC, HEAD_CH), jnp.float32)
    val_w = val_w.at[:, 0].set(nrm(ks[8], (HW * HW * N_VC,), 0.05))
    val_w = val_w.astype(jnp.bfloat16)
    val_b = jnp.zeros((1, HEAD_CH), jnp.float32)
    val_b = val_b.at[0, 0].set(nrm(ks[9], (), 0.01))

    return {"w_stack": w_stack, "gb_stack": gb_stack,
            "w_heads": w_heads.astype(jnp.bfloat16), "gb_heads": gb_heads,
            "pol_w": pol_w, "pol_b": pol_b, "val_w": val_w, "val_b": val_b}


# ----------------------------------------------------------------------------
# Full forward pass (mirrors ChessModel.forward).
# ----------------------------------------------------------------------------
def chess_model_forward(params, x_nchw):
    batch = x_nchw.shape[0]
    mp = batch * NPP
    mpa, _ = _padded_rows(batch)

    # NCHW -> NHWC, zero-pad channels 20->256 and space 8x8 -> 10x10 (the
    # 'same'-conv halo), flatten to the padded row layout used by the trunk.
    x = jnp.transpose(x_nchw, (0, 2, 3, 1)).astype(jnp.float32)
    x = jnp.pad(x, ((0, 0), (1, 1), (1, 1), (0, CH - IN_CH)))
    x = x.reshape(mp, CH)
    x_in = jnp.pad(x, ((OFF, mpa - OFF - mp), (0, 0)))

    # Interior-row mask, full lane width (all columns identical).
    m = jnp.zeros((batch, PP, PP), jnp.float32).at[:, 1:9, 1:9].set(1.0)
    m = jnp.pad(m.reshape(mp, 1), ((OFF, mpa - OFF - mp), (0, 0)))
    mask = jnp.broadcast_to(m, (mpa, CH))

    # One kernel: whole residual trunk + fused policy/value 1x1 convs (+BN+ReLU)
    heads = trunk_and_head_convs(x_in, mask, params, batch)      # (mpa, 128)

    hc = heads[OFF:OFF + mp].reshape(batch, PP, PP, HEAD_CH)[:, 1:9, 1:9, :]
    pc = hc[..., :N_PC].reshape(batch, HW * HW * N_PC).astype(jnp.bfloat16)
    vc = hc[..., N_PC:N_PC + N_VC].reshape(batch, HW * HW * N_VC).astype(jnp.bfloat16)

    policy = policy_fc(pc, params["pol_w"], params["pol_b"])
    value = value_fc(vc, params["val_w"], params["val_b"])[:, :1]
    return policy, value


if __name__ == "__main__":
    key = jax.random.PRNGKey(0)
    pkey, xkey = jax.random.split(key)
    params = init_params(pkey)

    B = 2
    x = jax.random.normal(xkey, (B, IN_CH, HW, HW), dtype=jnp.float32)  # NCHW

    fwd = jax.jit(chess_model_forward)
    policy, value = fwd(params, x)
    jax.block_until_ready((policy, value))

    assert policy.shape == (B, N_POLICY), policy.shape
    assert value.shape == (B, 1), value.shape
    assert bool(jnp.all(jnp.isfinite(policy))) and bool(jnp.all(jnp.isfinite(value)))
    assert bool(jnp.all(jnp.abs(value) <= 1.0))
    print("KERNEL_OK")
</pallas_src>

<mosaic_0001>
module attributes {stable_mosaic.version = 11 : i64} {
  func.func @_fc_kernel(%arg0: i32, %arg1: memref<2x1024xbf16, #tpu.memory_space<vmem>>, %arg2: memref<1024x256xbf16, #tpu.memory_space<vmem>>, %arg3: memref<1x256xf32, #tpu.memory_space<vmem>>, %arg4: memref<2x256xf32, #tpu.memory_space<vmem>>) attributes {dimension_semantics = [#tpu.dimension_semantics<parallel>], iteration_bounds = array<i64: 19>, scalar_prefetch = 0 : i64, scratch_operands = 0 : i64, tpu.core_type = #tpu.core_type<tc>, window_params = [{pipeline_mode = #tpu.pipeline_mode<synchronous>, transform_indices = @transform_0, window_bounds = array<i64: 2, 1024>}, {transform_indices = @transform_1, window_bounds = array<i64: 1024, 256>}, {transform_indices = @transform_2, window_bounds = array<i64: 1, 256>}, {transform_indices = @transform_3, window_bounds = array<i64: 2, 256>}]} {
    %c0 = arith.constant 0 : index
    %c0_0 = arith.constant 0 : index
    %0 = vector.load %arg1[%c0, %c0_0] : memref<2x1024xbf16, #tpu.memory_space<vmem>>, vector<2x1024xbf16>
    %c0_1 = arith.constant 0 : index
    %c0_2 = arith.constant 0 : index
    %1 = vector.load %arg2[%c0_1, %c0_2] : memref<1024x256xbf16, #tpu.memory_space<vmem>>, vector<1024x256xbf16>
    %cst = arith.constant dense<0.000000e+00> : vector<2x256xf32>
    %2 = tpu.matmul %0, %1, %cst {dimension_numbers = #tpu.dot_dimension_numbers<[1], [0], [0], [1], [0, 0, 1, 1], [], []>} : vector<2x1024xbf16>, vector<1024x256xbf16>, vector<2x256xf32> -> vector<2x256xf32>
    %c0_3 = arith.constant 0 : index
    %c0_4 = arith.constant 0 : index
    %3 = vector.load %arg3[%c0_3, %c0_4] : memref<1x256xf32, #tpu.memory_space<vmem>>, vector<1x256xf32>
    %4 = vector.broadcast %3 : vector<1x256xf32> to vector<2x256xf32>
    %5 = arith.addf %2, %4 : vector<2x256xf32>
    %c0_5 = arith.constant 0 : index
    %c0_6 = arith.constant 0 : index
    %6 = vector.load %arg4[%c0_5, %c0_6] : memref<2x256xf32, #tpu.memory_space<vmem>>, vector<2x256xf32>
    tpu.vector_store %arg4[%c0_5, %c0_6], %5 {strides = array<i32>} : memref<2x256xf32, #tpu.memory_space<vmem>>, vector<2x256xf32>,
    return
  }
  func.func @transform_0(%arg0: i32) -> (i32, i32) {
    %c0_i32 = arith.constant 0 : i32
    %c0_i32_0 = arith.constant 0 : i32
    %c0_i32_1 = arith.constant 0 : i32
    return %c0_i32, %c0_i32_0 : i32, i32
  }
  func.func @transform_1(%arg0: i32) -> (i32, i32) {
    %c0_i32 = arith.constant 0 : i32
    %c0_i32_0 = arith.constant 0 : i32
    return %c0_i32, %arg0 : i32, i32
  }
  func.func @transform_2(%arg0: i32) -> (i32, i32) {
    %c0_i32 = arith.constant 0 : i32
    %c0_i32_0 = arith.constant 0 : i32
    return %c0_i32, %arg0 : i32, i32
  }
  func.func @transform_3(%arg0: i32) -> (i32, i32) {
    %c0_i32 = arith.constant 0 : i32
    %c0_i32_0 = arith.constant 0 : i32
    return %c0_i32, %arg0 : i32, i32
  }
}

module attributes {stable_mosaic.version = 11 : i64} {
  func.func @_trunk_kernel(%arg0: i32, %arg1: memref<216x256xf32, #tpu.memory_space<vmem>>, %arg2: memref<1x2304x256xbf16, #tpu.memory_space<vmem>>, %arg3: memref<1x2x256xf32, #tpu.memory_space<vmem>>, %arg4: memref<216x256xf32, #tpu.memory_space<vmem>>, %arg5: memref<256x128xbf16, #tpu.memory_space<vmem>>, %arg6: memref<2x128xf32, #tpu.memory_space<vmem>>, %arg7: memref<216x128xf32, #tpu.memory_space<vmem>>, %arg8: memref<216x256xf32, #tpu.memory_space<vmem>>, %arg9: memref<184x256xf32, #tpu.memory_space<vmem>>) attributes {dimension_semantics = [#tpu.dimension_semantics<arbitrary>], iteration_bounds = array<i64: 23>, scalar_prefetch = 0 : i64, scratch_operands = 2 : i64, tpu.core_type = #tpu.core_type<tc>, window_params = [{pipeline_mode = #tpu.pipeline_mode<synchronous>, transform_indices = @transform_0, window_bounds = array<i64: 216, 256>}, {transform_indices = @transform_1, window_bounds = array<i64: 1, 2304, 256>}, {transform_indices = @transform_2, window_bounds = array<i64: 1, 2, 256>}, {pipeline_mode = #tpu.pipeline_mode<synchronous>, transform_indices = @transform_3, window_bounds = array<i64: 216, 256>}, {pipeline_mode = #tpu.pipeline_mode<synchronous>, transform_indices = @transform_4, window_bounds = array<i64: 256, 128>}, {pipeline_mode = #tpu.pipeline_mode<synchronous>, transform_indices = @transform_5, window_bounds = array<i64: 2, 128>}, {pipeline_mode = #tpu.pipeline_mode<synchronous>, transform_indices = @transform_6, window_bounds = array<i64: 216, 128>}]} {
    %c0_i32 = arith.constant 0 : i32
    %0 = arith.cmpi eq, %arg0, %c0_i32 : i32
    %1 = arith.extui %0 : i1 to i32
    %c0_i32_0 = arith.constant 0 : i32
    %2 = arith.cmpi ne, %1, %c0_i32_0 : i32
    scf.if %2 {
      %c0_65 = arith.constant 0 : index
      %c0_66 = arith.constant 0 : index
      %118 = vector.load %arg1[%c0_65, %c0_66] : memref<216x256xf32, #tpu.memory_space<vmem>>, vector<216x256xf32>
      %c0_67 = arith.constant 0 : index
      %c0_68 = arith.constant 0 : index
      %119 = vector.load %arg8[%c0_67, %c0_68] : memref<216x256xf32, #tpu.memory_space<vmem>>, vector<216x256xf32>
      tpu.vector_store %arg8[%c0_67, %c0_68], %118 {strides = array<i32>} : memref<216x256xf32, #tpu.memory_space<vmem>>, vector<216x256xf32>,
      %cst_69 = arith.constant 0.000000e+00 : f32
      %120 = vector.broadcast %cst_69 : f32 to vector<184x256xf32>
      %c0_70 = arith.constant 0 : index
      %c0_71 = arith.constant 0 : index
      %121 = vector.load %arg9[%c0_70, %c0_71] : memref<184x256xf32, #tpu.memory_space<vmem>>, vector<184x256xf32>
      tpu.vector_store %arg9[%c0_70, %c0_71], %120 {strides = array<i32>} : memref<184x256xf32, #tpu.memory_space<vmem>>, vector<184x256xf32>,
    } else {
    }
    %c1_i32 = arith.constant 1 : i32
    %3 = arith.subi %arg0, %c1_i32 : i32
    %c2_i32 = arith.constant 2 : i32
    %c0_i32_1 = arith.constant 0 : i32
    %4 = arith.cmpi eq, %c2_i32, %c0_i32_1 : i32
    %c1_i32_2 = arith.constant 1 : i32
    %5 = arith.select %4, %c1_i32_2, %c2_i32 : i32
    %6 = arith.remsi %3, %5 : i32
    %c0_i32_3 = arith.constant 0 : i32
    %7 = arith.cmpi ne, %6, %c0_i32_3 : i32
    %c0_i32_4 = arith.constant 0 : i32
    %8 = arith.cmpi slt, %6, %c0_i32_4 : i32
    %c0_i32_5 = arith.constant 0 : i32
    %9 = arith.cmpi slt, %5, %c0_i32_5 : i32
    %10 = arith.xori %8, %9 : i1
    %11 = arith.andi %10, %7 : i1
    %12 = arith.addi %6, %5 : i32
    %13 = arith.select %11, %12, %6 : i32
    %c1_i32_6 = arith.constant 1 : i32
    %14 = arith.cmpi sge, %arg0, %c1_i32_6 : i32
    %c0_i32_7 = arith.constant 0 : i32
    %15 = arith.cmpi eq, %13, %c0_i32_7 : i32
    %16 = arith.andi %14, %15 : i1
    %c1_i32_8 = arith.constant 1 : i32
    %17 = arith.cmpi sge, %arg0, %c1_i32_8 : i32
    %c1_i32_9 = arith.constant 1 : i32
    %18 = arith.cmpi eq, %13, %c1_i32_9 : i32
    %19 = arith.andi %17, %18 : i1
    %20 = arith.extui %16 : i1 to i32
    %c0_i32_10 = arith.constant 0 : i32
    %21 = arith.cmpi ne, %20, %c0_i32_10 : i32
    scf.if %21 {
      %c16_65 = arith.constant 16 : index
      %c0_66 = arith.constant 0 : index
      %118 = vector.load %arg8[%c16_65, %c0_66] : memref<216x256xf32, #tpu.memory_space<vmem>>, vector<184x256xf32>
      %c0_67 = arith.constant 0 : index
      %c0_68 = arith.constant 0 : index
      %119 = vector.load %arg9[%c0_67, %c0_68] : memref<184x256xf32, #tpu.memory_space<vmem>>, vector<184x256xf32>
      tpu.vector_store %arg9[%c0_67, %c0_68], %118 {strides = array<i32>} : memref<184x256xf32, #tpu.memory_space<vmem>>, vector<184x256xf32>,
    } else {
    }
    %c5 = arith.constant 5 : index
    %c0 = arith.constant 0 : index
    %22 = vector.load %arg8[%c5, %c0] : memref<216x256xf32, #tpu.memory_space<vmem>>, vector<184x256xf32>
    %23 = arith.truncf %22 : vector<184x256xf32> to vector<184x256xbf16>
    %c0_11 = arith.constant 0 : index
    %c0_12 = arith.constant 0 : index
    %c0_13 = arith.constant 0 : index
    %24 = vector.load %arg2[%c0_11, %c0_12, %c0_13] : memref<1x2304x256xbf16, #tpu.memory_space<vmem>>, vector<1x256x256xbf16>
    %25 = vector.shape_cast %24 : vector<1x256x256xbf16> to vector<256x256xbf16>
    %cst = arith.constant dense<0.000000e+00> : vector<184x256xf32>
    %26 = tpu.matmul %23, %25, %cst {dimension_numbers = #tpu.dot_dimension_numbers<[1], [0], [0], [1], [0, 0, 1, 1], [], []>} : vector<184x256xbf16>, vector<256x256xbf16>, vector<184x256xf32> -> vector<184x256xf32>
    %c6 = arith.constant 6 : index
    %c0_14 = arith.constant 0 : index
    %27 = vector.load %arg8[%c6, %c0_14] : memref<216x256xf32, #tpu.memory_space<vmem>>, vector<184x256xf32>
    %28 = arith.truncf %27 : vector<184x256xf32> to vector<184x256xbf16>
    %c0_15 = arith.constant 0 : index
    %c256 = arith.constant 256 : index
    %c0_16 = arith.constant 0 : index
    %29 = vector.load %arg2[%c0_15, %c256, %c0_16] : memref<1x2304x256xbf16, #tpu.memory_space<vmem>>, vector<1x256x256xbf16>
    %30 = vector.shape_cast %29 : vector<1x256x256xbf16> to vector<256x256xbf16>
    %cst_17 = arith.constant dense<0.000000e+00> : vector<184x256xf32>
    %31 = tpu.matmul %28, %30, %cst_17 {dimension_numbers = #tpu.dot_dimension_numbers<[1], [0], [0], [1], [0, 0, 1, 1], [], []>} : vector<184x256xbf16>, vector<256x256xbf16>, vector<184x256xf32> -> vector<184x256xf32>
    %32 = arith.addf %26, %31 : vector<184x256xf32>
    %c7 = arith.constant 7 : index
    %c0_18 = arith.constant 0 : index
    %33 = vector.load %arg8[%c7, %c0_18] : memref<216x256xf32, #tpu.memory_space<vmem>>, vector<184x256xf32>
    %34 = arith.truncf %33 : vector<184x256xf32> to vector<184x256xbf16>
    %c0_19 = arith.constant 0 : index
    %c512 = arith.constant 512 : index
    %c0_20 = arith.constant 0 : index
    %35 = vector.load %arg2[%c0_19, %c512, %c0_20] : memref<1x2304x256xbf16, #tpu.memory_space<vmem>>, vector<1x256x256xbf16>
    %36 = vector.shape_cast %35 : vector<1x256x256xbf16> to vector<256x256xbf16>
    %cst_21 = arith.constant dense<0.000000e+00> : vector<184x256xf32>
    %37 = tpu.matmul %34, %36, %cst_21 {dimension_numbers = #tpu.dot_dimension_numbers<[1], [0], [0], [1], [0, 0, 1, 1], [], []>} : vector<184x256xbf16>, vector<256x256xbf16>, vector<184x256xf32> -> vector<184x256xf32>
    %38 = arith.addf %32, %37 : vector<184x256xf32>
    %c15 = arith.constant 15 : index
    %c0_22 = arith.constant 0 : index
    %39 = vector.load %arg8[%c15, %c0_22] : memref<216x256xf32, #tpu.memory_space<vmem>>, vector<184x256xf32>
    %40 = arith.truncf %39 : vector<184x256xf32> to vector<184x256xbf16>
    %c0_23 = arith.constant 0 : index
    %c768 = arith.constant 768 : index
    %c0_24 = arith.constant 0 : index
    %41 = vector.load %arg2[%c0_23, %c768, %c0_24] : memref<1x2304x256xbf16, #tpu.memory_space<vmem>>, vector<1x256x256xbf16>
    %42 = vector.shape_cast %41 : vector<1x256x256xbf16> to vector<256x256xbf16>
    %cst_25 = arith.constant dense<0.000000e+00> : vector<184x256xf32>
    %43 = tpu.matmul %40, %42, %cst_25 {dimension_numbers = #tpu.dot_dimension_numbers<[1], [0], [0], [1], [0, 0, 1, 1], [], []>} : vector<184x256xbf16>, vector<256x256xbf16>, vector<184x256xf32> -> vector<184x256xf32>
    %44 = arith.addf %38, %43 : vector<184x256xf32>
    %c16 = arith.constant 16 : index
    %c0_26 = arith.constant 0 : index
    %45 = vector.load %arg8[%c16, %c0_26] : memref<216x256xf32, #tpu.memory_space<vmem>>, vector<184x256xf32>
    %46 = arith.truncf %45 : vector<184x256xf32> to vector<184x256xbf16>
    %c0_27 = arith.constant 0 : index
    %c1024 = arith.constant 1024 : index
    %c0_28 = arith.constant 0 : index
    %47 = vector.load %arg2[%c0_27, %c1024, %c0_28] : memref<1x2304x256xbf16, #tpu.memory_space<vmem>>, vector<1x256x256xbf16>
    %48 = vector.shape_cast %47 : vector<1x256x256xbf16> to vector<256x256xbf16>
    %cst_29 = arith.constant dense<0.000000e+00> : vector<184x256xf32>
    %49 = tpu.matmul %46, %48, %cst_29 {dimension_numbers = #tpu.dot_dimension_numbers<[1], [0], [0], [1], [0, 0, 1, 1], [], []>} : vector<184x256xbf16>, vector<256x256xbf16>, vector<184x256xf32> -> vector<184x256xf32>
    %50 = arith.addf %44, %49 : vector<184x256xf32>
    %c17 = arith.constant 17 : index
    %c0_30 = arith.constant 0 : index
    %51 = vector.load %arg8[%c17, %c0_30] : memref<216x256xf32, #tpu.memory_space<vmem>>, vector<184x256xf32>
    %52 = arith.truncf %51 : vector<184x256xf32> to vector<184x256xbf16>
    %c0_31 = arith.constant 0 : index
    %c1280 = arith.constant 1280 : index
    %c0_32 = arith.constant 0 : index
    %53 = vector.load %arg2[%c0_31, %c1280, %c0_32] : memref<1x2304x256xbf16, #tpu.memory_space<vmem>>, vector<1x256x256xbf16>
    %54 = vector.shape_cast %53 : vector<1x256x256xbf16> to vector<256x256xbf16>
    %cst_33 = arith.constant dense<0.000000e+00> : vector<184x256xf32>
    %55 = tpu.matmul %52, %54, %cst_33 {dimension_numbers = #tpu.dot_dimension_numbers<[1], [0], [0], [1], [0, 0, 1, 1], [], []>} : vector<184x256xbf16>, vector<256x256xbf16>, vector<184x256xf32> -> vector<184x256xf32>
    %56 = arith.addf %50, %55 : vector<184x256xf32>
    %c25 = arith.constant 25 : index
    %c0_34 = arith.constant 0 : index
    %57 = vector.load %arg8[%c25, %c0_34] : memref<216x256xf32, #tpu.memory_space<vmem>>, vector<184x256xf32>
    %58 = arith.truncf %57 : vector<184x256xf32> to vector<184x256xbf16>
    %c0_35 = arith.constant 0 : index
    %c1536 = arith.constant 1536 : index
    %c0_36 = arith.constant 0 : index
    %59 = vector.load %arg2[%c0_35, %c1536, %c0_36] : memref<1x2304x256xbf16, #tpu.memory_space<vmem>>, vector<1x256x256xbf16>
    %60 = vector.shape_cast %59 : vector<1x256x256xbf16> to vector<256x256xbf16>
    %cst_37 = arith.constant dense<0.000000e+00> : vector<184x256xf32>
    %61 = tpu.matmul %58, %60, %cst_37 {dimension_numbers = #tpu.dot_dimension_numbers<[1], [0], [0], [1], [0, 0, 1, 1], [], []>} : vector<184x256xbf16>, vector<256x256xbf16>, vector<184x256xf32> -> vector<184x256xf32>
    %62 = arith.addf %56, %61 : vector<184x256xf32>
    %c26 = arith.constant 26 : index
    %c0_38 = arith.constant 0 : index
    %63 = vector.load %arg8[%c26, %c0_38] : memref<216x256xf32, #tpu.memory_space<vmem>>, vector<184x256xf32>
    %64 = arith.truncf %63 : vector<184x256xf32> to vector<184x256xbf16>
    %c0_39 = arith.constant 0 : index
    %c1792 = arith.constant 1792 : index
    %c0_40 = arith.constant 0 : index
    %65 = vector.load %arg2[%c0_39, %c1792, %c0_40] : memref<1x2304x256xbf16, #tpu.memory_space<vmem>>, vector<1x256x256xbf16>
    %66 = vector.shape_cast %65 : vector<1x256x256xbf16> to vector<256x256xbf16>
    %cst_41 = arith.constant dense<0.000000e+00> : vector<184x256xf32>
    %67 = tpu.matmul %64, %66, %cst_41 {dimension_numbers = #tpu.dot_dimension_numbers<[1], [0], [0], [1], [0, 0, 1, 1], [], []>} : vector<184x256xbf16>, vector<256x256xbf16>, vector<184x256xf32> -> vector<184x256xf32>
    %68 = arith.addf %62, %67 : vector<184x256xf32>
    %c27 = arith.constant 27 : index
    %c0_42 = arith.constant 0 : index
    %69 = vector.load %arg8[%c27, %c0_42] : memref<216x256xf32, #tpu.memory_space<vmem>>, vector<184x256xf32>
    %70 = arith.truncf %69 : vector<184x256xf32> to vector<184x256xbf16>
    %c0_43 = arith.constant 0 : index
    %c2048 = arith.constant 2048 : index
    %c0_44 = arith.constant 0 : index
    %71 = vector.load %arg2[%c0_43, %c2048, %c0_44] : memref<1x2304x256xbf16, #tpu.memory_space<vmem>>, vector<1x256x256xbf16>
    %72 = vector.shape_cast %71 : vector<1x256x256xbf16> to vector<256x256xbf16>
    %cst_45 = arith.constant dense<0.000000e+00> : vector<184x256xf32>
    %73 = tpu.matmul %70, %72, %cst_45 {dimension_numbers = #tpu.dot_dimension_numbers<[1], [0], [0], [1], [0, 0, 1, 1], [], []>} : vector<184x256xbf16>, vector<256x256xbf16>, vector<184x256xf32> -> vector<184x256xf32>
    %74 = arith.addf %68, %73 : vector<184x256xf32>
    %c16_46 = arith.constant 16 : index
    %c0_47 = arith.constant 0 : index
    %75 = vector.load %arg4[%c16_46, %c0_47] : memref<216x256xf32, #tpu.memory_space<vmem>>, vector<184x256xf32>
    %76 = arith.mulf %74, %75 : vector<184x256xf32>
    %cst_48 = arith.constant dense<0.000000e+00> : vector<256xf32>
    %77 = vector.multi_reduction <add>, %76, %cst_48 [0] : vector<184x256xf32> to vector<256xf32>
    %78 = vector.shape_cast %77 : vector<256xf32> to vector<1x256xf32>
    %cst_49 = arith.constant 7.812500e-03 : f32
    %79 = vector.broadcast %cst_49 : f32 to vector<1x256xf32>
    %80 = arith.mulf %78, %79 : vector<1x256xf32>
    %81 = arith.mulf %76, %74 : vector<184x256xf32>
    %cst_50 = arith.constant dense<0.000000e+00> : vector<256xf32>
    %82 = vector.multi_reduction <add>, %81, %cst_50 [0] : vector<184x256xf32> to vector<256xf32>
    %83 = vector.shape_cast %82 : vector<256xf32> to vector<1x256xf32>
    %cst_51 = arith.constant 7.812500e-03 : f32
    %84 = vector.broadcast %cst_51 : f32 to vector<1x256xf32>
    %85 = arith.mulf %83, %84 : vector<1x256xf32>
    %86 = arith.mulf %80, %80 : vector<1x256xf32>
    %87 = arith.subf %85, %86 : vector<1x256xf32>
    %cst_52 = arith.constant 0.000000e+00 : f32
    %88 = vector.broadcast %cst_52 : f32 to vector<1x256xf32>
    %89 = arith.maximumf %87, %88 : vector<1x256xf32>
    %90 = vector.broadcast %80 : vector<1x256xf32> to vector<184x256xf32>
    %91 = arith.subf %74, %90 : vector<184x256xf32>
    %cst_53 = arith.constant 9.99999974E-6 : f32
    %92 = vector.broadcast %cst_53 : f32 to vector<1x256xf32>
    %93 = arith.addf %89, %92 : vector<1x256xf32>
    %94 = math.rsqrt %93 : vector<1x256xf32>
    %95 = vector.broadcast %94 : vector<1x256xf32> to vector<184x256xf32>
    %96 = arith.mulf %91, %95 : vector<184x256xf32>
    %c0_54 = arith.constant 0 : index
    %c0_55 = arith.constant 0 : index
    %c0_56 = arith.constant 0 : index
    %97 = vector.load %arg3[%c0_54, %c0_55, %c0_56] : memref<1x2x256xf32, #tpu.memory_space<vmem>>, vector<1x1x256xf32>
    %98 = vector.shape_cast %97 : vector<1x1x256xf32> to vector<1x256xf32>
    %99 = vector.broadcast %98 : vector<1x256xf32> to vector<184x256xf32>
    %100 = arith.mulf %96, %99 : vector<184x256xf32>
    %c0_57 = arith.constant 0 : index
    %c1 = arith.constant 1 : index
    %c0_58 = arith.constant 0 : index
    %101 = vector.load %arg3[%c0_57, %c1, %c0_58] : memref<1x2x256xf32, #tpu.memory_space<vmem>>, vector<1x1x256xf32>
    %102 = vector.shape_cast %101 : vector<1x1x256xf32> to vector<1x256xf32>
    %103 = vector.broadcast %102 : vector<1x256xf32> to vector<184x256xf32>
    %104 = arith.addf %100, %103 : vector<184x256xf32>
    %105 = arith.extui %19 : i1 to i32
    %106 = arith.sitofp %105 : i32 to f32
    %c0_59 = arith.constant 0 : index
    %c0_60 = arith.constant 0 : index
    %107 = vector.load %arg9[%c0_59, %c0_60] : memref<184x256xf32, #tpu.memory_space<vmem>>, vector<184x256xf32>
    %108 = vector.broadcast %106 : f32 to vector<184x256xf32>
    %109 = arith.mulf %108, %107 : vector<184x256xf32>
    %110 = arith.addf %104, %109 : vector<184x256xf32>
    %cst_61 = arith.constant 0.000000e+00 : f32
    %111 = vector.broadcast %cst_61 : f32 to vector<184x256xf32>
    %112 = arith.maximumf %110, %111 : vector<184x256xf32>
    %113 = arith.mulf %112, %75 : vector<184x256xf32>
    %c16_62 = arith.constant 16 : index
    %c0_63 = arith.constant 0 : index
    %114 = vector.load %arg8[%c16_62, %c0_63] : memref<216x256xf32, #tpu.memory_space<vmem>>, vector<184x256xf32>
    tpu.vector_store %arg8[%c16_62, %c0_63], %113 {strides = array<i32>} : memref<216x256xf32, #tpu.memory_space<vmem>>, vector<184x256xf32>,
    %c22_i32 = arith.constant 22 : i32
    %115 = arith.cmpi eq, %arg0, %c22_i32 : i32
    %116 = arith.extui %115 : i1 to i32
    %c0_i32_64 = arith.constant 0 : i32
    %117 = arith.cmpi ne, %116, %c0_i32_64 : i32
    scf.if %117 {
      %c0_65 = arith.constant 0 : index
      %c0_66 = arith.constant 0 : index
      %118 = vector.load %arg8[%c0_65, %c0_66] : memref<216x256xf32, #tpu.memory_space<vmem>>, vector<216x256xf32>
      %119 = arith.truncf %118 : vector<216x256xf32> to vector<216x256xbf16>
      %c0_67 = arith.constant 0 : index
      %c0_68 = arith.constant 0 : index
      %120 = vector.load %arg5[%c0_67, %c0_68] : memref<256x128xbf16, #tpu.memory_space<vmem>>, vector<256x128xbf16>
      %cst_69 = arith.constant dense<0.000000e+00> : vector<216x128xf32>
      %121 = tpu.matmul %119, %120, %cst_69 {dimension_numbers = #tpu.dot_dimension_numbers<[1], [0], [0], [1], [0, 0, 1, 1], [], []>} : vector<216x256xbf16>, vector<256x128xbf16>, vector<216x128xf32> -> vector<216x128xf32>
      %c0_70 = arith.constant 0 : index
      %c0_71 = arith.constant 0 : index
      %122 = vector.load %arg4[%c0_70, %c0_71] : memref<216x256xf32, #tpu.memory_space<vmem>>, vector<216x128xf32>
      %123 = arith.mulf %121, %122 : vector<216x128xf32>
      %cst_72 = arith.constant dense<0.000000e+00> : vector<128xf32>
      %124 = vector.multi_reduction <add>, %123, %cst_72 [0] : vector<216x128xf32> to vector<128xf32>
      %125 = vector.shape_cast %124 : vector<128xf32> to vector<1x128xf32>
      %cst_73 = arith.constant 7.812500e-03 : f32
      %126 = vector.broadcast %cst_73 : f32 to vector<1x128xf32>
      %127 = arith.mulf %125, %126 : vector<1x128xf32>
      %128 = arith.mulf %123, %121 : vector<216x128xf32>
      %cst_74 = arith.constant dense<0.000000e+00> : vector<128xf32>
      %129 = vector.multi_reduction <add>, %128, %cst_74 [0] : vector<216x128xf32> to vector<128xf32>
      %130 = vector.shape_cast %129 : vector<128xf32> to vector<1x128xf32>
      %cst_75 = arith.constant 7.812500e-03 : f32
      %131 = vector.broadcast %cst_75 : f32 to vector<1x128xf32>
      %132 = arith.mulf %130, %131 : vector<1x128xf32>
      %133 = arith.mulf %127, %127 : vector<1x128xf32>
      %134 = arith.subf %132, %133 : vector<1x128xf32>
      %cst_76 = arith.constant 0.000000e+00 : f32
      %135 = vector.broadcast %cst_76 : f32 to vector<1x128xf32>
      %136 = arith.maximumf %134, %135 : vector<1x128xf32>
      %137 = vector.broadcast %127 : vector<1x128xf32> to vector<216x128xf32>
      %138 = arith.subf %121, %137 : vector<216x128xf32>
      %cst_77 = arith.constant 9.99999974E-6 : f32
      %139 = vector.broadcast %cst_77 : f32 to vector<1x128xf32>
      %140 = arith.addf %136, %139 : vector<1x128xf32>
      %141 = math.rsqrt %140 : vector<1x128xf32>
      %142 = vector.broadcast %141 : vector<1x128xf32> to vector<216x128xf32>
      %143 = arith.mulf %138, %142 : vector<216x128xf32>
      %c0_78 = arith.constant 0 : index
      %c0_79 = arith.constant 0 : index
      %144 = vector.load %arg6[%c0_78, %c0_79] : memref<2x128xf32, #tpu.memory_space<vmem>>, vector<1x128xf32>
      %145 = vector.broadcast %144 : vector<1x128xf32> to vector<216x128xf32>
      %146 = arith.mulf %143, %145 : vector<216x128xf32>
      %c1_80 = arith.constant 1 : index
      %c0_81 = arith.constant 0 : index
      %147 = vector.load %arg6[%c1_80, %c0_81] : memref<2x128xf32, #tpu.memory_space<vmem>>, vector<1x128xf32>
      %148 = vector.broadcast %147 : vector<1x128xf32> to vector<216x128xf32>
      %149 = arith.addf %146, %148 : vector<216x128xf32>
      %cst_82 = arith.constant 0.000000e+00 : f32
      %150 = vector.broadcast %cst_82 : f32 to vector<216x128xf32>
      %151 = arith.maximumf %149, %150 : vector<216x128xf32>
      %152 = arith.mulf %151, %122 : vector<216x128xf32>
      %c0_83 = arith.constant 0 : index
      %c0_84 = arith.constant 0 : index
      %153 = vector.load %arg7[%c0_83, %c0_84] : memref<216x128xf32, #tpu.memory_space<vmem>>, vector<216x128xf32>
      tpu.vector_store %arg7[%c0_83, %c0_84], %152 {strides = array<i32>} : memref<216x128xf32, #tpu.memory_space<vmem>>, vector<216x128xf32>,
    } else {
    }
    return
  }
  func.func @transform_0(%arg0: i32) -> (i32, i32) {
    %c0_i32 = arith.constant 0 : i32
    %c0_i32_0 = arith.constant 0 : i32
    %c0_i32_1 = arith.constant 0 : i32
    return %c0_i32, %c0_i32_0 : i32, i32
  }
  func.func @transform_1(%arg0: i32) -> (i32, i32, i32) {
    %c0_i32 = arith.constant 0 : i32
    %c0_i32_0 = arith.constant 0 : i32
    %c0_i32_1 = arith.constant 0 : i32
    return %arg0, %c0_i32, %c0_i32_0 : i32, i32, i32
  }
  func.func @transform_2(%arg0: i32) -> (i32, i32, i32) {
    %c0_i32 = arith.constant 0 : i32
    %c0_i32_0 = arith.constant 0 : i32
    %c0_i32_1 = arith.constant 0 : i32
    return %arg0, %c0_i32, %c0_i32_0 : i32, i32, i32
  }
  func.func @transform_3(%arg0: i32) -> (i32, i32) {
    %c0_i32 = arith.constant 0 : i32
    %c0_i32_0 = arith.constant 0 : i32
    %c0_i32_1 = arith.constant 0 : i32
    return %c0_i32, %c0_i32_0 : i32, i32
  }
  func.func @transform_4(%arg0: i32) -> (i32, i32) {
    %c0_i32 = arith.constant 0 : i32
    %c0_i32_0 = arith.constant 0 : i32
    %c0_i32_1 = arith.constant 0 : i32
    return %c0_i32, %c0_i32_0 : i32, i32
  }
  func.func @transform_5(%arg0: i32) -> (i32, i32) {
    %c0_i32 = arith.constant 0 : i32
    %c0_i32_0 = arith.constant 0 : i32
    %c0_i32_1 = arith.constant 0 : i32
    return %c0_i32, %c0_i32_0 : i32, i32
  }
  func.func @transform_6(%arg0: i32) -> (i32, i32) {
    %c0_i32 = arith.constant 0 : i32
    %c0_i32_0 = arith.constant 0 : i32
    %c0_i32_1 = arith.constant 0 : i32
    return %c0_i32, %c0_i32_0 : i32, i32
  }
}

module attributes {stable_mosaic.version = 11 : i64} {
  func.func @_value_kernel(%arg0: i32, %arg1: memref<2x256xbf16, #tpu.memory_space<vmem>>, %arg2: memref<256x128xbf16, #tpu.memory_space<vmem>>, %arg3: memref<1x128xf32, #tpu.memory_space<vmem>>, %arg4: memref<2x128xf32, #tpu.memory_space<vmem>>) attributes {dimension_semantics = [#tpu.dimension_semantics<arbitrary>], iteration_bounds = array<i64: 1>, scalar_prefetch = 0 : i64, scratch_operands = 0 : i64, tpu.core_type = #tpu.core_type<tc>, window_params = [{pipeline_mode = #tpu.pipeline_mode<synchronous>, transform_indices = @transform_0, window_bounds = array<i64: 2, 256>}, {pipeline_mode = #tpu.pipeline_mode<synchronous>, transform_indices = @transform_1, window_bounds = array<i64: 256, 128>}, {pipeline_mode = #tpu.pipeline_mode<synchronous>, transform_indices = @transform_2, window_bounds = array<i64: 1, 128>}, {pipeline_mode = #tpu.pipeline_mode<synchronous>, transform_indices = @transform_3, window_bounds = array<i64: 2, 128>}]} {
    %c0 = arith.constant 0 : index
    %c0_0 = arith.constant 0 : index
    %0 = vector.load %arg1[%c0, %c0_0] : memref<2x256xbf16, #tpu.memory_space<vmem>>, vector<2x256xbf16>
    %c0_1 = arith.constant 0 : index
    %c0_2 = arith.constant 0 : index
    %1 = vector.load %arg2[%c0_1, %c0_2] : memref<256x128xbf16, #tpu.memory_space<vmem>>, vector<256x128xbf16>
    %cst = arith.constant dense<0.000000e+00> : vector<2x128xf32>
    %2 = tpu.matmul %0, %1, %cst {dimension_numbers = #tpu.dot_dimension_numbers<[1], [0], [0], [1], [0, 0, 1, 1], [], []>} : vector<2x256xbf16>, vector<256x128xbf16>, vector<2x128xf32> -> vector<2x128xf32>
    %c0_3 = arith.constant 0 : index
    %c0_4 = arith.constant 0 : index
    %3 = vector.load %arg3[%c0_3, %c0_4] : memref<1x128xf32, #tpu.memory_space<vmem>>, vector<1x128xf32>
    %4 = vector.broadcast %3 : vector<1x128xf32> to vector<2x128xf32>
    %5 = arith.addf %2, %4 : vector<2x128xf32>
    %6 = math.tanh %5 : vector<2x128xf32>
    %c0_5 = arith.constant 0 : index
    %c0_6 = arith.constant 0 : index
    %7 = vector.load %arg4[%c0_5, %c0_6] : memref<2x128xf32, #tpu.memory_space<vmem>>, vector<2x128xf32>
    tpu.vector_store %arg4[%c0_5, %c0_6], %6 {strides = array<i32>} : memref<2x128xf32, #tpu.memory_space<vmem>>, vector<2x128xf32>,
    return
  }
  func.func @transform_0(%arg0: i32) -> (i32, i32) {
    %c0_i32 = arith.constant 0 : i32
    %c0_i32_0 = arith.constant 0 : i32
    %c0_i32_1 = arith.constant 0 : i32
    return %c0_i32, %c0_i32_0 : i32, i32
  }
  func.func @transform_1(%arg0: i32) -> (i32, i32) {
    %c0_i32 = arith.constant 0 : i32
    %c0_i32_0 = arith.constant 0 : i32
    %c0_i32_1 = arith.constant 0 : i32
    return %c0_i32, %c0_i32_0 : i32, i32
  }
  func.func @transform_2(%arg0: i32) -> (i32, i32) {
    %c0_i32 = arith.constant 0 : i32
    %c0_i32_0 = arith.constant 0 : i32
    %c0_i32_1 = arith.constant 0 : i32
    return %c0_i32, %c0_i32_0 : i32, i32
  }
  func.func @transform_3(%arg0: i32) -> (i32, i32) {
    %c0_i32 = arith.constant 0 : i32
    %c0_i32_0 = arith.constant 0 : i32
    %c0_i32_1 = arith.constant 0 : i32
    return %c0_i32, %c0_i32_0 : i32, i32
  }
}

</mosaic_0001>

<llo_original>
// kernel: chess_model_forward.4
$region0: #{chess_model_forward.4}
  #allocation0 [shape = 'u32[]', space=smem, size = 0x4, offset = 0x4, fixed_abs, tag = 'smem constant byte address 0x4 - core index']
  #allocation1 [shape = 'u32[72,128]{1,0:T(1,128)}', space=vmem, size = 0x9000, scoped, tag = 'internal scratch']
  %s0 = inlined_call_operand.vmem [shape: bf16[2,1024], index: 0, kind: input, shape index: {}]
  %s1 = inlined_call_operand.hbm [shape: bf16[1024,4864], index: 1, kind: input, shape index: {}]
  %s2 = inlined_call_operand.hbm [shape: f32[1,4864], index: 2, kind: input, shape index: {}]
  %s3 = inlined_call_operand.hbm [shape: f32[2,4864], index: 3, kind: output, shape index: {}]
  %s4 = sld [smem:[#allocation0]]
  $region53: #{chess_model_forward.4} parent=0
    _
  %s6 = ssub.s32 1, %s4
  %s7 = scalar_select 0, %s6, %s4
  $region1: #{chess_model_forward.4} parent=0
    #allocation2 [shape = 'u8[1048576]{0}', space=vmem, size = 0x100000, scoped, tag = 'input window, operand 1']
    #allocation3 [shape = 's32[2]{0}', space=sflag, size = 0x8, scoped, tag = 'scoped memory for chess_model_forward.4']
    #allocation4 [shape = 's32[2]{0}', space=sflag, size = 0x8, scoped, tag = 'scoped memory for chess_model_forward.4']
    #allocation5 [shape = 'u8[2048]{0}', space=vmem, size = 0x800, scoped, tag = 'input window, operand 2']
    #allocation6 [shape = 's32[2]{0}', space=sflag, size = 0x8, scoped, tag = 'scoped memory for chess_model_forward.4']
    #allocation7 [shape = 'u8[4096]{0}', space=vmem, size = 0x1000, scoped, tag = 'output window, operand 0']
    %8 = vsyncpa [#allocation3], 0
    %s9 = scalar_lea.sflag [#allocation3], 1
    %10 = vsyncpa %s9, 0
    %11 = vsyncpa [#allocation6], 0
    %s12 = scalar_lea.sflag [#allocation6], 1
    %13 = vsyncpa %s12, 0
    %14 = vsyncpa [#allocation4], 0
    %s15 = scalar_lea.sflag [#allocation4], 1
    %16 = vsyncpa %s15, 0
    loop: start=0, step=1, limit=21
    $region2: #{chess_model_forward.4} parent=1 // loop_pre_header
      _
    $region3: #{chess_model_forward.4} parent=1 // loop_header
      %s18 = sphi 0, %s22
      %p19 = scmp.ge.s32.totalorder %s18, 21
      %s26 = sphi 0, %s26
      %s28 = sphi 0, %s26
      %s29 = sphi 0, %s28
      %s43 = sphi 0, %s29
      %s49 = sphi 0, %s51
      %s52 = sphi 0, %s49
      %s53 = sphi 0, %s52
      %s69 = sphi 0, %s53
      %s75 = sphi 0, %s77
      %s78 = sphi 0, %s75
      %s79 = sphi 0, %s78
      %s95 = sphi 0, %s79
      %s101 = sphi 0, %s103
      %s104 = sphi 0, %s101
      %s105 = sphi 0, %s104
      %s121 = sphi 0, %s105
    $region4: #{chess_model_forward.4} parent=1 // loop_header_branch
      %21 = sbr.rel (%p19) target = $region8
    $region5: #{chess_model_forward.4} parent=1 // loop_body
      %s23 = ssub.s32 %s18, 1
      %s24 = ssub.s32 %s18, 2
      %s25 = sadd.s32 %s18, 1
      %s27 = sadd.s32 %s26, 1
      %p30 = scmp.eq.s32.totalorder %s18, 18
      %p31 = scmp.ne.s32.totalorder %s26, %s28
      %p32 = scmp.eq.s32.totalorder %s18, 0
      %p33 = por %p31, %p32
      %p34 = scmp.ne.s32.totalorder %s26, %s28
      %p35 = scmp.eq.s32.totalorder %s23, 18
      %p36 = por %p34, %p35
      %p37 = scmp.ne.s32.totalorder %s28, %s29
      %p38 = scmp.eq.s32.totalorder %s23, 0
      %p39 = por %p37, %p38
      %p40 = scmp.ne.s32.totalorder %s28, %s29
      %p41 = scmp.eq.s32.totalorder %s24, 18
      %p42 = por %p40, %p41
      %p44 = scmp.ne.s32.totalorder %s29, %s43
      %p45 = scmp.eq.s32.totalorder %s24, 0
      %p46 = por %p44, %p45
      %s47 = ssub.s32 %s18, %s25
      %p48 = scmp.eq.s32.totalorder %s47, 0
      %s50 = sadd.s32 %s49, 1
      %s51 = scalar_select %p48, %s49, %s50
      %p54 = pneg %p48
      %p55 = scmp.eq.s32.totalorder %s18, 18
      %p56 = por %p54, %p55
      %p57 = scmp.ne.s32.totalorder %s49, %s52
      %p58 = scmp.eq.s32.totalorder %s18, 0
      %p59 = por %p57, %p58
      %p60 = scmp.ne.s32.totalorder %s49, %s52
      %p61 = scmp.eq.s32.totalorder %s23, 18
      %p62 = por %p60, %p61
      %p63 = scmp.ne.s32.totalorder %s52, %s53
      %p64 = scmp.eq.s32.totalorder %s23, 0
      %p65 = por %p63, %p64
      %p66 = scmp.ne.s32.totalorder %s52, %s53
      %p67 = scmp.eq.s32.totalorder %s24, 18
      %p68 = por %p66, %p67
      %p70 = scmp.ne.s32.totalorder %s53, %s69
      %p71 = scmp.eq.s32.totalorder %s24, 0
      %p72 = por %p70, %p71
      %s73 = ssub.s32 %s18, %s25
      %p74 = scmp.eq.s32.totalorder %s73, 0
      %s76 = sadd.s32 %s75, 1
      %s77 = scalar_select %p74, %s75, %s76
      %p80 = pneg %p74
      %p81 = scmp.eq.s32.totalorder %s18, 18
      %p82 = por %p80, %p81
      %p83 = scmp.ne.s32.totalorder %s75, %s78
      %p84 = scmp.eq.s32.totalorder %s18, 0
      %p85 = por %p83, %p84
      %p86 = scmp.ne.s32.totalorder %s75, %s78
      %p87 = scmp.eq.s32.totalorder %s23, 18
      %p88 = por %p86, %p87
      %p89 = scmp.ne.s32.totalorder %s78, %s79
      %p90 = scmp.eq.s32.totalorder %s23, 0
      %p91 = por %p89, %p90
      %p92 = scmp.ne.s32.totalorder %s78, %s79
      %p93 = scmp.eq.s32.totalorder %s24, 18
      %p94 = por %p92, %p93
      %p96 = scmp.ne.s32.totalorder %s79, %s95
      %p97 = scmp.eq.s32.totalorder %s24, 0
      %p98 = por %p96, %p97
      %s99 = ssub.s32 %s18, %s25
      %p100 = scmp.eq.s32.totalorder %s99, 0
      %s102 = sadd.s32 %s101, 1
      %s103 = scalar_select %p100, %s101, %s102
      %p106 = pneg %p100
      %p107 = scmp.eq.s32.totalorder %s18, 18
      %p108 = por %p106, %p107
      %p109 = scmp.ne.s32.totalorder %s101, %s104
      %p110 = scmp.eq.s32.totalorder %s18, 0
      %p111 = por %p109, %p110
      %p112 = scmp.ne.s32.totalorder %s101, %s104
      %p113 = scmp.eq.s32.totalorder %s23, 18
      %p114 = por %p112, %p113
      %p115 = scmp.ne.s32.totalorder %s104, %s105
      %p116 = scmp.eq.s32.totalorder %s23, 0
      %p117 = por %p115, %p116
      %p118 = scmp.ne.s32.totalorder %s104, %s105
      %p119 = scmp.eq.s32.totalorder %s24, 18
      %p120 = por %p118, %p119
      %p122 = scmp.ne.s32.totalorder %s105, %s121
      %p123 = scmp.eq.s32.totalorder %s24, 0
      %p124 = por %p122, %p123
      %p125 = scmp.le.s32.totalorder 1, %s18
      %p126 = scmp.lt.s32.totalorder %s18, 20
      %p127 = pnand %p125, %p126
      %p128 = pneg %p127
      // Predicated region
      $region9: #{chess_model_forward.4} parent=5 // pred_check
        _
      $region10: #{chess_model_forward.4} parent=5 // pred_check_branch
        %130 = sbr.rel (%p127) target = $region12
      $region11: #{chess_model_forward.4} parent=5 // pred_region
        %s131 = ssub.s32 %s18, 1
        // Predicated region
        $region13: #{chess_model_forward.4} parent=11 // pred_check
          %p132 = pneg %p39
        $region14: #{chess_model_forward.4} parent=11 // pred_check_branch
          %134 = sbr.rel (%p132) target = $region16
        $region15: #{chess_model_forward.4} parent=11 // pred_region
          _
        $region16: #{chess_model_forward.4} parent=11 // pred_fallthru
          _
      $region12: #{chess_model_forward.4} parent=5 // pred_fallthru
        _
      %p135 = scmp.lt.s32.totalorder %s18, 19
      // Predicated region
      $region17: #{chess_model_forward.4} parent=5 // pred_check
        %p136 = pneg %p135
      $region18: #{chess_model_forward.4} parent=5 // pred_check_branch
        %138 = sbr.rel (%p136) target = $region20
      $region19: #{chess_model_forward.4} parent=5 // pred_region
        // Predicated region
        $region21: #{chess_model_forward.4} parent=19 // pred_check
          %p139 = pneg %p59
        $region22: #{chess_model_forward.4} parent=19 // pred_check_branch
          %141 = sbr.rel (%p139) target = $region24
        $region23: #{chess_model_forward.4} parent=19 // pred_region
          %s142 = sand.u32 %s49, 1
          %s143 = scalar_lea.sflag [#allocation3], %s142
          %s144 = sand.u32 %s49, 1
          %s145 = smul.addr %s144, 1024
          %s146 = scalar_lea.vmem [#allocation2], %s145
          %s147 = smul.u32 2, %s18
          %149 = vsyncadd %s143, 0
          %s150 = smul.addr %s147, 4
          %s151 = scalar_lea.hbm %s1, %s150
          %s152 = sshll.u32 %s151, 4
          %s153 = int_to_ptr.hbm [resolvable:$true] %s152
          %s154 = sshll.u32 %s146, 4
          %s155 = int_to_ptr.vmem [resolvable:$true] %s154
          %160 = dma.hbm_to_vmem [thread:$0]  %s153, 16384, %s155, %s143, 2432, 128, 8
        $region24: #{chess_model_forward.4} parent=19 // pred_fallthru
          _
        // Predicated region
        $region25: #{chess_model_forward.4} parent=19 // pred_check
          %p161 = pneg %p85
        $region26: #{chess_model_forward.4} parent=19 // pred_check_branch
          %163 = sbr.rel (%p161) target = $region28
        $region27: #{chess_model_forward.4} parent=19 // pred_region
          %s164 = sand.u32 %s75, 1
          %s165 = scalar_lea.sflag [#allocation6], %s164
          %s166 = sand.u32 %s75, 1
          %s167 = smul.addr %s166, 2
          %s168 = scalar_lea.vmem [#allocation5], %s167
          %s169 = smul.u32 2, %s18
          %171 = vsyncadd %s165, 0
          %s172 = scalar_lea.hbm %s2, %s169
          %s174 = sshll.u32 %s172, 4
          %s175 = int_to_ptr.hbm [resolvable:$true] %s174
          %s176 = sshll.u32 %s168, 4
          %s177 = int_to_ptr.vmem [resolvable:$true] %s176
          %179 = dma.hbm_to_vmem [thread:$0]  %s175, 32, %s177, %s165
        $region28: #{chess_model_forward.4} parent=19 // pred_fallthru
          _
      $region20: #{chess_model_forward.4} parent=5 // pred_fallthru
        _
      %p180 = scmp.le.s32.totalorder 1, %s18
      %p181 = scmp.lt.s32.totalorder %s18, 20
      %p182 = pnand %p180, %p181
      %p183 = pneg %p182
      // Predicated region
      $region29: #{chess_model_forward.4} parent=5 // pred_check
        _
      $region30: #{chess_model_forward.4} parent=5 // pred_check_branch
        %185 = sbr.rel (%p182) target = $region32
      $region31: #{chess_model_forward.4} parent=5 // pred_region
        %s186 = ssub.s32 %s18, 1
        %s187 = sand.u32 %s52, 1
        %s188 = scalar_lea.sflag [#allocation3], %s187
        %s189 = sand.u32 %s52, 1
        %s190 = smul.addr %s189, 1024
        %s191 = scalar_lea.vmem [#allocation2], %s190
        // Predicated region
        $region33: #{chess_model_forward.4} parent=31 // pred_check
          %p192 = pneg %p65
        $region34: #{chess_model_forward.4} parent=31 // pred_check_branch
          %194 = sbr.rel (%p192) target = $region36
        $region35: #{chess_model_forward.4} parent=31 // pred_region
          %196 = dma.done %s188, 16384
        $region36: #{chess_model_forward.4} parent=31 // pred_fallthru
          _
        %s197 = sand.u32 %s78, 1
        %s198 = scalar_lea.sflag [#allocation6], %s197
        %s199 = sand.u32 %s78, 1
        %s200 = smul.addr %s199, 2
        %s201 = scalar_lea.vmem [#allocation5], %s200
        // Predicated region
        $region37: #{chess_model_forward.4} parent=31 // pred_check
          %p202 = pneg %p91
        $region38: #{chess_model_forward.4} parent=31 // pred_check_branch
          %204 = sbr.rel (%p202) target = $region40
        $region39: #{chess_model_forward.4} parent=31 // pred_region
          %206 = dma.done %s198, 32
        $region40: #{chess_model_forward.4} parent=31 // pred_fallthru
          _
        %p207 = pneg %p39
        %p208 = pneg %p36
        %s209 = sand.u32 %s52, 1
        %s210 = scalar_lea.sflag [#allocation3], %s209
        %s211 = sand.u32 %s52, 1
        %s212 = smul.addr %s211, 1024
        %s213 = scalar_lea.vmem [#allocation2], %s212
        %p214 = pneg %p65
        %p215 = pneg %p62
        %s216 = sand.u32 %s78, 1
        %s217 = scalar_lea.sflag [#allocation6], %s216
        %s218 = sand.u32 %s78, 1
        %s219 = smul.addr %s218, 2
        %s220 = scalar_lea.vmem [#allocation5], %s219
        %p221 = pneg %p91
        %p222 = pneg %p88
        %p223 = pneg %p117
        %p224 = pneg %p114
        %s225 = sand.u32 %s104, 1
        %s226 = scalar_lea.sflag [#allocation4], %s225
        %s227 = sand.u32 %s104, 1
        %s228 = smul.addr %s227, 4
        %s229 = scalar_lea.vmem [#allocation7], %s228
        %s230 = smul.u32 2, %s23
        %s231 = smul.u32 2, %s23
        %s232 = smul.u32 2, %s23
        %v233 = vld [vmem:[%s0] sm:$0xff]
        %v234 = vld [vmem:[%s191] sm:$0xff]
        %v235 = vld [vmem:[%s191 + $0x8] sm:$0xff]
        %v236 = vld [vmem:[%s191 + $0x10] sm:$0xff]
        %v237 = vld [vmem:[%s191 + $0x18] sm:$0xff]
        %v238 = vld [vmem:[%s191 + $0x20] sm:$0xff]
        %v239 = vld [vmem:[%s191 + $0x28] sm:$0xff]
        %v240 = vld [vmem:[%s191 + $0x30] sm:$0xff]
        %v241 = vld [vmem:[%s191 + $0x38] sm:$0xff]
        %v242 = vld [vmem:[%s191 + $0x40] sm:$0xff]
        %v243 = vld [vmem:[%s191 + $0x48] sm:$0xff]
        %v244 = vld [vmem:[%s191 + $0x50] sm:$0xff]
        %v245 = vld [vmem:[%s191 + $0x58] sm:$0xff]
        %v246 = vld [vmem:[%s191 + $0x60] sm:$0xff]
        %v247 = vld [vmem:[%s191 + $0x68] sm:$0xff]
        %v248 = vld [vmem:[%s191 + $0x70] sm:$0xff]
        %v249 = vld [vmem:[%s191 + $0x78] sm:$0xff]
        %v250 = vld [vmem:[%s191 + $0x80] sm:$0xff]
        %v251 = vld [vmem:[%s191 + $0x88] sm:$0xff]
        %v252 = vld [vmem:[%s191 + $0x90] sm:$0xff]
        %v253 = vld [vmem:[%s191 + $0x98] sm:$0xff]
        %v254 = vld [vmem:[%s191 + $0xa0] sm:$0xff]
        %v255 = vld [vmem:[%s191 + $0xa8] sm:$0xff]
        %v256 = vld [vmem:[%s191 + $0xb0] sm:$0xff]
        %v257 = vld [vmem:[%s191 + $0xb8] sm:$0xff]
        %v258 = vld [vmem:[%s191 + $0xc0] sm:$0xff]
        %v259 = vld [vmem:[%s191 + $0xc8] sm:$0xff]
        %v260 = vld [vmem:[%s191 + $0xd0] sm:$0xff]
        %v261 = vld [vmem:[%s191 + $0xd8] sm:$0xff]
        %v262 = vld [vmem:[%s191 + $0xe0] sm:$0xff]
        %v263 = vld [vmem:[%s191 + $0xe8] sm:$0xff]
        %v264 = vld [vmem:[%s191 + $0xf0] sm:$0xff]
        %v265 = vld [vmem:[%s191 + $0xf8] sm:$0xff]
        %v266 = vld [vmem:[%s191 + $0x100] sm:$0xff]
        %v267 = vld [vmem:[%s191 + $0x108] sm:$0xff]
        %v268 = vld [vmem:[%s191 + $0x110] sm:$0xff]
        %v269 = vld [vmem:[%s191 + $0x118] sm:$0xff]
        %v270 = vld [vmem:[%s191 + $0x120] sm:$0xff]
        %v271 = vld [vmem:[%s191 + $0x128] sm:$0xff]
        %v272 = vld [vmem:[%s191 + $0x130] sm:$0xff]
        %v273 = vld [vmem:[%s191 + $0x138] sm:$0xff]
        %v274 = vld [vmem:[%s191 + $0x140] sm:$0xff]
        %v275 = vld [vmem:[%s191 + $0x148] sm:$0xff]
        %v276 = vld [vmem:[%s191 + $0x150] sm:$0xff]
        %v277 = vld [vmem:[%s191 + $0x158] sm:$0xff]
        %v278 = vld [vmem:[%s191 + $0x160] sm:$0xff]
        %v279 = vld [vmem:[%s191 + $0x168] sm:$0xff]
        %v280 = vld [vmem:[%s191 + $0x170] sm:$0xff]
        %v281 = vld [vmem:[%s191 + $0x178] sm:$0xff]
        %v282 = vld [vmem:[%s191 + $0x180] sm:$0xff]
        %v283 = vld [vmem:[%s191 + $0x188] sm:$0xff]
        %v284 = vld [vmem:[%s191 + $0x190] sm:$0xff]
        %v285 = vld [vmem:[%s191 + $0x198] sm:$0xff]
        %v286 = vld [vmem:[%s191 + $0x1a0] sm:$0xff]
        %v287 = vld [vmem:[%s191 + $0x1a8] sm:$0xff]
        %v288 = vld [vmem:[%s191 + $0x1b0] sm:$0xff]
        %v289 = vld [vmem:[%s191 + $0x1b8] sm:$0xff]
        %v290 = vld [vmem:[%s191 + $0x1c0] sm:$0xff]
        %v291 = vld [vmem:[%s191 + $0x1c8] sm:$0xff]
        %v292 = vld [vmem:[%s191 + $0x1d0] sm:$0xff]
        %v293 = vld [vmem:[%s191 + $0x1d8] sm:$0xff]
        %v294 = vld [vmem:[%s191 + $0x1e0] sm:$0xff]
        %v295 = vld [vmem:[%s191 + $0x1e8] sm:$0xff]
        %v296 = vld [vmem:[%s191 + $0x1f0] sm:$0xff]
        %v297 = vld [vmem:[%s191 + $0x1f8] sm:$0xff]
        %v298 = vld [vmem:[%s191 + $0x200] sm:$0xff]
        %v299 = vld [vmem:[%s191 + $0x208] sm:$0xff]
        %v300 = vld [vmem:[%s191 + $0x210] sm:$0xff]
        %v301 = vld [vmem:[%s191 + $0x218] sm:$0xff]
        %v302 = vld [vmem:[%s191 + $0x220] sm:$0xff]
        %v303 = vld [vmem:[%s191 + $0x228] sm:$0xff]
        %v304 = vld [vmem:[%s191 + $0x230] sm:$0xff]
        %v305 = vld [vmem:[%s191 + $0x238] sm:$0xff]
        %v306 = vld [vmem:[%s191 + $0x240] sm:$0xff]
        %v307 = vld [vmem:[%s191 + $0x248] sm:$0xff]
        %v308 = vld [vmem:[%s191 + $0x250] sm:$0xff]
        %v309 = vld [vmem:[%s191 + $0x258] sm:$0xff]
        %v310 = vld [vmem:[%s191 + $0x260] sm:$0xff]
        %v311 = vld [vmem:[%s191 + $0x268] sm:$0xff]
        %v312 = vld [vmem:[%s191 + $0x270] sm:$0xff]
        %v313 = vld [vmem:[%s191 + $0x278] sm:$0xff]
        %v314 = vld [vmem:[%s191 + $0x280] sm:$0xff]
        %v315 = vld [vmem:[%s191 + $0x288] sm:$0xff]
        %v316 = vld [vmem:[%s191 + $0x290] sm:$0xff]
        %v317 = vld [vmem:[%s191 + $0x298] sm:$0xff]
        %v318 = vld [vmem:[%s191 + $0x2a0] sm:$0xff]
        %v319 = vld [vmem:[%s191 + $0x2a8] sm:$0xff]
        %v320 = vld [vmem:[%s191 + $0x2b0] sm:$0xff]
        %v321 = vld [vmem:[%s191 + $0x2b8] sm:$0xff]
        %v322 = vld [vmem:[%s191 + $0x2c0] sm:$0xff]
        %v323 = vld [vmem:[%s191 + $0x2c8] sm:$0xff]
        %v324 = vld [vmem:[%s191 + $0x2d0] sm:$0xff]
        %v325 = vld [vmem:[%s191 + $0x2d8] sm:$0xff]
        %v326 = vld [vmem:[%s191 + $0x2e0] sm:$0xff]
        %v327 = vld [vmem:[%s191 + $0x2e8] sm:$0xff]
        %v328 = vld [vmem:[%s191 + $0x2f0] sm:$0xff]
        %v329 = vld [vmem:[%s191 + $0x2f8] sm:$0xff]
        %v330 = vld [vmem:[%s191 + $0x300] sm:$0xff]
        %v331 = vld [vmem:[%s191 + $0x308] sm:$0xff]
        %v332 = vld [vmem:[%s191 + $0x310] sm:$0xff]
        %v333 = vld [vmem:[%s191 + $0x318] sm:$0xff]
        %v334 = vld [vmem:[%s191 + $0x320] sm:$0xff]
        %v335 = vld [vmem:[%s191 + $0x328] sm:$0xff]
        %v336 = vld [vmem:[%s191 + $0x330] sm:$0xff]
        %v337 = vld [vmem:[%s191 + $0x338] sm:$0xff]
        %v338 = vld [vmem:[%s191 + $0x340] sm:$0xff]
        %v339 = vld [vmem:[%s191 + $0x348] sm:$0xff]
        %v340 = vld [vmem:[%s191 + $0x350] sm:$0xff]
        %v341 = vld [vmem:[%s191 + $0x358] sm:$0xff]
        %v342 = vld [vmem:[%s191 + $0x360] sm:$0xff]
        %v343 = vld [vmem:[%s191 + $0x368] sm:$0xff]
        %v344 = vld [vmem:[%s191 + $0x370] sm:$0xff]
        %v345 = vld [vmem:[%s191 + $0x378] sm:$0xff]
        %v346 = vld [vmem:[%s191 + $0x380] sm:$0xff]
        %v347 = vld [vmem:[%s191 + $0x388] sm:$0xff]
        %v348 = vld [vmem:[%s191 + $0x390] sm:$0xff]
        %v349 = vld [vmem:[%s191 + $0x398] sm:$0xff]
        %v350 = vld [vmem:[%s191 + $0x3a0] sm:$0xff]
        %v351 = vld [vmem:[%s191 + $0x3a8] sm:$0xff]
        %v352 = vld [vmem:[%s191 + $0x3b0] sm:$0xff]
        %v353 = vld [vmem:[%s191 + $0x3b8] sm:$0xff]
        %v354 = vld [vmem:[%s191 + $0x3c0] sm:$0xff]
        %v355 = vld [vmem:[%s191 + $0x3c8] sm:$0xff]
        %v356 = vld [vmem:[%s191 + $0x3d0] sm:$0xff]
        %v357 = vld [vmem:[%s191 + $0x3d8] sm:$0xff]
        %v358 = vld [vmem:[%s191 + $0x3e0] sm:$0xff]
        %v359 = vld [vmem:[%s191 + $0x3e8] sm:$0xff]
        %v360 = vld [vmem:[%s191 + $0x3f0] sm:$0xff]
        %v361 = vld [vmem:[%s191 + $0x3f8] sm:$0xff]
        %v362 = vld [vmem:[%s201] sm:$0x3]
        %v364 = vperm.slane %v362, 0
        %v365 = vperm.slane %v362, 1
        %369 = vst [vmem:[#allocation1] ss:$9 sm:$0xff] %v233
        %v370 = vld [vmem:[#allocation1] sm:$0xff]
        %v371 = vld [vmem:[#allocation1 + $0x9] sm:$0xff]
        %v372 = vld [vmem:[#allocation1 + $0x12] sm:$0xff]
        %v373 = vld [vmem:[#allocation1 + $0x1b] sm:$0xff]
        %v374 = vld [vmem:[#allocation1 + $0x24] sm:$0xff]
        %v375 = vld [vmem:[#allocation1 + $0x2d] sm:$0xff]
        %v376 = vld [vmem:[#allocation1 + $0x36] sm:$0xff]
        %v377 = vld [vmem:[#allocation1 + $0x3f] sm:$0xff]
        %v514 = vunpack.c.l.b16 %v234
        %v515 = vunpack.c.h.b16 %v234
        %v516 = vunpack.c.l.b16 %v235
        %v517 = vunpack.c.h.b16 %v235
        %v518 = vunpack.c.l.b16 %v236
        %v519 = vunpack.c.h.b16 %v236
        %v520 = vunpack.c.l.b16 %v237
        %v521 = vunpack.c.h.b16 %v237
        %v522 = vunpack.c.l.b16 %v238
        %v523 = vunpack.c.h.b16 %v238
        %v524 = vunpack.c.l.b16 %v239
        %v525 = vunpack.c.h.b16 %v239
        %v526 = vunpack.c.l.b16 %v240
        %v527 = vunpack.c.h.b16 %v240
        %v528 = vunpack.c.l.b16 %v241
        %v529 = vunpack.c.h.b16 %v241
        %v530 = vunpack.c.l.b16 %v242
        %v531 = vunpack.c.h.b16 %v242
        %v532 = vunpack.c.l.b16 %v243
        %v533 = vunpack.c.h.b16 %v243
        %v534 = vunpack.c.l.b16 %v244
        %v535 = vunpack.c.h.b16 %v244
        %v536 = vunpack.c.l.b16 %v245
        %v537 = vunpack.c.h.b16 %v245
        %v538 = vunpack.c.l.b16 %v246
        %v539 = vunpack.c.h.b16 %v246
        %v540 = vunpack.c.l.b16 %v247
        %v541 = vunpack.c.h.b16 %v247
        %v542 = vunpack.c.l.b16 %v248
        %v543 = vunpack.c.h.b16 %v248
        %v544 = vunpack.c.l.b16 %v249
        %v545 = vunpack.c.h.b16 %v249
        %v546 = vunpack.c.l.b16 %v250
        %v547 = vunpack.c.h.b16 %v250
        %v548 = vunpack.c.l.b16 %v251
        %v549 = vunpack.c.h.b16 %v251
        %v550 = vunpack.c.l.b16 %v252
        %v551 = vunpack.c.h.b16 %v252
        %v552 = vunpack.c.l.b16 %v253
        %v553 = vunpack.c.h.b16 %v253
        %v554 = vunpack.c.l.b16 %v254
        %v555 = vunpack.c.h.b16 %v254
        %v556 = vunpack.c.l.b16 %v255
        %v557 = vunpack.c.h.b16 %v255
        %v558 = vunpack.c.l.b16 %v256
        %v559 = vunpack.c.h.b16 %v256
        %v560 = vunpack.c.l.b16 %v257
        %v561 = vunpack.c.h.b16 %v257
        %v562 = vunpack.c.l.b16 %v258
        %v563 = vunpack.c.h.b16 %v258
        %v564 = vunpack.c.l.b16 %v259
        %v565 = vunpack.c.h.b16 %v259
        %v566 = vunpack.c.l.b16 %v260
        %v567 = vunpack.c.h.b16 %v260
        %v568 = vunpack.c.l.b16 %v261
        %v569 = vunpack.c.h.b16 %v261
        %v570 = vunpack.c.l.b16 %v262
        %v571 = vunpack.c.h.b16 %v262
        %v572 = vunpack.c.l.b16 %v263
        %v573 = vunpack.c.h.b16 %v263
        %v574 = vunpack.c.l.b16 %v264
        %v575 = vunpack.c.h.b16 %v264
        %v576 = vunpack.c.l.b16 %v265
        %v577 = vunpack.c.h.b16 %v265
        %v578 = vunpack.c.l.b16 %v266
        %v579 = vunpack.c.h.b16 %v266
        %v580 = vunpack.c.l.b16 %v267
        %v581 = vunpack.c.h.b16 %v267
        %v582 = vunpack.c.l.b16 %v268
        %v583 = vunpack.c.h.b16 %v268
        %v584 = vunpack.c.l.b16 %v269
        %v585 = vunpack.c.h.b16 %v269
        %v586 = vunpack.c.l.b16 %v270
        %v587 = vunpack.c.h.b16 %v270
        %v588 = vunpack.c.l.b16 %v271
        %v589 = vunpack.c.h.b16 %v271
        %v590 = vunpack.c.l.b16 %v272
        %v591 = vunpack.c.h.b16 %v272
        %v592 = vunpack.c.l.b16 %v273
        %v593 = vunpack.c.h.b16 %v273
        %v594 = vunpack.c.l.b16 %v274
        %v595 = vunpack.c.h.b16 %v274
        %v596 = vunpack.c.l.b16 %v275
        %v597 = vunpack.c.h.b16 %v275
        %v598 = vunpack.c.l.b16 %v276
        %v599 = vunpack.c.h.b16 %v276
        %v600 = vunpack.c.l.b16 %v277
        %v601 = vunpack.c.h.b16 %v277
        %v602 = vunpack.c.l.b16 %v278
        %v603 = vunpack.c.h.b16 %v278
        %v604 = vunpack.c.l.b16 %v279
        %v605 = vunpack.c.h.b16 %v279
        %v606 = vunpack.c.l.b16 %v280
        %v607 = vunpack.c.h.b16 %v280
        %v608 = vunpack.c.l.b16 %v281
        %v609 = vunpack.c.h.b16 %v281
        %v610 = vunpack.c.l.b16 %v282
        %v611 = vunpack.c.h.b16 %v282
        %v612 = vunpack.c.l.b16 %v283
        %v613 = vunpack.c.h.b16 %v283
        %v614 = vunpack.c.l.b16 %v284
        %v615 = vunpack.c.h.b16 %v284
        %v616 = vunpack.c.l.b16 %v285
        %v617 = vunpack.c.h.b16 %v285
        %v618 = vunpack.c.l.b16 %v286
        %v619 = vunpack.c.h.b16 %v286
        %v620 = vunpack.c.l.b16 %v287
        %v621 = vunpack.c.h.b16 %v287
        %v622 = vunpack.c.l.b16 %v288
        %v623 = vunpack.c.h.b16 %v288
        %v624 = vunpack.c.l.b16 %v289
        %v625 = vunpack.c.h.b16 %v289
        %v626 = vunpack.c.l.b16 %v290
        %v627 = vunpack.c.h.b16 %v290
        %v628 = vunpack.c.l.b16 %v291
        %v629 = vunpack.c.h.b16 %v291
        %v630 = vunpack.c.l.b16 %v292
        %v631 = vunpack.c.h.b16 %v292
        %v632 = vunpack.c.l.b16 %v293
        %v633 = vunpack.c.h.b16 %v293
        %v634 = vunpack.c.l.b16 %v294
        %v635 = vunpack.c.h.b16 %v294
        %v636 = vunpack.c.l.b16 %v295
        %v637 = vunpack.c.h.b16 %v295
        %v638 = vunpack.c.l.b16 %v296
        %v639 = vunpack.c.h.b16 %v296
        %v640 = vunpack.c.l.b16 %v297
        %v641 = vunpack.c.h.b16 %v297
        %v642 = vunpack.c.l.b16 %v298
        %v643 = vunpack.c.h.b16 %v298
        %v644 = vunpack.c.l.b16 %v299
        %v645 = vunpack.c.h.b16 %v299
        %v646 = vunpack.c.l.b16 %v300
        %v647 = vunpack.c.h.b16 %v300
        %v648 = vunpack.c.l.b16 %v301
        %v649 = vunpack.c.h.b16 %v301
        %v650 = vunpack.c.l.b16 %v302
        %v651 = vunpack.c.h.b16 %v302
        %v652 = vunpack.c.l.b16 %v303
        %v653 = vunpack.c.h.b16 %v303
        %v654 = vunpack.c.l.b16 %v304
        %v655 = vunpack.c.h.b16 %v304
        %v656 = vunpack.c.l.b16 %v305
        %v657 = vunpack.c.h.b16 %v305
        %v658 = vunpack.c.l.b16 %v306
        %v659 = vunpack.c.h.b16 %v306
        %v660 = vunpack.c.l.b16 %v307
        %v661 = vunpack.c.h.b16 %v307
        %v662 = vunpack.c.l.b16 %v308
        %v663 = vunpack.c.h.b16 %v308
        %v664 = vunpack.c.l.b16 %v309
        %v665 = vunpack.c.h.b16 %v309
        %v666 = vunpack.c.l.b16 %v310
        %v667 = vunpack.c.h.b16 %v310
        %v668 = vunpack.c.l.b16 %v311
        %v669 = vunpack.c.h.b16 %v311
        %v670 = vunpack.c.l.b16 %v312
        %v671 = vunpack.c.h.b16 %v312
        %v672 = vunpack.c.l.b16 %v313
        %v673 = vunpack.c.h.b16 %v313
        %v674 = vunpack.c.l.b16 %v314
        %v675 = vunpack.c.h.b16 %v314
        %v676 = vunpack.c.l.b16 %v315
        %v677 = vunpack.c.h.b16 %v315
        %v678 = vunpack.c.l.b16 %v316
        %v679 = vunpack.c.h.b16 %v316
        %v680 = vunpack.c.l.b16 %v317
        %v681 = vunpack.c.h.b16 %v317
        %v682 = vunpack.c.l.b16 %v318
        %v683 = vunpack.c.h.b16 %v318
        %v684 = vunpack.c.l.b16 %v319
        %v685 = vunpack.c.h.b16 %v319
        %v686 = vunpack.c.l.b16 %v320
        %v687 = vunpack.c.h.b16 %v320
        %v688 = vunpack.c.l.b16 %v321
        %v689 = vunpack.c.h.b16 %v321
        %v690 = vunpack.c.l.b16 %v322
        %v691 = vunpack.c.h.b16 %v322
        %v692 = vunpack.c.l.b16 %v323
        %v693 = vunpack.c.h.b16 %v323
        %v694 = vunpack.c.l.b16 %v324
        %v695 = vunpack.c.h.b16 %v324
        %v696 = vunpack.c.l.b16 %v325
        %v697 = vunpack.c.h.b16 %v325
        %v698 = vunpack.c.l.b16 %v326
        %v699 = vunpack.c.h.b16 %v326
        %v700 = vunpack.c.l.b16 %v327
        %v701 = vunpack.c.h.b16 %v327
        %v702 = vunpack.c.l.b16 %v328
        %v703 = vunpack.c.h.b16 %v328
        %v704 = vunpack.c.l.b16 %v329
        %v705 = vunpack.c.h.b16 %v329
        %v706 = vunpack.c.l.b16 %v330
        %v707 = vunpack.c.h.b16 %v330
        %v708 = vunpack.c.l.b16 %v331
        %v709 = vunpack.c.h.b16 %v331
        %v710 = vunpack.c.l.b16 %v332
        %v711 = vunpack.c.h.b16 %v332
        %v712 = vunpack.c.l.b16 %v333
        %v713 = vunpack.c.h.b16 %v333
        %v714 = vunpack.c.l.b16 %v334
        %v715 = vunpack.c.h.b16 %v334
        %v716 = vunpack.c.l.b16 %v335
        %v717 = vunpack.c.h.b16 %v335
        %v718 = vunpack.c.l.b16 %v336
        %v719 = vunpack.c.h.b16 %v336
        %v720 = vunpack.c.l.b16 %v337
        %v721 = vunpack.c.h.b16 %v337
        %v722 = vunpack.c.l.b16 %v338
        %v723 = vunpack.c.h.b16 %v338
        %v724 = vunpack.c.l.b16 %v339
        %v725 = vunpack.c.h.b16 %v339
        %v726 = vunpack.c.l.b16 %v340
        %v727 = vunpack.c.h.b16 %v340
        %v728 = vunpack.c.l.b16 %v341
        %v729 = vunpack.c.h.b16 %v341
        %v730 = vunpack.c.l.b16 %v342
        %v731 = vunpack.c.h.b16 %v342
        %v732 = vunpack.c.l.b16 %v343
        %v733 = vunpack.c.h.b16 %v343
        %v734 = vunpack.c.l.b16 %v344
        %v735 = vunpack.c.h.b16 %v344
        %v736 = vunpack.c.l.b16 %v345
        %v737 = vunpack.c.h.b16 %v345
        %v738 = vunpack.c.l.b16 %v346
        %v739 = vunpack.c.h.b16 %v346
        %v740 = vunpack.c.l.b16 %v347
        %v741 = vunpack.c.h.b16 %v347
        %v742 = vunpack.c.l.b16 %v348
        %v743 = vunpack.c.h.b16 %v348
        %v744 = vunpack.c.l.b16 %v349
        %v745 = vunpack.c.h.b16 %v349
        %v746 = vunpack.c.l.b16 %v350
        %v747 = vunpack.c.h.b16 %v350
        %v748 = vunpack.c.l.b16 %v351
        %v749 = vunpack.c.h.b16 %v351
        %v750 = vunpack.c.l.b16 %v352
        %v751 = vunpack.c.h.b16 %v352
        %v752 = vunpack.c.l.b16 %v353
        %v753 = vunpack.c.h.b16 %v353
        %v754 = vunpack.c.l.b16 %v354
        %v755 = vunpack.c.h.b16 %v354
        %v756 = vunpack.c.l.b16 %v355
        %v757 = vunpack.c.h.b16 %v355
        %v758 = vunpack.c.l.b16 %v356
        %v759 = vunpack.c.h.b16 %v356
        %v760 = vunpack.c.l.b16 %v357
        %v761 = vunpack.c.h.b16 %v357
        %v762 = vunpack.c.l.b16 %v358
        %v763 = vunpack.c.h.b16 %v358
        %v764 = vunpack.c.l.b16 %v359
        %v765 = vunpack.c.h.b16 %v359
        %v766 = vunpack.c.l.b16 %v360
        %v767 = vunpack.c.h.b16 %v360
        %v768 = vunpack.c.l.b16 %v361
        %v769 = vunpack.c.h.b16 %v361
        %v770 = vpack.c.b16 %v516, %v514
        %v771 = vpack.c.b16 %v517, %v515
        %v772 = vpack.c.b16 %v520, %v518
        %v773 = vpack.c.b16 %v521, %v519
        %v774 = vpack.c.b16 %v524, %v522
        %v775 = vpack.c.b16 %v525, %v523
        %v776 = vpack.c.b16 %v528, %v526
        %v777 = vpack.c.b16 %v529, %v527
        %v778 = vpack.c.b16 %v532, %v530
        %v779 = vpack.c.b16 %v533, %v531
        %v780 = vpack.c.b16 %v536, %v534
        %v781 = vpack.c.b16 %v537, %v535
        %v782 = vpack.c.b16 %v540, %v538
        %v783 = vpack.c.b16 %v541, %v539
        %v784 = vpack.c.b16 %v544, %v542
        %v785 = vpack.c.b16 %v545, %v543
        %v786 = vpack.c.b16 %v548, %v546
        %v787 = vpack.c.b16 %v549, %v547
        %v788 = vpack.c.b16 %v552, %v550
        %v789 = vpack.c.b16 %v553, %v551
        %v790 = vpack.c.b16 %v556, %v554
        %v791 = vpack.c.b16 %v557, %v555
        %v792 = vpack.c.b16 %v560, %v558
        %v793 = vpack.c.b16 %v561, %v559
        %v794 = vpack.c.b16 %v564, %v562
        %v795 = vpack.c.b16 %v565, %v563
        %v796 = vpack.c.b16 %v568, %v566
        %v797 = vpack.c.b16 %v569, %v567
        %v798 = vpack.c.b16 %v572, %v570
        %v799 = vpack.c.b16 %v573, %v571
        %v800 = vpack.c.b16 %v576, %v574
        %v801 = vpack.c.b16 %v577, %v575
        %v802 = vpack.c.b16 %v580, %v578
        %v803 = vpack.c.b16 %v581, %v579
        %v804 = vpack.c.b16 %v584, %v582
        %v805 = vpack.c.b16 %v585, %v583
        %v806 = vpack.c.b16 %v588, %v586
        %v807 = vpack.c.b16 %v589, %v587
        %v808 = vpack.c.b16 %v592, %v590
        %v809 = vpack.c.b16 %v593, %v591
        %v810 = vpack.c.b16 %v596, %v594
        %v811 = vpack.c.b16 %v597, %v595
        %v812 = vpack.c.b16 %v600, %v598
        %v813 = vpack.c.b16 %v601, %v599
        %v814 = vpack.c.b16 %v604, %v602
        %v815 = vpack.c.b16 %v605, %v603
        %v816 = vpack.c.b16 %v608, %v606
        %v817 = vpack.c.b16 %v609, %v607
        %v818 = vpack.c.b16 %v612, %v610
        %v819 = vpack.c.b16 %v613, %v611
        %v820 = vpack.c.b16 %v616, %v614
        %v821 = vpack.c.b16 %v617, %v615
        %v822 = vpack.c.b16 %v620, %v618
        %v823 = vpack.c.b16 %v621, %v619
        %v824 = vpack.c.b16 %v624, %v622
        %v825 = vpack.c.b16 %v625, %v623
        %v826 = vpack.c.b16 %v628, %v626
        %v827 = vpack.c.b16 %v629, %v627
        %v828 = vpack.c.b16 %v632, %v630
        %v829 = vpack.c.b16 %v633, %v631
        %v830 = vpack.c.b16 %v636, %v634
        %v831 = vpack.c.b16 %v637, %v635
        %v832 = vpack.c.b16 %v640, %v638
        %v833 = vpack.c.b16 %v641, %v639
        %v834 = vpack.c.b16 %v644, %v642
        %v835 = vpack.c.b16 %v645, %v643
        %v836 = vpack.c.b16 %v648, %v646
        %v837 = vpack.c.b16 %v649, %v647
        %v838 = vpack.c.b16 %v652, %v650
        %v839 = vpack.c.b16 %v653, %v651
        %v840 = vpack.c.b16 %v656, %v654
        %v841 = vpack.c.b16 %v657, %v655
        %v842 = vpack.c.b16 %v660, %v658
        %v843 = vpack.c.b16 %v661, %v659
        %v844 = vpack.c.b16 %v664, %v662
        %v845 = vpack.c.b16 %v665, %v663
        %v846 = vpack.c.b16 %v668, %v666
        %v847 = vpack.c.b16 %v669, %v667
        %v848 = vpack.c.b16 %v672, %v670
        %v849 = vpack.c.b16 %v673, %v671
        %v850 = vpack.c.b16 %v676, %v674
        %v851 = vpack.c.b16 %v677, %v675
        %v852 = vpack.c.b16 %v680, %v678
        %v853 = vpack.c.b16 %v681, %v679
        %v854 = vpack.c.b16 %v684, %v682
        %v855 = vpack.c.b16 %v685, %v683
        %v856 = vpack.c.b16 %v688, %v686
        %v857 = vpack.c.b16 %v689, %v687
        %v858 = vpack.c.b16 %v692, %v690
        %v859 = vpack.c.b16 %v693, %v691
        %v860 = vpack.c.b16 %v696, %v694
        %v861 = vpack.c.b16 %v697, %v695
        %v862 = vpack.c.b16 %v700, %v698
        %v863 = vpack.c.b16 %v701, %v699
        %v864 = vpack.c.b16 %v704, %v702
        %v865 = vpack.c.b16 %v705, %v703
        %v866 = vpack.c.b16 %v708, %v706
        %v867 = vpack.c.b16 %v709, %v707
        %v868 = vpack.c.b16 %v712, %v710
        %v869 = vpack.c.b16 %v713, %v711
        %v870 = vpack.c.b16 %v716, %v714
        %v871 = vpack.c.b16 %v717, %v715
        %v872 = vpack.c.b16 %v720, %v718
        %v873 = vpack.c.b16 %v721, %v719
        %v874 = vpack.c.b16 %v724, %v722
        %v875 = vpack.c.b16 %v725, %v723
        %v876 = vpack.c.b16 %v728, %v726
        %v877 = vpack.c.b16 %v729, %v727
        %v878 = vpack.c.b16 %v732, %v730
        %v879 = vpack.c.b16 %v733, %v731
        %v880 = vpack.c.b16 %v736, %v734
        %v881 = vpack.c.b16 %v737, %v735
        %v882 = vpack.c.b16 %v740, %v738
        %v883 = vpack.c.b16 %v741, %v739
        %v884 = vpack.c.b16 %v744, %v742
        %v885 = vpack.c.b16 %v745, %v743
        %v886 = vpack.c.b16 %v748, %v746
        %v887 = vpack.c.b16 %v749, %v747
        %v888 = vpack.c.b16 %v752, %v750
        %v889 = vpack.c.b16 %v753, %v751
        %v890 = vpack.c.b16 %v756, %v754
        %v891 = vpack.c.b16 %v757, %v755
        %v892 = vpack.c.b16 %v760, %v758
        %v893 = vpack.c.b16 %v761, %v759
        %v894 = vpack.c.b16 %v764, %v762
        %v895 = vpack.c.b16 %v765, %v763
        %v896 = vpack.c.b16 %v768, %v766
        %v897 = vpack.c.b16 %v769, %v767
        %1026 = vmatpush.bf16.msra.mxu0 %v784
        %1027 = vmatpush.bf16.msra.mxu0 %v782
        %1028 = vmatpush.bf16.msra.mxu0 %v780
        %1029 = vmatpush.bf16.msra.mxu0 %v778
        %1030 = vmatpush.bf16.msra.mxu0 %v776
        %1031 = vmatpush.bf16.msra.mxu0 %v774
        %1032 = vmatpush.bf16.msra.mxu0 %v772
        %1033 = vmatpush.bf16.msra.mxu0 %v770
        %1034 = vmatmul.bf16.gmra.mxu0 %v370
        %v1035 = vpop.f32.mrf.mxu0
        %v1036 = vadd.f32 %v364, %v1035
        %v1037 = vpop.f32.mrf.mxu0
        %1038 = vdwg.mxu0
        %1039 = vmatpush.bf16.msra.mxu0 %v800
        %1040 = vmatpush.bf16.msra.mxu0 %v798
        %1041 = vmatpush.bf16.msra.mxu0 %v796
        %1042 = vmatpush.bf16.msra.mxu0 %v794
        %1043 = vmatpush.bf16.msra.mxu0 %v792
        %1044 = vmatpush.bf16.msra.mxu0 %v790
        %1045 = vmatpush.bf16.msra.mxu0 %v788
        %1046 = vmatpush.bf16.msra.mxu0 %v786
        %1047 = vmatmul.bf16.gmra.mxu0 %v371
        %v1048 = vpop.f32.mrf.mxu0
        %v1049 = vadd.f32 %v1036, %v1048
        %v1050 = vpop.f32.mrf.mxu0
        %1051 = vdwg.mxu0
        %1052 = vmatpush.bf16.msra.mxu0 %v816
        %1053 = vmatpush.bf16.msra.mxu0 %v814
        %1054 = vmatpush.bf16.msra.mxu0 %v812
        %1055 = vmatpush.bf16.msra.mxu0 %v810
        %1056 = vmatpush.bf16.msra.mxu0 %v808
        %1057 = vmatpush.bf16.msra.mxu0 %v806
        %1058 = vmatpush.bf16.msra.mxu0 %v804
        %1059 = vmatpush.bf16.msra.mxu0 %v802
        %1060 = vmatmul.bf16.gmra.mxu0 %v372
        %v1061 = vpop.f32.mrf.mxu0
        %v1062 = vadd.f32 %v1049, %v1061
        %v1063 = vpop.f32.mrf.mxu0
        %1064 = vdwg.mxu0
        %1065 = vmatpush.bf16.msra.mxu0 %v832
        %1066 = vmatpush.bf16.msra.mxu0 %v830
        %1067 = vmatpush.bf16.msra.mxu0 %v828
        %1068 = vmatpush.bf16.msra.mxu0 %v826
        %1069 = vmatpush.bf16.msra.mxu0 %v824
        %1070 = vmatpush.bf16.msra.mxu0 %v822
        %1071 = vmatpush.bf16.msra.mxu0 %v820
        %1072 = vmatpush.bf16.msra.mxu0 %v818
        %1073 = vmatmul.bf16.gmra.mxu0 %v373
        %v1074 = vpop.f32.mrf.mxu0
        %v1075 = vadd.f32 %v1062, %v1074
        %v1076 = vpop.f32.mrf.mxu0
        %1077 = vdwg.mxu0
        %1078 = vmatpush.bf16.msra.mxu0 %v848
        %1079 = vmatpush.bf16.msra.mxu0 %v846
        %1080 = vmatpush.bf16.msra.mxu0 %v844
        %1081 = vmatpush.bf16.msra.mxu0 %v842
        %1082 = vmatpush.bf16.msra.mxu0 %v840
        %1083 = vmatpush.bf16.msra.mxu0 %v838
        %1084 = vmatpush.bf16.msra.mxu0 %v836
        %1085 = vmatpush.bf16.msra.mxu0 %v834
        %1086 = vmatmul.bf16.gmra.mxu0 %v374
        %v1087 = vpop.f32.mrf.mxu0
        %v1088 = vadd.f32 %v1075, %v1087
        %v1089 = vpop.f32.mrf.mxu0
        %1090 = vdwg.mxu0
        %1091 = vmatpush.bf16.msra.mxu0 %v864
        %1092 = vmatpush.bf16.msra.mxu0 %v862
        %1093 = vmatpush.bf16.msra.mxu0 %v860
        %1094 = vmatpush.bf16.msra.mxu0 %v858
        %1095 = vmatpush.bf16.msra.mxu0 %v856
        %1096 = vmatpush.bf16.msra.mxu0 %v854
        %1097 = vmatpush.bf16.msra.mxu0 %v852
        %1098 = vmatpush.bf16.msra.mxu0 %v850
        %1099 = vmatmul.bf16.gmra.mxu0 %v375
        %v1100 = vpop.f32.mrf.mxu0
        %v1101 = vadd.f32 %v1088, %v1100
        %v1102 = vpop.f32.mrf.mxu0
        %1103 = vdwg.mxu0
        %1104 = vmatpush.bf16.msra.mxu0 %v880
        %1105 = vmatpush.bf16.msra.mxu0 %v878
        %1106 = vmatpush.bf16.msra.mxu0 %v876
        %1107 = vmatpush.bf16.msra.mxu0 %v874
        %1108 = vmatpush.bf16.msra.mxu0 %v872
        %1109 = vmatpush.bf16.msra.mxu0 %v870
        %1110 = vmatpush.bf16.msra.mxu0 %v868
        %1111 = vmatpush.bf16.msra.mxu0 %v866
        %1112 = vmatmul.bf16.gmra.mxu0 %v376
        %v1113 = vpop.f32.mrf.mxu0
        %v1114 = vadd.f32 %v1101, %v1113
        %v1115 = vpop.f32.mrf.mxu0
        %1116 = vdwg.mxu0
        %1117 = vmatpush.bf16.msra.mxu0 %v896
        %1118 = vmatpush.bf16.msra.mxu0 %v894
        %1119 = vmatpush.bf16.msra.mxu0 %v892
        %1120 = vmatpush.bf16.msra.mxu0 %v890
        %1121 = vmatpush.bf16.msra.mxu0 %v888
        %1122 = vmatpush.bf16.msra.mxu0 %v886
        %1123 = vmatpush.bf16.msra.mxu0 %v884
        %1124 = vmatpush.bf16.msra.mxu0 %v882
        %1125 = vmatmul.bf16.gmra.mxu0 %v377
        %v1126 = vpop.f32.mrf.mxu0
        %v1127 = vadd.f32 %v1114, %v1126
        %v1128 = vpop.f32.mrf.mxu0
        %1129 = vdwg.mxu0
        %1130 = vmatpush.bf16.msra.mxu0 %v785
        %1131 = vmatpush.bf16.msra.mxu0 %v783
        %1132 = vmatpush.bf16.msra.mxu0 %v781
        %1133 = vmatpush.bf16.msra.mxu0 %v779
        %1134 = vmatpush.bf16.msra.mxu0 %v777
        %1135 = vmatpush.bf16.msra.mxu0 %v775
        %1136 = vmatpush.bf16.msra.mxu0 %v773
        %1137 = vmatpush.bf16.msra.mxu0 %v771
        %1138 = vmatmul.bf16.gmra.mxu0 %v370
        %v1139 = vpop.f32.mrf.mxu0
        %v1140 = vadd.f32 %v365, %v1139
        %v1141 = vpop.f32.mrf.mxu0
        %1142 = vdwg.mxu0
        %1143 = vmatpush.bf16.msra.mxu0 %v801
        %1144 = vmatpush.bf16.msra.mxu0 %v799
        %1145 = vmatpush.bf16.msra.mxu0 %v797
        %1146 = vmatpush.bf16.msra.mxu0 %v795
        %1147 = vmatpush.bf16.msra.mxu0 %v793
        %1148 = vmatpush.bf16.msra.mxu0 %v791
        %1149 = vmatpush.bf16.msra.mxu0 %v789
        %1150 = vmatpush.bf16.msra.mxu0 %v787
        %1151 = vmatmul.bf16.gmra.mxu0 %v371
        %v1152 = vpop.f32.mrf.mxu0
        %v1153 = vadd.f32 %v1140, %v1152
        %v1154 = vpop.f32.mrf.mxu0
        %1155 = vdwg.mxu0
        %1156 = vmatpush.bf16.msra.mxu0 %v817
        %1157 = vmatpush.bf16.msra.mxu0 %v815
        %1158 = vmatpush.bf16.msra.mxu0 %v813
        %1159 = vmatpush.bf16.msra.mxu0 %v811
        %1160 = vmatpush.bf16.msra.mxu0 %v809
        %1161 = vmatpush.bf16.msra.mxu0 %v807
        %1162 = vmatpush.bf16.msra.mxu0 %v805
        %1163 = vmatpush.bf16.msra.mxu0 %v803
        %1164 = vmatmul.bf16.gmra.mxu0 %v372
        %v1165 = vpop.f32.mrf.mxu0
        %v1166 = vadd.f32 %v1153, %v1165
        %v1167 = vpop.f32.mrf.mxu0
        %1168 = vdwg.mxu0
        %1169 = vmatpush.bf16.msra.mxu0 %v833
        %1170 = vmatpush.bf16.msra.mxu0 %v831
        %1171 = vmatpush.bf16.msra.mxu0 %v829
        %1172 = vmatpush.bf16.msra.mxu0 %v827
        %1173 = vmatpush.bf16.msra.mxu0 %v825
        %1174 = vmatpush.bf16.msra.mxu0 %v823
        %1175 = vmatpush.bf16.msra.mxu0 %v821
        %1176 = vmatpush.bf16.msra.mxu0 %v819
        %1177 = vmatmul.bf16.gmra.mxu0 %v373
        %v1178 = vpop.f32.mrf.mxu0
        %v1179 = vadd.f32 %v1166, %v1178
        %v1180 = vpop.f32.mrf.mxu0
        %1181 = vdwg.mxu0
        %1182 = vmatpush.bf16.msra.mxu0 %v849
        %1183 = vmatpush.bf16.msra.mxu0 %v847
        %1184 = vmatpush.bf16.msra.mxu0 %v845
        %1185 = vmatpush.bf16.msra.mxu0 %v843
        %1186 = vmatpush.bf16.msra.mxu0 %v841
        %1187 = vmatpush.bf16.msra.mxu0 %v839
        %1188 = vmatpush.bf16.msra.mxu0 %v837
        %1189 = vmatpush.bf16.msra.mxu0 %v835
        %1190 = vmatmul.bf16.gmra.mxu0 %v374
        %v1191 = vpop.f32.mrf.mxu0
        %v1192 = vadd.f32 %v1179, %v1191
        %v1193 = vpop.f32.mrf.mxu0
        %1194 = vdwg.mxu0
        %1195 = vmatpush.bf16.msra.mxu0 %v865
        %1196 = vmatpush.bf16.msra.mxu0 %v863
        %1197 = vmatpush.bf16.msra.mxu0 %v861
        %1198 = vmatpush.bf16.msra.mxu0 %v859
        %1199 = vmatpush.bf16.msra.mxu0 %v857
        %1200 = vmatpush.bf16.msra.mxu0 %v855
        %1201 = vmatpush.bf16.msra.mxu0 %v853
        %1202 = vmatpush.bf16.msra.mxu0 %v851
        %1203 = vmatmul.bf16.gmra.mxu0 %v375
        %v1204 = vpop.f32.mrf.mxu0
        %v1205 = vadd.f32 %v1192, %v1204
        %v1206 = vpop.f32.mrf.mxu0
        %1207 = vdwg.mxu0
        %1208 = vmatpush.bf16.msra.mxu0 %v881
        %1209 = vmatpush.bf16.msra.mxu0 %v879
        %1210 = vmatpush.bf16.msra.mxu0 %v877
        %1211 = vmatpush.bf16.msra.mxu0 %v875
        %1212 = vmatpush.bf16.msra.mxu0 %v873
        %1213 = vmatpush.bf16.msra.mxu0 %v871
        %1214 = vmatpush.bf16.msra.mxu0 %v869
        %1215 = vmatpush.bf16.msra.mxu0 %v867
        %1216 = vmatmul.bf16.gmra.mxu0 %v376
        %v1217 = vpop.f32.mrf.mxu0
        %v1218 = vadd.f32 %v1205, %v1217
        %v1219 = vpop.f32.mrf.mxu0
        %1220 = vdwg.mxu0
        %1221 = vmatpush.bf16.msra.mxu0 %v897
        %1222 = vmatpush.bf16.msra.mxu0 %v895
        %1223 = vmatpush.bf16.msra.mxu0 %v893
        %1224 = vmatpush.bf16.msra.mxu0 %v891
        %1225 = vmatpush.bf16.msra.mxu0 %v889
        %1226 = vmatpush.bf16.msra.mxu0 %v887
        %1227 = vmatpush.bf16.msra.mxu0 %v885
        %1228 = vmatpush.bf16.msra.mxu0 %v883
        %1229 = vmatmul.bf16.gmra.mxu0 %v377
        %v1230 = vpop.f32.mrf.mxu0
        %v1231 = vadd.f32 %v1218, %v1230
        %v1232 = vpop.f32.mrf.mxu0
        %1233 = vdwg.mxu0
        %v1236 = vrot.slane %v1231, 6
        %vm1237 = vcmask 1041408
        %v1238 = vsel %vm1237, %v1127, %v1236
        %1240 = vst [vmem:[%s229] sm:$0xf] %v1238
        %s1241 = sand.u32 %s104, 1
        %s1242 = scalar_lea.sflag [#allocation4], %s1241
        %s1243 = sand.u32 %s104, 1
        %s1244 = smul.addr %s1243, 4
        %s1245 = scalar_lea.vmem [#allocation7], %s1244
        // Predicated region
        $region41: #{chess_model_forward.4} parent=31 // pred_check
          %p1246 = pneg %p114
        $region42: #{chess_model_forward.4} parent=31 // pred_check_branch
          %1248 = sbr.rel (%p1246) target = $region44
        $region43: #{chess_model_forward.4} parent=31 // pred_region
          %s1249 = smul.u32 2, %s23
          %1251 = vsyncadd %s1242, 0
          %s1252 = smul.addr %s1249, 2
          %s1253 = scalar_lea.hbm %s3, %s1252
          %s1255 = sshll.u32 %s1245, 4
          %s1256 = int_to_ptr.vmem [resolvable:$true] %s1255
          %s1257 = sshll.u32 %s1253, 4
          %s1258 = int_to_ptr.hbm [resolvable:$true] %s1257
          %1260 = dma.vmem_to_hbm [thread:$0]  %s1256, 64, %s1258, %s1242
        $region44: #{chess_model_forward.4} parent=31 // pred_fallthru
          _
      $region32: #{chess_model_forward.4} parent=5 // pred_fallthru
        _
      %p1261 = scmp.le.s32.totalorder 2, %s18
      // Predicated region
      $region45: #{chess_model_forward.4} parent=5 // pred_check
        %p1262 = pneg %p1261
      $region46: #{chess_model_forward.4} parent=5 // pred_check_branch
        %1264 = sbr.rel (%p1262) target = $region48
      $region47: #{chess_model_forward.4} parent=5 // pred_region
        %s1265 = ssub.s32 %s18, 2
        // Predicated region
        $region49: #{chess_model_forward.4} parent=47 // pred_check
          %p1266 = pneg %p120
        $region50: #{chess_model_forward.4} parent=47 // pred_check_branch
          %1268 = sbr.rel (%p1266) target = $region52
        $region51: #{chess_model_forward.4} parent=47 // pred_region
          %s1269 = sand.u32 %s105, 1
          %s1270 = scalar_lea.sflag [#allocation4], %s1269
          %s1271 = sand.u32 %s105, 1
          %s1272 = smul.addr %s1271, 4
          %s1273 = scalar_lea.vmem [#allocation7], %s1272
          %1275 = dma.done %s1270, 64
        $region52: #{chess_model_forward.4} parent=47 // pred_fallthru
          _
      $region48: #{chess_model_forward.4} parent=5 // pred_fallthru
        _
    $region6: #{chess_model_forward.4} parent=1 // loop_footer
      %s22 = sadd.s32 1, %s18
    $region7: #{chess_model_forward.4} parent=1 // loop_footer_branch
      %17 = sbr.rel target = $region3
    $region8: #{chess_model_forward.4} parent=1 // loop_exit
      _
    %1276 = vsyncpa [#allocation3], 1
    %s1277 = scalar_lea.sflag [#allocation3], 1
    %1278 = vsyncpa %s1277, 1
    %1279 = vsyncpa [#allocation6], 1
    %s1280 = scalar_lea.sflag [#allocation6], 1
    %1281 = vsyncpa %s1280, 1
    %1282 = vsyncpa [#allocation4], 1
    %s1283 = scalar_lea.sflag [#allocation4], 1
    %1284 = vsyncpa %s1283, 1

// kernel: chess_model_forward.5
$region0: #{chess_model_forward.5}
  #allocation0 [shape = 'u32[]', space=smem, size = 0x4, offset = 0x4, fixed_abs, tag = 'smem constant byte address 0x4 - core index']
  #allocation1 [shape = 'u32[72,128]{1,0:T(1,128)}', space=vmem, size = 0x9000, scoped, tag = 'internal scratch']
  %s0 = inlined_call_operand.vmem [shape: bf16[2,256], index: 0, kind: input, shape index: {}]
  %s1 = inlined_call_operand.hbm [shape: bf16[256,128], index: 1, kind: input, shape index: {}]
  %s2 = inlined_call_operand.hbm [shape: f32[1,128], index: 2, kind: input, shape index: {}]
  %s3 = inlined_call_operand.vmem [shape: f32[2,128], index: 3, kind: output, shape index: {}]
  %s4 = sld [smem:[#allocation0]]
  $region30: #{chess_model_forward.5} parent=0
    _
  %s6 = ssub.s32 1, %s4
  %s7 = scalar_select 0, %s6, %s4
  $region1: #{chess_model_forward.5} parent=0
    #allocation2 [shape = 'u8[65536]{0}', space=vmem, size = 0x10000, scoped, tag = 'input window, operand 1, single buffered']
    #allocation3 [shape = 's32[1]{0}', space=sflag, size = 0x4, scoped, tag = 'scoped memory for chess_model_forward.5']
    #allocation4 [shape = 'u8[512]{0}', space=vmem, size = 0x400, scoped, tag = 'input window, operand 2, single buffered']
    #allocation5 [shape = 's32[1]{0}', space=sflag, size = 0x4, scoped, tag = 'scoped memory for chess_model_forward.5']
    %8 = vsyncpa [#allocation3], 0
    %9 = vsyncpa [#allocation5], 0
    // Predicated region
    $region2: #{chess_model_forward.5} parent=1 // pred_check
      _
    $region3: #{chess_model_forward.5} parent=1 // pred_check_branch
      %11 = sbr.rel (0) target = $region5
    $region4: #{chess_model_forward.5} parent=1 // pred_region
      _
    $region5: #{chess_model_forward.5} parent=1 // pred_fallthru
      _
    // Predicated region
    $region6: #{chess_model_forward.5} parent=1 // pred_check
      _
    $region7: #{chess_model_forward.5} parent=1 // pred_check_branch
      %13 = sbr.rel (0) target = $region9
    $region8: #{chess_model_forward.5} parent=1 // pred_region
      %15 = vsyncadd [#allocation3], 0
      %s16 = sshll.u32 %s1, 4
      %s17 = int_to_ptr.hbm [resolvable:$true] %s16
      %s18 = sshll.u32 [#allocation2], 4
      %s19 = int_to_ptr.vmem [resolvable:$true] %s18
      %24 = dma.hbm_to_vmem [thread:$0]  %s17, 2048, %s19, [#allocation3], 64, 64, 4
    $region9: #{chess_model_forward.5} parent=1 // pred_fallthru
      _
    // Predicated region
    $region10: #{chess_model_forward.5} parent=1 // pred_check
      _
    $region11: #{chess_model_forward.5} parent=1 // pred_check_branch
      %26 = sbr.rel (0) target = $region13
    $region12: #{chess_model_forward.5} parent=1 // pred_region
      %28 = vsyncadd [#allocation5], 0
      %s30 = sshll.u32 %s2, 4
      %s31 = int_to_ptr.hbm [resolvable:$true] %s30
      %s32 = sshll.u32 [#allocation4], 4
      %s33 = int_to_ptr.vmem [resolvable:$true] %s32
      %35 = dma.hbm_to_vmem [thread:$0]  %s31, 16, %s33, [#allocation5]
    $region13: #{chess_model_forward.5} parent=1 // pred_fallthru
      _
    // Predicated region
    $region14: #{chess_model_forward.5} parent=1 // pred_check
      _
    $region15: #{chess_model_forward.5} parent=1 // pred_check_branch
      %37 = sbr.rel (0) target = $region17
    $region16: #{chess_model_forward.5} parent=1 // pred_region
      %39 = dma.done [#allocation3], 2048
    $region17: #{chess_model_forward.5} parent=1 // pred_fallthru
      _
    // Predicated region
    $region18: #{chess_model_forward.5} parent=1 // pred_check
      _
    $region19: #{chess_model_forward.5} parent=1 // pred_check_branch
      %41 = sbr.rel (0) target = $region21
    $region20: #{chess_model_forward.5} parent=1 // pred_region
      %43 = dma.done [#allocation5], 16
    $region21: #{chess_model_forward.5} parent=1 // pred_fallthru
      _
    %v44 = vld [vmem:[%s0] sm:$0x3]
    %v45 = vld [vmem:[#allocation2] sm:$0xf]
    %v46 = vld [vmem:[#allocation2 + $0x4] sm:$0xf]
    %v47 = vld [vmem:[#allocation2 + $0x8] sm:$0xf]
    %v48 = vld [vmem:[#allocation2 + $0xc] sm:$0xf]
    %v49 = vld [vmem:[#allocation2 + $0x10] sm:$0xf]
    %v50 = vld [vmem:[#allocation2 + $0x14] sm:$0xf]
    %v51 = vld [vmem:[#allocation2 + $0x18] sm:$0xf]
    %v52 = vld [vmem:[#allocation2 + $0x1c] sm:$0xf]
    %v53 = vld [vmem:[#allocation2 + $0x20] sm:$0xf]
    %v54 = vld [vmem:[#allocation2 + $0x24] sm:$0xf]
    %v55 = vld [vmem:[#allocation2 + $0x28] sm:$0xf]
    %v56 = vld [vmem:[#allocation2 + $0x2c] sm:$0xf]
    %v57 = vld [vmem:[#allocation2 + $0x30] sm:$0xf]
    %v58 = vld [vmem:[#allocation2 + $0x34] sm:$0xf]
    %v59 = vld [vmem:[#allocation2 + $0x38] sm:$0xf]
    %v60 = vld [vmem:[#allocation2 + $0x3c] sm:$0xf]
    %v61 = vld [vmem:[#allocation2 + $0x40] sm:$0xf]
    %v62 = vld [vmem:[#allocation2 + $0x44] sm:$0xf]
    %v63 = vld [vmem:[#allocation2 + $0x48] sm:$0xf]
    %v64 = vld [vmem:[#allocation2 + $0x4c] sm:$0xf]
    %v65 = vld [vmem:[#allocation2 + $0x50] sm:$0xf]
    %v66 = vld [vmem:[#allocation2 + $0x54] sm:$0xf]
    %v67 = vld [vmem:[#allocation2 + $0x58] sm:$0xf]
    %v68 = vld [vmem:[#allocation2 + $0x5c] sm:$0xf]
    %v69 = vld [vmem:[#allocation2 + $0x60] sm:$0xf]
    %v70 = vld [vmem:[#allocation2 + $0x64] sm:$0xf]
    %v71 = vld [vmem:[#allocation2 + $0x68] sm:$0xf]
    %v72 = vld [vmem:[#allocation2 + $0x6c] sm:$0xf]
    %v73 = vld [vmem:[#allocation2 + $0x70] sm:$0xf]
    %v74 = vld [vmem:[#allocation2 + $0x74] sm:$0xf]
    %v75 = vld [vmem:[#allocation2 + $0x78] sm:$0xf]
    %v76 = vld [vmem:[#allocation2 + $0x7c] sm:$0xf]
    %v77 = vld [vmem:[#allocation4] sm:$0x1]
    %v79 = vperm.slane %v77, 0
    %82 = vst [vmem:[#allocation1] ss:$9 sm:$0xff] %v44
    %v83 = vld [vmem:[#allocation1] sm:$0xff]
    %v84 = vld [vmem:[#allocation1 + $0x9] sm:$0xff]
    %v119 = vunpack.c.l.b16 %v45
    %v120 = vunpack.c.l.b16 %v46
    %v121 = vunpack.c.l.b16 %v47
    %v122 = vunpack.c.l.b16 %v48
    %v123 = vunpack.c.l.b16 %v49
    %v124 = vunpack.c.l.b16 %v50
    %v125 = vunpack.c.l.b16 %v51
    %v126 = vunpack.c.l.b16 %v52
    %v127 = vunpack.c.l.b16 %v53
    %v128 = vunpack.c.l.b16 %v54
    %v129 = vunpack.c.l.b16 %v55
    %v130 = vunpack.c.l.b16 %v56
    %v131 = vunpack.c.l.b16 %v57
    %v132 = vunpack.c.l.b16 %v58
    %v133 = vunpack.c.l.b16 %v59
    %v134 = vunpack.c.l.b16 %v60
    %v135 = vunpack.c.l.b16 %v61
    %v136 = vunpack.c.l.b16 %v62
    %v137 = vunpack.c.l.b16 %v63
    %v138 = vunpack.c.l.b16 %v64
    %v139 = vunpack.c.l.b16 %v65
    %v140 = vunpack.c.l.b16 %v66
    %v141 = vunpack.c.l.b16 %v67
    %v142 = vunpack.c.l.b16 %v68
    %v143 = vunpack.c.l.b16 %v69
    %v144 = vunpack.c.l.b16 %v70
    %v145 = vunpack.c.l.b16 %v71
    %v146 = vunpack.c.l.b16 %v72
    %v147 = vunpack.c.l.b16 %v73
    %v148 = vunpack.c.l.b16 %v74
    %v149 = vunpack.c.l.b16 %v75
    %v150 = vunpack.c.l.b16 %v76
    %v151 = vpack.c.b16 %v120, %v119
    %v152 = vpack.c.b16 %v122, %v121
    %v153 = vpack.c.b16 %v124, %v123
    %v154 = vpack.c.b16 %v126, %v125
    %v155 = vpack.c.b16 %v128, %v127
    %v156 = vpack.c.b16 %v130, %v129
    %v157 = vpack.c.b16 %v132, %v131
    %v158 = vpack.c.b16 %v134, %v133
    %v159 = vpack.c.b16 %v136, %v135
    %v160 = vpack.c.b16 %v138, %v137
    %v161 = vpack.c.b16 %v140, %v139
    %v162 = vpack.c.b16 %v142, %v141
    %v163 = vpack.c.b16 %v144, %v143
    %v164 = vpack.c.b16 %v146, %v145
    %v165 = vpack.c.b16 %v148, %v147
    %v166 = vpack.c.b16 %v150, %v149
    %183 = vmatpush.bf16.msra.mxu0 %v158
    %184 = vmatpush.bf16.msra.mxu0 %v157
    %185 = vmatpush.bf16.msra.mxu0 %v156
    %186 = vmatpush.bf16.msra.mxu0 %v155
    %187 = vmatpush.bf16.msra.mxu0 %v154
    %188 = vmatpush.bf16.msra.mxu0 %v153
    %189 = vmatpush.bf16.msra.mxu0 %v152
    %190 = vmatpush.bf16.msra.mxu0 %v151
    %191 = vmatmul.bf16.gmra.mxu0 %v83
    %v192 = vpop.f32.mrf.mxu0
    %v193 = vadd.f32 %v79, %v192
    %v194 = vpop.f32.mrf.mxu0
    %195 = vdwg.mxu0
    %196 = vmatpush.bf16.msra.mxu0 %v166
    %197 = vmatpush.bf16.msra.mxu0 %v165
    %198 = vmatpush.bf16.msra.mxu0 %v164
    %199 = vmatpush.bf16.msra.mxu0 %v163
    %200 = vmatpush.bf16.msra.mxu0 %v162
    %201 = vmatpush.bf16.msra.mxu0 %v161
    %202 = vmatpush.bf16.msra.mxu0 %v160
    %203 = vmatpush.bf16.msra.mxu0 %v159
    %204 = vmatmul.bf16.gmra.mxu0 %v84
    %v205 = vpop.f32.mrf.mxu0
    %v206 = vadd.f32 %v193, %v205
    %v207 = vpop.f32.mrf.mxu0
    %208 = vdwg.mxu0
    %v209 = vtanh.pop %v206
    %210 = vst [vmem:[%s3] sm:$0x3] %v209
    // Predicated region
    $region22: #{chess_model_forward.5} parent=1 // pred_check
      _
    $region23: #{chess_model_forward.5} parent=1 // pred_check_branch
      %212 = sbr.rel (0) target = $region25
    $region24: #{chess_model_forward.5} parent=1 // pred_region
      _
    $region25: #{chess_model_forward.5} parent=1 // pred_fallthru
      _
    // Predicated region
    $region26: #{chess_model_forward.5} parent=1 // pred_check
      _
    $region27: #{chess_model_forward.5} parent=1 // pred_check_branch
      %214 = sbr.rel (0) target = $region29
    $region28: #{chess_model_forward.5} parent=1 // pred_region
      _
    $region29: #{chess_model_forward.5} parent=1 // pred_fallthru
      _
    %215 = vsyncpa [#allocation3], 1
    %216 = vsyncpa [#allocation5], 1

// kernel: chess_model_forward.3
$region0: #{chess_model_forward.3}
  #allocation0 [shape = 'u32[]', space=smem, size = 0x4, offset = 0x4, fixed_abs, tag = 'smem constant byte address 0x4 - core index']
  #allocation1 [shape = 'u32[72,128]{1,0:T(1,128)}', space=vmem, size = 0x9000, scoped, tag = 'internal scratch']
  #allocation2 [shape = 'f32[216,256]{1,0:T(8,128)}', space=vmem, size = 0x36000, scoped, tag = 'scratch operand']
  #allocation3 [shape = 'f32[184,256]{1,0:T(8,128)}', space=vmem, size = 0x2e000, scoped, tag = 'scratch operand']
  %s0 = inlined_call_operand.vmem [shape: f32[216,256], index: 0, kind: input, shape index: {}]
  %s1 = inlined_call_operand.hbm [shape: bf16[23,2304,256], index: 1, kind: input, shape index: {}]
  %s2 = inlined_call_operand.hbm [shape: f32[23,2,256], index: 2, kind: input, shape index: {}]
  %s3 = inlined_call_operand.vmem [shape: f32[216,256], index: 3, kind: input, shape index: {}]
  %s4 = inlined_call_operand.hbm [shape: bf16[256,128], index: 4, kind: input, shape index: {}]
  %s5 = inlined_call_operand.hbm [shape: f32[2,128], index: 5, kind: input, shape index: {}]
  %s6 = inlined_call_operand.vmem [shape: f32[216,128], index: 6, kind: output, shape index: {}]
  %s7 = sld [smem:[#allocation0]]
  $region85: #{chess_model_forward.3} parent=0
    _
  %s9 = ssub.s32 1, %s7
  %s10 = scalar_select 0, %s9, %s7
  $region1: #{chess_model_forward.3} parent=0
    #allocation4 [shape = 'u8[2359296]{0}', space=vmem, size = 0x240000, scoped, tag = 'input window, operand 1']
    #allocation5 [shape = 's32[2]{0}', space=sflag, size = 0x8, scoped, tag = 'scoped memory for chess_model_forward.3']
    #allocation6 [shape = 'u8[4096]{0}', space=vmem, size = 0x1000, scoped, tag = 'input window, operand 2']
    #allocation7 [shape = 's32[2]{0}', space=sflag, size = 0x8, scoped, tag = 'scoped memory for chess_model_forward.3']
    #allocation8 [shape = 'u8[65536]{0}', space=vmem, size = 0x10000, scoped, tag = 'input window, operand 4, single buffered']
    #allocation9 [shape = 'u8[1024]{0}', space=vmem, size = 0x400, scoped, tag = 'input window, operand 5, single buffered']
    #allocation10 [shape = 's32[1]{0}', space=sflag, size = 0x4, scoped, tag = 'scoped memory for chess_model_forward.3']
    %11 = vsyncpa [#allocation5], 0
    %s12 = scalar_lea.sflag [#allocation5], 1
    %13 = vsyncpa %s12, 0
    %14 = vsyncpa [#allocation7], 0
    %s15 = scalar_lea.sflag [#allocation7], 1
    %16 = vsyncpa %s15, 0
    %17 = vsyncpa [#allocation10], 0
    loop: start=0, step=1, limit=25
    $region2: #{chess_model_forward.3} parent=1 // loop_pre_header
      _
    $region3: #{chess_model_forward.3} parent=1 // loop_header
      %s19 = sphi 0, %s23
      %p20 = scmp.ge.s32.totalorder %s19, 25
      %s27 = sphi 0, %s27
      %s29 = sphi 0, %s27
      %s30 = sphi 0, %s29
      %s44 = sphi 0, %s30
      %s50 = sphi 0, %s52
      %s53 = sphi 0, %s50
      %s54 = sphi 0, %s53
      %s70 = sphi 0, %s54
      %s76 = sphi 0, %s78
      %s79 = sphi 0, %s76
      %s80 = sphi 0, %s79
      %s96 = sphi 0, %s80
      %s100 = sphi 0, %s100
      %s102 = sphi 0, %s100
      %s103 = sphi 0, %s102
      %s117 = sphi 0, %s103
      %s121 = sphi 0, %s121
      %s123 = sphi 0, %s121
      %s124 = sphi 0, %s123
      %s138 = sphi 0, %s124
      %s142 = sphi 0, %s142
      %s144 = sphi 0, %s142
      %s145 = sphi 0, %s144
      %s159 = sphi 0, %s145
      %s163 = sphi 0, %s163
      %s165 = sphi 0, %s163
      %s166 = sphi 0, %s165
      %s180 = sphi 0, %s166
    $region4: #{chess_model_forward.3} parent=1 // loop_header_branch
      %22 = sbr.rel (%p20) target = $region8
    $region5: #{chess_model_forward.3} parent=1 // loop_body
      %s24 = ssub.s32 %s19, 1
      %s25 = ssub.s32 %s19, 2
      %s26 = sadd.s32 %s19, 1
      %s28 = sadd.s32 %s27, 1
      %p31 = scmp.eq.s32.totalorder %s19, 22
      %p32 = scmp.ne.s32.totalorder %s27, %s29
      %p33 = scmp.eq.s32.totalorder %s19, 0
      %p34 = por %p32, %p33
      %p35 = scmp.ne.s32.totalorder %s27, %s29
      %p36 = scmp.eq.s32.totalorder %s24, 22
      %p37 = por %p35, %p36
      %p38 = scmp.ne.s32.totalorder %s29, %s30
      %p39 = scmp.eq.s32.totalorder %s24, 0
      %p40 = por %p38, %p39
      %p41 = scmp.ne.s32.totalorder %s29, %s30
      %p42 = scmp.eq.s32.totalorder %s25, 22
      %p43 = por %p41, %p42
      %p45 = scmp.ne.s32.totalorder %s30, %s44
      %p46 = scmp.eq.s32.totalorder %s25, 0
      %p47 = por %p45, %p46
      %s48 = ssub.s32 %s19, %s26
      %p49 = scmp.eq.s32.totalorder %s48, 0
      %s51 = sadd.s32 %s50, 1
      %s52 = scalar_select %p49, %s50, %s51
      %p55 = pneg %p49
      %p56 = scmp.eq.s32.totalorder %s19, 22
      %p57 = por %p55, %p56
      %p58 = scmp.ne.s32.totalorder %s50, %s53
      %p59 = scmp.eq.s32.totalorder %s19, 0
      %p60 = por %p58, %p59
      %p61 = scmp.ne.s32.totalorder %s50, %s53
      %p62 = scmp.eq.s32.totalorder %s24, 22
      %p63 = por %p61, %p62
      %p64 = scmp.ne.s32.totalorder %s53, %s54
      %p65 = scmp.eq.s32.totalorder %s24, 0
      %p66 = por %p64, %p65
      %p67 = scmp.ne.s32.totalorder %s53, %s54
      %p68 = scmp.eq.s32.totalorder %s25, 22
      %p69 = por %p67, %p68
      %p71 = scmp.ne.s32.totalorder %s54, %s70
      %p72 = scmp.eq.s32.totalorder %s25, 0
      %p73 = por %p71, %p72
      %s74 = ssub.s32 %s19, %s26
      %p75 = scmp.eq.s32.totalorder %s74, 0
      %s77 = sadd.s32 %s76, 1
      %s78 = scalar_select %p75, %s76, %s77
      %p81 = pneg %p75
      %p82 = scmp.eq.s32.totalorder %s19, 22
      %p83 = por %p81, %p82
      %p84 = scmp.ne.s32.totalorder %s76, %s79
      %p85 = scmp.eq.s32.totalorder %s19, 0
      %p86 = por %p84, %p85
      %p87 = scmp.ne.s32.totalorder %s76, %s79
      %p88 = scmp.eq.s32.totalorder %s24, 22
      %p89 = por %p87, %p88
      %p90 = scmp.ne.s32.totalorder %s79, %s80
      %p91 = scmp.eq.s32.totalorder %s24, 0
      %p92 = por %p90, %p91
      %p93 = scmp.ne.s32.totalorder %s79, %s80
      %p94 = scmp.eq.s32.totalorder %s25, 22
      %p95 = por %p93, %p94
      %p97 = scmp.ne.s32.totalorder %s80, %s96
      %p98 = scmp.eq.s32.totalorder %s25, 0
      %p99 = por %p97, %p98
      %s101 = sadd.s32 %s100, 1
      %p104 = scmp.eq.s32.totalorder %s19, 22
      %p105 = scmp.ne.s32.totalorder %s100, %s102
      %p106 = scmp.eq.s32.totalorder %s19, 0
      %p107 = por %p105, %p106
      %p108 = scmp.ne.s32.totalorder %s100, %s102
      %p109 = scmp.eq.s32.totalorder %s24, 22
      %p110 = por %p108, %p109
      %p111 = scmp.ne.s32.totalorder %s102, %s103
      %p112 = scmp.eq.s32.totalorder %s24, 0
      %p113 = por %p111, %p112
      %p114 = scmp.ne.s32.totalorder %s102, %s103
      %p115 = scmp.eq.s32.totalorder %s25, 22
      %p116 = por %p114, %p115
      %p118 = scmp.ne.s32.totalorder %s103, %s117
      %p119 = scmp.eq.s32.totalorder %s25, 0
      %p120 = por %p118, %p119
      %s122 = sadd.s32 %s121, 1
      %p125 = scmp.eq.s32.totalorder %s19, 22
      %p126 = scmp.ne.s32.totalorder %s121, %s123
      %p127 = scmp.eq.s32.totalorder %s19, 0
      %p128 = por %p126, %p127
      %p129 = scmp.ne.s32.totalorder %s121, %s123
      %p130 = scmp.eq.s32.totalorder %s24, 22
      %p131 = por %p129, %p130
      %p132 = scmp.ne.s32.totalorder %s123, %s124
      %p133 = scmp.eq.s32.totalorder %s24, 0
      %p134 = por %p132, %p133
      %p135 = scmp.ne.s32.totalorder %s123, %s124
      %p136 = scmp.eq.s32.totalorder %s25, 22
      %p137 = por %p135, %p136
      %p139 = scmp.ne.s32.totalorder %s124, %s138
      %p140 = scmp.eq.s32.totalorder %s25, 0
      %p141 = por %p139, %p140
      %s143 = sadd.s32 %s142, 1
      %p146 = scmp.eq.s32.totalorder %s19, 22
      %p147 = scmp.ne.s32.totalorder %s142, %s144
      %p148 = scmp.eq.s32.totalorder %s19, 0
      %p149 = por %p147, %p148
      %p150 = scmp.ne.s32.totalorder %s142, %s144
      %p151 = scmp.eq.s32.totalorder %s24, 22
      %p152 = por %p150, %p151
      %p153 = scmp.ne.s32.totalorder %s144, %s145
      %p154 = scmp.eq.s32.totalorder %s24, 0
      %p155 = por %p153, %p154
      %p156 = scmp.ne.s32.totalorder %s144, %s145
      %p157 = scmp.eq.s32.totalorder %s25, 22
      %p158 = por %p156, %p157
      %p160 = scmp.ne.s32.totalorder %s145, %s159
      %p161 = scmp.eq.s32.totalorder %s25, 0
      %p162 = por %p160, %p161
      %s164 = sadd.s32 %s163, 1
      %p167 = scmp.eq.s32.totalorder %s19, 22
      %p168 = scmp.ne.s32.totalorder %s163, %s165
      %p169 = scmp.eq.s32.totalorder %s19, 0
      %p170 = por %p168, %p169
      %p171 = scmp.ne.s32.totalorder %s163, %s165
      %p172 = scmp.eq.s32.totalorder %s24, 22
      %p173 = por %p171, %p172
      %p174 = scmp.ne.s32.totalorder %s165, %s166
      %p175 = scmp.eq.s32.totalorder %s24, 0
      %p176 = por %p174, %p175
      %p177 = scmp.ne.s32.totalorder %s165, %s166
      %p178 = scmp.eq.s32.totalorder %s25, 22
      %p179 = por %p177, %p178
      %p181 = scmp.ne.s32.totalorder %s166, %s180
      %p182 = scmp.eq.s32.totalorder %s25, 0
      %p183 = por %p181, %p182
      %p184 = scmp.le.s32.totalorder 1, %s19
      %p185 = scmp.lt.s32.totalorder %s19, 24
      %p186 = pnand %p184, %p185
      %p187 = pneg %p186
      // Predicated region
      $region9: #{chess_model_forward.3} parent=5 // pred_check
        _
      $region10: #{chess_model_forward.3} parent=5 // pred_check_branch
        %189 = sbr.rel (%p186) target = $region12
      $region11: #{chess_model_forward.3} parent=5 // pred_region
        %s190 = ssub.s32 %s19, 1
        // Predicated region
        $region13: #{chess_model_forward.3} parent=11 // pred_check
          %p191 = pneg %p40
        $region14: #{chess_model_forward.3} parent=11 // pred_check_branch
          %193 = sbr.rel (%p191) target = $region16
        $region15: #{chess_model_forward.3} parent=11 // pred_region
          _
        $region16: #{chess_model_forward.3} parent=11 // pred_fallthru
          _
        // Predicated region
        $region17: #{chess_model_forward.3} parent=11 // pred_check
          %p194 = pneg %p113
        $region18: #{chess_model_forward.3} parent=11 // pred_check_branch
          %196 = sbr.rel (%p194) target = $region20
        $region19: #{chess_model_forward.3} parent=11 // pred_region
          _
        $region20: #{chess_model_forward.3} parent=11 // pred_fallthru
          _
        // Predicated region
        $region21: #{chess_model_forward.3} parent=11 // pred_check
          %p197 = pneg %p134
        $region22: #{chess_model_forward.3} parent=11 // pred_check_branch
          %199 = sbr.rel (%p197) target = $region24
        $region23: #{chess_model_forward.3} parent=11 // pred_region
          %201 = vsyncadd [#allocation7], 0
          %s202 = sshll.u32 %s4, 4
          %s203 = int_to_ptr.hbm [resolvable:$true] %s202
          %s204 = sshll.u32 [#allocation8], 4
          %s205 = int_to_ptr.vmem [resolvable:$true] %s204
          %210 = dma.hbm_to_vmem [thread:$0]  %s203, 2048, %s205, [#allocation7], 64, 64, 4
        $region24: #{chess_model_forward.3} parent=11 // pred_fallthru
          _
        // Predicated region
        $region25: #{chess_model_forward.3} parent=11 // pred_check
          %p211 = pneg %p155
        $region26: #{chess_model_forward.3} parent=11 // pred_check_branch
          %213 = sbr.rel (%p211) target = $region28
        $region27: #{chess_model_forward.3} parent=11 // pred_region
          %215 = vsyncadd [#allocation10], 0
          %s217 = sshll.u32 %s5, 4
          %s218 = int_to_ptr.hbm [resolvable:$true] %s217
          %s219 = sshll.u32 [#allocation9], 4
          %s220 = int_to_ptr.vmem [resolvable:$true] %s219
          %222 = dma.hbm_to_vmem [thread:$0]  %s218, 32, %s220, [#allocation10]
        $region28: #{chess_model_forward.3} parent=11 // pred_fallthru
          _
      $region12: #{chess_model_forward.3} parent=5 // pred_fallthru
        _
      %p223 = scmp.lt.s32.totalorder %s19, 23
      // Predicated region
      $region29: #{chess_model_forward.3} parent=5 // pred_check
        %p224 = pneg %p223
      $region30: #{chess_model_forward.3} parent=5 // pred_check_branch
        %226 = sbr.rel (%p224) target = $region32
      $region31: #{chess_model_forward.3} parent=5 // pred_region
        // Predicated region
        $region33: #{chess_model_forward.3} parent=31 // pred_check
          %p227 = pneg %p60
        $region34: #{chess_model_forward.3} parent=31 // pred_check_branch
          %229 = sbr.rel (%p227) target = $region36
        $region35: #{chess_model_forward.3} parent=31 // pred_region
          %s230 = sand.u32 %s50, 1
          %s231 = scalar_lea.sflag [#allocation5], %s230
          %s232 = sand.u32 %s50, 1
          %s233 = smul.addr %s232, 2304
          %s234 = scalar_lea.vmem [#allocation4], %s233
          %236 = vsyncadd %s231, 0
          %s237 = smul.addr %s19, 576
          %s238 = smul.addr %s237, 4
          %s239 = scalar_lea.hbm %s1, %s238
          %s240 = sshll.u32 %s239, 4
          %s241 = int_to_ptr.hbm [resolvable:$true] %s240
          %s242 = sshll.u32 %s234, 4
          %s243 = int_to_ptr.vmem [resolvable:$true] %s242
          %248 = dma.hbm_to_vmem [thread:$0]  %s241, 36864, %s243, %s231, 128, 128, 8
        $region36: #{chess_model_forward.3} parent=31 // pred_fallthru
          _
        // Predicated region
        $region37: #{chess_model_forward.3} parent=31 // pred_check
          %p249 = pneg %p86
        $region38: #{chess_model_forward.3} parent=31 // pred_check_branch
          %251 = sbr.rel (%p249) target = $region40
        $region39: #{chess_model_forward.3} parent=31 // pred_region
          %s252 = sand.u32 %s19, 1
          %s253 = scalar_lea.sflag [#allocation7], %s252
          %s254 = sand.u32 %s76, 1
          %s255 = smul.addr %s254, 4
          %s256 = scalar_lea.vmem [#allocation6], %s255
          %258 = vsyncadd %s253, 0
          %s259 = smul.addr %s19, 2
          %s260 = smul.addr %s259, 2
          %s261 = scalar_lea.hbm %s2, %s260
          %s263 = sshll.u32 %s261, 4
          %s264 = int_to_ptr.hbm [resolvable:$true] %s263
          %s265 = sshll.u32 %s256, 4
          %s266 = int_to_ptr.vmem [resolvable:$true] %s265
          %268 = dma.hbm_to_vmem [thread:$0]  %s264, 64, %s266, %s253
        $region40: #{chess_model_forward.3} parent=31 // pred_fallthru
          _
      $region32: #{chess_model_forward.3} parent=5 // pred_fallthru
        _
      %p269 = scmp.le.s32.totalorder 1, %s19
      %p270 = scmp.lt.s32.totalorder %s19, 24
      %p271 = pnand %p269, %p270
      %p272 = pneg %p271
      // Predicated region
      $region41: #{chess_model_forward.3} parent=5 // pred_check
        _
      $region42: #{chess_model_forward.3} parent=5 // pred_check_branch
        %274 = sbr.rel (%p271) target = $region44
      $region43: #{chess_model_forward.3} parent=5 // pred_region
        %s275 = ssub.s32 %s19, 1
        %s276 = sand.u32 %s53, 1
        %s277 = scalar_lea.sflag [#allocation5], %s276
        %s278 = sand.u32 %s53, 1
        %s279 = smul.addr %s278, 2304
        %s280 = scalar_lea.vmem [#allocation4], %s279
        // Predicated region
        $region45: #{chess_model_forward.3} parent=43 // pred_check
          %p281 = pneg %p66
        $region46: #{chess_model_forward.3} parent=43 // pred_check_branch
          %283 = sbr.rel (%p281) target = $region48
        $region47: #{chess_model_forward.3} parent=43 // pred_region
          %285 = dma.done %s277, 36864
        $region48: #{chess_model_forward.3} parent=43 // pred_fallthru
          _
        %s286 = sand.u32 %s24, 1
        %s287 = scalar_lea.sflag [#allocation7], %s286
        %s288 = sand.u32 %s79, 1
        %s289 = smul.addr %s288, 4
        %s290 = scalar_lea.vmem [#allocation6], %s289
        // Predicated region
        $region49: #{chess_model_forward.3} parent=43 // pred_check
          %p291 = pneg %p92
        $region50: #{chess_model_forward.3} parent=43 // pred_check_branch
          %293 = sbr.rel (%p291) target = $region52
        $region51: #{chess_model_forward.3} parent=43 // pred_region
          %295 = dma.done %s287, 64
        $region52: #{chess_model_forward.3} parent=43 // pred_fallthru
          _
        // Predicated region
        $region53: #{chess_model_forward.3} parent=43 // pred_check
          %p296 = pneg %p134
        $region54: #{chess_model_forward.3} parent=43 // pred_check_branch
          %298 = sbr.rel (%p296) target = $region56
        $region55: #{chess_model_forward.3} parent=43 // pred_region
          %300 = dma.done [#allocation7], 2048
        $region56: #{chess_model_forward.3} parent=43 // pred_fallthru
          _
        // Predicated region
        $region57: #{chess_model_forward.3} parent=43 // pred_check
          %p301 = pneg %p155
        $region58: #{chess_model_forward.3} parent=43 // pred_check_branch
          %303 = sbr.rel (%p301) target = $region60
        $region59: #{chess_model_forward.3} parent=43 // pred_region
          %305 = dma.done [#allocation10], 32
        $region60: #{chess_model_forward.3} parent=43 // pred_fallthru
          _
        %p306 = pneg %p40
        %p307 = pneg %p37
        %s308 = sand.u32 %s53, 1
        %s309 = scalar_lea.sflag [#allocation5], %s308
        %s310 = sand.u32 %s53, 1
        %s311 = smul.addr %s310, 2304
        %s312 = scalar_lea.vmem [#allocation4], %s311
        %p313 = pneg %p66
        %p314 = pneg %p63
        %s315 = sand.u32 %s24, 1
        %s316 = scalar_lea.sflag [#allocation7], %s315
        %s317 = sand.u32 %s79, 1
        %s318 = smul.addr %s317, 4
        %s319 = scalar_lea.vmem [#allocation6], %s318
        %p320 = pneg %p92
        %p321 = pneg %p89
        %p322 = pneg %p113
        %p323 = pneg %p110
        %p324 = pneg %p134
        %p325 = pneg %p131
        %p326 = pneg %p155
        %p327 = pneg %p152
        %p328 = pneg %p176
        %p329 = pneg %p173
        %p330 = scmp.eq.s32.totalorder %s24, 0
        // Predicated region
        $region61: #{chess_model_forward.3} parent=43 // pred_check
          %p331 = pneg %p330
        $region62: #{chess_model_forward.3} parent=43 // pred_check_branch
          %333 = sbr.rel (%p331) target = $region64
        $region63: #{chess_model_forward.3} parent=43 // pred_region
          %v334 = vld [vmem:[%s0] sm:$0xff]
          %v335 = vld [vmem:[%s0 + $0x8] sm:$0xff]
          %v336 = vld [vmem:[%s0 + $0x10] sm:$0xff]
          %v337 = vld [vmem:[%s0 + $0x18] sm:$0xff]
          %v338 = vld [vmem:[%s0 + $0x20] sm:$0xff]
          %v339 = vld [vmem:[%s0 + $0x28] sm:$0xff]
          %v340 = vld [vmem:[%s0 + $0x30] sm:$0xff]
          %v341 = vld [vmem:[%s0 + $0x38] sm:$0xff]
          %v342 = vld [vmem:[%s0 + $0x40] sm:$0xff]
          %v343 = vld [vmem:[%s0 + $0x48] sm:$0xff]
          %v344 = vld [vmem:[%s0 + $0x50] sm:$0xff]
          %v345 = vld [vmem:[%s0 + $0x58] sm:$0xff]
          %v346 = vld [vmem:[%s0 + $0x60] sm:$0xff]
          %v347 = vld [vmem:[%s0 + $0x68] sm:$0xff]
          %v348 = vld [vmem:[%s0 + $0x70] sm:$0xff]
          %v349 = vld [vmem:[%s0 + $0x78] sm:$0xff]
          %v350 = vld [vmem:[%s0 + $0x80] sm:$0xff]
          %v351 = vld [vmem:[%s0 + $0x88] sm:$0xff]
          %v352 = vld [vmem:[%s0 + $0x90] sm:$0xff]
          %v353 = vld [vmem:[%s0 + $0x98] sm:$0xff]
          %v354 = vld [vmem:[%s0 + $0xa0] sm:$0xff]
          %v355 = vld [vmem:[%s0 + $0xa8] sm:$0xff]
          %v356 = vld [vmem:[%s0 + $0xb0] sm:$0xff]
          %v357 = vld [vmem:[%s0 + $0xb8] sm:$0xff]
          %v358 = vld [vmem:[%s0 + $0xc0] sm:$0xff]
          %v359 = vld [vmem:[%s0 + $0xc8] sm:$0xff]
          %v360 = vld [vmem:[%s0 + $0xd0] sm:$0xff]
          %v361 = vld [vmem:[%s0 + $0xd8] sm:$0xff]
          %v362 = vld [vmem:[%s0 + $0xe0] sm:$0xff]
          %v363 = vld [vmem:[%s0 + $0xe8] sm:$0xff]
          %v364 = vld [vmem:[%s0 + $0xf0] sm:$0xff]
          %v365 = vld [vmem:[%s0 + $0xf8] sm:$0xff]
          %v366 = vld [vmem:[%s0 + $0x100] sm:$0xff]
          %v367 = vld [vmem:[%s0 + $0x108] sm:$0xff]
          %v368 = vld [vmem:[%s0 + $0x110] sm:$0xff]
          %v369 = vld [vmem:[%s0 + $0x118] sm:$0xff]
          %v370 = vld [vmem:[%s0 + $0x120] sm:$0xff]
          %v371 = vld [vmem:[%s0 + $0x128] sm:$0xff]
          %v372 = vld [vmem:[%s0 + $0x130] sm:$0xff]
          %v373 = vld [vmem:[%s0 + $0x138] sm:$0xff]
          %v374 = vld [vmem:[%s0 + $0x140] sm:$0xff]
          %v375 = vld [vmem:[%s0 + $0x148] sm:$0xff]
          %v376 = vld [vmem:[%s0 + $0x150] sm:$0xff]
          %v377 = vld [vmem:[%s0 + $0x158] sm:$0xff]
          %v378 = vld [vmem:[%s0 + $0x160] sm:$0xff]
          %v379 = vld [vmem:[%s0 + $0x168] sm:$0xff]
          %v380 = vld [vmem:[%s0 + $0x170] sm:$0xff]
          %v381 = vld [vmem:[%s0 + $0x178] sm:$0xff]
          %v382 = vld [vmem:[%s0 + $0x180] sm:$0xff]
          %v383 = vld [vmem:[%s0 + $0x188] sm:$0xff]
          %v384 = vld [vmem:[%s0 + $0x190] sm:$0xff]
          %v385 = vld [vmem:[%s0 + $0x198] sm:$0xff]
          %v386 = vld [vmem:[%s0 + $0x1a0] sm:$0xff]
          %v387 = vld [vmem:[%s0 + $0x1a8] sm:$0xff]
          %388 = vst [vmem:[#allocation2] sm:$0xff] %v334
          %389 = vst [vmem:[#allocation2 + $0x8] sm:$0xff] %v335
          %390 = vst [vmem:[#allocation2 + $0x10] sm:$0xff] %v336
          %391 = vst [vmem:[#allocation2 + $0x18] sm:$0xff] %v337
          %392 = vst [vmem:[#allocation2 + $0x20] sm:$0xff] %v338
          %393 = vst [vmem:[#allocation2 + $0x28] sm:$0xff] %v339
          %394 = vst [vmem:[#allocation2 + $0x30] sm:$0xff] %v340
          %395 = vst [vmem:[#allocation2 + $0x38] sm:$0xff] %v341
          %396 = vst [vmem:[#allocation2 + $0x40] sm:$0xff] %v342
          %397 = vst [vmem:[#allocation2 + $0x48] sm:$0xff] %v343
          %398 = vst [vmem:[#allocation2 + $0x50] sm:$0xff] %v344
          %399 = vst [vmem:[#allocation2 + $0x58] sm:$0xff] %v345
          %400 = vst [vmem:[#allocation2 + $0x60] sm:$0xff] %v346
          %401 = vst [vmem:[#allocation2 + $0x68] sm:$0xff] %v347
          %402 = vst [vmem:[#allocation2 + $0x70] sm:$0xff] %v348
          %403 = vst [vmem:[#allocation2 + $0x78] sm:$0xff] %v349
          %404 = vst [vmem:[#allocation2 + $0x80] sm:$0xff] %v350
          %405 = vst [vmem:[#allocation2 + $0x88] sm:$0xff] %v351
          %406 = vst [vmem:[#allocation2 + $0x90] sm:$0xff] %v352
          %407 = vst [vmem:[#allocation2 + $0x98] sm:$0xff] %v353
          %408 = vst [vmem:[#allocation2 + $0xa0] sm:$0xff] %v354
          %409 = vst [vmem:[#allocation2 + $0xa8] sm:$0xff] %v355
          %410 = vst [vmem:[#allocation2 + $0xb0] sm:$0xff] %v356
          %411 = vst [vmem:[#allocation2 + $0xb8] sm:$0xff] %v357
          %412 = vst [vmem:[#allocation2 + $0xc0] sm:$0xff] %v358
          %413 = vst [vmem:[#allocation2 + $0xc8] sm:$0xff] %v359
          %414 = vst [vmem:[#allocation2 + $0xd0] sm:$0xff] %v360
          %415 = vst [vmem:[#allocation2 + $0xd8] sm:$0xff] %v361
          %416 = vst [vmem:[#allocation2 + $0xe0] sm:$0xff] %v362
          %417 = vst [vmem:[#allocation2 + $0xe8] sm:$0xff] %v363
          %418 = vst [vmem:[#allocation2 + $0xf0] sm:$0xff] %v364
          %419 = vst [vmem:[#allocation2 + $0xf8] sm:$0xff] %v365
          %420 = vst [vmem:[#allocation2 + $0x100] sm:$0xff] %v366
          %421 = vst [vmem:[#allocation2 + $0x108] sm:$0xff] %v367
          %422 = vst [vmem:[#allocation2 + $0x110] sm:$0xff] %v368
          %423 = vst [vmem:[#allocation2 + $0x118] sm:$0xff] %v369
          %424 = vst [vmem:[#allocation2 + $0x120] sm:$0xff] %v370
          %425 = vst [vmem:[#allocation2 + $0x128] sm:$0xff] %v371
          %426 = vst [vmem:[#allocation2 + $0x130] sm:$0xff] %v372
          %427 = vst [vmem:[#allocation2 + $0x138] sm:$0xff] %v373
          %428 = vst [vmem:[#allocation2 + $0x140] sm:$0xff] %v374
          %429 = vst [vmem:[#allocation2 + $0x148] sm:$0xff] %v375
          %430 = vst [vmem:[#allocation2 + $0x150] sm:$0xff] %v376
          %431 = vst [vmem:[#allocation2 + $0x158] sm:$0xff] %v377
          %432 = vst [vmem:[#allocation2 + $0x160] sm:$0xff] %v378
          %433 = vst [vmem:[#allocation2 + $0x168] sm:$0xff] %v379
          %434 = vst [vmem:[#allocation2 + $0x170] sm:$0xff] %v380
          %435 = vst [vmem:[#allocation2 + $0x178] sm:$0xff] %v381
          %436 = vst [vmem:[#allocation2 + $0x180] sm:$0xff] %v382
          %437 = vst [vmem:[#allocation2 + $0x188] sm:$0xff] %v383
          %438 = vst [vmem:[#allocation2 + $0x190] sm:$0xff] %v384
          %439 = vst [vmem:[#allocation2 + $0x198] sm:$0xff] %v385
          %440 = vst [vmem:[#allocation2 + $0x1a0] sm:$0xff] %v386
          %441 = vst [vmem:[#allocation2 + $0x1a8] sm:$0xff] %v387
          %442 = vst [vmem:[#allocation3] sm:$0xff] 0.0
          %443 = vst [vmem:[#allocation3 + $0x8] sm:$0xff] 0.0
          %444 = vst [vmem:[#allocation3 + $0x10] sm:$0xff] 0.0
          %445 = vst [vmem:[#allocation3 + $0x18] sm:$0xff] 0.0
          %446 = vst [vmem:[#allocation3 + $0x20] sm:$0xff] 0.0
          %447 = vst [vmem:[#allocation3 + $0x28] sm:$0xff] 0.0
          %448 = vst [vmem:[#allocation3 + $0x30] sm:$0xff] 0.0
          %449 = vst [vmem:[#allocation3 + $0x38] sm:$0xff] 0.0
          %450 = vst [vmem:[#allocation3 + $0x40] sm:$0xff] 0.0
          %451 = vst [vmem:[#allocation3 + $0x48] sm:$0xff] 0.0
          %452 = vst [vmem:[#allocation3 + $0x50] sm:$0xff] 0.0
          %453 = vst [vmem:[#allocation3 + $0x58] sm:$0xff] 0.0
          %454 = vst [vmem:[#allocation3 + $0x60] sm:$0xff] 0.0
          %455 = vst [vmem:[#allocation3 + $0x68] sm:$0xff] 0.0
          %456 = vst [vmem:[#allocation3 + $0x70] sm:$0xff] 0.0
          %457 = vst [vmem:[#allocation3 + $0x78] sm:$0xff] 0.0
          %458 = vst [vmem:[#allocation3 + $0x80] sm:$0xff] 0.0
          %459 = vst [vmem:[#allocation3 + $0x88] sm:$0xff] 0.0
          %460 = vst [vmem:[#allocation3 + $0x90] sm:$0xff] 0.0
          %461 = vst [vmem:[#allocation3 + $0x98] sm:$0xff] 0.0
          %462 = vst [vmem:[#allocation3 + $0xa0] sm:$0xff] 0.0
          %463 = vst [vmem:[#allocation3 + $0xa8] sm:$0xff] 0.0
          %464 = vst [vmem:[#allocation3 + $0xb0] sm:$0xff] 0.0
          %465 = vst [vmem:[#allocation3 + $0xb8] sm:$0xff] 0.0
          %466 = vst [vmem:[#allocation3 + $0xc0] sm:$0xff] 0.0
          %467 = vst [vmem:[#allocation3 + $0xc8] sm:$0xff] 0.0
          %468 = vst [vmem:[#allocation3 + $0xd0] sm:$0xff] 0.0
          %469 = vst [vmem:[#allocation3 + $0xd8] sm:$0xff] 0.0
          %470 = vst [vmem:[#allocation3 + $0xe0] sm:$0xff] 0.0
          %471 = vst [vmem:[#allocation3 + $0xe8] sm:$0xff] 0.0
          %472 = vst [vmem:[#allocation3 + $0xf0] sm:$0xff] 0.0
          %473 = vst [vmem:[#allocation3 + $0xf8] sm:$0xff] 0.0
          %474 = vst [vmem:[#allocation3 + $0x100] sm:$0xff] 0.0
          %475 = vst [vmem:[#allocation3 + $0x108] sm:$0xff] 0.0
          %476 = vst [vmem:[#allocation3 + $0x110] sm:$0xff] 0.0
          %477 = vst [vmem:[#allocation3 + $0x118] sm:$0xff] 0.0
          %478 = vst [vmem:[#allocation3 + $0x120] sm:$0xff] 0.0
          %479 = vst [vmem:[#allocation3 + $0x128] sm:$0xff] 0.0
          %480 = vst [vmem:[#allocation3 + $0x130] sm:$0xff] 0.0
          %481 = vst [vmem:[#allocation3 + $0x138] sm:$0xff] 0.0
          %482 = vst [vmem:[#allocation3 + $0x140] sm:$0xff] 0.0
          %483 = vst [vmem:[#allocation3 + $0x148] sm:$0xff] 0.0
          %484 = vst [vmem:[#allocation3 + $0x150] sm:$0xff] 0.0
          %485 = vst [vmem:[#allocation3 + $0x158] sm:$0xff] 0.0
          %486 = vst [vmem:[#allocation3 + $0x160] sm:$0xff] 0.0
          %487 = vst [vmem:[#allocation3 + $0x168] sm:$0xff] 0.0
        $region64: #{chess_model_forward.3} parent=43 // pred_fallthru
          _
        %s488 = ssub.s32 %s24, 1
        %p489 = scmp.lt.s32.totalorder %s488, 0
        %s490 = ssub.s32 0, %s488
        %s491 = scalar_select %p489, %s490, %s488
        %s492 = sand.u32 %s491, 1
        %s493 = ssub.s32 0, %s492
        %s494 = scalar_select %p489, %s493, %s492
        %p495 = scmp.ne.s32.totalorder %s494, 0
        %p496 = scmp.lt.s32.totalorder %s494, 0
        %p497 = pnand %p496, %p495
        %p498 = pneg %p497
        %s499 = sadd.s32 %s494, 2
        %s500 = scalar_select %p498, %s499, %s494
        %p501 = scmp.ge.s32.totalorder %s24, 1
        %p502 = scmp.eq.s32.totalorder %s500, 0
        %p503 = pnand %p501, %p502
        %p504 = pneg %p503
        %p505 = scmp.eq.s32.totalorder %s500, 1
        %p506 = pnand %p501, %p505
        %p507 = pneg %p506
        // Predicated region
        $region65: #{chess_model_forward.3} parent=43 // pred_check
          _
        $region66: #{chess_model_forward.3} parent=43 // pred_check_branch
          %509 = sbr.rel (%p503) target = $region68
        $region67: #{chess_model_forward.3} parent=43 // pred_region
          %v510 = vld [vmem:[#allocation2 + $0x20] sm:$0xff]
          %v511 = vld [vmem:[#allocation2 + $0x28] sm:$0xff]
          %v512 = vld [vmem:[#allocation2 + $0x30] sm:$0xff]
          %v513 = vld [vmem:[#allocation2 + $0x38] sm:$0xff]
          %v514 = vld [vmem:[#allocation2 + $0x40] sm:$0xff]
          %v515 = vld [vmem:[#allocation2 + $0x48] sm:$0xff]
          %v516 = vld [vmem:[#allocation2 + $0x50] sm:$0xff]
          %v517 = vld [vmem:[#allocation2 + $0x58] sm:$0xff]
          %v518 = vld [vmem:[#allocation2 + $0x60] sm:$0xff]
          %v519 = vld [vmem:[#allocation2 + $0x68] sm:$0xff]
          %v520 = vld [vmem:[#allocation2 + $0x70] sm:$0xff]
          %v521 = vld [vmem:[#allocation2 + $0x78] sm:$0xff]
          %v522 = vld [vmem:[#allocation2 + $0x80] sm:$0xff]
          %v523 = vld [vmem:[#allocation2 + $0x88] sm:$0xff]
          %v524 = vld [vmem:[#allocation2 + $0x90] sm:$0xff]
          %v525 = vld [vmem:[#allocation2 + $0x98] sm:$0xff]
          %v526 = vld [vmem:[#allocation2 + $0xa0] sm:$0xff]
          %v527 = vld [vmem:[#allocation2 + $0xa8] sm:$0xff]
          %v528 = vld [vmem:[#allocation2 + $0xb0] sm:$0xff]
          %v529 = vld [vmem:[#allocation2 + $0xb8] sm:$0xff]
          %v530 = vld [vmem:[#allocation2 + $0xc0] sm:$0xff]
          %v531 = vld [vmem:[#allocation2 + $0xc8] sm:$0xff]
          %v532 = vld [vmem:[#allocation2 + $0xd0] sm:$0xff]
          %v533 = vld [vmem:[#allocation2 + $0xd8] sm:$0xff]
          %v534 = vld [vmem:[#allocation2 + $0xe0] sm:$0xff]
          %v535 = vld [vmem:[#allocation2 + $0xe8] sm:$0xff]
          %v536 = vld [vmem:[#allocation2 + $0xf0] sm:$0xff]
          %v537 = vld [vmem:[#allocation2 + $0xf8] sm:$0xff]
          %v538 = vld [vmem:[#allocation2 + $0x100] sm:$0xff]
          %v539 = vld [vmem:[#allocation2 + $0x108] sm:$0xff]
          %v540 = vld [vmem:[#allocation2 + $0x110] sm:$0xff]
          %v541 = vld [vmem:[#allocation2 + $0x118] sm:$0xff]
          %v542 = vld [vmem:[#allocation2 + $0x120] sm:$0xff]
          %v543 = vld [vmem:[#allocation2 + $0x128] sm:$0xff]
          %v544 = vld [vmem:[#allocation2 + $0x130] sm:$0xff]
          %v545 = vld [vmem:[#allocation2 + $0x138] sm:$0xff]
          %v546 = vld [vmem:[#allocation2 + $0x140] sm:$0xff]
          %v547 = vld [vmem:[#allocation2 + $0x148] sm:$0xff]
          %v548 = vld [vmem:[#allocation2 + $0x150] sm:$0xff]
          %v549 = vld [vmem:[#allocation2 + $0x158] sm:$0xff]
          %v550 = vld [vmem:[#allocation2 + $0x160] sm:$0xff]
          %v551 = vld [vmem:[#allocation2 + $0x168] sm:$0xff]
          %v552 = vld [vmem:[#allocation2 + $0x170] sm:$0xff]
          %v553 = vld [vmem:[#allocation2 + $0x178] sm:$0xff]
          %v554 = vld [vmem:[#allocation2 + $0x180] sm:$0xff]
          %v555 = vld [vmem:[#allocation2 + $0x188] sm:$0xff]
          %556 = vst [vmem:[#allocation3] sm:$0xff] %v510
          %557 = vst [vmem:[#allocation3 + $0x8] sm:$0xff] %v511
          %558 = vst [vmem:[#allocation3 + $0x10] sm:$0xff] %v512
          %559 = vst [vmem:[#allocation3 + $0x18] sm:$0xff] %v513
          %560 = vst [vmem:[#allocation3 + $0x20] sm:$0xff] %v514
          %561 = vst [vmem:[#allocation3 + $0x28] sm:$0xff] %v515
          %562 = vst [vmem:[#allocation3 + $0x30] sm:$0xff] %v516
          %563 = vst [vmem:[#allocation3 + $0x38] sm:$0xff] %v517
          %564 = vst [vmem:[#allocation3 + $0x40] sm:$0xff] %v518
          %565 = vst [vmem:[#allocation3 + $0x48] sm:$0xff] %v519
          %566 = vst [vmem:[#allocation3 + $0x50] sm:$0xff] %v520
          %567 = vst [vmem:[#allocation3 + $0x58] sm:$0xff] %v521
          %568 = vst [vmem:[#allocation3 + $0x60] sm:$0xff] %v522
          %569 = vst [vmem:[#allocation3 + $0x68] sm:$0xff] %v523
          %570 = vst [vmem:[#allocation3 + $0x70] sm:$0xff] %v524
          %571 = vst [vmem:[#allocation3 + $0x78] sm:$0xff] %v525
          %572 = vst [vmem:[#allocation3 + $0x80] sm:$0xff] %v526
          %573 = vst [vmem:[#allocation3 + $0x88] sm:$0xff] %v527
          %574 = vst [vmem:[#allocation3 + $0x90] sm:$0xff] %v528
          %575 = vst [vmem:[#allocation3 + $0x98] sm:$0xff] %v529
          %576 = vst [vmem:[#allocation3 + $0xa0] sm:$0xff] %v530
          %577 = vst [vmem:[#allocation3 + $0xa8] sm:$0xff] %v531
          %578 = vst [vmem:[#allocation3 + $0xb0] sm:$0xff] %v532
          %579 = vst [vmem:[#allocation3 + $0xb8] sm:$0xff] %v533
          %580 = vst [vmem:[#allocation3 + $0xc0] sm:$0xff] %v534
          %581 = vst [vmem:[#allocation3 + $0xc8] sm:$0xff] %v535
          %582 = vst [vmem:[#allocation3 + $0xd0] sm:$0xff] %v536
          %583 = vst [vmem:[#allocation3 + $0xd8] sm:$0xff] %v537
          %584 = vst [vmem:[#allocation3 + $0xe0] sm:$0xff] %v538
          %585 = vst [vmem:[#allocation3 + $0xe8] sm:$0xff] %v539
          %586 = vst [vmem:[#allocation3 + $0xf0] sm:$0xff] %v540
          %587 = vst [vmem:[#allocation3 + $0xf8] sm:$0xff] %v541
          %588 = vst [vmem:[#allocation3 + $0x100] sm:$0xff] %v542
          %589 = vst [vmem:[#allocation3 + $0x108] sm:$0xff] %v543
          %590 = vst [vmem:[#allocation3 + $0x110] sm:$0xff] %v544
          %591 = vst [vmem:[#allocation3 + $0x118] sm:$0xff] %v545
          %592 = vst [vmem:[#allocation3 + $0x120] sm:$0xff] %v546
          %593 = vst [vmem:[#allocation3 + $0x128] sm:$0xff] %v547
          %594 = vst [vmem:[#allocation3 + $0x130] sm:$0xff] %v548
          %595 = vst [vmem:[#allocation3 + $0x138] sm:$0xff] %v549
          %596 = vst [vmem:[#allocation3 + $0x140] sm:$0xff] %v550
          %597 = vst [vmem:[#allocation3 + $0x148] sm:$0xff] %v551
          %598 = vst [vmem:[#allocation3 + $0x150] sm:$0xff] %v552
          %599 = vst [vmem:[#allocation3 + $0x158] sm:$0xff] %v553
          %600 = vst [vmem:[#allocation3 + $0x160] sm:$0xff] %v554
          %601 = vst [vmem:[#allocation3 + $0x168] sm:$0xff] %v555
        $region68: #{chess_model_forward.3} parent=43 // pred_fallthru
          _
        %v602 = vld [vmem:[#allocation2] sm:$0xe0]
        %v603 = vld [vmem:[#allocation2 + $0x8] sm:$0xe0]
        %v604 = vld [vmem:[#allocation2 + $0x10] sm:$0xff]
        %v605 = vld [vmem:[#allocation2 + $0x18] sm:$0xff]
        %v606 = vld [vmem:[#allocation2 + $0x20] sm:$0xff]
        %v607 = vld [vmem:[#allocation2 + $0x28] sm:$0xff]
        %v608 = vld [vmem:[#allocation2 + $0x30] sm:$0xff]
        %v609 = vld [vmem:[#allocation2 + $0x38] sm:$0xff]
        %v610 = vld [vmem:[#allocation2 + $0x40] sm:$0xff]
        %v611 = vld [vmem:[#allocation2 + $0x48] sm:$0xff]
        %v612 = vld [vmem:[#allocation2 + $0x50] sm:$0xff]
        %v613 = vld [vmem:[#allocation2 + $0x58] sm:$0xff]
        %v614 = vld [vmem:[#allocation2 + $0x60] sm:$0xff]
        %v615 = vld [vmem:[#allocation2 + $0x68] sm:$0xff]
        %v616 = vld [vmem:[#allocation2 + $0x70] sm:$0xff]
        %v617 = vld [vmem:[#allocation2 + $0x78] sm:$0xff]
        %v618 = vld [vmem:[#allocation2 + $0x80] sm:$0xff]
        %v619 = vld [vmem:[#allocation2 + $0x88] sm:$0xff]
        %v620 = vld [vmem:[#allocation2 + $0x90] sm:$0xff]
        %v621 = vld [vmem:[#allocation2 + $0x98] sm:$0xff]
        %v622 = vld [vmem:[#allocation2 + $0xa0] sm:$0xff]
        %v623 = vld [vmem:[#allocation2 + $0xa8] sm:$0xff]
        %v624 = vld [vmem:[#allocation2 + $0xb0] sm:$0xff]
        %v625 = vld [vmem:[#allocation2 + $0xb8] sm:$0xff]
        %v626 = vld [vmem:[#allocation2 + $0xc0] sm:$0xff]
        %v627 = vld [vmem:[#allocation2 + $0xc8] sm:$0xff]
        %v628 = vld [vmem:[#allocation2 + $0xd0] sm:$0xff]
        %v629 = vld [vmem:[#allocation2 + $0xd8] sm:$0xff]
        %v630 = vld [vmem:[#allocation2 + $0xe0] sm:$0xff]
        %v631 = vld [vmem:[#allocation2 + $0xe8] sm:$0xff]
        %v632 = vld [vmem:[#allocation2 + $0xf0] sm:$0xff]
        %v633 = vld [vmem:[#allocation2 + $0xf8] sm:$0xff]
        %v634 = vld [vmem:[#allocation2 + $0x100] sm:$0xff]
        %v635 = vld [vmem:[#allocation2 + $0x108] sm:$0xff]
        %v636 = vld [vmem:[#allocation2 + $0x110] sm:$0xff]
        %v637 = vld [vmem:[#allocation2 + $0x118] sm:$0xff]
        %v638 = vld [vmem:[#allocation2 + $0x120] sm:$0xff]
        %v639 = vld [vmem:[#allocation2 + $0x128] sm:$0xff]
        %v640 = vld [vmem:[#allocation2 + $0x130] sm:$0xff]
        %v641 = vld [vmem:[#allocation2 + $0x138] sm:$0xff]
        %v642 = vld [vmem:[#allocation2 + $0x140] sm:$0xff]
        %v643 = vld [vmem:[#allocation2 + $0x148] sm:$0xff]
        %v644 = vld [vmem:[#allocation2 + $0x150] sm:$0xff]
        %v645 = vld [vmem:[#allocation2 + $0x158] sm:$0xff]
        %v646 = vld [vmem:[#allocation2 + $0x160] sm:$0xff]
        %v647 = vld [vmem:[#allocation2 + $0x168] sm:$0xff]
        %v648 = vld [vmem:[#allocation2 + $0x170] sm:$0x1f]
        %v649 = vld [vmem:[#allocation2 + $0x178] sm:$0x1f]
        %v650 = vpack.c.bf16 %v604, %v602
        %v651 = vpack.c.bf16 %v605, %v603
        %v652 = vpack.c.bf16 %v608, %v606
        %v653 = vpack.c.bf16 %v609, %v607
        %v654 = vpack.c.bf16 %v612, %v610
        %v655 = vpack.c.bf16 %v613, %v611
        %v656 = vpack.c.bf16 %v616, %v614
        %v657 = vpack.c.bf16 %v617, %v615
        %v658 = vpack.c.bf16 %v620, %v618
        %v659 = vpack.c.bf16 %v621, %v619
        %v660 = vpack.c.bf16 %v624, %v622
        %v661 = vpack.c.bf16 %v625, %v623
        %v662 = vpack.c.bf16 %v628, %v626
        %v663 = vpack.c.bf16 %v629, %v627
        %v664 = vpack.c.bf16 %v632, %v630
        %v665 = vpack.c.bf16 %v633, %v631
        %v666 = vpack.c.bf16 %v636, %v634
        %v667 = vpack.c.bf16 %v637, %v635
        %v668 = vpack.c.bf16 %v640, %v638
        %v669 = vpack.c.bf16 %v641, %v639
        %v670 = vpack.c.bf16 %v644, %v642
        %v671 = vpack.c.bf16 %v645, %v643
        %v672 = vpack.c.bf16 %v648, %v646
        %v673 = vpack.c.bf16 %v649, %v647
        %v674 = vld [vmem:[%s280] sm:$0xff]
        %v675 = vld [vmem:[%s280 + $0x8] sm:$0xff]
        %v676 = vld [vmem:[%s280 + $0x10] sm:$0xff]
        %v677 = vld [vmem:[%s280 + $0x18] sm:$0xff]
        %v678 = vld [vmem:[%s280 + $0x20] sm:$0xff]
        %v679 = vld [vmem:[%s280 + $0x28] sm:$0xff]
        %v680 = vld [vmem:[%s280 + $0x30] sm:$0xff]
        %v681 = vld [vmem:[%s280 + $0x38] sm:$0xff]
        %v682 = vld [vmem:[%s280 + $0x40] sm:$0xff]
        %v683 = vld [vmem:[%s280 + $0x48] sm:$0xff]
        %v684 = vld [vmem:[%s280 + $0x50] sm:$0xff]
        %v685 = vld [vmem:[%s280 + $0x58] sm:$0xff]
        %v686 = vld [vmem:[%s280 + $0x60] sm:$0xff]
        %v687 = vld [vmem:[%s280 + $0x68] sm:$0xff]
        %v688 = vld [vmem:[%s280 + $0x70] sm:$0xff]
        %v689 = vld [vmem:[%s280 + $0x78] sm:$0xff]
        %v690 = vld [vmem:[%s280 + $0x80] sm:$0xff]
        %v691 = vld [vmem:[%s280 + $0x88] sm:$0xff]
        %v692 = vld [vmem:[%s280 + $0x90] sm:$0xff]
        %v693 = vld [vmem:[%s280 + $0x98] sm:$0xff]
        %v694 = vld [vmem:[%s280 + $0xa0] sm:$0xff]
        %v695 = vld [vmem:[%s280 + $0xa8] sm:$0xff]
        %v696 = vld [vmem:[%s280 + $0xb0] sm:$0xff]
        %v697 = vld [vmem:[%s280 + $0xb8] sm:$0xff]
        %v698 = vld [vmem:[%s280 + $0xc0] sm:$0xff]
        %v699 = vld [vmem:[%s280 + $0xc8] sm:$0xff]
        %v700 = vld [vmem:[%s280 + $0xd0] sm:$0xff]
        %v701 = vld [vmem:[%s280 + $0xd8] sm:$0xff]
        %v702 = vld [vmem:[%s280 + $0xe0] sm:$0xff]
        %v703 = vld [vmem:[%s280 + $0xe8] sm:$0xff]
        %v704 = vld [vmem:[%s280 + $0xf0] sm:$0xff]
        %v705 = vld [vmem:[%s280 + $0xf8] sm:$0xff]
        %v706 = vld [vmem:[#allocation2] sm:$0xc0]
        %v707 = vld [vmem:[#allocation2 + $0x8] sm:$0xc0]
        %v708 = vld [vmem:[#allocation2 + $0x170] sm:$0x3f]
        %v709 = vld [vmem:[#allocation2 + $0x178] sm:$0x3f]
        %v710 = vpack.c.bf16 %v604, %v706
        %v711 = vpack.c.bf16 %v605, %v707
        %v712 = vpack.c.bf16 %v708, %v646
        %v713 = vpack.c.bf16 %v709, %v647
        %v714 = vld [vmem:[%s280 + $0x100] sm:$0xff]
        %v715 = vld [vmem:[%s280 + $0x108] sm:$0xff]
        %v716 = vld [vmem:[%s280 + $0x110] sm:$0xff]
        %v717 = vld [vmem:[%s280 + $0x118] sm:$0xff]
        %v718 = vld [vmem:[%s280 + $0x120] sm:$0xff]
        %v719 = vld [vmem:[%s280 + $0x128] sm:$0xff]
        %v720 = vld [vmem:[%s280 + $0x130] sm:$0xff]
        %v721 = vld [vmem:[%s280 + $0x138] sm:$0xff]
        %v722 = vld [vmem:[%s280 + $0x140] sm:$0xff]
        %v723 = vld [vmem:[%s280 + $0x148] sm:$0xff]
        %v724 = vld [vmem:[%s280 + $0x150] sm:$0xff]
        %v725 = vld [vmem:[%s280 + $0x158] sm:$0xff]
        %v726 = vld [vmem:[%s280 + $0x160] sm:$0xff]
        %v727 = vld [vmem:[%s280 + $0x168] sm:$0xff]
        %v728 = vld [vmem:[%s280 + $0x170] sm:$0xff]
        %v729 = vld [vmem:[%s280 + $0x178] sm:$0xff]
        %v730 = vld [vmem:[%s280 + $0x180] sm:$0xff]
        %v731 = vld [vmem:[%s280 + $0x188] sm:$0xff]
        %v732 = vld [vmem:[%s280 + $0x190] sm:$0xff]
        %v733 = vld [vmem:[%s280 + $0x198] sm:$0xff]
        %v734 = vld [vmem:[%s280 + $0x1a0] sm:$0xff]
        %v735 = vld [vmem:[%s280 + $0x1a8] sm:$0xff]
        %v736 = vld [vmem:[%s280 + $0x1b0] sm:$0xff]
        %v737 = vld [vmem:[%s280 + $0x1b8] sm:$0xff]
        %v738 = vld [vmem:[%s280 + $0x1c0] sm:$0xff]
        %v739 = vld [vmem:[%s280 + $0x1c8] sm:$0xff]
        %v740 = vld [vmem:[%s280 + $0x1d0] sm:$0xff]
        %v741 = vld [vmem:[%s280 + $0x1d8] sm:$0xff]
        %v742 = vld [vmem:[%s280 + $0x1e0] sm:$0xff]
        %v743 = vld [vmem:[%s280 + $0x1e8] sm:$0xff]
        %v744 = vld [vmem:[%s280 + $0x1f0] sm:$0xff]
        %v745 = vld [vmem:[%s280 + $0x1f8] sm:$0xff]
        %vm770 = vcmask 1044480
        %v771 = vrot.slane %v710, 3
        %v772 = vrot.slane %v652, 3
        %v773 = vsel %vm770, %v771, %v772
        %v774 = vrot.slane %v711, 3
        %v775 = vrot.slane %v653, 3
        %v776 = vsel %vm770, %v774, %v775
        %v777 = vrot.slane %v654, 3
        %v778 = vsel %vm770, %v772, %v777
        %v779 = vrot.slane %v655, 3
        %v780 = vsel %vm770, %v775, %v779
        %v781 = vrot.slane %v656, 3
        %v782 = vsel %vm770, %v777, %v781
        %v783 = vrot.slane %v657, 3
        %v784 = vsel %vm770, %v779, %v783
        %v785 = vrot.slane %v658, 3
        %v786 = vsel %vm770, %v781, %v785
        %v787 = vrot.slane %v659, 3
        %v788 = vsel %vm770, %v783, %v787
        %v789 = vrot.slane %v660, 3
        %v790 = vsel %vm770, %v785, %v789
        %v791 = vrot.slane %v661, 3
        %v792 = vsel %vm770, %v787, %v791
        %v793 = vrot.slane %v662, 3
        %v794 = vsel %vm770, %v789, %v793
        %v795 = vrot.slane %v663, 3
        %v796 = vsel %vm770, %v791, %v795
        %v797 = vrot.slane %v664, 3
        %v798 = vsel %vm770, %v793, %v797
        %v799 = vrot.slane %v665, 3
        %v800 = vsel %vm770, %v795, %v799
        %v801 = vrot.slane %v666, 3
        %v802 = vsel %vm770, %v797, %v801
        %v803 = vrot.slane %v667, 3
        %v804 = vsel %vm770, %v799, %v803
        %v805 = vrot.slane %v668, 3
        %v806 = vsel %vm770, %v801, %v805
        %v807 = vrot.slane %v669, 3
        %v808 = vsel %vm770, %v803, %v807
        %v809 = vrot.slane %v670, 3
        %v810 = vsel %vm770, %v805, %v809
        %v811 = vrot.slane %v671, 3
        %v812 = vsel %vm770, %v807, %v811
        %v813 = vrot.slane %v712, 3
        %v814 = vsel %vm770, %v809, %v813
        %v815 = vrot.slane %v713, 3
        %v816 = vsel %vm770, %v811, %v815
        %v873 = vunpack.c.l.b16 %v714
        %v874 = vunpack.c.h.b16 %v714
        %v875 = vunpack.c.l.b16 %v715
        %v876 = vunpack.c.h.b16 %v715
        %v877 = vunpack.c.l.b16 %v716
        %v878 = vunpack.c.h.b16 %v716
        %v879 = vunpack.c.l.b16 %v717
        %v880 = vunpack.c.h.b16 %v717
        %v881 = vunpack.c.l.b16 %v718
        %v882 = vunpack.c.h.b16 %v718
        %v883 = vunpack.c.l.b16 %v719
        %v884 = vunpack.c.h.b16 %v719
        %v885 = vunpack.c.l.b16 %v720
        %v886 = vunpack.c.h.b16 %v720
        %v887 = vunpack.c.l.b16 %v721
        %v888 = vunpack.c.h.b16 %v721
        %v889 = vunpack.c.l.b16 %v722
        %v890 = vunpack.c.h.b16 %v722
        %v891 = vunpack.c.l.b16 %v723
        %v892 = vunpack.c.h.b16 %v723
        %v893 = vunpack.c.l.b16 %v724
        %v894 = vunpack.c.h.b16 %v724
        %v895 = vunpack.c.l.b16 %v725
        %v896 = vunpack.c.h.b16 %v725
        %v897 = vunpack.c.l.b16 %v726
        %v898 = vunpack.c.h.b16 %v726
        %v899 = vunpack.c.l.b16 %v727
        %v900 = vunpack.c.h.b16 %v727
        %v901 = vunpack.c.l.b16 %v728
        %v902 = vunpack.c.h.b16 %v728
        %v903 = vunpack.c.l.b16 %v729
        %v904 = vunpack.c.h.b16 %v729
        %v905 = vunpack.c.l.b16 %v730
        %v906 = vunpack.c.h.b16 %v730
        %v907 = vunpack.c.l.b16 %v731
        %v908 = vunpack.c.h.b16 %v731
        %v909 = vunpack.c.l.b16 %v732
        %v910 = vunpack.c.h.b16 %v732
        %v911 = vunpack.c.l.b16 %v733
        %v912 = vunpack.c.h.b16 %v733
        %v913 = vunpack.c.l.b16 %v734
        %v914 = vunpack.c.h.b16 %v734
        %v915 = vunpack.c.l.b16 %v735
        %v916 = vunpack.c.h.b16 %v735
        %v917 = vunpack.c.l.b16 %v736
        %v918 = vunpack.c.h.b16 %v736
        %v919 = vunpack.c.l.b16 %v737
        %v920 = vunpack.c.h.b16 %v737
        %v921 = vunpack.c.l.b16 %v738
        %v922 = vunpack.c.h.b16 %v738
        %v923 = vunpack.c.l.b16 %v739
        %v924 = vunpack.c.h.b16 %v739
        %v925 = vunpack.c.l.b16 %v740
        %v926 = vunpack.c.h.b16 %v740
        %v927 = vunpack.c.l.b16 %v741
        %v928 = vunpack.c.h.b16 %v741
        %v929 = vunpack.c.l.b16 %v742
        %v930 = vunpack.c.h.b16 %v742
        %v931 = vunpack.c.l.b16 %v743
        %v932 = vunpack.c.h.b16 %v743
        %v933 = vunpack.c.l.b16 %v744
        %v934 = vunpack.c.h.b16 %v744
        %v935 = vunpack.c.l.b16 %v745
        %v936 = vunpack.c.h.b16 %v745
        %v937 = vpack.c.b16 %v875, %v873
        %v938 = vpack.c.b16 %v876, %v874
        %v939 = vpack.c.b16 %v879, %v877
        %v940 = vpack.c.b16 %v880, %v878
        %v941 = vpack.c.b16 %v883, %v881
        %v942 = vpack.c.b16 %v884, %v882
        %v943 = vpack.c.b16 %v887, %v885
        %v944 = vpack.c.b16 %v888, %v886
        %v945 = vpack.c.b16 %v891, %v889
        %v946 = vpack.c.b16 %v892, %v890
        %v947 = vpack.c.b16 %v895, %v893
        %v948 = vpack.c.b16 %v896, %v894
        %v949 = vpack.c.b16 %v899, %v897
        %v950 = vpack.c.b16 %v900, %v898
        %v951 = vpack.c.b16 %v903, %v901
        %v952 = vpack.c.b16 %v904, %v902
        %v953 = vpack.c.b16 %v907, %v905
        %v954 = vpack.c.b16 %v908, %v906
        %v955 = vpack.c.b16 %v911, %v909
        %v956 = vpack.c.b16 %v912, %v910
        %v957 = vpack.c.b16 %v915, %v913
        %v958 = vpack.c.b16 %v916, %v914
        %v959 = vpack.c.b16 %v919, %v917
        %v960 = vpack.c.b16 %v920, %v918
        %v961 = vpack.c.b16 %v923, %v921
        %v962 = vpack.c.b16 %v924, %v922
        %v963 = vpack.c.b16 %v927, %v925
        %v964 = vpack.c.b16 %v928, %v926
        %v965 = vpack.c.b16 %v931, %v929
        %v966 = vpack.c.b16 %v932, %v930
        %v967 = vpack.c.b16 %v935, %v933
        %v968 = vpack.c.b16 %v936, %v934
        %1001 = vmatpush.bf16.msra.mxu0 %v951
        %1002 = vmatpush.bf16.msra.mxu0 %v949
        %1003 = vmatpush.bf16.msra.mxu0 %v947
        %1004 = vmatpush.bf16.msra.mxu0 %v945
        %1005 = vmatpush.bf16.msra.mxu0 %v943
        %1006 = vmatpush.bf16.msra.mxu0 %v941
        %1007 = vmatpush.bf16.msra.mxu0 %v939
        %1008 = vmatpush.bf16.msra.mxu0 %v937
        %1009 = vmatmul.bf16.gmra.mxu0 %v773
        %v1010 = vpop.f32.mrf.mxu0
        %v1011 = vadd.f32 0.0, %v1010
        %v1012 = vpop.f32.mrf.mxu0
        %v1013 = vadd.f32 0.0, %v1012
        %1014 = vmatmul.bf16.gmra.mxu0 %v778
        %v1015 = vpop.f32.mrf.mxu0
        %v1016 = vadd.f32 0.0, %v1015
        %v1017 = vpop.f32.mrf.mxu0
        %v1018 = vadd.f32 0.0, %v1017
        %1019 = vmatmul.bf16.gmra.mxu0 %v782
        %v1020 = vpop.f32.mrf.mxu0
        %v1021 = vadd.f32 0.0, %v1020
        %v1022 = vpop.f32.mrf.mxu0
        %v1023 = vadd.f32 0.0, %v1022
        %1024 = vmatmul.bf16.gmra.mxu0 %v786
        %v1025 = vpop.f32.mrf.mxu0
        %v1026 = vadd.f32 0.0, %v1025
        %v1027 = vpop.f32.mrf.mxu0
        %v1028 = vadd.f32 0.0, %v1027
        %1029 = vmatmul.bf16.gmra.mxu0 %v790
        %v1030 = vpop.f32.mrf.mxu0
        %v1031 = vadd.f32 0.0, %v1030
        %v1032 = vpop.f32.mrf.mxu0
        %v1033 = vadd.f32 0.0, %v1032
        %1034 = vmatmul.bf16.gmra.mxu0 %v794
        %v1035 = vpop.f32.mrf.mxu0
        %v1036 = vadd.f32 0.0, %v1035
        %v1037 = vpop.f32.mrf.mxu0
        %v1038 = vadd.f32 0.0, %v1037
        %1039 = vmatmul.bf16.gmra.mxu0 %v798
        %v1040 = vpop.f32.mrf.mxu0
        %v1041 = vadd.f32 0.0, %v1040
        %v1042 = vpop.f32.mrf.mxu0
        %v1043 = vadd.f32 0.0, %v1042
        %1044 = vmatmul.bf16.gmra.mxu0 %v802
        %v1045 = vpop.f32.mrf.mxu0
        %v1046 = vadd.f32 0.0, %v1045
        %v1047 = vpop.f32.mrf.mxu0
        %v1048 = vadd.f32 0.0, %v1047
        %1049 = vmatmul.bf16.gmra.mxu0 %v806
        %v1050 = vpop.f32.mrf.mxu0
        %v1051 = vadd.f32 0.0, %v1050
        %v1052 = vpop.f32.mrf.mxu0
        %v1053 = vadd.f32 0.0, %v1052
        %1054 = vmatmul.bf16.gmra.mxu0 %v810
        %v1055 = vpop.f32.mrf.mxu0
        %v1056 = vadd.f32 0.0, %v1055
        %v1057 = vpop.f32.mrf.mxu0
        %v1058 = vadd.f32 0.0, %v1057
        %1059 = vmatmul.bf16.gmra.mxu0 %v814
        %v1060 = vpop.f32.mrf.mxu0
        %v1061 = vadd.f32 0.0, %v1060
        %v1062 = vpop.f32.mrf.mxu0
        %v1063 = vadd.f32 0.0, %v1062
        %1064 = vmatmul.bf16.gmra.mxu0 %v813
        %v1065 = vpop.f32.mrf.mxu0
        %v1066 = vadd.f32 0.0, %v1065
        %v1067 = vpop.f32.mrf.mxu0
        %1068 = vdwg.mxu0
        %1069 = vmatpush.bf16.msra.mxu0 %v967
        %1070 = vmatpush.bf16.msra.mxu0 %v965
        %1071 = vmatpush.bf16.msra.mxu0 %v963
        %1072 = vmatpush.bf16.msra.mxu0 %v961
        %1073 = vmatpush.bf16.msra.mxu0 %v959
        %1074 = vmatpush.bf16.msra.mxu0 %v957
        %1075 = vmatpush.bf16.msra.mxu0 %v955
        %1076 = vmatpush.bf16.msra.mxu0 %v953
        %1077 = vmatmul.bf16.gmra.mxu0 %v776
        %v1078 = vpop.f32.mrf.mxu0
        %v1079 = vadd.f32 %v1011, %v1078
        %v1080 = vpop.f32.mrf.mxu0
        %v1081 = vadd.f32 %v1013, %v1080
        %1082 = vmatmul.bf16.gmra.mxu0 %v780
        %v1083 = vpop.f32.mrf.mxu0
        %v1084 = vadd.f32 %v1016, %v1083
        %v1085 = vpop.f32.mrf.mxu0
        %v1086 = vadd.f32 %v1018, %v1085
        %1087 = vmatmul.bf16.gmra.mxu0 %v784
        %v1088 = vpop.f32.mrf.mxu0
        %v1089 = vadd.f32 %v1021, %v1088
        %v1090 = vpop.f32.mrf.mxu0
        %v1091 = vadd.f32 %v1023, %v1090
        %1092 = vmatmul.bf16.gmra.mxu0 %v788
        %v1093 = vpop.f32.mrf.mxu0
        %v1094 = vadd.f32 %v1026, %v1093
        %v1095 = vpop.f32.mrf.mxu0
        %v1096 = vadd.f32 %v1028, %v1095
        %1097 = vmatmul.bf16.gmra.mxu0 %v792
        %v1098 = vpop.f32.mrf.mxu0
        %v1099 = vadd.f32 %v1031, %v1098
        %v1100 = vpop.f32.mrf.mxu0
        %v1101 = vadd.f32 %v1033, %v1100
        %1102 = vmatmul.bf16.gmra.mxu0 %v796
        %v1103 = vpop.f32.mrf.mxu0
        %v1104 = vadd.f32 %v1036, %v1103
        %v1105 = vpop.f32.mrf.mxu0
        %v1106 = vadd.f32 %v1038, %v1105
        %1107 = vmatmul.bf16.gmra.mxu0 %v800
        %v1108 = vpop.f32.mrf.mxu0
        %v1109 = vadd.f32 %v1041, %v1108
        %v1110 = vpop.f32.mrf.mxu0
        %v1111 = vadd.f32 %v1043, %v1110
        %1112 = vmatmul.bf16.gmra.mxu0 %v804
        %v1113 = vpop.f32.mrf.mxu0
        %v1114 = vadd.f32 %v1046, %v1113
        %v1115 = vpop.f32.mrf.mxu0
        %v1116 = vadd.f32 %v1048, %v1115
        %1117 = vmatmul.bf16.gmra.mxu0 %v808
        %v1118 = vpop.f32.mrf.mxu0
        %v1119 = vadd.f32 %v1051, %v1118
        %v1120 = vpop.f32.mrf.mxu0
        %v1121 = vadd.f32 %v1053, %v1120
        %1122 = vmatmul.bf16.gmra.mxu0 %v812
        %v1123 = vpop.f32.mrf.mxu0
        %v1124 = vadd.f32 %v1056, %v1123
        %v1125 = vpop.f32.mrf.mxu0
        %v1126 = vadd.f32 %v1058, %v1125
        %1127 = vmatmul.bf16.gmra.mxu0 %v816
        %v1128 = vpop.f32.mrf.mxu0
        %v1129 = vadd.f32 %v1061, %v1128
        %v1130 = vpop.f32.mrf.mxu0
        %v1131 = vadd.f32 %v1063, %v1130
        %1132 = vmatmul.bf16.gmra.mxu0 %v815
        %v1133 = vpop.f32.mrf.mxu0
        %v1134 = vadd.f32 %v1066, %v1133
        %v1135 = vpop.f32.mrf.mxu0
        %1136 = vdwg.mxu0
        %1137 = vmatpush.bf16.msra.mxu0 %v952
        %1138 = vmatpush.bf16.msra.mxu0 %v950
        %1139 = vmatpush.bf16.msra.mxu0 %v948
        %1140 = vmatpush.bf16.msra.mxu0 %v946
        %1141 = vmatpush.bf16.msra.mxu0 %v944
        %1142 = vmatpush.bf16.msra.mxu0 %v942
        %1143 = vmatpush.bf16.msra.mxu0 %v940
        %1144 = vmatpush.bf16.msra.mxu0 %v938
        %1145 = vmatmul.bf16.gmra.mxu0 %v773
        %v1146 = vpop.f32.mrf.mxu0
        %v1147 = vadd.f32 0.0, %v1146
        %v1148 = vpop.f32.mrf.mxu0
        %v1149 = vadd.f32 0.0, %v1148
        %1150 = vmatmul.bf16.gmra.mxu0 %v778
        %v1151 = vpop.f32.mrf.mxu0
        %v1152 = vadd.f32 0.0, %v1151
        %v1153 = vpop.f32.mrf.mxu0
        %v1154 = vadd.f32 0.0, %v1153
        %1155 = vmatmul.bf16.gmra.mxu0 %v782
        %v1156 = vpop.f32.mrf.mxu0
        %v1157 = vadd.f32 0.0, %v1156
        %v1158 = vpop.f32.mrf.mxu0
        %v1159 = vadd.f32 0.0, %v1158
        %1160 = vmatmul.bf16.gmra.mxu0 %v786
        %v1161 = vpop.f32.mrf.mxu0
        %v1162 = vadd.f32 0.0, %v1161
        %v1163 = vpop.f32.mrf.mxu0
        %v1164 = vadd.f32 0.0, %v1163
        %1165 = vmatmul.bf16.gmra.mxu0 %v790
        %v1166 = vpop.f32.mrf.mxu0
        %v1167 = vadd.f32 0.0, %v1166
        %v1168 = vpop.f32.mrf.mxu0
        %v1169 = vadd.f32 0.0, %v1168
        %1170 = vmatmul.bf16.gmra.mxu0 %v794
        %v1171 = vpop.f32.mrf.mxu0
        %v1172 = vadd.f32 0.0, %v1171
        %v1173 = vpop.f32.mrf.mxu0
        %v1174 = vadd.f32 0.0, %v1173
        %1175 = vmatmul.bf16.gmra.mxu0 %v798
        %v1176 = vpop.f32.mrf.mxu0
        %v1177 = vadd.f32 0.0, %v1176
        %v1178 = vpop.f32.mrf.mxu0
        %v1179 = vadd.f32 0.0, %v1178
        %1180 = vmatmul.bf16.gmra.mxu0 %v802
        %v1181 = vpop.f32.mrf.mxu0
        %v1182 = vadd.f32 0.0, %v1181
        %v1183 = vpop.f32.mrf.mxu0
        %v1184 = vadd.f32 0.0, %v1183
        %1185 = vmatmul.bf16.gmra.mxu0 %v806
        %v1186 = vpop.f32.mrf.mxu0
        %v1187 = vadd.f32 0.0, %v1186
        %v1188 = vpop.f32.mrf.mxu0
        %v1189 = vadd.f32 0.0, %v1188
        %1190 = vmatmul.bf16.gmra.mxu0 %v810
        %v1191 = vpop.f32.mrf.mxu0
        %v1192 = vadd.f32 0.0, %v1191
        %v1193 = vpop.f32.mrf.mxu0
        %v1194 = vadd.f32 0.0, %v1193
        %1195 = vmatmul.bf16.gmra.mxu0 %v814
        %v1196 = vpop.f32.mrf.mxu0
        %v1197 = vadd.f32 0.0, %v1196
        %v1198 = vpop.f32.mrf.mxu0
        %v1199 = vadd.f32 0.0, %v1198
        %1200 = vmatmul.bf16.gmra.mxu0 %v813
        %v1201 = vpop.f32.mrf.mxu0
        %v1202 = vadd.f32 0.0, %v1201
        %v1203 = vpop.f32.mrf.mxu0
        %1204 = vdwg.mxu0
        %1205 = vmatpush.bf16.msra.mxu0 %v968
        %1206 = vmatpush.bf16.msra.mxu0 %v966
        %1207 = vmatpush.bf16.msra.mxu0 %v964
        %1208 = vmatpush.bf16.msra.mxu0 %v962
        %1209 = vmatpush.bf16.msra.mxu0 %v960
        %1210 = vmatpush.bf16.msra.mxu0 %v958
        %1211 = vmatpush.bf16.msra.mxu0 %v956
        %1212 = vmatpush.bf16.msra.mxu0 %v954
        %1213 = vmatmul.bf16.gmra.mxu0 %v776
        %v1214 = vpop.f32.mrf.mxu0
        %v1215 = vadd.f32 %v1147, %v1214
        %v1216 = vpop.f32.mrf.mxu0
        %v1217 = vadd.f32 %v1149, %v1216
        %1218 = vmatmul.bf16.gmra.mxu0 %v780
        %v1219 = vpop.f32.mrf.mxu0
        %v1220 = vadd.f32 %v1152, %v1219
        %v1221 = vpop.f32.mrf.mxu0
        %v1222 = vadd.f32 %v1154, %v1221
        %1223 = vmatmul.bf16.gmra.mxu0 %v784
        %v1224 = vpop.f32.mrf.mxu0
        %v1225 = vadd.f32 %v1157, %v1224
        %v1226 = vpop.f32.mrf.mxu0
        %v1227 = vadd.f32 %v1159, %v1226
        %1228 = vmatmul.bf16.gmra.mxu0 %v788
        %v1229 = vpop.f32.mrf.mxu0
        %v1230 = vadd.f32 %v1162, %v1229
        %v1231 = vpop.f32.mrf.mxu0
        %v1232 = vadd.f32 %v1164, %v1231
        %1233 = vmatmul.bf16.gmra.mxu0 %v792
        %v1234 = vpop.f32.mrf.mxu0
        %v1235 = vadd.f32 %v1167, %v1234
        %v1236 = vpop.f32.mrf.mxu0
        %v1237 = vadd.f32 %v1169, %v1236
        %1238 = vmatmul.bf16.gmra.mxu0 %v796
        %v1239 = vpop.f32.mrf.mxu0
        %v1240 = vadd.f32 %v1172, %v1239
        %v1241 = vpop.f32.mrf.mxu0
        %v1242 = vadd.f32 %v1174, %v1241
        %1243 = vmatmul.bf16.gmra.mxu0 %v800
        %v1244 = vpop.f32.mrf.mxu0
        %v1245 = vadd.f32 %v1177, %v1244
        %v1246 = vpop.f32.mrf.mxu0
        %v1247 = vadd.f32 %v1179, %v1246
        %1248 = vmatmul.bf16.gmra.mxu0 %v804
        %v1249 = vpop.f32.mrf.mxu0
        %v1250 = vadd.f32 %v1182, %v1249
        %v1251 = vpop.f32.mrf.mxu0
        %v1252 = vadd.f32 %v1184, %v1251
        %1253 = vmatmul.bf16.gmra.mxu0 %v808
        %v1254 = vpop.f32.mrf.mxu0
        %v1255 = vadd.f32 %v1187, %v1254
        %v1256 = vpop.f32.mrf.mxu0
        %v1257 = vadd.f32 %v1189, %v1256
        %1258 = vmatmul.bf16.gmra.mxu0 %v812
        %v1259 = vpop.f32.mrf.mxu0
        %v1260 = vadd.f32 %v1192, %v1259
        %v1261 = vpop.f32.mrf.mxu0
        %v1262 = vadd.f32 %v1194, %v1261
        %1263 = vmatmul.bf16.gmra.mxu0 %v816
        %v1264 = vpop.f32.mrf.mxu0
        %v1265 = vadd.f32 %v1197, %v1264
        %v1266 = vpop.f32.mrf.mxu0
        %v1267 = vadd.f32 %v1199, %v1266
        %1268 = vmatmul.bf16.gmra.mxu0 %v815
        %v1269 = vpop.f32.mrf.mxu0
        %v1270 = vadd.f32 %v1202, %v1269
        %v1271 = vpop.f32.mrf.mxu0
        %1272 = vdwg.mxu0
        %vm1273 = vsmask.f32 5376
        %v1275 = vshrl.u32 %v650, 16
        %v1277 = vrot.slane %v1275, 2
        %v1278 = vshll.u32 %v650, 16
        %v1280 = vrot.slane %v1278, 3
        %v1281 = vor.u32 %v1277, %v1280
        %v1283 = vshrl.u32 %v652, 16
        %v1285 = vrot.slane %v1283, 2
        %v1286 = vshll.u32 %v652, 16
        %v1288 = vrot.slane %v1286, 3
        %v1289 = vor.u32 %v1285, %v1288
        %v1290 = vsel %vm1273, %v1281, %v1289
        %v1292 = vshrl.u32 %v651, 16
        %v1294 = vrot.slane %v1292, 2
        %v1295 = vshll.u32 %v651, 16
        %v1297 = vrot.slane %v1295, 3
        %v1298 = vor.u32 %v1294, %v1297
        %v1300 = vshrl.u32 %v653, 16
        %v1302 = vrot.slane %v1300, 2
        %v1303 = vshll.u32 %v653, 16
        %v1305 = vrot.slane %v1303, 3
        %v1306 = vor.u32 %v1302, %v1305
        %v1307 = vsel %vm1273, %v1298, %v1306
        %v1309 = vshrl.u32 %v654, 16
        %v1311 = vrot.slane %v1309, 2
        %v1312 = vshll.u32 %v654, 16
        %v1314 = vrot.slane %v1312, 3
        %v1315 = vor.u32 %v1311, %v1314
        %v1316 = vsel %vm1273, %v1289, %v1315
        %v1318 = vshrl.u32 %v655, 16
        %v1320 = vrot.slane %v1318, 2
        %v1321 = vshll.u32 %v655, 16
        %v1323 = vrot.slane %v1321, 3
        %v1324 = vor.u32 %v1320, %v1323
        %v1325 = vsel %vm1273, %v1306, %v1324
        %v1327 = vshrl.u32 %v656, 16
        %v1329 = vrot.slane %v1327, 2
        %v1330 = vshll.u32 %v656, 16
        %v1332 = vrot.slane %v1330, 3
        %v1333 = vor.u32 %v1329, %v1332
        %v1334 = vsel %vm1273, %v1315, %v1333
        %v1336 = vshrl.u32 %v657, 16
        %v1338 = vrot.slane %v1336, 2
        %v1339 = vshll.u32 %v657, 16
        %v1341 = vrot.slane %v1339, 3
        %v1342 = vor.u32 %v1338, %v1341
        %v1343 = vsel %vm1273, %v1324, %v1342
        %v1345 = vshrl.u32 %v658, 16
        %v1347 = vrot.slane %v1345, 2
        %v1348 = vshll.u32 %v658, 16
        %v1350 = vrot.slane %v1348, 3
        %v1351 = vor.u32 %v1347, %v1350
        %v1352 = vsel %vm1273, %v1333, %v1351
        %v1354 = vshrl.u32 %v659, 16
        %v1356 = vrot.slane %v1354, 2
        %v1357 = vshll.u32 %v659, 16
        %v1359 = vrot.slane %v1357, 3
        %v1360 = vor.u32 %v1356, %v1359
        %v1361 = vsel %vm1273, %v1342, %v1360
        %v1363 = vshrl.u32 %v660, 16
        %v1365 = vrot.slane %v1363, 2
        %v1366 = vshll.u32 %v660, 16
        %v1368 = vrot.slane %v1366, 3
        %v1369 = vor.u32 %v1365, %v1368
        %v1370 = vsel %vm1273, %v1351, %v1369
        %v1372 = vshrl.u32 %v661, 16
        %v1374 = vrot.slane %v1372, 2
        %v1375 = vshll.u32 %v661, 16
        %v1377 = vrot.slane %v1375, 3
        %v1378 = vor.u32 %v1374, %v1377
        %v1379 = vsel %vm1273, %v1360, %v1378
        %v1381 = vshrl.u32 %v662, 16
        %v1383 = vrot.slane %v1381, 2
        %v1384 = vshll.u32 %v662, 16
        %v1386 = vrot.slane %v1384, 3
        %v1387 = vor.u32 %v1383, %v1386
        %v1388 = vsel %vm1273, %v1369, %v1387
        %v1390 = vshrl.u32 %v663, 16
        %v1392 = vrot.slane %v1390, 2
        %v1393 = vshll.u32 %v663, 16
        %v1395 = vrot.slane %v1393, 3
        %v1396 = vor.u32 %v1392, %v1395
        %v1397 = vsel %vm1273, %v1378, %v1396
        %v1399 = vshrl.u32 %v664, 16
        %v1401 = vrot.slane %v1399, 2
        %v1402 = vshll.u32 %v664, 16
        %v1404 = vrot.slane %v1402, 3
        %v1405 = vor.u32 %v1401, %v1404
        %v1406 = vsel %vm1273, %v1387, %v1405
        %v1408 = vshrl.u32 %v665, 16
        %v1410 = vrot.slane %v1408, 2
        %v1411 = vshll.u32 %v665, 16
        %v1413 = vrot.slane %v1411, 3
        %v1414 = vor.u32 %v1410, %v1413
        %v1415 = vsel %vm1273, %v1396, %v1414
        %v1417 = vshrl.u32 %v666, 16
        %v1419 = vrot.slane %v1417, 2
        %v1420 = vshll.u32 %v666, 16
        %v1422 = vrot.slane %v1420, 3
        %v1423 = vor.u32 %v1419, %v1422
        %v1424 = vsel %vm1273, %v1405, %v1423
        %v1426 = vshrl.u32 %v667, 16
        %v1428 = vrot.slane %v1426, 2
        %v1429 = vshll.u32 %v667, 16
        %v1431 = vrot.slane %v1429, 3
        %v1432 = vor.u32 %v1428, %v1431
        %v1433 = vsel %vm1273, %v1414, %v1432
        %v1435 = vshrl.u32 %v668, 16
        %v1437 = vrot.slane %v1435, 2
        %v1438 = vshll.u32 %v668, 16
        %v1440 = vrot.slane %v1438, 3
        %v1441 = vor.u32 %v1437, %v1440
        %v1442 = vsel %vm1273, %v1423, %v1441
        %v1444 = vshrl.u32 %v669, 16
        %v1446 = vrot.slane %v1444, 2
        %v1447 = vshll.u32 %v669, 16
        %v1449 = vrot.slane %v1447, 3
        %v1450 = vor.u32 %v1446, %v1449
        %v1451 = vsel %vm1273, %v1432, %v1450
        %v1453 = vshrl.u32 %v670, 16
        %v1455 = vrot.slane %v1453, 2
        %v1456 = vshll.u32 %v670, 16
        %v1458 = vrot.slane %v1456, 3
        %v1459 = vor.u32 %v1455, %v1458
        %v1460 = vsel %vm1273, %v1441, %v1459
        %v1462 = vshrl.u32 %v671, 16
        %v1464 = vrot.slane %v1462, 2
        %v1465 = vshll.u32 %v671, 16
        %v1467 = vrot.slane %v1465, 3
        %v1468 = vor.u32 %v1464, %v1467
        %v1469 = vsel %vm1273, %v1450, %v1468
        %v1471 = vshrl.u32 %v672, 16
        %v1473 = vrot.slane %v1471, 2
        %v1474 = vshll.u32 %v672, 16
        %v1476 = vrot.slane %v1474, 3
        %v1477 = vor.u32 %v1473, %v1476
        %v1478 = vsel %vm1273, %v1459, %v1477
        %v1480 = vshrl.u32 %v673, 16
        %v1482 = vrot.slane %v1480, 2
        %v1483 = vshll.u32 %v673, 16
        %v1485 = vrot.slane %v1483, 3
        %v1486 = vor.u32 %v1482, %v1485
        %v1487 = vsel %vm1273, %v1468, %v1486
        %v1544 = vunpack.c.l.b16 %v674
        %v1545 = vunpack.c.h.b16 %v674
        %v1546 = vunpack.c.l.b16 %v675
        %v1547 = vunpack.c.h.b16 %v675
        %v1548 = vunpack.c.l.b16 %v676
        %v1549 = vunpack.c.h.b16 %v676
        %v1550 = vunpack.c.l.b16 %v677
        %v1551 = vunpack.c.h.b16 %v677
        %v1552 = vunpack.c.l.b16 %v678
        %v1553 = vunpack.c.h.b16 %v678
        %v1554 = vunpack.c.l.b16 %v679
        %v1555 = vunpack.c.h.b16 %v679
        %v1556 = vunpack.c.l.b16 %v680
        %v1557 = vunpack.c.h.b16 %v680
        %v1558 = vunpack.c.l.b16 %v681
        %v1559 = vunpack.c.h.b16 %v681
        %v1560 = vunpack.c.l.b16 %v682
        %v1561 = vunpack.c.h.b16 %v682
        %v1562 = vunpack.c.l.b16 %v683
        %v1563 = vunpack.c.h.b16 %v683
        %v1564 = vunpack.c.l.b16 %v684
        %v1565 = vunpack.c.h.b16 %v684
        %v1566 = vunpack.c.l.b16 %v685
        %v1567 = vunpack.c.h.b16 %v685
        %v1568 = vunpack.c.l.b16 %v686
        %v1569 = vunpack.c.h.b16 %v686
        %v1570 = vunpack.c.l.b16 %v687
        %v1571 = vunpack.c.h.b16 %v687
        %v1572 = vunpack.c.l.b16 %v688
        %v1573 = vunpack.c.h.b16 %v688
        %v1574 = vunpack.c.l.b16 %v689
        %v1575 = vunpack.c.h.b16 %v689
        %v1576 = vunpack.c.l.b16 %v690
        %v1577 = vunpack.c.h.b16 %v690
        %v1578 = vunpack.c.l.b16 %v691
        %v1579 = vunpack.c.h.b16 %v691
        %v1580 = vunpack.c.l.b16 %v692
        %v1581 = vunpack.c.h.b16 %v692
        %v1582 = vunpack.c.l.b16 %v693
        %v1583 = vunpack.c.h.b16 %v693
        %v1584 = vunpack.c.l.b16 %v694
        %v1585 = vunpack.c.h.b16 %v694
        %v1586 = vunpack.c.l.b16 %v695
        %v1587 = vunpack.c.h.b16 %v695
        %v1588 = vunpack.c.l.b16 %v696
        %v1589 = vunpack.c.h.b16 %v696
        %v1590 = vunpack.c.l.b16 %v697
        %v1591 = vunpack.c.h.b16 %v697
        %v1592 = vunpack.c.l.b16 %v698
        %v1593 = vunpack.c.h.b16 %v698
        %v1594 = vunpack.c.l.b16 %v699
        %v1595 = vunpack.c.h.b16 %v699
        %v1596 = vunpack.c.l.b16 %v700
        %v1597 = vunpack.c.h.b16 %v700
        %v1598 = vunpack.c.l.b16 %v701
        %v1599 = vunpack.c.h.b16 %v701
        %v1600 = vunpack.c.l.b16 %v702
        %v1601 = vunpack.c.h.b16 %v702
        %v1602 = vunpack.c.l.b16 %v703
        %v1603 = vunpack.c.h.b16 %v703
        %v1604 = vunpack.c.l.b16 %v704
        %v1605 = vunpack.c.h.b16 %v704
        %v1606 = vunpack.c.l.b16 %v705
        %v1607 = vunpack.c.h.b16 %v705
        %v1608 = vpack.c.b16 %v1546, %v1544
        %v1609 = vpack.c.b16 %v1547, %v1545
        %v1610 = vpack.c.b16 %v1550, %v1548
        %v1611 = vpack.c.b16 %v1551, %v1549
        %v1612 = vpack.c.b16 %v1554, %v1552
        %v1613 = vpack.c.b16 %v1555, %v1553
        %v1614 = vpack.c.b16 %v1558, %v1556
        %v1615 = vpack.c.b16 %v1559, %v1557
        %v1616 = vpack.c.b16 %v1562, %v1560
        %v1617 = vpack.c.b16 %v1563, %v1561
        %v1618 = vpack.c.b16 %v1566, %v1564
        %v1619 = vpack.c.b16 %v1567, %v1565
        %v1620 = vpack.c.b16 %v1570, %v1568
        %v1621 = vpack.c.b16 %v1571, %v1569
        %v1622 = vpack.c.b16 %v1574, %v1572
        %v1623 = vpack.c.b16 %v1575, %v1573
        %v1624 = vpack.c.b16 %v1578, %v1576
        %v1625 = vpack.c.b16 %v1579, %v1577
        %v1626 = vpack.c.b16 %v1582, %v1580
        %v1627 = vpack.c.b16 %v1583, %v1581
        %v1628 = vpack.c.b16 %v1586, %v1584
        %v1629 = vpack.c.b16 %v1587, %v1585
        %v1630 = vpack.c.b16 %v1590, %v1588
        %v1631 = vpack.c.b16 %v1591, %v1589
        %v1632 = vpack.c.b16 %v1594, %v1592
        %v1633 = vpack.c.b16 %v1595, %v1593
        %v1634 = vpack.c.b16 %v1598, %v1596
        %v1635 = vpack.c.b16 %v1599, %v1597
        %v1636 = vpack.c.b16 %v1602, %v1600
        %v1637 = vpack.c.b16 %v1603, %v1601
        %v1638 = vpack.c.b16 %v1606, %v1604
        %v1639 = vpack.c.b16 %v1607, %v1605
        %1672 = vmatpush.bf16.msra.mxu0 %v1622
        %1673 = vmatpush.bf16.msra.mxu0 %v1620
        %1674 = vmatpush.bf16.msra.mxu0 %v1618
        %1675 = vmatpush.bf16.msra.mxu0 %v1616
        %1676 = vmatpush.bf16.msra.mxu0 %v1614
        %1677 = vmatpush.bf16.msra.mxu0 %v1612
        %1678 = vmatpush.bf16.msra.mxu0 %v1610
        %1679 = vmatpush.bf16.msra.mxu0 %v1608
        %1680 = vmatmul.bf16.gmra.mxu0 %v1290
        %v1681 = vpop.f32.mrf.mxu0
        %v1682 = vadd.f32 %v1079, %v1681
        %v1683 = vpop.f32.mrf.mxu0
        %v1684 = vadd.f32 %v1081, %v1683
        %1685 = vmatmul.bf16.gmra.mxu0 %v1316
        %v1686 = vpop.f32.mrf.mxu0
        %v1687 = vadd.f32 %v1084, %v1686
        %v1688 = vpop.f32.mrf.mxu0
        %v1689 = vadd.f32 %v1086, %v1688
        %1690 = vmatmul.bf16.gmra.mxu0 %v1334
        %v1691 = vpop.f32.mrf.mxu0
        %v1692 = vadd.f32 %v1089, %v1691
        %v1693 = vpop.f32.mrf.mxu0
        %v1694 = vadd.f32 %v1091, %v1693
        %1695 = vmatmul.bf16.gmra.mxu0 %v1352
        %v1696 = vpop.f32.mrf.mxu0
        %v1697 = vadd.f32 %v1094, %v1696
        %v1698 = vpop.f32.mrf.mxu0
        %v1699 = vadd.f32 %v1096, %v1698
        %1700 = vmatmul.bf16.gmra.mxu0 %v1370
        %v1701 = vpop.f32.mrf.mxu0
        %v1702 = vadd.f32 %v1099, %v1701
        %v1703 = vpop.f32.mrf.mxu0
        %v1704 = vadd.f32 %v1101, %v1703
        %1705 = vmatmul.bf16.gmra.mxu0 %v1388
        %v1706 = vpop.f32.mrf.mxu0
        %v1707 = vadd.f32 %v1104, %v1706
        %v1708 = vpop.f32.mrf.mxu0
        %v1709 = vadd.f32 %v1106, %v1708
        %1710 = vmatmul.bf16.gmra.mxu0 %v1406
        %v1711 = vpop.f32.mrf.mxu0
        %v1712 = vadd.f32 %v1109, %v1711
        %v1713 = vpop.f32.mrf.mxu0
        %v1714 = vadd.f32 %v1111, %v1713
        %1715 = vmatmul.bf16.gmra.mxu0 %v1424
        %v1716 = vpop.f32.mrf.mxu0
        %v1717 = vadd.f32 %v1114, %v1716
        %v1718 = vpop.f32.mrf.mxu0
        %v1719 = vadd.f32 %v1116, %v1718
        %1720 = vmatmul.bf16.gmra.mxu0 %v1442
        %v1721 = vpop.f32.mrf.mxu0
        %v1722 = vadd.f32 %v1119, %v1721
        %v1723 = vpop.f32.mrf.mxu0
        %v1724 = vadd.f32 %v1121, %v1723
        %1725 = vmatmul.bf16.gmra.mxu0 %v1460
        %v1726 = vpop.f32.mrf.mxu0
        %v1727 = vadd.f32 %v1124, %v1726
        %v1728 = vpop.f32.mrf.mxu0
        %v1729 = vadd.f32 %v1126, %v1728
        %1730 = vmatmul.bf16.gmra.mxu0 %v1478
        %v1731 = vpop.f32.mrf.mxu0
        %v1732 = vadd.f32 %v1129, %v1731
        %v1733 = vpop.f32.mrf.mxu0
        %v1734 = vadd.f32 %v1131, %v1733
        %1735 = vmatmul.bf16.gmra.mxu0 %v1477
        %v1736 = vpop.f32.mrf.mxu0
        %v1737 = vadd.f32 %v1134, %v1736
        %v1738 = vpop.f32.mrf.mxu0
        %1739 = vdwg.mxu0
        %1740 = vmatpush.bf16.msra.mxu0 %v1638
        %1741 = vmatpush.bf16.msra.mxu0 %v1636
        %1742 = vmatpush.bf16.msra.mxu0 %v1634
        %1743 = vmatpush.bf16.msra.mxu0 %v1632
        %1744 = vmatpush.bf16.msra.mxu0 %v1630
        %1745 = vmatpush.bf16.msra.mxu0 %v1628
        %1746 = vmatpush.bf16.msra.mxu0 %v1626
        %1747 = vmatpush.bf16.msra.mxu0 %v1624
        %1748 = vmatmul.bf16.gmra.mxu0 %v1307
        %v1749 = vpop.f32.mrf.mxu0
        %v1750 = vadd.f32 %v1682, %v1749
        %v1751 = vpop.f32.mrf.mxu0
        %v1752 = vadd.f32 %v1684, %v1751
        %1753 = vmatmul.bf16.gmra.mxu0 %v1325
        %v1754 = vpop.f32.mrf.mxu0
        %v1755 = vadd.f32 %v1687, %v1754
        %v1756 = vpop.f32.mrf.mxu0
        %v1757 = vadd.f32 %v1689, %v1756
        %1758 = vmatmul.bf16.gmra.mxu0 %v1343
        %v1759 = vpop.f32.mrf.mxu0
        %v1760 = vadd.f32 %v1692, %v1759
        %v1761 = vpop.f32.mrf.mxu0
        %v1762 = vadd.f32 %v1694, %v1761
        %1763 = vmatmul.bf16.gmra.mxu0 %v1361
        %v1764 = vpop.f32.mrf.mxu0
        %v1765 = vadd.f32 %v1697, %v1764
        %v1766 = vpop.f32.mrf.mxu0
        %v1767 = vadd.f32 %v1699, %v1766
        %1768 = vmatmul.bf16.gmra.mxu0 %v1379
        %v1769 = vpop.f32.mrf.mxu0
        %v1770 = vadd.f32 %v1702, %v1769
        %v1771 = vpop.f32.mrf.mxu0
        %v1772 = vadd.f32 %v1704, %v1771
        %1773 = vmatmul.bf16.gmra.mxu0 %v1397
        %v1774 = vpop.f32.mrf.mxu0
        %v1775 = vadd.f32 %v1707, %v1774
        %v1776 = vpop.f32.mrf.mxu0
        %v1777 = vadd.f32 %v1709, %v1776
        %1778 = vmatmul.bf16.gmra.mxu0 %v1415
        %v1779 = vpop.f32.mrf.mxu0
        %v1780 = vadd.f32 %v1712, %v1779
        %v1781 = vpop.f32.mrf.mxu0
        %v1782 = vadd.f32 %v1714, %v1781
        %1783 = vmatmul.bf16.gmra.mxu0 %v1433
        %v1784 = vpop.f32.mrf.mxu0
        %v1785 = vadd.f32 %v1717, %v1784
        %v1786 = vpop.f32.mrf.mxu0
        %v1787 = vadd.f32 %v1719, %v1786
        %1788 = vmatmul.bf16.gmra.mxu0 %v1451
        %v1789 = vpop.f32.mrf.mxu0
        %v1790 = vadd.f32 %v1722, %v1789
        %v1791 = vpop.f32.mrf.mxu0
        %v1792 = vadd.f32 %v1724, %v1791
        %1793 = vmatmul.bf16.gmra.mxu0 %v1469
        %v1794 = vpop.f32.mrf.mxu0
        %v1795 = vadd.f32 %v1727, %v1794
        %v1796 = vpop.f32.mrf.mxu0
        %v1797 = vadd.f32 %v1729, %v1796
        %1798 = vmatmul.bf16.gmra.mxu0 %v1487
        %v1799 = vpop.f32.mrf.mxu0
        %v1800 = vadd.f32 %v1732, %v1799
        %v1801 = vpop.f32.mrf.mxu0
        %v1802 = vadd.f32 %v1734, %v1801
        %1803 = vmatmul.bf16.gmra.mxu0 %v1486
        %v1804 = vpop.f32.mrf.mxu0
        %v1805 = vadd.f32 %v1737, %v1804
        %v1806 = vpop.f32.mrf.mxu0
        %1807 = vdwg.mxu0
        %1808 = vmatpush.bf16.msra.mxu0 %v1623
        %1809 = vmatpush.bf16.msra.mxu0 %v1621
        %1810 = vmatpush.bf16.msra.mxu0 %v1619
        %1811 = vmatpush.bf16.msra.mxu0 %v1617
        %1812 = vmatpush.bf16.msra.mxu0 %v1615
        %1813 = vmatpush.bf16.msra.mxu0 %v1613
        %1814 = vmatpush.bf16.msra.mxu0 %v1611
        %1815 = vmatpush.bf16.msra.mxu0 %v1609
        %1816 = vmatmul.bf16.gmra.mxu0 %v1290
        %v1817 = vpop.f32.mrf.mxu0
        %v1818 = vadd.f32 %v1215, %v1817
        %v1819 = vpop.f32.mrf.mxu0
        %v1820 = vadd.f32 %v1217, %v1819
        %1821 = vmatmul.bf16.gmra.mxu0 %v1316
        %v1822 = vpop.f32.mrf.mxu0
        %v1823 = vadd.f32 %v1220, %v1822
        %v1824 = vpop.f32.mrf.mxu0
        %v1825 = vadd.f32 %v1222, %v1824
        %1826 = vmatmul.bf16.gmra.mxu0 %v1334
        %v1827 = vpop.f32.mrf.mxu0
        %v1828 = vadd.f32 %v1225, %v1827
        %v1829 = vpop.f32.mrf.mxu0
        %v1830 = vadd.f32 %v1227, %v1829
        %1831 = vmatmul.bf16.gmra.mxu0 %v1352
        %v1832 = vpop.f32.mrf.mxu0
        %v1833 = vadd.f32 %v1230, %v1832
        %v1834 = vpop.f32.mrf.mxu0
        %v1835 = vadd.f32 %v1232, %v1834
        %1836 = vmatmul.bf16.gmra.mxu0 %v1370
        %v1837 = vpop.f32.mrf.mxu0
        %v1838 = vadd.f32 %v1235, %v1837
        %v1839 = vpop.f32.mrf.mxu0
        %v1840 = vadd.f32 %v1237, %v1839
        %1841 = vmatmul.bf16.gmra.mxu0 %v1388
        %v1842 = vpop.f32.mrf.mxu0
        %v1843 = vadd.f32 %v1240, %v1842
        %v1844 = vpop.f32.mrf.mxu0
        %v1845 = vadd.f32 %v1242, %v1844
        %1846 = vmatmul.bf16.gmra.mxu0 %v1406
        %v1847 = vpop.f32.mrf.mxu0
        %v1848 = vadd.f32 %v1245, %v1847
        %v1849 = vpop.f32.mrf.mxu0
        %v1850 = vadd.f32 %v1247, %v1849
        %1851 = vmatmul.bf16.gmra.mxu0 %v1424
        %v1852 = vpop.f32.mrf.mxu0
        %v1853 = vadd.f32 %v1250, %v1852
        %v1854 = vpop.f32.mrf.mxu0
        %v1855 = vadd.f32 %v1252, %v1854
        %1856 = vmatmul.bf16.gmra.mxu0 %v1442
        %v1857 = vpop.f32.mrf.mxu0
        %v1858 = vadd.f32 %v1255, %v1857
        %v1859 = vpop.f32.mrf.mxu0
        %v1860 = vadd.f32 %v1257, %v1859
        %1861 = vmatmul.bf16.gmra.mxu0 %v1460
        %v1862 = vpop.f32.mrf.mxu0
        %v1863 = vadd.f32 %v1260, %v1862
        %v1864 = vpop.f32.mrf.mxu0
        %v1865 = vadd.f32 %v1262, %v1864
        %1866 = vmatmul.bf16.gmra.mxu0 %v1478
        %v1867 = vpop.f32.mrf.mxu0
        %v1868 = vadd.f32 %v1265, %v1867
        %v1869 = vpop.f32.mrf.mxu0
        %v1870 = vadd.f32 %v1267, %v1869
        %1871 = vmatmul.bf16.gmra.mxu0 %v1477
        %v1872 = vpop.f32.mrf.mxu0
        %v1873 = vadd.f32 %v1270, %v1872
        %v1874 = vpop.f32.mrf.mxu0
        %1875 = vdwg.mxu0
        %1876 = vmatpush.bf16.msra.mxu0 %v1639
        %1877 = vmatpush.bf16.msra.mxu0 %v1637
        %1878 = vmatpush.bf16.msra.mxu0 %v1635
        %1879 = vmatpush.bf16.msra.mxu0 %v1633
        %1880 = vmatpush.bf16.msra.mxu0 %v1631
        %1881 = vmatpush.bf16.msra.mxu0 %v1629
        %1882 = vmatpush.bf16.msra.mxu0 %v1627
        %1883 = vmatpush.bf16.msra.mxu0 %v1625
        %1884 = vmatmul.bf16.gmra.mxu0 %v1307
        %v1885 = vpop.f32.mrf.mxu0
        %v1886 = vadd.f32 %v1818, %v1885
        %v1887 = vpop.f32.mrf.mxu0
        %v1888 = vadd.f32 %v1820, %v1887
        %1889 = vmatmul.bf16.gmra.mxu0 %v1325
        %v1890 = vpop.f32.mrf.mxu0
        %v1891 = vadd.f32 %v1823, %v1890
        %v1892 = vpop.f32.mrf.mxu0
        %v1893 = vadd.f32 %v1825, %v1892
        %1894 = vmatmul.bf16.gmra.mxu0 %v1343
        %v1895 = vpop.f32.mrf.mxu0
        %v1896 = vadd.f32 %v1828, %v1895
        %v1897 = vpop.f32.mrf.mxu0
        %v1898 = vadd.f32 %v1830, %v1897
        %1899 = vmatmul.bf16.gmra.mxu0 %v1361
        %v1900 = vpop.f32.mrf.mxu0
        %v1901 = vadd.f32 %v1833, %v1900
        %v1902 = vpop.f32.mrf.mxu0
        %v1903 = vadd.f32 %v1835, %v1902
        %1904 = vmatmul.bf16.gmra.mxu0 %v1379
        %v1905 = vpop.f32.mrf.mxu0
        %v1906 = vadd.f32 %v1838, %v1905
        %v1907 = vpop.f32.mrf.mxu0
        %v1908 = vadd.f32 %v1840, %v1907
        %1909 = vmatmul.bf16.gmra.mxu0 %v1397
        %v1910 = vpop.f32.mrf.mxu0
        %v1911 = vadd.f32 %v1843, %v1910
        %v1912 = vpop.f32.mrf.mxu0
        %v1913 = vadd.f32 %v1845, %v1912
        %1914 = vmatmul.bf16.gmra.mxu0 %v1415
        %v1915 = vpop.f32.mrf.mxu0
        %v1916 = vadd.f32 %v1848, %v1915
        %v1917 = vpop.f32.mrf.mxu0
        %v1918 = vadd.f32 %v1850, %v1917
        %1919 = vmatmul.bf16.gmra.mxu0 %v1433
        %v1920 = vpop.f32.mrf.mxu0
        %v1921 = vadd.f32 %v1853, %v1920
        %v1922 = vpop.f32.mrf.mxu0
        %v1923 = vadd.f32 %v1855, %v1922
        %1924 = vmatmul.bf16.gmra.mxu0 %v1451
        %v1925 = vpop.f32.mrf.mxu0
        %v1926 = vadd.f32 %v1858, %v1925
        %v1927 = vpop.f32.mrf.mxu0
        %v1928 = vadd.f32 %v1860, %v1927
        %1929 = vmatmul.bf16.gmra.mxu0 %v1469
        %v1930 = vpop.f32.mrf.mxu0
        %v1931 = vadd.f32 %v1863, %v1930
        %v1932 = vpop.f32.mrf.mxu0
        %v1933 = vadd.f32 %v1865, %v1932
        %1934 = vmatmul.bf16.gmra.mxu0 %v1487
        %v1935 = vpop.f32.mrf.mxu0
        %v1936 = vadd.f32 %v1868, %v1935
        %v1937 = vpop.f32.mrf.mxu0
        %v1938 = vadd.f32 %v1870, %v1937
        %1939 = vmatmul.bf16.gmra.mxu0 %v1486
        %v1940 = vpop.f32.mrf.mxu0
        %v1941 = vadd.f32 %v1873, %v1940
        %v1942 = vpop.f32.mrf.mxu0
        %1943 = vdwg.mxu0
        %v1944 = vld [vmem:[#allocation2] sm:$0x80]
        %v1945 = vld [vmem:[#allocation2 + $0x8] sm:$0x80]
        %v1946 = vld [vmem:[#allocation2 + $0x170] sm:$0x7f]
        %v1947 = vld [vmem:[#allocation2 + $0x178] sm:$0x7f]
        %v1948 = vpack.c.bf16 %v604, %v1944
        %v1949 = vpack.c.bf16 %v605, %v1945
        %v1950 = vpack.c.bf16 %v1946, %v646
        %v1951 = vpack.c.bf16 %v1947, %v647
        %v1952 = vld [vmem:[%s280 + $0x200] sm:$0xff]
        %v1953 = vld [vmem:[%s280 + $0x208] sm:$0xff]
        %v1954 = vld [vmem:[%s280 + $0x210] sm:$0xff]
        %v1955 = vld [vmem:[%s280 + $0x218] sm:$0xff]
        %v1956 = vld [vmem:[%s280 + $0x220] sm:$0xff]
        %v1957 = vld [vmem:[%s280 + $0x228] sm:$0xff]
        %v1958 = vld [vmem:[%s280 + $0x230] sm:$0xff]
        %v1959 = vld [vmem:[%s280 + $0x238] sm:$0xff]
        %v1960 = vld [vmem:[%s280 + $0x240] sm:$0xff]
        %v1961 = vld [vmem:[%s280 + $0x248] sm:$0xff]
        %v1962 = vld [vmem:[%s280 + $0x250] sm:$0xff]
        %v1963 = vld [vmem:[%s280 + $0x258] sm:$0xff]
        %v1964 = vld [vmem:[%s280 + $0x260] sm:$0xff]
        %v1965 = vld [vmem:[%s280 + $0x268] sm:$0xff]
        %v1966 = vld [vmem:[%s280 + $0x270] sm:$0xff]
        %v1967 = vld [vmem:[%s280 + $0x278] sm:$0xff]
        %v1968 = vld [vmem:[%s280 + $0x280] sm:$0xff]
        %v1969 = vld [vmem:[%s280 + $0x288] sm:$0xff]
        %v1970 = vld [vmem:[%s280 + $0x290] sm:$0xff]
        %v1971 = vld [vmem:[%s280 + $0x298] sm:$0xff]
        %v1972 = vld [vmem:[%s280 + $0x2a0] sm:$0xff]
        %v1973 = vld [vmem:[%s280 + $0x2a8] sm:$0xff]
        %v1974 = vld [vmem:[%s280 + $0x2b0] sm:$0xff]
        %v1975 = vld [vmem:[%s280 + $0x2b8] sm:$0xff]
        %v1976 = vld [vmem:[%s280 + $0x2c0] sm:$0xff]
        %v1977 = vld [vmem:[%s280 + $0x2c8] sm:$0xff]
        %v1978 = vld [vmem:[%s280 + $0x2d0] sm:$0xff]
        %v1979 = vld [vmem:[%s280 + $0x2d8] sm:$0xff]
        %v1980 = vld [vmem:[%s280 + $0x2e0] sm:$0xff]
        %v1981 = vld [vmem:[%s280 + $0x2e8] sm:$0xff]
        %v1982 = vld [vmem:[%s280 + $0x2f0] sm:$0xff]
        %v1983 = vld [vmem:[%s280 + $0x2f8] sm:$0xff]
        %vm1984 = vsmask.f32 4352
        %v1986 = vshrl.u32 %v1948, 16
        %v1988 = vrot.slane %v1986, 3
        %v1989 = vshll.u32 %v1948, 16
        %v1991 = vrot.slane %v1989, 4
        %v1992 = vor.u32 %v1988, %v1991
        %v1993 = vrot.slane %v1283, 3
        %v1994 = vrot.slane %v1286, 4
        %v1995 = vor.u32 %v1993, %v1994
        %v1996 = vsel %vm1984, %v1992, %v1995
        %v1998 = vshrl.u32 %v1949, 16
        %v2000 = vrot.slane %v1998, 3
        %v2001 = vshll.u32 %v1949, 16
        %v2003 = vrot.slane %v2001, 4
        %v2004 = vor.u32 %v2000, %v2003
        %v2005 = vrot.slane %v1300, 3
        %v2006 = vrot.slane %v1303, 4
        %v2007 = vor.u32 %v2005, %v2006
        %v2008 = vsel %vm1984, %v2004, %v2007
        %v2009 = vrot.slane %v1309, 3
        %v2010 = vrot.slane %v1312, 4
        %v2011 = vor.u32 %v2009, %v2010
        %v2012 = vsel %vm1984, %v1995, %v2011
        %v2013 = vrot.slane %v1318, 3
        %v2014 = vrot.slane %v1321, 4
        %v2015 = vor.u32 %v2013, %v2014
        %v2016 = vsel %vm1984, %v2007, %v2015
        %v2017 = vrot.slane %v1327, 3
        %v2018 = vrot.slane %v1330, 4
        %v2019 = vor.u32 %v2017, %v2018
        %v2020 = vsel %vm1984, %v2011, %v2019
        %v2021 = vrot.slane %v1336, 3
        %v2022 = vrot.slane %v1339, 4
        %v2023 = vor.u32 %v2021, %v2022
        %v2024 = vsel %vm1984, %v2015, %v2023
        %v2025 = vrot.slane %v1345, 3
        %v2026 = vrot.slane %v1348, 4
        %v2027 = vor.u32 %v2025, %v2026
        %v2028 = vsel %vm1984, %v2019, %v2027
        %v2029 = vrot.slane %v1354, 3
        %v2030 = vrot.slane %v1357, 4
        %v2031 = vor.u32 %v2029, %v2030
        %v2032 = vsel %vm1984, %v2023, %v2031
        %v2033 = vrot.slane %v1363, 3
        %v2034 = vrot.slane %v1366, 4
        %v2035 = vor.u32 %v2033, %v2034
        %v2036 = vsel %vm1984, %v2027, %v2035
        %v2037 = vrot.slane %v1372, 3
        %v2038 = vrot.slane %v1375, 4
        %v2039 = vor.u32 %v2037, %v2038
        %v2040 = vsel %vm1984, %v2031, %v2039
        %v2041 = vrot.slane %v1381, 3
        %v2042 = vrot.slane %v1384, 4
        %v2043 = vor.u32 %v2041, %v2042
        %v2044 = vsel %vm1984, %v2035, %v2043
        %v2045 = vrot.slane %v1390, 3
        %v2046 = vrot.slane %v1393, 4
        %v2047 = vor.u32 %v2045, %v2046
        %v2048 = vsel %vm1984, %v2039, %v2047
        %v2049 = vrot.slane %v1399, 3
        %v2050 = vrot.slane %v1402, 4
        %v2051 = vor.u32 %v2049, %v2050
        %v2052 = vsel %vm1984, %v2043, %v2051
        %v2053 = vrot.slane %v1408, 3
        %v2054 = vrot.slane %v1411, 4
        %v2055 = vor.u32 %v2053, %v2054
        %v2056 = vsel %vm1984, %v2047, %v2055
        %v2057 = vrot.slane %v1417, 3
        %v2058 = vrot.slane %v1420, 4
        %v2059 = vor.u32 %v2057, %v2058
        %v2060 = vsel %vm1984, %v2051, %v2059
        %v2061 = vrot.slane %v1426, 3
        %v2062 = vrot.slane %v1429, 4
        %v2063 = vor.u32 %v2061, %v2062
        %v2064 = vsel %vm1984, %v2055, %v2063
        %v2065 = vrot.slane %v1435, 3
        %v2066 = vrot.slane %v1438, 4
        %v2067 = vor.u32 %v2065, %v2066
        %v2068 = vsel %vm1984, %v2059, %v2067
        %v2069 = vrot.slane %v1444, 3
        %v2070 = vrot.slane %v1447, 4
        %v2071 = vor.u32 %v2069, %v2070
        %v2072 = vsel %vm1984, %v2063, %v2071
        %v2073 = vrot.slane %v1453, 3
        %v2074 = vrot.slane %v1456, 4
        %v2075 = vor.u32 %v2073, %v2074
        %v2076 = vsel %vm1984, %v2067, %v2075
        %v2077 = vrot.slane %v1462, 3
        %v2078 = vrot.slane %v1465, 4
        %v2079 = vor.u32 %v2077, %v2078
        %v2080 = vsel %vm1984, %v2071, %v2079
        %v2082 = vshrl.u32 %v1950, 16
        %v2084 = vrot.slane %v2082, 3
        %v2085 = vshll.u32 %v1950, 16
        %v2087 = vrot.slane %v2085, 4
        %v2088 = vor.u32 %v2084, %v2087
        %v2089 = vsel %vm1984, %v2075, %v2088
        %v2091 = vshrl.u32 %v1951, 16
        %v2093 = vrot.slane %v2091, 3
        %v2094 = vshll.u32 %v1951, 16
        %v2096 = vrot.slane %v2094, 4
        %v2097 = vor.u32 %v2093, %v2096
        %v2098 = vsel %vm1984, %v2079, %v2097
        %v2155 = vunpack.c.l.b16 %v1952
        %v2156 = vunpack.c.h.b16 %v1952
        %v2157 = vunpack.c.l.b16 %v1953
        %v2158 = vunpack.c.h.b16 %v1953
        %v2159 = vunpack.c.l.b16 %v1954
        %v2160 = vunpack.c.h.b16 %v1954
        %v2161 = vunpack.c.l.b16 %v1955
        %v2162 = vunpack.c.h.b16 %v1955
        %v2163 = vunpack.c.l.b16 %v1956
        %v2164 = vunpack.c.h.b16 %v1956
        %v2165 = vunpack.c.l.b16 %v1957
        %v2166 = vunpack.c.h.b16 %v1957
        %v2167 = vunpack.c.l.b16 %v1958
        %v2168 = vunpack.c.h.b16 %v1958
        %v2169 = vunpack.c.l.b16 %v1959
        %v2170 = vunpack.c.h.b16 %v1959
        %v2171 = vunpack.c.l.b16 %v1960
        %v2172 = vunpack.c.h.b16 %v1960
        %v2173 = vunpack.c.l.b16 %v1961
        %v2174 = vunpack.c.h.b16 %v1961
        %v2175 = vunpack.c.l.b16 %v1962
        %v2176 = vunpack.c.h.b16 %v1962
        %v2177 = vunpack.c.l.b16 %v1963
        %v2178 = vunpack.c.h.b16 %v1963
        %v2179 = vunpack.c.l.b16 %v1964
        %v2180 = vunpack.c.h.b16 %v1964
        %v2181 = vunpack.c.l.b16 %v1965
        %v2182 = vunpack.c.h.b16 %v1965
        %v2183 = vunpack.c.l.b16 %v1966
        %v2184 = vunpack.c.h.b16 %v1966
        %v2185 = vunpack.c.l.b16 %v1967
        %v2186 = vunpack.c.h.b16 %v1967
        %v2187 = vunpack.c.l.b16 %v1968
        %v2188 = vunpack.c.h.b16 %v1968
        %v2189 = vunpack.c.l.b16 %v1969
        %v2190 = vunpack.c.h.b16 %v1969
        %v2191 = vunpack.c.l.b16 %v1970
        %v2192 = vunpack.c.h.b16 %v1970
        %v2193 = vunpack.c.l.b16 %v1971
        %v2194 = vunpack.c.h.b16 %v1971
        %v2195 = vunpack.c.l.b16 %v1972
        %v2196 = vunpack.c.h.b16 %v1972
        %v2197 = vunpack.c.l.b16 %v1973
        %v2198 = vunpack.c.h.b16 %v1973
        %v2199 = vunpack.c.l.b16 %v1974
        %v2200 = vunpack.c.h.b16 %v1974
        %v2201 = vunpack.c.l.b16 %v1975
        %v2202 = vunpack.c.h.b16 %v1975
        %v2203 = vunpack.c.l.b16 %v1976
        %v2204 = vunpack.c.h.b16 %v1976
        %v2205 = vunpack.c.l.b16 %v1977
        %v2206 = vunpack.c.h.b16 %v1977
        %v2207 = vunpack.c.l.b16 %v1978
        %v2208 = vunpack.c.h.b16 %v1978
        %v2209 = vunpack.c.l.b16 %v1979
        %v2210 = vunpack.c.h.b16 %v1979
        %v2211 = vunpack.c.l.b16 %v1980
        %v2212 = vunpack.c.h.b16 %v1980
        %v2213 = vunpack.c.l.b16 %v1981
        %v2214 = vunpack.c.h.b16 %v1981
        %v2215 = vunpack.c.l.b16 %v1982
        %v2216 = vunpack.c.h.b16 %v1982
        %v2217 = vunpack.c.l.b16 %v1983
        %v2218 = vunpack.c.h.b16 %v1983
        %v2219 = vpack.c.b16 %v2157, %v2155
        %v2220 = vpack.c.b16 %v2158, %v2156
        %v2221 = vpack.c.b16 %v2161, %v2159
        %v2222 = vpack.c.b16 %v2162, %v2160
        %v2223 = vpack.c.b16 %v2165, %v2163
        %v2224 = vpack.c.b16 %v2166, %v2164
        %v2225 = vpack.c.b16 %v2169, %v2167
        %v2226 = vpack.c.b16 %v2170, %v2168
        %v2227 = vpack.c.b16 %v2173, %v2171
        %v2228 = vpack.c.b16 %v2174, %v2172
        %v2229 = vpack.c.b16 %v2177, %v2175
        %v2230 = vpack.c.b16 %v2178, %v2176
        %v2231 = vpack.c.b16 %v2181, %v2179
        %v2232 = vpack.c.b16 %v2182, %v2180
        %v2233 = vpack.c.b16 %v2185, %v2183
        %v2234 = vpack.c.b16 %v2186, %v2184
        %v2235 = vpack.c.b16 %v2189, %v2187
        %v2236 = vpack.c.b16 %v2190, %v2188
        %v2237 = vpack.c.b16 %v2193, %v2191
        %v2238 = vpack.c.b16 %v2194, %v2192
        %v2239 = vpack.c.b16 %v2197, %v2195
        %v2240 = vpack.c.b16 %v2198, %v2196
        %v2241 = vpack.c.b16 %v2201, %v2199
        %v2242 = vpack.c.b16 %v2202, %v2200
        %v2243 = vpack.c.b16 %v2205, %v2203
        %v2244 = vpack.c.b16 %v2206, %v2204
        %v2245 = vpack.c.b16 %v2209, %v2207
        %v2246 = vpack.c.b16 %v2210, %v2208
        %v2247 = vpack.c.b16 %v2213, %v2211
        %v2248 = vpack.c.b16 %v2214, %v2212
        %v2249 = vpack.c.b16 %v2217, %v2215
        %v2250 = vpack.c.b16 %v2218, %v2216
        %2283 = vmatpush.bf16.msra.mxu0 %v2233
        %2284 = vmatpush.bf16.msra.mxu0 %v2231
        %2285 = vmatpush.bf16.msra.mxu0 %v2229
        %2286 = vmatpush.bf16.msra.mxu0 %v2227
        %2287 = vmatpush.bf16.msra.mxu0 %v2225
        %2288 = vmatpush.bf16.msra.mxu0 %v2223
        %2289 = vmatpush.bf16.msra.mxu0 %v2221
        %2290 = vmatpush.bf16.msra.mxu0 %v2219
        %2291 = vmatmul.bf16.gmra.mxu0 %v1996
        %v2292 = vpop.f32.mrf.mxu0
        %v2293 = vadd.f32 0.0, %v2292
        %v2294 = vpop.f32.mrf.mxu0
        %v2295 = vadd.f32 0.0, %v2294
        %2296 = vmatmul.bf16.gmra.mxu0 %v2012
        %v2297 = vpop.f32.mrf.mxu0
        %v2298 = vadd.f32 0.0, %v2297
        %v2299 = vpop.f32.mrf.mxu0
        %v2300 = vadd.f32 0.0, %v2299
        %2301 = vmatmul.bf16.gmra.mxu0 %v2020
        %v2302 = vpop.f32.mrf.mxu0
        %v2303 = vadd.f32 0.0, %v2302
        %v2304 = vpop.f32.mrf.mxu0
        %v2305 = vadd.f32 0.0, %v2304
        %2306 = vmatmul.bf16.gmra.mxu0 %v2028
        %v2307 = vpop.f32.mrf.mxu0
        %v2308 = vadd.f32 0.0, %v2307
        %v2309 = vpop.f32.mrf.mxu0
        %v2310 = vadd.f32 0.0, %v2309
        %2311 = vmatmul.bf16.gmra.mxu0 %v2036
        %v2312 = vpop.f32.mrf.mxu0
        %v2313 = vadd.f32 0.0, %v2312
        %v2314 = vpop.f32.mrf.mxu0
        %v2315 = vadd.f32 0.0, %v2314
        %2316 = vmatmul.bf16.gmra.mxu0 %v2044
        %v2317 = vpop.f32.mrf.mxu0
        %v2318 = vadd.f32 0.0, %v2317
        %v2319 = vpop.f32.mrf.mxu0
        %v2320 = vadd.f32 0.0, %v2319
        %2321 = vmatmul.bf16.gmra.mxu0 %v2052
        %v2322 = vpop.f32.mrf.mxu0
        %v2323 = vadd.f32 0.0, %v2322
        %v2324 = vpop.f32.mrf.mxu0
        %v2325 = vadd.f32 0.0, %v2324
        %2326 = vmatmul.bf16.gmra.mxu0 %v2060
        %v2327 = vpop.f32.mrf.mxu0
        %v2328 = vadd.f32 0.0, %v2327
        %v2329 = vpop.f32.mrf.mxu0
        %v2330 = vadd.f32 0.0, %v2329
        %2331 = vmatmul.bf16.gmra.mxu0 %v2068
        %v2332 = vpop.f32.mrf.mxu0
        %v2333 = vadd.f32 0.0, %v2332
        %v2334 = vpop.f32.mrf.mxu0
        %v2335 = vadd.f32 0.0, %v2334
        %2336 = vmatmul.bf16.gmra.mxu0 %v2076
        %v2337 = vpop.f32.mrf.mxu0
        %v2338 = vadd.f32 0.0, %v2337
        %v2339 = vpop.f32.mrf.mxu0
        %v2340 = vadd.f32 0.0, %v2339
        %2341 = vmatmul.bf16.gmra.mxu0 %v2089
        %v2342 = vpop.f32.mrf.mxu0
        %v2343 = vadd.f32 0.0, %v2342
        %v2344 = vpop.f32.mrf.mxu0
        %v2345 = vadd.f32 0.0, %v2344
        %2346 = vmatmul.bf16.gmra.mxu0 %v2088
        %v2347 = vpop.f32.mrf.mxu0
        %v2348 = vadd.f32 0.0, %v2347
        %v2349 = vpop.f32.mrf.mxu0
        %2350 = vdwg.mxu0
        %2351 = vmatpush.bf16.msra.mxu0 %v2249
        %2352 = vmatpush.bf16.msra.mxu0 %v2247
        %2353 = vmatpush.bf16.msra.mxu0 %v2245
        %2354 = vmatpush.bf16.msra.mxu0 %v2243
        %2355 = vmatpush.bf16.msra.mxu0 %v2241
        %2356 = vmatpush.bf16.msra.mxu0 %v2239
        %2357 = vmatpush.bf16.msra.mxu0 %v2237
        %2358 = vmatpush.bf16.msra.mxu0 %v2235
        %2359 = vmatmul.bf16.gmra.mxu0 %v2008
        %v2360 = vpop.f32.mrf.mxu0
        %v2361 = vadd.f32 %v2293, %v2360
        %v2362 = vpop.f32.mrf.mxu0
        %v2363 = vadd.f32 %v2295, %v2362
        %2364 = vmatmul.bf16.gmra.mxu0 %v2016
        %v2365 = vpop.f32.mrf.mxu0
        %v2366 = vadd.f32 %v2298, %v2365
        %v2367 = vpop.f32.mrf.mxu0
        %v2368 = vadd.f32 %v2300, %v2367
        %2369 = vmatmul.bf16.gmra.mxu0 %v2024
        %v2370 = vpop.f32.mrf.mxu0
        %v2371 = vadd.f32 %v2303, %v2370
        %v2372 = vpop.f32.mrf.mxu0
        %v2373 = vadd.f32 %v2305, %v2372
        %2374 = vmatmul.bf16.gmra.mxu0 %v2032
        %v2375 = vpop.f32.mrf.mxu0
        %v2376 = vadd.f32 %v2308, %v2375
        %v2377 = vpop.f32.mrf.mxu0
        %v2378 = vadd.f32 %v2310, %v2377
        %2379 = vmatmul.bf16.gmra.mxu0 %v2040
        %v2380 = vpop.f32.mrf.mxu0
        %v2381 = vadd.f32 %v2313, %v2380
        %v2382 = vpop.f32.mrf.mxu0
        %v2383 = vadd.f32 %v2315, %v2382
        %2384 = vmatmul.bf16.gmra.mxu0 %v2048
        %v2385 = vpop.f32.mrf.mxu0
        %v2386 = vadd.f32 %v2318, %v2385
        %v2387 = vpop.f32.mrf.mxu0
        %v2388 = vadd.f32 %v2320, %v2387
        %2389 = vmatmul.bf16.gmra.mxu0 %v2056
        %v2390 = vpop.f32.mrf.mxu0
        %v2391 = vadd.f32 %v2323, %v2390
        %v2392 = vpop.f32.mrf.mxu0
        %v2393 = vadd.f32 %v2325, %v2392
        %2394 = vmatmul.bf16.gmra.mxu0 %v2064
        %v2395 = vpop.f32.mrf.mxu0
        %v2396 = vadd.f32 %v2328, %v2395
        %v2397 = vpop.f32.mrf.mxu0
        %v2398 = vadd.f32 %v2330, %v2397
        %2399 = vmatmul.bf16.gmra.mxu0 %v2072
        %v2400 = vpop.f32.mrf.mxu0
        %v2401 = vadd.f32 %v2333, %v2400
        %v2402 = vpop.f32.mrf.mxu0
        %v2403 = vadd.f32 %v2335, %v2402
        %2404 = vmatmul.bf16.gmra.mxu0 %v2080
        %v2405 = vpop.f32.mrf.mxu0
        %v2406 = vadd.f32 %v2338, %v2405
        %v2407 = vpop.f32.mrf.mxu0
        %v2408 = vadd.f32 %v2340, %v2407
        %2409 = vmatmul.bf16.gmra.mxu0 %v2098
        %v2410 = vpop.f32.mrf.mxu0
        %v2411 = vadd.f32 %v2343, %v2410
        %v2412 = vpop.f32.mrf.mxu0
        %v2413 = vadd.f32 %v2345, %v2412
        %2414 = vmatmul.bf16.gmra.mxu0 %v2097
        %v2415 = vpop.f32.mrf.mxu0
        %v2416 = vadd.f32 %v2348, %v2415
        %v2417 = vpop.f32.mrf.mxu0
        %2418 = vdwg.mxu0
        %2419 = vmatpush.bf16.msra.mxu0 %v2234
        %2420 = vmatpush.bf16.msra.mxu0 %v2232
        %2421 = vmatpush.bf16.msra.mxu0 %v2230
        %2422 = vmatpush.bf16.msra.mxu0 %v2228
        %2423 = vmatpush.bf16.msra.mxu0 %v2226
        %2424 = vmatpush.bf16.msra.mxu0 %v2224
        %2425 = vmatpush.bf16.msra.mxu0 %v2222
        %2426 = vmatpush.bf16.msra.mxu0 %v2220
        %2427 = vmatmul.bf16.gmra.mxu0 %v1996
        %v2428 = vpop.f32.mrf.mxu0
        %v2429 = vadd.f32 0.0, %v2428
        %v2430 = vpop.f32.mrf.mxu0
        %v2431 = vadd.f32 0.0, %v2430
        %2432 = vmatmul.bf16.gmra.mxu0 %v2012
        %v2433 = vpop.f32.mrf.mxu0
        %v2434 = vadd.f32 0.0, %v2433
        %v2435 = vpop.f32.mrf.mxu0
        %v2436 = vadd.f32 0.0, %v2435
        %2437 = vmatmul.bf16.gmra.mxu0 %v2020
        %v2438 = vpop.f32.mrf.mxu0
        %v2439 = vadd.f32 0.0, %v2438
        %v2440 = vpop.f32.mrf.mxu0
        %v2441 = vadd.f32 0.0, %v2440
        %2442 = vmatmul.bf16.gmra.mxu0 %v2028
        %v2443 = vpop.f32.mrf.mxu0
        %v2444 = vadd.f32 0.0, %v2443
        %v2445 = vpop.f32.mrf.mxu0
        %v2446 = vadd.f32 0.0, %v2445
        %2447 = vmatmul.bf16.gmra.mxu0 %v2036
        %v2448 = vpop.f32.mrf.mxu0
        %v2449 = vadd.f32 0.0, %v2448
        %v2450 = vpop.f32.mrf.mxu0
        %v2451 = vadd.f32 0.0, %v2450
        %2452 = vmatmul.bf16.gmra.mxu0 %v2044
        %v2453 = vpop.f32.mrf.mxu0
        %v2454 = vadd.f32 0.0, %v2453
        %v2455 = vpop.f32.mrf.mxu0
        %v2456 = vadd.f32 0.0, %v2455
        %2457 = vmatmul.bf16.gmra.mxu0 %v2052
        %v2458 = vpop.f32.mrf.mxu0
        %v2459 = vadd.f32 0.0, %v2458
        %v2460 = vpop.f32.mrf.mxu0
        %v2461 = vadd.f32 0.0, %v2460
        %2462 = vmatmul.bf16.gmra.mxu0 %v2060
        %v2463 = vpop.f32.mrf.mxu0
        %v2464 = vadd.f32 0.0, %v2463
        %v2465 = vpop.f32.mrf.mxu0
        %v2466 = vadd.f32 0.0, %v2465
        %2467 = vmatmul.bf16.gmra.mxu0 %v2068
        %v2468 = vpop.f32.mrf.mxu0
        %v2469 = vadd.f32 0.0, %v2468
        %v2470 = vpop.f32.mrf.mxu0
        %v2471 = vadd.f32 0.0, %v2470
        %2472 = vmatmul.bf16.gmra.mxu0 %v2076
        %v2473 = vpop.f32.mrf.mxu0
        %v2474 = vadd.f32 0.0, %v2473
        %v2475 = vpop.f32.mrf.mxu0
        %v2476 = vadd.f32 0.0, %v2475
        %2477 = vmatmul.bf16.gmra.mxu0 %v2089
        %v2478 = vpop.f32.mrf.mxu0
        %v2479 = vadd.f32 0.0, %v2478
        %v2480 = vpop.f32.mrf.mxu0
        %v2481 = vadd.f32 0.0, %v2480
        %2482 = vmatmul.bf16.gmra.mxu0 %v2088
        %v2483 = vpop.f32.mrf.mxu0
        %v2484 = vadd.f32 0.0, %v2483
        %v2485 = vpop.f32.mrf.mxu0
        %2486 = vdwg.mxu0
        %2487 = vmatpush.bf16.msra.mxu0 %v2250
        %2488 = vmatpush.bf16.msra.mxu0 %v2248
        %2489 = vmatpush.bf16.msra.mxu0 %v2246
        %2490 = vmatpush.bf16.msra.mxu0 %v2244
        %2491 = vmatpush.bf16.msra.mxu0 %v2242
        %2492 = vmatpush.bf16.msra.mxu0 %v2240
        %2493 = vmatpush.bf16.msra.mxu0 %v2238
        %2494 = vmatpush.bf16.msra.mxu0 %v2236
        %2495 = vmatmul.bf16.gmra.mxu0 %v2008
        %v2496 = vpop.f32.mrf.mxu0
        %v2497 = vadd.f32 %v2429, %v2496
        %v2498 = vpop.f32.mrf.mxu0
        %v2499 = vadd.f32 %v2431, %v2498
        %2500 = vmatmul.bf16.gmra.mxu0 %v2016
        %v2501 = vpop.f32.mrf.mxu0
        %v2502 = vadd.f32 %v2434, %v2501
        %v2503 = vpop.f32.mrf.mxu0
        %v2504 = vadd.f32 %v2436, %v2503
        %2505 = vmatmul.bf16.gmra.mxu0 %v2024
        %v2506 = vpop.f32.mrf.mxu0
        %v2507 = vadd.f32 %v2439, %v2506
        %v2508 = vpop.f32.mrf.mxu0
        %v2509 = vadd.f32 %v2441, %v2508
        %2510 = vmatmul.bf16.gmra.mxu0 %v2032
        %v2511 = vpop.f32.mrf.mxu0
        %v2512 = vadd.f32 %v2444, %v2511
        %v2513 = vpop.f32.mrf.mxu0
        %v2514 = vadd.f32 %v2446, %v2513
        %2515 = vmatmul.bf16.gmra.mxu0 %v2040
        %v2516 = vpop.f32.mrf.mxu0
        %v2517 = vadd.f32 %v2449, %v2516
        %v2518 = vpop.f32.mrf.mxu0
        %v2519 = vadd.f32 %v2451, %v2518
        %2520 = vmatmul.bf16.gmra.mxu0 %v2048
        %v2521 = vpop.f32.mrf.mxu0
        %v2522 = vadd.f32 %v2454, %v2521
        %v2523 = vpop.f32.mrf.mxu0
        %v2524 = vadd.f32 %v2456, %v2523
        %2525 = vmatmul.bf16.gmra.mxu0 %v2056
        %v2526 = vpop.f32.mrf.mxu0
        %v2527 = vadd.f32 %v2459, %v2526
        %v2528 = vpop.f32.mrf.mxu0
        %v2529 = vadd.f32 %v2461, %v2528
        %2530 = vmatmul.bf16.gmra.mxu0 %v2064
        %v2531 = vpop.f32.mrf.mxu0
        %v2532 = vadd.f32 %v2464, %v2531
        %v2533 = vpop.f32.mrf.mxu0
        %v2534 = vadd.f32 %v2466, %v2533
        %2535 = vmatmul.bf16.gmra.mxu0 %v2072
        %v2536 = vpop.f32.mrf.mxu0
        %v2537 = vadd.f32 %v2469, %v2536
        %v2538 = vpop.f32.mrf.mxu0
        %v2539 = vadd.f32 %v2471, %v2538
        %2540 = vmatmul.bf16.gmra.mxu0 %v2080
        %v2541 = vpop.f32.mrf.mxu0
        %v2542 = vadd.f32 %v2474, %v2541
        %v2543 = vpop.f32.mrf.mxu0
        %v2544 = vadd.f32 %v2476, %v2543
        %2545 = vmatmul.bf16.gmra.mxu0 %v2098
        %v2546 = vpop.f32.mrf.mxu0
        %v2547 = vadd.f32 %v2479, %v2546
        %v2548 = vpop.f32.mrf.mxu0
        %v2549 = vadd.f32 %v2481, %v2548
        %2550 = vmatmul.bf16.gmra.mxu0 %v2097
        %v2551 = vpop.f32.mrf.mxu0
        %v2552 = vadd.f32 %v2484, %v2551
        %v2553 = vpop.f32.mrf.mxu0
        %2554 = vdwg.mxu0
        %v2555 = vadd.f32 %v1750, %v2361
        %v2556 = vadd.f32 %v1886, %v2497
        %v2557 = vadd.f32 %v1752, %v2363
        %v2558 = vadd.f32 %v1888, %v2499
        %v2559 = vadd.f32 %v1755, %v2366
        %v2560 = vadd.f32 %v1891, %v2502
        %v2561 = vadd.f32 %v1757, %v2368
        %v2562 = vadd.f32 %v1893, %v2504
        %v2563 = vadd.f32 %v1760, %v2371
        %v2564 = vadd.f32 %v1896, %v2507
        %v2565 = vadd.f32 %v1762, %v2373
        %v2566 = vadd.f32 %v1898, %v2509
        %v2567 = vadd.f32 %v1765, %v2376
        %v2568 = vadd.f32 %v1901, %v2512
        %v2569 = vadd.f32 %v1767, %v2378
        %v2570 = vadd.f32 %v1903, %v2514
        %v2571 = vadd.f32 %v1770, %v2381
        %v2572 = vadd.f32 %v1906, %v2517
        %v2573 = vadd.f32 %v1772, %v2383
        %v2574 = vadd.f32 %v1908, %v2519
        %v2575 = vadd.f32 %v1775, %v2386
        %v2576 = vadd.f32 %v1911, %v2522
        %v2577 = vadd.f32 %v1777, %v2388
        %v2578 = vadd.f32 %v1913, %v2524
        %v2579 = vadd.f32 %v1780, %v2391
        %v2580 = vadd.f32 %v1916, %v2527
        %v2581 = vadd.f32 %v1782, %v2393
        %v2582 = vadd.f32 %v1918, %v2529
        %v2583 = vadd.f32 %v1785, %v2396
        %v2584 = vadd.f32 %v1921, %v2532
        %v2585 = vadd.f32 %v1787, %v2398
        %v2586 = vadd.f32 %v1923, %v2534
        %v2587 = vadd.f32 %v1790, %v2401
        %v2588 = vadd.f32 %v1926, %v2537
        %v2589 = vadd.f32 %v1792, %v2403
        %v2590 = vadd.f32 %v1928, %v2539
        %v2591 = vadd.f32 %v1795, %v2406
        %v2592 = vadd.f32 %v1931, %v2542
        %v2593 = vadd.f32 %v1797, %v2408
        %v2594 = vadd.f32 %v1933, %v2544
        %v2595 = vadd.f32 %v1800, %v2411
        %v2596 = vadd.f32 %v1936, %v2547
        %v2597 = vadd.f32 %v1802, %v2413
        %v2598 = vadd.f32 %v1938, %v2549
        %v2599 = vadd.f32 %v1805, %v2416
        %v2600 = vadd.f32 %v1941, %v2552
        %v2601 = vld [vmem:[#allocation2 + $0x10] sm:$0x80]
        %v2602 = vld [vmem:[#allocation2 + $0x18] sm:$0x80]
        %v2603 = vld [vmem:[#allocation2 + $0x20] sm:$0xff]
        %v2604 = vld [vmem:[#allocation2 + $0x28] sm:$0xff]
        %v2605 = vld [vmem:[#allocation2 + $0x30] sm:$0xff]
        %v2606 = vld [vmem:[#allocation2 + $0x38] sm:$0xff]
        %v2607 = vld [vmem:[#allocation2 + $0x40] sm:$0xff]
        %v2608 = vld [vmem:[#allocation2 + $0x48] sm:$0xff]
        %v2609 = vld [vmem:[#allocation2 + $0x50] sm:$0xff]
        %v2610 = vld [vmem:[#allocation2 + $0x58] sm:$0xff]
        %v2611 = vld [vmem:[#allocation2 + $0x60] sm:$0xff]
        %v2612 = vld [vmem:[#allocation2 + $0x68] sm:$0xff]
        %v2613 = vld [vmem:[#allocation2 + $0x70] sm:$0xff]
        %v2614 = vld [vmem:[#allocation2 + $0x78] sm:$0xff]
        %v2615 = vld [vmem:[#allocation2 + $0x80] sm:$0xff]
        %v2616 = vld [vmem:[#allocation2 + $0x88] sm:$0xff]
        %v2617 = vld [vmem:[#allocation2 + $0x90] sm:$0xff]
        %v2618 = vld [vmem:[#allocation2 + $0x98] sm:$0xff]
        %v2619 = vld [vmem:[#allocation2 + $0xa0] sm:$0xff]
        %v2620 = vld [vmem:[#allocation2 + $0xa8] sm:$0xff]
        %v2621 = vld [vmem:[#allocation2 + $0xb0] sm:$0xff]
        %v2622 = vld [vmem:[#allocation2 + $0xb8] sm:$0xff]
        %v2623 = vld [vmem:[#allocation2 + $0xc0] sm:$0xff]
        %v2624 = vld [vmem:[#allocation2 + $0xc8] sm:$0xff]
        %v2625 = vld [vmem:[#allocation2 + $0xd0] sm:$0xff]
        %v2626 = vld [vmem:[#allocation2 + $0xd8] sm:$0xff]
        %v2627 = vld [vmem:[#allocation2 + $0xe0] sm:$0xff]
        %v2628 = vld [vmem:[#allocation2 + $0xe8] sm:$0xff]
        %v2629 = vld [vmem:[#allocation2 + $0xf0] sm:$0xff]
        %v2630 = vld [vmem:[#allocation2 + $0xf8] sm:$0xff]
        %v2631 = vld [vmem:[#allocation2 + $0x100] sm:$0xff]
        %v2632 = vld [vmem:[#allocation2 + $0x108] sm:$0xff]
        %v2633 = vld [vmem:[#allocation2 + $0x110] sm:$0xff]
        %v2634 = vld [vmem:[#allocation2 + $0x118] sm:$0xff]
        %v2635 = vld [vmem:[#allocation2 + $0x120] sm:$0xff]
        %v2636 = vld [vmem:[#allocation2 + $0x128] sm:$0xff]
        %v2637 = vld [vmem:[#allocation2 + $0x130] sm:$0xff]
        %v2638 = vld [vmem:[#allocation2 + $0x138] sm:$0xff]
        %v2639 = vld [vmem:[#allocation2 + $0x140] sm:$0xff]
        %v2640 = vld [vmem:[#allocation2 + $0x148] sm:$0xff]
        %v2641 = vld [vmem:[#allocation2 + $0x150] sm:$0xff]
        %v2642 = vld [vmem:[#allocation2 + $0x158] sm:$0xff]
        %v2643 = vld [vmem:[#allocation2 + $0x160] sm:$0xff]
        %v2644 = vld [vmem:[#allocation2 + $0x168] sm:$0xff]
        %v2645 = vld [vmem:[#allocation2 + $0x170] sm:$0xff]
        %v2646 = vld [vmem:[#allocation2 + $0x178] sm:$0xff]
        %v2647 = vld [vmem:[#allocation2 + $0x180] sm:$0x7f]
        %v2648 = vld [vmem:[#allocation2 + $0x188] sm:$0x7f]
        %v2649 = vpack.c.bf16 %v2603, %v2601
        %v2650 = vpack.c.bf16 %v2604, %v2602
        %v2651 = vpack.c.bf16 %v2607, %v2605
        %v2652 = vpack.c.bf16 %v2608, %v2606
        %v2653 = vpack.c.bf16 %v2611, %v2609
        %v2654 = vpack.c.bf16 %v2612, %v2610
        %v2655 = vpack.c.bf16 %v2615, %v2613
        %v2656 = vpack.c.bf16 %v2616, %v2614
        %v2657 = vpack.c.bf16 %v2619, %v2617
        %v2658 = vpack.c.bf16 %v2620, %v2618
        %v2659 = vpack.c.bf16 %v2623, %v2621
        %v2660 = vpack.c.bf16 %v2624, %v2622
        %v2661 = vpack.c.bf16 %v2627, %v2625
        %v2662 = vpack.c.bf16 %v2628, %v2626
        %v2663 = vpack.c.bf16 %v2631, %v2629
        %v2664 = vpack.c.bf16 %v2632, %v2630
        %v2665 = vpack.c.bf16 %v2635, %v2633
        %v2666 = vpack.c.bf16 %v2636, %v2634
        %v2667 = vpack.c.bf16 %v2639, %v2637
        %v2668 = vpack.c.bf16 %v2640, %v2638
        %v2669 = vpack.c.bf16 %v2643, %v2641
        %v2670 = vpack.c.bf16 %v2644, %v2642
        %v2671 = vpack.c.bf16 %v2647, %v2645
        %v2672 = vpack.c.bf16 %v2648, %v2646
        %v2673 = vld [vmem:[%s280 + $0x300] sm:$0xff]
        %v2674 = vld [vmem:[%s280 + $0x308] sm:$0xff]
        %v2675 = vld [vmem:[%s280 + $0x310] sm:$0xff]
        %v2676 = vld [vmem:[%s280 + $0x318] sm:$0xff]
        %v2677 = vld [vmem:[%s280 + $0x320] sm:$0xff]
        %v2678 = vld [vmem:[%s280 + $0x328] sm:$0xff]
        %v2679 = vld [vmem:[%s280 + $0x330] sm:$0xff]
        %v2680 = vld [vmem:[%s280 + $0x338] sm:$0xff]
        %v2681 = vld [vmem:[%s280 + $0x340] sm:$0xff]
        %v2682 = vld [vmem:[%s280 + $0x348] sm:$0xff]
        %v2683 = vld [vmem:[%s280 + $0x350] sm:$0xff]
        %v2684 = vld [vmem:[%s280 + $0x358] sm:$0xff]
        %v2685 = vld [vmem:[%s280 + $0x360] sm:$0xff]
        %v2686 = vld [vmem:[%s280 + $0x368] sm:$0xff]
        %v2687 = vld [vmem:[%s280 + $0x370] sm:$0xff]
        %v2688 = vld [vmem:[%s280 + $0x378] sm:$0xff]
        %v2689 = vld [vmem:[%s280 + $0x380] sm:$0xff]
        %v2690 = vld [vmem:[%s280 + $0x388] sm:$0xff]
        %v2691 = vld [vmem:[%s280 + $0x390] sm:$0xff]
        %v2692 = vld [vmem:[%s280 + $0x398] sm:$0xff]
        %v2693 = vld [vmem:[%s280 + $0x3a0] sm:$0xff]
        %v2694 = vld [vmem:[%s280 + $0x3a8] sm:$0xff]
        %v2695 = vld [vmem:[%s280 + $0x3b0] sm:$0xff]
        %v2696 = vld [vmem:[%s280 + $0x3b8] sm:$0xff]
        %v2697 = vld [vmem:[%s280 + $0x3c0] sm:$0xff]
        %v2698 = vld [vmem:[%s280 + $0x3c8] sm:$0xff]
        %v2699 = vld [vmem:[%s280 + $0x3d0] sm:$0xff]
        %v2700 = vld [vmem:[%s280 + $0x3d8] sm:$0xff]
        %v2701 = vld [vmem:[%s280 + $0x3e0] sm:$0xff]
        %v2702 = vld [vmem:[%s280 + $0x3e8] sm:$0xff]
        %v2703 = vld [vmem:[%s280 + $0x3f0] sm:$0xff]
        %v2704 = vld [vmem:[%s280 + $0x3f8] sm:$0xff]
        %v2706 = vshrl.u32 %v2649, 16
        %v2708 = vrot.slane %v2706, 3
        %v2709 = vshll.u32 %v2649, 16
        %v2711 = vrot.slane %v2709, 4
        %v2712 = vor.u32 %v2708, %v2711
        %v2714 = vshrl.u32 %v2651, 16
        %v2716 = vrot.slane %v2714, 3
        %v2717 = vshll.u32 %v2651, 16
        %v2719 = vrot.slane %v2717, 4
        %v2720 = vor.u32 %v2716, %v2719
        %v2721 = vsel %vm1984, %v2712, %v2720
        %v2723 = vshrl.u32 %v2650, 16
        %v2725 = vrot.slane %v2723, 3
        %v2726 = vshll.u32 %v2650, 16
        %v2728 = vrot.slane %v2726, 4
        %v2729 = vor.u32 %v2725, %v2728
        %v2731 = vshrl.u32 %v2652, 16
        %v2733 = vrot.slane %v2731, 3
        %v2734 = vshll.u32 %v2652, 16
        %v2736 = vrot.slane %v2734, 4
        %v2737 = vor.u32 %v2733, %v2736
        %v2738 = vsel %vm1984, %v2729, %v2737
        %v2740 = vshrl.u32 %v2653, 16
        %v2742 = vrot.slane %v2740, 3
        %v2743 = vshll.u32 %v2653, 16
        %v2745 = vrot.slane %v2743, 4
        %v2746 = vor.u32 %v2742, %v2745
        %v2747 = vsel %vm1984, %v2720, %v2746
        %v2749 = vshrl.u32 %v2654, 16
        %v2751 = vrot.slane %v2749, 3
        %v2752 = vshll.u32 %v2654, 16
        %v2754 = vrot.slane %v2752, 4
        %v2755 = vor.u32 %v2751, %v2754
        %v2756 = vsel %vm1984, %v2737, %v2755
        %v2758 = vshrl.u32 %v2655, 16
        %v2760 = vrot.slane %v2758, 3
        %v2761 = vshll.u32 %v2655, 16
        %v2763 = vrot.slane %v2761, 4
        %v2764 = vor.u32 %v2760, %v2763
        %v2765 = vsel %vm1984, %v2746, %v2764
        %v2767 = vshrl.u32 %v2656, 16
        %v2769 = vrot.slane %v2767, 3
        %v2770 = vshll.u32 %v2656, 16
        %v2772 = vrot.slane %v2770, 4
        %v2773 = vor.u32 %v2769, %v2772
        %v2774 = vsel %vm1984, %v2755, %v2773
        %v2776 = vshrl.u32 %v2657, 16
        %v2778 = vrot.slane %v2776, 3
        %v2779 = vshll.u32 %v2657, 16
        %v2781 = vrot.slane %v2779, 4
        %v2782 = vor.u32 %v2778, %v2781
        %v2783 = vsel %vm1984, %v2764, %v2782
        %v2785 = vshrl.u32 %v2658, 16
        %v2787 = vrot.slane %v2785, 3
        %v2788 = vshll.u32 %v2658, 16
        %v2790 = vrot.slane %v2788, 4
        %v2791 = vor.u32 %v2787, %v2790
        %v2792 = vsel %vm1984, %v2773, %v2791
        %v2794 = vshrl.u32 %v2659, 16
        %v2796 = vrot.slane %v2794, 3
        %v2797 = vshll.u32 %v2659, 16
        %v2799 = vrot.slane %v2797, 4
        %v2800 = vor.u32 %v2796, %v2799
        %v2801 = vsel %vm1984, %v2782, %v2800
        %v2803 = vshrl.u32 %v2660, 16
        %v2805 = vrot.slane %v2803, 3
        %v2806 = vshll.u32 %v2660, 16
        %v2808 = vrot.slane %v2806, 4
        %v2809 = vor.u32 %v2805, %v2808
        %v2810 = vsel %vm1984, %v2791, %v2809
        %v2812 = vshrl.u32 %v2661, 16
        %v2814 = vrot.slane %v2812, 3
        %v2815 = vshll.u32 %v2661, 16
        %v2817 = vrot.slane %v2815, 4
        %v2818 = vor.u32 %v2814, %v2817
        %v2819 = vsel %vm1984, %v2800, %v2818
        %v2821 = vshrl.u32 %v2662, 16
        %v2823 = vrot.slane %v2821, 3
        %v2824 = vshll.u32 %v2662, 16
        %v2826 = vrot.slane %v2824, 4
        %v2827 = vor.u32 %v2823, %v2826
        %v2828 = vsel %vm1984, %v2809, %v2827
        %v2830 = vshrl.u32 %v2663, 16
        %v2832 = vrot.slane %v2830, 3
        %v2833 = vshll.u32 %v2663, 16
        %v2835 = vrot.slane %v2833, 4
        %v2836 = vor.u32 %v2832, %v2835
        %v2837 = vsel %vm1984, %v2818, %v2836
        %v2839 = vshrl.u32 %v2664, 16
        %v2841 = vrot.slane %v2839, 3
        %v2842 = vshll.u32 %v2664, 16
        %v2844 = vrot.slane %v2842, 4
        %v2845 = vor.u32 %v2841, %v2844
        %v2846 = vsel %vm1984, %v2827, %v2845
        %v2848 = vshrl.u32 %v2665, 16
        %v2850 = vrot.slane %v2848, 3
        %v2851 = vshll.u32 %v2665, 16
        %v2853 = vrot.slane %v2851, 4
        %v2854 = vor.u32 %v2850, %v2853
        %v2855 = vsel %vm1984, %v2836, %v2854
        %v2857 = vshrl.u32 %v2666, 16
        %v2859 = vrot.slane %v2857, 3
        %v2860 = vshll.u32 %v2666, 16
        %v2862 = vrot.slane %v2860, 4
        %v2863 = vor.u32 %v2859, %v2862
        %v2864 = vsel %vm1984, %v2845, %v2863
        %v2866 = vshrl.u32 %v2667, 16
        %v2868 = vrot.slane %v2866, 3
        %v2869 = vshll.u32 %v2667, 16
        %v2871 = vrot.slane %v2869, 4
        %v2872 = vor.u32 %v2868, %v2871
        %v2873 = vsel %vm1984, %v2854, %v2872
        %v2875 = vshrl.u32 %v2668, 16
        %v2877 = vrot.slane %v2875, 3
        %v2878 = vshll.u32 %v2668, 16
        %v2880 = vrot.slane %v2878, 4
        %v2881 = vor.u32 %v2877, %v2880
        %v2882 = vsel %vm1984, %v2863, %v2881
        %v2884 = vshrl.u32 %v2669, 16
        %v2886 = vrot.slane %v2884, 3
        %v2887 = vshll.u32 %v2669, 16
        %v2889 = vrot.slane %v2887, 4
        %v2890 = vor.u32 %v2886, %v2889
        %v2891 = vsel %vm1984, %v2872, %v2890
        %v2893 = vshrl.u32 %v2670, 16
        %v2895 = vrot.slane %v2893, 3
        %v2896 = vshll.u32 %v2670, 16
        %v2898 = vrot.slane %v2896, 4
        %v2899 = vor.u32 %v2895, %v2898
        %v2900 = vsel %vm1984, %v2881, %v2899
        %v2902 = vshrl.u32 %v2671, 16
        %v2904 = vrot.slane %v2902, 3
        %v2905 = vshll.u32 %v2671, 16
        %v2907 = vrot.slane %v2905, 4
        %v2908 = vor.u32 %v2904, %v2907
        %v2909 = vsel %vm1984, %v2890, %v2908
        %v2911 = vshrl.u32 %v2672, 16
        %v2913 = vrot.slane %v2911, 3
        %v2914 = vshll.u32 %v2672, 16
        %v2916 = vrot.slane %v2914, 4
        %v2917 = vor.u32 %v2913, %v2916
        %v2918 = vsel %vm1984, %v2899, %v2917
        %v2975 = vunpack.c.l.b16 %v2673
        %v2976 = vunpack.c.h.b16 %v2673
        %v2977 = vunpack.c.l.b16 %v2674
        %v2978 = vunpack.c.h.b16 %v2674
        %v2979 = vunpack.c.l.b16 %v2675
        %v2980 = vunpack.c.h.b16 %v2675
        %v2981 = vunpack.c.l.b16 %v2676
        %v2982 = vunpack.c.h.b16 %v2676
        %v2983 = vunpack.c.l.b16 %v2677
        %v2984 = vunpack.c.h.b16 %v2677
        %v2985 = vunpack.c.l.b16 %v2678
        %v2986 = vunpack.c.h.b16 %v2678
        %v2987 = vunpack.c.l.b16 %v2679
        %v2988 = vunpack.c.h.b16 %v2679
        %v2989 = vunpack.c.l.b16 %v2680
        %v2990 = vunpack.c.h.b16 %v2680
        %v2991 = vunpack.c.l.b16 %v2681
        %v2992 = vunpack.c.h.b16 %v2681
        %v2993 = vunpack.c.l.b16 %v2682
        %v2994 = vunpack.c.h.b16 %v2682
        %v2995 = vunpack.c.l.b16 %v2683
        %v2996 = vunpack.c.h.b16 %v2683
        %v2997 = vunpack.c.l.b16 %v2684
        %v2998 = vunpack.c.h.b16 %v2684
        %v2999 = vunpack.c.l.b16 %v2685
        %v3000 = vunpack.c.h.b16 %v2685
        %v3001 = vunpack.c.l.b16 %v2686
        %v3002 = vunpack.c.h.b16 %v2686
        %v3003 = vunpack.c.l.b16 %v2687
        %v3004 = vunpack.c.h.b16 %v2687
        %v3005 = vunpack.c.l.b16 %v2688
        %v3006 = vunpack.c.h.b16 %v2688
        %v3007 = vunpack.c.l.b16 %v2689
        %v3008 = vunpack.c.h.b16 %v2689
        %v3009 = vunpack.c.l.b16 %v2690
        %v3010 = vunpack.c.h.b16 %v2690
        %v3011 = vunpack.c.l.b16 %v2691
        %v3012 = vunpack.c.h.b16 %v2691
        %v3013 = vunpack.c.l.b16 %v2692
        %v3014 = vunpack.c.h.b16 %v2692
        %v3015 = vunpack.c.l.b16 %v2693
        %v3016 = vunpack.c.h.b16 %v2693
        %v3017 = vunpack.c.l.b16 %v2694
        %v3018 = vunpack.c.h.b16 %v2694
        %v3019 = vunpack.c.l.b16 %v2695
        %v3020 = vunpack.c.h.b16 %v2695
        %v3021 = vunpack.c.l.b16 %v2696
        %v3022 = vunpack.c.h.b16 %v2696
        %v3023 = vunpack.c.l.b16 %v2697
        %v3024 = vunpack.c.h.b16 %v2697
        %v3025 = vunpack.c.l.b16 %v2698
        %v3026 = vunpack.c.h.b16 %v2698
        %v3027 = vunpack.c.l.b16 %v2699
        %v3028 = vunpack.c.h.b16 %v2699
        %v3029 = vunpack.c.l.b16 %v2700
        %v3030 = vunpack.c.h.b16 %v2700
        %v3031 = vunpack.c.l.b16 %v2701
        %v3032 = vunpack.c.h.b16 %v2701
        %v3033 = vunpack.c.l.b16 %v2702
        %v3034 = vunpack.c.h.b16 %v2702
        %v3035 = vunpack.c.l.b16 %v2703
        %v3036 = vunpack.c.h.b16 %v2703
        %v3037 = vunpack.c.l.b16 %v2704
        %v3038 = vunpack.c.h.b16 %v2704
        %v3039 = vpack.c.b16 %v2977, %v2975
        %v3040 = vpack.c.b16 %v2978, %v2976
        %v3041 = vpack.c.b16 %v2981, %v2979
        %v3042 = vpack.c.b16 %v2982, %v2980
        %v3043 = vpack.c.b16 %v2985, %v2983
        %v3044 = vpack.c.b16 %v2986, %v2984
        %v3045 = vpack.c.b16 %v2989, %v2987
        %v3046 = vpack.c.b16 %v2990, %v2988
        %v3047 = vpack.c.b16 %v2993, %v2991
        %v3048 = vpack.c.b16 %v2994, %v2992
        %v3049 = vpack.c.b16 %v2997, %v2995
        %v3050 = vpack.c.b16 %v2998, %v2996
        %v3051 = vpack.c.b16 %v3001, %v2999
        %v3052 = vpack.c.b16 %v3002, %v3000
        %v3053 = vpack.c.b16 %v3005, %v3003
        %v3054 = vpack.c.b16 %v3006, %v3004
        %v3055 = vpack.c.b16 %v3009, %v3007
        %v3056 = vpack.c.b16 %v3010, %v3008
        %v3057 = vpack.c.b16 %v3013, %v3011
        %v3058 = vpack.c.b16 %v3014, %v3012
        %v3059 = vpack.c.b16 %v3017, %v3015
        %v3060 = vpack.c.b16 %v3018, %v3016
        %v3061 = vpack.c.b16 %v3021, %v3019
        %v3062 = vpack.c.b16 %v3022, %v3020
        %v3063 = vpack.c.b16 %v3025, %v3023
        %v3064 = vpack.c.b16 %v3026, %v3024
        %v3065 = vpack.c.b16 %v3029, %v3027
        %v3066 = vpack.c.b16 %v3030, %v3028
        %v3067 = vpack.c.b16 %v3033, %v3031
        %v3068 = vpack.c.b16 %v3034, %v3032
        %v3069 = vpack.c.b16 %v3037, %v3035
        %v3070 = vpack.c.b16 %v3038, %v3036
        %3103 = vmatpush.bf16.msra.mxu0 %v3053
        %3104 = vmatpush.bf16.msra.mxu0 %v3051
        %3105 = vmatpush.bf16.msra.mxu0 %v3049
        %3106 = vmatpush.bf16.msra.mxu0 %v3047
        %3107 = vmatpush.bf16.msra.mxu0 %v3045
        %3108 = vmatpush.bf16.msra.mxu0 %v3043
        %3109 = vmatpush.bf16.msra.mxu0 %v3041
        %3110 = vmatpush.bf16.msra.mxu0 %v3039
        %3111 = vmatmul.bf16.gmra.mxu0 %v2721
        %v3112 = vpop.f32.mrf.mxu0
        %v3113 = vadd.f32 0.0, %v3112
        %v3114 = vpop.f32.mrf.mxu0
        %v3115 = vadd.f32 0.0, %v3114
        %3116 = vmatmul.bf16.gmra.mxu0 %v2747
        %v3117 = vpop.f32.mrf.mxu0
        %v3118 = vadd.f32 0.0, %v3117
        %v3119 = vpop.f32.mrf.mxu0
        %v3120 = vadd.f32 0.0, %v3119
        %3121 = vmatmul.bf16.gmra.mxu0 %v2765
        %v3122 = vpop.f32.mrf.mxu0
        %v3123 = vadd.f32 0.0, %v3122
        %v3124 = vpop.f32.mrf.mxu0
        %v3125 = vadd.f32 0.0, %v3124
        %3126 = vmatmul.bf16.gmra.mxu0 %v2783
        %v3127 = vpop.f32.mrf.mxu0
        %v3128 = vadd.f32 0.0, %v3127
        %v3129 = vpop.f32.mrf.mxu0
        %v3130 = vadd.f32 0.0, %v3129
        %3131 = vmatmul.bf16.gmra.mxu0 %v2801
        %v3132 = vpop.f32.mrf.mxu0
        %v3133 = vadd.f32 0.0, %v3132
        %v3134 = vpop.f32.mrf.mxu0
        %v3135 = vadd.f32 0.0, %v3134
        %3136 = vmatmul.bf16.gmra.mxu0 %v2819
        %v3137 = vpop.f32.mrf.mxu0
        %v3138 = vadd.f32 0.0, %v3137
        %v3139 = vpop.f32.mrf.mxu0
        %v3140 = vadd.f32 0.0, %v3139
        %3141 = vmatmul.bf16.gmra.mxu0 %v2837
        %v3142 = vpop.f32.mrf.mxu0
        %v3143 = vadd.f32 0.0, %v3142
        %v3144 = vpop.f32.mrf.mxu0
        %v3145 = vadd.f32 0.0, %v3144
        %3146 = vmatmul.bf16.gmra.mxu0 %v2855
        %v3147 = vpop.f32.mrf.mxu0
        %v3148 = vadd.f32 0.0, %v3147
        %v3149 = vpop.f32.mrf.mxu0
        %v3150 = vadd.f32 0.0, %v3149
        %3151 = vmatmul.bf16.gmra.mxu0 %v2873
        %v3152 = vpop.f32.mrf.mxu0
        %v3153 = vadd.f32 0.0, %v3152
        %v3154 = vpop.f32.mrf.mxu0
        %v3155 = vadd.f32 0.0, %v3154
        %3156 = vmatmul.bf16.gmra.mxu0 %v2891
        %v3157 = vpop.f32.mrf.mxu0
        %v3158 = vadd.f32 0.0, %v3157
        %v3159 = vpop.f32.mrf.mxu0
        %v3160 = vadd.f32 0.0, %v3159
        %3161 = vmatmul.bf16.gmra.mxu0 %v2909
        %v3162 = vpop.f32.mrf.mxu0
        %v3163 = vadd.f32 0.0, %v3162
        %v3164 = vpop.f32.mrf.mxu0
        %v3165 = vadd.f32 0.0, %v3164
        %3166 = vmatmul.bf16.gmra.mxu0 %v2908
        %v3167 = vpop.f32.mrf.mxu0
        %v3168 = vadd.f32 0.0, %v3167
        %v3169 = vpop.f32.mrf.mxu0
        %3170 = vdwg.mxu0
        %3171 = vmatpush.bf16.msra.mxu0 %v3069
        %3172 = vmatpush.bf16.msra.mxu0 %v3067
        %3173 = vmatpush.bf16.msra.mxu0 %v3065
        %3174 = vmatpush.bf16.msra.mxu0 %v3063
        %3175 = vmatpush.bf16.msra.mxu0 %v3061
        %3176 = vmatpush.bf16.msra.mxu0 %v3059
        %3177 = vmatpush.bf16.msra.mxu0 %v3057
        %3178 = vmatpush.bf16.msra.mxu0 %v3055
        %3179 = vmatmul.bf16.gmra.mxu0 %v2738
        %v3180 = vpop.f32.mrf.mxu0
        %v3181 = vadd.f32 %v3113, %v3180
        %v3182 = vpop.f32.mrf.mxu0
        %v3183 = vadd.f32 %v3115, %v3182
        %3184 = vmatmul.bf16.gmra.mxu0 %v2756
        %v3185 = vpop.f32.mrf.mxu0
        %v3186 = vadd.f32 %v3118, %v3185
        %v3187 = vpop.f32.mrf.mxu0
        %v3188 = vadd.f32 %v3120, %v3187
        %3189 = vmatmul.bf16.gmra.mxu0 %v2774
        %v3190 = vpop.f32.mrf.mxu0
        %v3191 = vadd.f32 %v3123, %v3190
        %v3192 = vpop.f32.mrf.mxu0
        %v3193 = vadd.f32 %v3125, %v3192
        %3194 = vmatmul.bf16.gmra.mxu0 %v2792
        %v3195 = vpop.f32.mrf.mxu0
        %v3196 = vadd.f32 %v3128, %v3195
        %v3197 = vpop.f32.mrf.mxu0
        %v3198 = vadd.f32 %v3130, %v3197
        %3199 = vmatmul.bf16.gmra.mxu0 %v2810
        %v3200 = vpop.f32.mrf.mxu0
        %v3201 = vadd.f32 %v3133, %v3200
        %v3202 = vpop.f32.mrf.mxu0
        %v3203 = vadd.f32 %v3135, %v3202
        %3204 = vmatmul.bf16.gmra.mxu0 %v2828
        %v3205 = vpop.f32.mrf.mxu0
        %v3206 = vadd.f32 %v3138, %v3205
        %v3207 = vpop.f32.mrf.mxu0
        %v3208 = vadd.f32 %v3140, %v3207
        %3209 = vmatmul.bf16.gmra.mxu0 %v2846
        %v3210 = vpop.f32.mrf.mxu0
        %v3211 = vadd.f32 %v3143, %v3210
        %v3212 = vpop.f32.mrf.mxu0
        %v3213 = vadd.f32 %v3145, %v3212
        %3214 = vmatmul.bf16.gmra.mxu0 %v2864
        %v3215 = vpop.f32.mrf.mxu0
        %v3216 = vadd.f32 %v3148, %v3215
        %v3217 = vpop.f32.mrf.mxu0
        %v3218 = vadd.f32 %v3150, %v3217
        %3219 = vmatmul.bf16.gmra.mxu0 %v2882
        %v3220 = vpop.f32.mrf.mxu0
        %v3221 = vadd.f32 %v3153, %v3220
        %v3222 = vpop.f32.mrf.mxu0
        %v3223 = vadd.f32 %v3155, %v3222
        %3224 = vmatmul.bf16.gmra.mxu0 %v2900
        %v3225 = vpop.f32.mrf.mxu0
        %v3226 = vadd.f32 %v3158, %v3225
        %v3227 = vpop.f32.mrf.mxu0
        %v3228 = vadd.f32 %v3160, %v3227
        %3229 = vmatmul.bf16.gmra.mxu0 %v2918
        %v3230 = vpop.f32.mrf.mxu0
        %v3231 = vadd.f32 %v3163, %v3230
        %v3232 = vpop.f32.mrf.mxu0
        %v3233 = vadd.f32 %v3165, %v3232
        %3234 = vmatmul.bf16.gmra.mxu0 %v2917
        %v3235 = vpop.f32.mrf.mxu0
        %v3236 = vadd.f32 %v3168, %v3235
        %v3237 = vpop.f32.mrf.mxu0
        %3238 = vdwg.mxu0
        %3239 = vmatpush.bf16.msra.mxu0 %v3054
        %3240 = vmatpush.bf16.msra.mxu0 %v3052
        %3241 = vmatpush.bf16.msra.mxu0 %v3050
        %3242 = vmatpush.bf16.msra.mxu0 %v3048
        %3243 = vmatpush.bf16.msra.mxu0 %v3046
        %3244 = vmatpush.bf16.msra.mxu0 %v3044
        %3245 = vmatpush.bf16.msra.mxu0 %v3042
        %3246 = vmatpush.bf16.msra.mxu0 %v3040
        %3247 = vmatmul.bf16.gmra.mxu0 %v2721
        %v3248 = vpop.f32.mrf.mxu0
        %v3249 = vadd.f32 0.0, %v3248
        %v3250 = vpop.f32.mrf.mxu0
        %v3251 = vadd.f32 0.0, %v3250
        %3252 = vmatmul.bf16.gmra.mxu0 %v2747
        %v3253 = vpop.f32.mrf.mxu0
        %v3254 = vadd.f32 0.0, %v3253
        %v3255 = vpop.f32.mrf.mxu0
        %v3256 = vadd.f32 0.0, %v3255
        %3257 = vmatmul.bf16.gmra.mxu0 %v2765
        %v3258 = vpop.f32.mrf.mxu0
        %v3259 = vadd.f32 0.0, %v3258
        %v3260 = vpop.f32.mrf.mxu0
        %v3261 = vadd.f32 0.0, %v3260
        %3262 = vmatmul.bf16.gmra.mxu0 %v2783
        %v3263 = vpop.f32.mrf.mxu0
        %v3264 = vadd.f32 0.0, %v3263
        %v3265 = vpop.f32.mrf.mxu0
        %v3266 = vadd.f32 0.0, %v3265
        %3267 = vmatmul.bf16.gmra.mxu0 %v2801
        %v3268 = vpop.f32.mrf.mxu0
        %v3269 = vadd.f32 0.0, %v3268
        %v3270 = vpop.f32.mrf.mxu0
        %v3271 = vadd.f32 0.0, %v3270
        %3272 = vmatmul.bf16.gmra.mxu0 %v2819
        %v3273 = vpop.f32.mrf.mxu0
        %v3274 = vadd.f32 0.0, %v3273
        %v3275 = vpop.f32.mrf.mxu0
        %v3276 = vadd.f32 0.0, %v3275
        %3277 = vmatmul.bf16.gmra.mxu0 %v2837
        %v3278 = vpop.f32.mrf.mxu0
        %v3279 = vadd.f32 0.0, %v3278
        %v3280 = vpop.f32.mrf.mxu0
        %v3281 = vadd.f32 0.0, %v3280
        %3282 = vmatmul.bf16.gmra.mxu0 %v2855
        %v3283 = vpop.f32.mrf.mxu0
        %v3284 = vadd.f32 0.0, %v3283
        %v3285 = vpop.f32.mrf.mxu0
        %v3286 = vadd.f32 0.0, %v3285
        %3287 = vmatmul.bf16.gmra.mxu0 %v2873
        %v3288 = vpop.f32.mrf.mxu0
        %v3289 = vadd.f32 0.0, %v3288
        %v3290 = vpop.f32.mrf.mxu0
        %v3291 = vadd.f32 0.0, %v3290
        %3292 = vmatmul.bf16.gmra.mxu0 %v2891
        %v3293 = vpop.f32.mrf.mxu0
        %v3294 = vadd.f32 0.0, %v3293
        %v3295 = vpop.f32.mrf.mxu0
        %v3296 = vadd.f32 0.0, %v3295
        %3297 = vmatmul.bf16.gmra.mxu0 %v2909
        %v3298 = vpop.f32.mrf.mxu0
        %v3299 = vadd.f32 0.0, %v3298
        %v3300 = vpop.f32.mrf.mxu0
        %v3301 = vadd.f32 0.0, %v3300
        %3302 = vmatmul.bf16.gmra.mxu0 %v2908
        %v3303 = vpop.f32.mrf.mxu0
        %v3304 = vadd.f32 0.0, %v3303
        %v3305 = vpop.f32.mrf.mxu0
        %3306 = vdwg.mxu0
        %3307 = vmatpush.bf16.msra.mxu0 %v3070
        %3308 = vmatpush.bf16.msra.mxu0 %v3068
        %3309 = vmatpush.bf16.msra.mxu0 %v3066
        %3310 = vmatpush.bf16.msra.mxu0 %v3064
        %3311 = vmatpush.bf16.msra.mxu0 %v3062
        %3312 = vmatpush.bf16.msra.mxu0 %v3060
        %3313 = vmatpush.bf16.msra.mxu0 %v3058
        %3314 = vmatpush.bf16.msra.mxu0 %v3056
        %3315 = vmatmul.bf16.gmra.mxu0 %v2738
        %v3316 = vpop.f32.mrf.mxu0
        %v3317 = vadd.f32 %v3249, %v3316
        %v3318 = vpop.f32.mrf.mxu0
        %v3319 = vadd.f32 %v3251, %v3318
        %3320 = vmatmul.bf16.gmra.mxu0 %v2756
        %v3321 = vpop.f32.mrf.mxu0
        %v3322 = vadd.f32 %v3254, %v3321
        %v3323 = vpop.f32.mrf.mxu0
        %v3324 = vadd.f32 %v3256, %v3323
        %3325 = vmatmul.bf16.gmra.mxu0 %v2774
        %v3326 = vpop.f32.mrf.mxu0
        %v3327 = vadd.f32 %v3259, %v3326
        %v3328 = vpop.f32.mrf.mxu0
        %v3329 = vadd.f32 %v3261, %v3328
        %3330 = vmatmul.bf16.gmra.mxu0 %v2792
        %v3331 = vpop.f32.mrf.mxu0
        %v3332 = vadd.f32 %v3264, %v3331
        %v3333 = vpop.f32.mrf.mxu0
        %v3334 = vadd.f32 %v3266, %v3333
        %3335 = vmatmul.bf16.gmra.mxu0 %v2810
        %v3336 = vpop.f32.mrf.mxu0
        %v3337 = vadd.f32 %v3269, %v3336
        %v3338 = vpop.f32.mrf.mxu0
        %v3339 = vadd.f32 %v3271, %v3338
        %3340 = vmatmul.bf16.gmra.mxu0 %v2828
        %v3341 = vpop.f32.mrf.mxu0
        %v3342 = vadd.f32 %v3274, %v3341
        %v3343 = vpop.f32.mrf.mxu0
        %v3344 = vadd.f32 %v3276, %v3343
        %3345 = vmatmul.bf16.gmra.mxu0 %v2846
        %v3346 = vpop.f32.mrf.mxu0
        %v3347 = vadd.f32 %v3279, %v3346
        %v3348 = vpop.f32.mrf.mxu0
        %v3349 = vadd.f32 %v3281, %v3348
        %3350 = vmatmul.bf16.gmra.mxu0 %v2864
        %v3351 = vpop.f32.mrf.mxu0
        %v3352 = vadd.f32 %v3284, %v3351
        %v3353 = vpop.f32.mrf.mxu0
        %v3354 = vadd.f32 %v3286, %v3353
        %3355 = vmatmul.bf16.gmra.mxu0 %v2882
        %v3356 = vpop.f32.mrf.mxu0
        %v3357 = vadd.f32 %v3289, %v3356
        %v3358 = vpop.f32.mrf.mxu0
        %v3359 = vadd.f32 %v3291, %v3358
        %3360 = vmatmul.bf16.gmra.mxu0 %v2900
        %v3361 = vpop.f32.mrf.mxu0
        %v3362 = vadd.f32 %v3294, %v3361
        %v3363 = vpop.f32.mrf.mxu0
        %v3364 = vadd.f32 %v3296, %v3363
        %3365 = vmatmul.bf16.gmra.mxu0 %v2918
        %v3366 = vpop.f32.mrf.mxu0
        %v3367 = vadd.f32 %v3299, %v3366
        %v3368 = vpop.f32.mrf.mxu0
        %v3369 = vadd.f32 %v3301, %v3368
        %3370 = vmatmul.bf16.gmra.mxu0 %v2917
        %v3371 = vpop.f32.mrf.mxu0
        %v3372 = vadd.f32 %v3304, %v3371
        %v3373 = vpop.f32.mrf.mxu0
        %3374 = vdwg.mxu0
        %v3375 = vadd.f32 %v2555, %v3181
        %v3376 = vadd.f32 %v2556, %v3317
        %v3377 = vadd.f32 %v2557, %v3183
        %v3378 = vadd.f32 %v2558, %v3319
        %v3379 = vadd.f32 %v2559, %v3186
        %v3380 = vadd.f32 %v2560, %v3322
        %v3381 = vadd.f32 %v2561, %v3188
        %v3382 = vadd.f32 %v2562, %v3324
        %v3383 = vadd.f32 %v2563, %v3191
        %v3384 = vadd.f32 %v2564, %v3327
        %v3385 = vadd.f32 %v2565, %v3193
        %v3386 = vadd.f32 %v2566, %v3329
        %v3387 = vadd.f32 %v2567, %v3196
        %v3388 = vadd.f32 %v2568, %v3332
        %v3389 = vadd.f32 %v2569, %v3198
        %v3390 = vadd.f32 %v2570, %v3334
        %v3391 = vadd.f32 %v2571, %v3201
        %v3392 = vadd.f32 %v2572, %v3337
        %v3393 = vadd.f32 %v2573, %v3203
        %v3394 = vadd.f32 %v2574, %v3339
        %v3395 = vadd.f32 %v2575, %v3206
        %v3396 = vadd.f32 %v2576, %v3342
        %v3397 = vadd.f32 %v2577, %v3208
        %v3398 = vadd.f32 %v2578, %v3344
        %v3399 = vadd.f32 %v2579, %v3211
        %v3400 = vadd.f32 %v2580, %v3347
        %v3401 = vadd.f32 %v2581, %v3213
        %v3402 = vadd.f32 %v2582, %v3349
        %v3403 = vadd.f32 %v2583, %v3216
        %v3404 = vadd.f32 %v2584, %v3352
        %v3405 = vadd.f32 %v2585, %v3218
        %v3406 = vadd.f32 %v2586, %v3354
        %v3407 = vadd.f32 %v2587, %v3221
        %v3408 = vadd.f32 %v2588, %v3357
        %v3409 = vadd.f32 %v2589, %v3223
        %v3410 = vadd.f32 %v2590, %v3359
        %v3411 = vadd.f32 %v2591, %v3226
        %v3412 = vadd.f32 %v2592, %v3362
        %v3413 = vadd.f32 %v2593, %v3228
        %v3414 = vadd.f32 %v2594, %v3364
        %v3415 = vadd.f32 %v2595, %v3231
        %v3416 = vadd.f32 %v2596, %v3367
        %v3417 = vadd.f32 %v2597, %v3233
        %v3418 = vadd.f32 %v2598, %v3369
        %v3419 = vadd.f32 %v2599, %v3236
        %v3420 = vadd.f32 %v2600, %v3372
        %v3421 = vld [vmem:[#allocation2 + $0x180] sm:$0xff]
        %v3422 = vld [vmem:[#allocation2 + $0x188] sm:$0xff]
        %v3423 = vpack.c.bf16 %v2605, %v2603
        %v3424 = vpack.c.bf16 %v2606, %v2604
        %v3425 = vpack.c.bf16 %v2609, %v2607
        %v3426 = vpack.c.bf16 %v2610, %v2608
        %v3427 = vpack.c.bf16 %v2613, %v2611
        %v3428 = vpack.c.bf16 %v2614, %v2612
        %v3429 = vpack.c.bf16 %v2617, %v2615
        %v3430 = vpack.c.bf16 %v2618, %v2616
        %v3431 = vpack.c.bf16 %v2621, %v2619
        %v3432 = vpack.c.bf16 %v2622, %v2620
        %v3433 = vpack.c.bf16 %v2625, %v2623
        %v3434 = vpack.c.bf16 %v2626, %v2624
        %v3435 = vpack.c.bf16 %v2629, %v2627
        %v3436 = vpack.c.bf16 %v2630, %v2628
        %v3437 = vpack.c.bf16 %v2633, %v2631
        %v3438 = vpack.c.bf16 %v2634, %v2632
        %v3439 = vpack.c.bf16 %v2637, %v2635
        %v3440 = vpack.c.bf16 %v2638, %v2636
        %v3441 = vpack.c.bf16 %v2641, %v2639
        %v3442 = vpack.c.bf16 %v2642, %v2640
        %v3443 = vpack.c.bf16 %v2645, %v2643
        %v3444 = vpack.c.bf16 %v2646, %v2644
        %v3445 = vpack.c.bf16 %v3421, %v3421
        %v3446 = vpack.c.bf16 %v3422, %v3422
        %v3447 = vld [vmem:[%s280 + $0x400] sm:$0xff]
        %v3448 = vld [vmem:[%s280 + $0x408] sm:$0xff]
        %v3449 = vld [vmem:[%s280 + $0x410] sm:$0xff]
        %v3450 = vld [vmem:[%s280 + $0x418] sm:$0xff]
        %v3451 = vld [vmem:[%s280 + $0x420] sm:$0xff]
        %v3452 = vld [vmem:[%s280 + $0x428] sm:$0xff]
        %v3453 = vld [vmem:[%s280 + $0x430] sm:$0xff]
        %v3454 = vld [vmem:[%s280 + $0x438] sm:$0xff]
        %v3455 = vld [vmem:[%s280 + $0x440] sm:$0xff]
        %v3456 = vld [vmem:[%s280 + $0x448] sm:$0xff]
        %v3457 = vld [vmem:[%s280 + $0x450] sm:$0xff]
        %v3458 = vld [vmem:[%s280 + $0x458] sm:$0xff]
        %v3459 = vld [vmem:[%s280 + $0x460] sm:$0xff]
        %v3460 = vld [vmem:[%s280 + $0x468] sm:$0xff]
        %v3461 = vld [vmem:[%s280 + $0x470] sm:$0xff]
        %v3462 = vld [vmem:[%s280 + $0x478] sm:$0xff]
        %v3463 = vld [vmem:[%s280 + $0x480] sm:$0xff]
        %v3464 = vld [vmem:[%s280 + $0x488] sm:$0xff]
        %v3465 = vld [vmem:[%s280 + $0x490] sm:$0xff]
        %v3466 = vld [vmem:[%s280 + $0x498] sm:$0xff]
        %v3467 = vld [vmem:[%s280 + $0x4a0] sm:$0xff]
        %v3468 = vld [vmem:[%s280 + $0x4a8] sm:$0xff]
        %v3469 = vld [vmem:[%s280 + $0x4b0] sm:$0xff]
        %v3470 = vld [vmem:[%s280 + $0x4b8] sm:$0xff]
        %v3471 = vld [vmem:[%s280 + $0x4c0] sm:$0xff]
        %v3472 = vld [vmem:[%s280 + $0x4c8] sm:$0xff]
        %v3473 = vld [vmem:[%s280 + $0x4d0] sm:$0xff]
        %v3474 = vld [vmem:[%s280 + $0x4d8] sm:$0xff]
        %v3475 = vld [vmem:[%s280 + $0x4e0] sm:$0xff]
        %v3476 = vld [vmem:[%s280 + $0x4e8] sm:$0xff]
        %v3477 = vld [vmem:[%s280 + $0x4f0] sm:$0xff]
        %v3478 = vld [vmem:[%s280 + $0x4f8] sm:$0xff]
        %v3511 = vunpack.c.l.b16 %v3447
        %v3512 = vunpack.c.h.b16 %v3447
        %v3513 = vunpack.c.l.b16 %v3448
        %v3514 = vunpack.c.h.b16 %v3448
        %v3515 = vunpack.c.l.b16 %v3449
        %v3516 = vunpack.c.h.b16 %v3449
        %v3517 = vunpack.c.l.b16 %v3450
        %v3518 = vunpack.c.h.b16 %v3450
        %v3519 = vunpack.c.l.b16 %v3451
        %v3520 = vunpack.c.h.b16 %v3451
        %v3521 = vunpack.c.l.b16 %v3452
        %v3522 = vunpack.c.h.b16 %v3452
        %v3523 = vunpack.c.l.b16 %v3453
        %v3524 = vunpack.c.h.b16 %v3453
        %v3525 = vunpack.c.l.b16 %v3454
        %v3526 = vunpack.c.h.b16 %v3454
        %v3527 = vunpack.c.l.b16 %v3455
        %v3528 = vunpack.c.h.b16 %v3455
        %v3529 = vunpack.c.l.b16 %v3456
        %v3530 = vunpack.c.h.b16 %v3456
        %v3531 = vunpack.c.l.b16 %v3457
        %v3532 = vunpack.c.h.b16 %v3457
        %v3533 = vunpack.c.l.b16 %v3458
        %v3534 = vunpack.c.h.b16 %v3458
        %v3535 = vunpack.c.l.b16 %v3459
        %v3536 = vunpack.c.h.b16 %v3459
        %v3537 = vunpack.c.l.b16 %v3460
        %v3538 = vunpack.c.h.b16 %v3460
        %v3539 = vunpack.c.l.b16 %v3461
        %v3540 = vunpack.c.h.b16 %v3461
        %v3541 = vunpack.c.l.b16 %v3462
        %v3542 = vunpack.c.h.b16 %v3462
        %v3543 = vunpack.c.l.b16 %v3463
        %v3544 = vunpack.c.h.b16 %v3463
        %v3545 = vunpack.c.l.b16 %v3464
        %v3546 = vunpack.c.h.b16 %v3464
        %v3547 = vunpack.c.l.b16 %v3465
        %v3548 = vunpack.c.h.b16 %v3465
        %v3549 = vunpack.c.l.b16 %v3466
        %v3550 = vunpack.c.h.b16 %v3466
        %v3551 = vunpack.c.l.b16 %v3467
        %v3552 = vunpack.c.h.b16 %v3467
        %v3553 = vunpack.c.l.b16 %v3468
        %v3554 = vunpack.c.h.b16 %v3468
        %v3555 = vunpack.c.l.b16 %v3469
        %v3556 = vunpack.c.h.b16 %v3469
        %v3557 = vunpack.c.l.b16 %v3470
        %v3558 = vunpack.c.h.b16 %v3470
        %v3559 = vunpack.c.l.b16 %v3471
        %v3560 = vunpack.c.h.b16 %v3471
        %v3561 = vunpack.c.l.b16 %v3472
        %v3562 = vunpack.c.h.b16 %v3472
        %v3563 = vunpack.c.l.b16 %v3473
        %v3564 = vunpack.c.h.b16 %v3473
        %v3565 = vunpack.c.l.b16 %v3474
        %v3566 = vunpack.c.h.b16 %v3474
        %v3567 = vunpack.c.l.b16 %v3475
        %v3568 = vunpack.c.h.b16 %v3475
        %v3569 = vunpack.c.l.b16 %v3476
        %v3570 = vunpack.c.h.b16 %v3476
        %v3571 = vunpack.c.l.b16 %v3477
        %v3572 = vunpack.c.h.b16 %v3477
        %v3573 = vunpack.c.l.b16 %v3478
        %v3574 = vunpack.c.h.b16 %v3478
        %v3575 = vpack.c.b16 %v3513, %v3511
        %v3576 = vpack.c.b16 %v3514, %v3512
        %v3577 = vpack.c.b16 %v3517, %v3515
        %v3578 = vpack.c.b16 %v3518, %v3516
        %v3579 = vpack.c.b16 %v3521, %v3519
        %v3580 = vpack.c.b16 %v3522, %v3520
        %v3581 = vpack.c.b16 %v3525, %v3523
        %v3582 = vpack.c.b16 %v3526, %v3524
        %v3583 = vpack.c.b16 %v3529, %v3527
        %v3584 = vpack.c.b16 %v3530, %v3528
        %v3585 = vpack.c.b16 %v3533, %v3531
        %v3586 = vpack.c.b16 %v3534, %v3532
        %v3587 = vpack.c.b16 %v3537, %v3535
        %v3588 = vpack.c.b16 %v3538, %v3536
        %v3589 = vpack.c.b16 %v3541, %v3539
        %v3590 = vpack.c.b16 %v3542, %v3540
        %v3591 = vpack.c.b16 %v3545, %v3543
        %v3592 = vpack.c.b16 %v3546, %v3544
        %v3593 = vpack.c.b16 %v3549, %v3547
        %v3594 = vpack.c.b16 %v3550, %v3548
        %v3595 = vpack.c.b16 %v3553, %v3551
        %v3596 = vpack.c.b16 %v3554, %v3552
        %v3597 = vpack.c.b16 %v3557, %v3555
        %v3598 = vpack.c.b16 %v3558, %v3556
        %v3599 = vpack.c.b16 %v3561, %v3559
        %v3600 = vpack.c.b16 %v3562, %v3560
        %v3601 = vpack.c.b16 %v3565, %v3563
        %v3602 = vpack.c.b16 %v3566, %v3564
        %v3603 = vpack.c.b16 %v3569, %v3567
        %v3604 = vpack.c.b16 %v3570, %v3568
        %v3605 = vpack.c.b16 %v3573, %v3571
        %v3606 = vpack.c.b16 %v3574, %v3572
        %3639 = vmatpush.bf16.msra.mxu0 %v3589
        %3640 = vmatpush.bf16.msra.mxu0 %v3587
        %3641 = vmatpush.bf16.msra.mxu0 %v3585
        %3642 = vmatpush.bf16.msra.mxu0 %v3583
        %3643 = vmatpush.bf16.msra.mxu0 %v3581
        %3644 = vmatpush.bf16.msra.mxu0 %v3579
        %3645 = vmatpush.bf16.msra.mxu0 %v3577
        %3646 = vmatpush.bf16.msra.mxu0 %v3575
        %3647 = vmatmul.bf16.gmra.mxu0 %v3423
        %v3648 = vpop.f32.mrf.mxu0
        %v3649 = vadd.f32 0.0, %v3648
        %v3650 = vpop.f32.mrf.mxu0
        %v3651 = vadd.f32 0.0, %v3650
        %3652 = vmatmul.bf16.gmra.mxu0 %v3425
        %v3653 = vpop.f32.mrf.mxu0
        %v3654 = vadd.f32 0.0, %v3653
        %v3655 = vpop.f32.mrf.mxu0
        %v3656 = vadd.f32 0.0, %v3655
        %3657 = vmatmul.bf16.gmra.mxu0 %v3427
        %v3658 = vpop.f32.mrf.mxu0
        %v3659 = vadd.f32 0.0, %v3658
        %v3660 = vpop.f32.mrf.mxu0
        %v3661 = vadd.f32 0.0, %v3660
        %3662 = vmatmul.bf16.gmra.mxu0 %v3429
        %v3663 = vpop.f32.mrf.mxu0
        %v3664 = vadd.f32 0.0, %v3663
        %v3665 = vpop.f32.mrf.mxu0
        %v3666 = vadd.f32 0.0, %v3665
        %3667 = vmatmul.bf16.gmra.mxu0 %v3431
        %v3668 = vpop.f32.mrf.mxu0
        %v3669 = vadd.f32 0.0, %v3668
        %v3670 = vpop.f32.mrf.mxu0
        %v3671 = vadd.f32 0.0, %v3670
        %3672 = vmatmul.bf16.gmra.mxu0 %v3433
        %v3673 = vpop.f32.mrf.mxu0
        %v3674 = vadd.f32 0.0, %v3673
        %v3675 = vpop.f32.mrf.mxu0
        %v3676 = vadd.f32 0.0, %v3675
        %3677 = vmatmul.bf16.gmra.mxu0 %v3435
        %v3678 = vpop.f32.mrf.mxu0
        %v3679 = vadd.f32 0.0, %v3678
        %v3680 = vpop.f32.mrf.mxu0
        %v3681 = vadd.f32 0.0, %v3680
        %3682 = vmatmul.bf16.gmra.mxu0 %v3437
        %v3683 = vpop.f32.mrf.mxu0
        %v3684 = vadd.f32 0.0, %v3683
        %v3685 = vpop.f32.mrf.mxu0
        %v3686 = vadd.f32 0.0, %v3685
        %3687 = vmatmul.bf16.gmra.mxu0 %v3439
        %v3688 = vpop.f32.mrf.mxu0
        %v3689 = vadd.f32 0.0, %v3688
        %v3690 = vpop.f32.mrf.mxu0
        %v3691 = vadd.f32 0.0, %v3690
        %3692 = vmatmul.bf16.gmra.mxu0 %v3441
        %v3693 = vpop.f32.mrf.mxu0
        %v3694 = vadd.f32 0.0, %v3693
        %v3695 = vpop.f32.mrf.mxu0
        %v3696 = vadd.f32 0.0, %v3695
        %3697 = vmatmul.bf16.gmra.mxu0 %v3443
        %v3698 = vpop.f32.mrf.mxu0
        %v3699 = vadd.f32 0.0, %v3698
        %v3700 = vpop.f32.mrf.mxu0
        %v3701 = vadd.f32 0.0, %v3700
        %3702 = vmatmul.bf16.gmra.mxu0 %v3445
        %v3703 = vpop.f32.mrf.mxu0
        %v3704 = vadd.f32 0.0, %v3703
        %v3705 = vpop.f32.mrf.mxu0
        %3706 = vdwg.mxu0
        %3707 = vmatpush.bf16.msra.mxu0 %v3605
        %3708 = vmatpush.bf16.msra.mxu0 %v3603
        %3709 = vmatpush.bf16.msra.mxu0 %v3601
        %3710 = vmatpush.bf16.msra.mxu0 %v3599
        %3711 = vmatpush.bf16.msra.mxu0 %v3597
        %3712 = vmatpush.bf16.msra.mxu0 %v3595
        %3713 = vmatpush.bf16.msra.mxu0 %v3593
        %3714 = vmatpush.bf16.msra.mxu0 %v3591
        %3715 = vmatmul.bf16.gmra.mxu0 %v3424
        %v3716 = vpop.f32.mrf.mxu0
        %v3717 = vadd.f32 %v3649, %v3716
        %v3718 = vpop.f32.mrf.mxu0
        %v3719 = vadd.f32 %v3651, %v3718
        %3720 = vmatmul.bf16.gmra.mxu0 %v3426
        %v3721 = vpop.f32.mrf.mxu0
        %v3722 = vadd.f32 %v3654, %v3721
        %v3723 = vpop.f32.mrf.mxu0
        %v3724 = vadd.f32 %v3656, %v3723
        %3725 = vmatmul.bf16.gmra.mxu0 %v3428
        %v3726 = vpop.f32.mrf.mxu0
        %v3727 = vadd.f32 %v3659, %v3726
        %v3728 = vpop.f32.mrf.mxu0
        %v3729 = vadd.f32 %v3661, %v3728
        %3730 = vmatmul.bf16.gmra.mxu0 %v3430
        %v3731 = vpop.f32.mrf.mxu0
        %v3732 = vadd.f32 %v3664, %v3731
        %v3733 = vpop.f32.mrf.mxu0
        %v3734 = vadd.f32 %v3666, %v3733
        %3735 = vmatmul.bf16.gmra.mxu0 %v3432
        %v3736 = vpop.f32.mrf.mxu0
        %v3737 = vadd.f32 %v3669, %v3736
        %v3738 = vpop.f32.mrf.mxu0
        %v3739 = vadd.f32 %v3671, %v3738
        %3740 = vmatmul.bf16.gmra.mxu0 %v3434
        %v3741 = vpop.f32.mrf.mxu0
        %v3742 = vadd.f32 %v3674, %v3741
        %v3743 = vpop.f32.mrf.mxu0
        %v3744 = vadd.f32 %v3676, %v3743
        %3745 = vmatmul.bf16.gmra.mxu0 %v3436
        %v3746 = vpop.f32.mrf.mxu0
        %v3747 = vadd.f32 %v3679, %v3746
        %v3748 = vpop.f32.mrf.mxu0
        %v3749 = vadd.f32 %v3681, %v3748
        %3750 = vmatmul.bf16.gmra.mxu0 %v3438
        %v3751 = vpop.f32.mrf.mxu0
        %v3752 = vadd.f32 %v3684, %v3751
        %v3753 = vpop.f32.mrf.mxu0
        %v3754 = vadd.f32 %v3686, %v3753
        %3755 = vmatmul.bf16.gmra.mxu0 %v3440
        %v3756 = vpop.f32.mrf.mxu0
        %v3757 = vadd.f32 %v3689, %v3756
        %v3758 = vpop.f32.mrf.mxu0
        %v3759 = vadd.f32 %v3691, %v3758
        %3760 = vmatmul.bf16.gmra.mxu0 %v3442
        %v3761 = vpop.f32.mrf.mxu0
        %v3762 = vadd.f32 %v3694, %v3761
        %v3763 = vpop.f32.mrf.mxu0
        %v3764 = vadd.f32 %v3696, %v3763
        %3765 = vmatmul.bf16.gmra.mxu0 %v3444
        %v3766 = vpop.f32.mrf.mxu0
        %v3767 = vadd.f32 %v3699, %v3766
        %v3768 = vpop.f32.mrf.mxu0
        %v3769 = vadd.f32 %v3701, %v3768
        %3770 = vmatmul.bf16.gmra.mxu0 %v3446
        %v3771 = vpop.f32.mrf.mxu0
        %v3772 = vadd.f32 %v3704, %v3771
        %v3773 = vpop.f32.mrf.mxu0
        %3774 = vdwg.mxu0
        %3775 = vmatpush.bf16.msra.mxu0 %v3590
        %3776 = vmatpush.bf16.msra.mxu0 %v3588
        %3777 = vmatpush.bf16.msra.mxu0 %v3586
        %3778 = vmatpush.bf16.msra.mxu0 %v3584
        %3779 = vmatpush.bf16.msra.mxu0 %v3582
        %3780 = vmatpush.bf16.msra.mxu0 %v3580
        %3781 = vmatpush.bf16.msra.mxu0 %v3578
        %3782 = vmatpush.bf16.msra.mxu0 %v3576
        %3783 = vmatmul.bf16.gmra.mxu0 %v3423
        %v3784 = vpop.f32.mrf.mxu0
        %v3785 = vadd.f32 0.0, %v3784
        %v3786 = vpop.f32.mrf.mxu0
        %v3787 = vadd.f32 0.0, %v3786
        %3788 = vmatmul.bf16.gmra.mxu0 %v3425
        %v3789 = vpop.f32.mrf.mxu0
        %v3790 = vadd.f32 0.0, %v3789
        %v3791 = vpop.f32.mrf.mxu0
        %v3792 = vadd.f32 0.0, %v3791
        %3793 = vmatmul.bf16.gmra.mxu0 %v3427
        %v3794 = vpop.f32.mrf.mxu0
        %v3795 = vadd.f32 0.0, %v3794
        %v3796 = vpop.f32.mrf.mxu0
        %v3797 = vadd.f32 0.0, %v3796
        %3798 = vmatmul.bf16.gmra.mxu0 %v3429
        %v3799 = vpop.f32.mrf.mxu0
        %v3800 = vadd.f32 0.0, %v3799
        %v3801 = vpop.f32.mrf.mxu0
        %v3802 = vadd.f32 0.0, %v3801
        %3803 = vmatmul.bf16.gmra.mxu0 %v3431
        %v3804 = vpop.f32.mrf.mxu0
        %v3805 = vadd.f32 0.0, %v3804
        %v3806 = vpop.f32.mrf.mxu0
        %v3807 = vadd.f32 0.0, %v3806
        %3808 = vmatmul.bf16.gmra.mxu0 %v3433
        %v3809 = vpop.f32.mrf.mxu0
        %v3810 = vadd.f32 0.0, %v3809
        %v3811 = vpop.f32.mrf.mxu0
        %v3812 = vadd.f32 0.0, %v3811
        %3813 = vmatmul.bf16.gmra.mxu0 %v3435
        %v3814 = vpop.f32.mrf.mxu0
        %v3815 = vadd.f32 0.0, %v3814
        %v3816 = vpop.f32.mrf.mxu0
        %v3817 = vadd.f32 0.0, %v3816
        %3818 = vmatmul.bf16.gmra.mxu0 %v3437
        %v3819 = vpop.f32.mrf.mxu0
        %v3820 = vadd.f32 0.0, %v3819
        %v3821 = vpop.f32.mrf.mxu0
        %v3822 = vadd.f32 0.0, %v3821
        %3823 = vmatmul.bf16.gmra.mxu0 %v3439
        %v3824 = vpop.f32.mrf.mxu0
        %v3825 = vadd.f32 0.0, %v3824
        %v3826 = vpop.f32.mrf.mxu0
        %v3827 = vadd.f32 0.0, %v3826
        %3828 = vmatmul.bf16.gmra.mxu0 %v3441
        %v3829 = vpop.f32.mrf.mxu0
        %v3830 = vadd.f32 0.0, %v3829
        %v3831 = vpop.f32.mrf.mxu0
        %v3832 = vadd.f32 0.0, %v3831
        %3833 = vmatmul.bf16.gmra.mxu0 %v3443
        %v3834 = vpop.f32.mrf.mxu0
        %v3835 = vadd.f32 0.0, %v3834
        %v3836 = vpop.f32.mrf.mxu0
        %v3837 = vadd.f32 0.0, %v3836
        %3838 = vmatmul.bf16.gmra.mxu0 %v3445
        %v3839 = vpop.f32.mrf.mxu0
        %v3840 = vadd.f32 0.0, %v3839
        %v3841 = vpop.f32.mrf.mxu0
        %3842 = vdwg.mxu0
        %3843 = vmatpush.bf16.msra.mxu0 %v3606
        %3844 = vmatpush.bf16.msra.mxu0 %v3604
        %3845 = vmatpush.bf16.msra.mxu0 %v3602
        %3846 = vmatpush.bf16.msra.mxu0 %v3600
        %3847 = vmatpush.bf16.msra.mxu0 %v3598
        %3848 = vmatpush.bf16.msra.mxu0 %v3596
        %3849 = vmatpush.bf16.msra.mxu0 %v3594
        %3850 = vmatpush.bf16.msra.mxu0 %v3592
        %3851 = vmatmul.bf16.gmra.mxu0 %v3424
        %v3852 = vpop.f32.mrf.mxu0
        %v3853 = vadd.f32 %v3785, %v3852
        %v3854 = vpop.f32.mrf.mxu0
        %v3855 = vadd.f32 %v3787, %v3854
        %3856 = vmatmul.bf16.gmra.mxu0 %v3426
        %v3857 = vpop.f32.mrf.mxu0
        %v3858 = vadd.f32 %v3790, %v3857
        %v3859 = vpop.f32.mrf.mxu0
        %v3860 = vadd.f32 %v3792, %v3859
        %3861 = vmatmul.bf16.gmra.mxu0 %v3428
        %v3862 = vpop.f32.mrf.mxu0
        %v3863 = vadd.f32 %v3795, %v3862
        %v3864 = vpop.f32.mrf.mxu0
        %v3865 = vadd.f32 %v3797, %v3864
        %3866 = vmatmul.bf16.gmra.mxu0 %v3430
        %v3867 = vpop.f32.mrf.mxu0
        %v3868 = vadd.f32 %v3800, %v3867
        %v3869 = vpop.f32.mrf.mxu0
        %v3870 = vadd.f32 %v3802, %v3869
        %3871 = vmatmul.bf16.gmra.mxu0 %v3432
        %v3872 = vpop.f32.mrf.mxu0
        %v3873 = vadd.f32 %v3805, %v3872
        %v3874 = vpop.f32.mrf.mxu0
        %v3875 = vadd.f32 %v3807, %v3874
        %3876 = vmatmul.bf16.gmra.mxu0 %v3434
        %v3877 = vpop.f32.mrf.mxu0
        %v3878 = vadd.f32 %v3810, %v3877
        %v3879 = vpop.f32.mrf.mxu0
        %v3880 = vadd.f32 %v3812, %v3879
        %3881 = vmatmul.bf16.gmra.mxu0 %v3436
        %v3882 = vpop.f32.mrf.mxu0
        %v3883 = vadd.f32 %v3815, %v3882
        %v3884 = vpop.f32.mrf.mxu0
        %v3885 = vadd.f32 %v3817, %v3884
        %3886 = vmatmul.bf16.gmra.mxu0 %v3438
        %v3887 = vpop.f32.mrf.mxu0
        %v3888 = vadd.f32 %v3820, %v3887
        %v3889 = vpop.f32.mrf.mxu0
        %v3890 = vadd.f32 %v3822, %v3889
        %3891 = vmatmul.bf16.gmra.mxu0 %v3440
        %v3892 = vpop.f32.mrf.mxu0
        %v3893 = vadd.f32 %v3825, %v3892
        %v3894 = vpop.f32.mrf.mxu0
        %v3895 = vadd.f32 %v3827, %v3894
        %3896 = vmatmul.bf16.gmra.mxu0 %v3442
        %v3897 = vpop.f32.mrf.mxu0
        %v3898 = vadd.f32 %v3830, %v3897
        %v3899 = vpop.f32.mrf.mxu0
        %v3900 = vadd.f32 %v3832, %v3899
        %3901 = vmatmul.bf16.gmra.mxu0 %v3444
        %v3902 = vpop.f32.mrf.mxu0
        %v3903 = vadd.f32 %v3835, %v3902
        %v3904 = vpop.f32.mrf.mxu0
        %v3905 = vadd.f32 %v3837, %v3904
        %3906 = vmatmul.bf16.gmra.mxu0 %v3446
        %v3907 = vpop.f32.mrf.mxu0
        %v3908 = vadd.f32 %v3840, %v3907
        %v3909 = vpop.f32.mrf.mxu0
        %3910 = vdwg.mxu0
        %v3911 = vadd.f32 %v3375, %v3717
        %v3912 = vadd.f32 %v3376, %v3853
        %v3913 = vadd.f32 %v3377, %v3719
        %v3914 = vadd.f32 %v3378, %v3855
        %v3915 = vadd.f32 %v3379, %v3722
        %v3916 = vadd.f32 %v3380, %v3858
        %v3917 = vadd.f32 %v3381, %v3724
        %v3918 = vadd.f32 %v3382, %v3860
        %v3919 = vadd.f32 %v3383, %v3727
        %v3920 = vadd.f32 %v3384, %v3863
        %v3921 = vadd.f32 %v3385, %v3729
        %v3922 = vadd.f32 %v3386, %v3865
        %v3923 = vadd.f32 %v3387, %v3732
        %v3924 = vadd.f32 %v3388, %v3868
        %v3925 = vadd.f32 %v3389, %v3734
        %v3926 = vadd.f32 %v3390, %v3870
        %v3927 = vadd.f32 %v3391, %v3737
        %v3928 = vadd.f32 %v3392, %v3873
        %v3929 = vadd.f32 %v3393, %v3739
        %v3930 = vadd.f32 %v3394, %v3875
        %v3931 = vadd.f32 %v3395, %v3742
        %v3932 = vadd.f32 %v3396, %v3878
        %v3933 = vadd.f32 %v3397, %v3744
        %v3934 = vadd.f32 %v3398, %v3880
        %v3935 = vadd.f32 %v3399, %v3747
        %v3936 = vadd.f32 %v3400, %v3883
        %v3937 = vadd.f32 %v3401, %v3749
        %v3938 = vadd.f32 %v3402, %v3885
        %v3939 = vadd.f32 %v3403, %v3752
        %v3940 = vadd.f32 %v3404, %v3888
        %v3941 = vadd.f32 %v3405, %v3754
        %v3942 = vadd.f32 %v3406, %v3890
        %v3943 = vadd.f32 %v3407, %v3757
        %v3944 = vadd.f32 %v3408, %v3893
        %v3945 = vadd.f32 %v3409, %v3759
        %v3946 = vadd.f32 %v3410, %v3895
        %v3947 = vadd.f32 %v3411, %v3762
        %v3948 = vadd.f32 %v3412, %v3898
        %v3949 = vadd.f32 %v3413, %v3764
        %v3950 = vadd.f32 %v3414, %v3900
        %v3951 = vadd.f32 %v3415, %v3767
        %v3952 = vadd.f32 %v3416, %v3903
        %v3953 = vadd.f32 %v3417, %v3769
        %v3954 = vadd.f32 %v3418, %v3905
        %v3955 = vadd.f32 %v3419, %v3772
        %v3956 = vadd.f32 %v3420, %v3908
        %v3957 = vld [vmem:[#allocation2 + $0x20] sm:$0xfe]
        %v3958 = vld [vmem:[#allocation2 + $0x28] sm:$0xfe]
        %v3959 = vld [vmem:[#allocation2 + $0x30] sm:$0xff]
        %v3960 = vld [vmem:[#allocation2 + $0x38] sm:$0xff]
        %v3961 = vld [vmem:[#allocation2 + $0x40] sm:$0xff]
        %v3962 = vld [vmem:[#allocation2 + $0x48] sm:$0xff]
        %v3963 = vld [vmem:[#allocation2 + $0x50] sm:$0xff]
        %v3964 = vld [vmem:[#allocation2 + $0x58] sm:$0xff]
        %v3965 = vld [vmem:[#allocation2 + $0x60] sm:$0xff]
        %v3966 = vld [vmem:[#allocation2 + $0x68] sm:$0xff]
        %v3967 = vld [vmem:[#allocation2 + $0x70] sm:$0xff]
        %v3968 = vld [vmem:[#allocation2 + $0x78] sm:$0xff]
        %v3969 = vld [vmem:[#allocation2 + $0x80] sm:$0xff]
        %v3970 = vld [vmem:[#allocation2 + $0x88] sm:$0xff]
        %v3971 = vld [vmem:[#allocation2 + $0x90] sm:$0xff]
        %v3972 = vld [vmem:[#allocation2 + $0x98] sm:$0xff]
        %v3973 = vld [vmem:[#allocation2 + $0xa0] sm:$0xff]
        %v3974 = vld [vmem:[#allocation2 + $0xa8] sm:$0xff]
        %v3975 = vld [vmem:[#allocation2 + $0xb0] sm:$0xff]
        %v3976 = vld [vmem:[#allocation2 + $0xb8] sm:$0xff]
        %v3977 = vld [vmem:[#allocation2 + $0xc0] sm:$0xff]
        %v3978 = vld [vmem:[#allocation2 + $0xc8] sm:$0xff]
        %v3979 = vld [vmem:[#allocation2 + $0xd0] sm:$0xff]
        %v3980 = vld [vmem:[#allocation2 + $0xd8] sm:$0xff]
        %v3981 = vld [vmem:[#allocation2 + $0xe0] sm:$0xff]
        %v3982 = vld [vmem:[#allocation2 + $0xe8] sm:$0xff]
        %v3983 = vld [vmem:[#allocation2 + $0xf0] sm:$0xff]
        %v3984 = vld [vmem:[#allocation2 + $0xf8] sm:$0xff]
        %v3985 = vld [vmem:[#allocation2 + $0x100] sm:$0xff]
        %v3986 = vld [vmem:[#allocation2 + $0x108] sm:$0xff]
        %v3987 = vld [vmem:[#allocation2 + $0x110] sm:$0xff]
        %v3988 = vld [vmem:[#allocation2 + $0x118] sm:$0xff]
        %v3989 = vld [vmem:[#allocation2 + $0x120] sm:$0xff]
        %v3990 = vld [vmem:[#allocation2 + $0x128] sm:$0xff]
        %v3991 = vld [vmem:[#allocation2 + $0x130] sm:$0xff]
        %v3992 = vld [vmem:[#allocation2 + $0x138] sm:$0xff]
        %v3993 = vld [vmem:[#allocation2 + $0x140] sm:$0xff]
        %v3994 = vld [vmem:[#allocation2 + $0x148] sm:$0xff]
        %v3995 = vld [vmem:[#allocation2 + $0x150] sm:$0xff]
        %v3996 = vld [vmem:[#allocation2 + $0x158] sm:$0xff]
        %v3997 = vld [vmem:[#allocation2 + $0x160] sm:$0xff]
        %v3998 = vld [vmem:[#allocation2 + $0x168] sm:$0xff]
        %v3999 = vld [vmem:[#allocation2 + $0x170] sm:$0xff]
        %v4000 = vld [vmem:[#allocation2 + $0x178] sm:$0xff]
        %v4001 = vld [vmem:[#allocation2 + $0x180] sm:$0xff]
        %v4002 = vld [vmem:[#allocation2 + $0x188] sm:$0xff]
        %v4003 = vld [vmem:[#allocation2 + $0x190] sm:$0x1]
        %v4004 = vld [vmem:[#allocation2 + $0x198] sm:$0x1]
        %v4005 = vpack.c.bf16 %v3959, %v3957
        %v4006 = vpack.c.bf16 %v3960, %v3958
        %v4007 = vpack.c.bf16 %v3963, %v3961
        %v4008 = vpack.c.bf16 %v3964, %v3962
        %v4009 = vpack.c.bf16 %v3967, %v3965
        %v4010 = vpack.c.bf16 %v3968, %v3966
        %v4011 = vpack.c.bf16 %v3971, %v3969
        %v4012 = vpack.c.bf16 %v3972, %v3970
        %v4013 = vpack.c.bf16 %v3975, %v3973
        %v4014 = vpack.c.bf16 %v3976, %v3974
        %v4015 = vpack.c.bf16 %v3979, %v3977
        %v4016 = vpack.c.bf16 %v3980, %v3978
        %v4017 = vpack.c.bf16 %v3983, %v3981
        %v4018 = vpack.c.bf16 %v3984, %v3982
        %v4019 = vpack.c.bf16 %v3987, %v3985
        %v4020 = vpack.c.bf16 %v3988, %v3986
        %v4021 = vpack.c.bf16 %v3991, %v3989
        %v4022 = vpack.c.bf16 %v3992, %v3990
        %v4023 = vpack.c.bf16 %v3995, %v3993
        %v4024 = vpack.c.bf16 %v3996, %v3994
        %v4025 = vpack.c.bf16 %v3999, %v3997
        %v4026 = vpack.c.bf16 %v4000, %v3998
        %v4027 = vpack.c.bf16 %v4003, %v4001
        %v4028 = vpack.c.bf16 %v4004, %v4002
        %v4029 = vld [vmem:[%s280 + $0x500] sm:$0xff]
        %v4030 = vld [vmem:[%s280 + $0x508] sm:$0xff]
        %v4031 = vld [vmem:[%s280 + $0x510] sm:$0xff]
        %v4032 = vld [vmem:[%s280 + $0x518] sm:$0xff]
        %v4033 = vld [vmem:[%s280 + $0x520] sm:$0xff]
        %v4034 = vld [vmem:[%s280 + $0x528] sm:$0xff]
        %v4035 = vld [vmem:[%s280 + $0x530] sm:$0xff]
        %v4036 = vld [vmem:[%s280 + $0x538] sm:$0xff]
        %v4037 = vld [vmem:[%s280 + $0x540] sm:$0xff]
        %v4038 = vld [vmem:[%s280 + $0x548] sm:$0xff]
        %v4039 = vld [vmem:[%s280 + $0x550] sm:$0xff]
        %v4040 = vld [vmem:[%s280 + $0x558] sm:$0xff]
        %v4041 = vld [vmem:[%s280 + $0x560] sm:$0xff]
        %v4042 = vld [vmem:[%s280 + $0x568] sm:$0xff]
        %v4043 = vld [vmem:[%s280 + $0x570] sm:$0xff]
        %v4044 = vld [vmem:[%s280 + $0x578] sm:$0xff]
        %v4045 = vld [vmem:[%s280 + $0x580] sm:$0xff]
        %v4046 = vld [vmem:[%s280 + $0x588] sm:$0xff]
        %v4047 = vld [vmem:[%s280 + $0x590] sm:$0xff]
        %v4048 = vld [vmem:[%s280 + $0x598] sm:$0xff]
        %v4049 = vld [vmem:[%s280 + $0x5a0] sm:$0xff]
        %v4050 = vld [vmem:[%s280 + $0x5a8] sm:$0xff]
        %v4051 = vld [vmem:[%s280 + $0x5b0] sm:$0xff]
        %v4052 = vld [vmem:[%s280 + $0x5b8] sm:$0xff]
        %v4053 = vld [vmem:[%s280 + $0x5c0] sm:$0xff]
        %v4054 = vld [vmem:[%s280 + $0x5c8] sm:$0xff]
        %v4055 = vld [vmem:[%s280 + $0x5d0] sm:$0xff]
        %v4056 = vld [vmem:[%s280 + $0x5d8] sm:$0xff]
        %v4057 = vld [vmem:[%s280 + $0x5e0] sm:$0xff]
        %v4058 = vld [vmem:[%s280 + $0x5e8] sm:$0xff]
        %v4059 = vld [vmem:[%s280 + $0x5f0] sm:$0xff]
        %v4060 = vld [vmem:[%s280 + $0x5f8] sm:$0xff]
        %vm4061 = vsmask.f32 7424
        %v4063 = vshrl.u32 %v4005, 16
        %v4065 = vshll.u32 %v4005, 16
        %v4067 = vrot.slane %v4065, 1
        %v4068 = vor.u32 %v4063, %v4067
        %v4070 = vshll.u32 %v4007, 16
        %v4072 = vrot.slane %v4070, 1
        %v4073 = vsel %vm4061, %v4068, %v4072
        %v4075 = vshrl.u32 %v4006, 16
        %v4077 = vshll.u32 %v4006, 16
        %v4079 = vrot.slane %v4077, 1
        %v4080 = vor.u32 %v4075, %v4079
        %v4082 = vshll.u32 %v4008, 16
        %v4084 = vrot.slane %v4082, 1
        %v4085 = vsel %vm4061, %v4080, %v4084
        %v4086 = vshrl.u32 %v4007, 16
        %v4088 = vor.u32 %v4086, %v4072
        %v4090 = vshll.u32 %v4009, 16
        %v4092 = vrot.slane %v4090, 1
        %v4093 = vsel %vm4061, %v4088, %v4092
        %v4094 = vshrl.u32 %v4008, 16
        %v4096 = vor.u32 %v4094, %v4084
        %v4098 = vshll.u32 %v4010, 16
        %v4100 = vrot.slane %v4098, 1
        %v4101 = vsel %vm4061, %v4096, %v4100
        %v4102 = vshrl.u32 %v4009, 16
        %v4104 = vor.u32 %v4102, %v4092
        %v4106 = vshll.u32 %v4011, 16
        %v4108 = vrot.slane %v4106, 1
        %v4109 = vsel %vm4061, %v4104, %v4108
        %v4110 = vshrl.u32 %v4010, 16
        %v4112 = vor.u32 %v4110, %v4100
        %v4114 = vshll.u32 %v4012, 16
        %v4116 = vrot.slane %v4114, 1
        %v4117 = vsel %vm4061, %v4112, %v4116
        %v4118 = vshrl.u32 %v4011, 16
        %v4120 = vor.u32 %v4118, %v4108
        %v4122 = vshll.u32 %v4013, 16
        %v4124 = vrot.slane %v4122, 1
        %v4125 = vsel %vm4061, %v4120, %v4124
        %v4126 = vshrl.u32 %v4012, 16
        %v4128 = vor.u32 %v4126, %v4116
        %v4130 = vshll.u32 %v4014, 16
        %v4132 = vrot.slane %v4130, 1
        %v4133 = vsel %vm4061, %v4128, %v4132
        %v4134 = vshrl.u32 %v4013, 16
        %v4136 = vor.u32 %v4134, %v4124
        %v4138 = vshll.u32 %v4015, 16
        %v4140 = vrot.slane %v4138, 1
        %v4141 = vsel %vm4061, %v4136, %v4140
        %v4142 = vshrl.u32 %v4014, 16
        %v4144 = vor.u32 %v4142, %v4132
        %v4146 = vshll.u32 %v4016, 16
        %v4148 = vrot.slane %v4146, 1
        %v4149 = vsel %vm4061, %v4144, %v4148
        %v4150 = vshrl.u32 %v4015, 16
        %v4152 = vor.u32 %v4150, %v4140
        %v4154 = vshll.u32 %v4017, 16
        %v4156 = vrot.slane %v4154, 1
        %v4157 = vsel %vm4061, %v4152, %v4156
        %v4158 = vshrl.u32 %v4016, 16
        %v4160 = vor.u32 %v4158, %v4148
        %v4162 = vshll.u32 %v4018, 16
        %v4164 = vrot.slane %v4162, 1
        %v4165 = vsel %vm4061, %v4160, %v4164
        %v4166 = vshrl.u32 %v4017, 16
        %v4168 = vor.u32 %v4166, %v4156
        %v4170 = vshll.u32 %v4019, 16
        %v4172 = vrot.slane %v4170, 1
        %v4173 = vsel %vm4061, %v4168, %v4172
        %v4174 = vshrl.u32 %v4018, 16
        %v4176 = vor.u32 %v4174, %v4164
        %v4178 = vshll.u32 %v4020, 16
        %v4180 = vrot.slane %v4178, 1
        %v4181 = vsel %vm4061, %v4176, %v4180
        %v4182 = vshrl.u32 %v4019, 16
        %v4184 = vor.u32 %v4182, %v4172
        %v4186 = vshll.u32 %v4021, 16
        %v4188 = vrot.slane %v4186, 1
        %v4189 = vsel %vm4061, %v4184, %v4188
        %v4190 = vshrl.u32 %v4020, 16
        %v4192 = vor.u32 %v4190, %v4180
        %v4194 = vshll.u32 %v4022, 16
        %v4196 = vrot.slane %v4194, 1
        %v4197 = vsel %vm4061, %v4192, %v4196
        %v4198 = vshrl.u32 %v4021, 16
        %v4200 = vor.u32 %v4198, %v4188
        %v4202 = vshll.u32 %v4023, 16
        %v4204 = vrot.slane %v4202, 1
        %v4205 = vsel %vm4061, %v4200, %v4204
        %v4206 = vshrl.u32 %v4022, 16
        %v4208 = vor.u32 %v4206, %v4196
        %v4210 = vshll.u32 %v4024, 16
        %v4212 = vrot.slane %v4210, 1
        %v4213 = vsel %vm4061, %v4208, %v4212
        %v4214 = vshrl.u32 %v4023, 16
        %v4216 = vor.u32 %v4214, %v4204
        %v4218 = vshll.u32 %v4025, 16
        %v4220 = vrot.slane %v4218, 1
        %v4221 = vsel %vm4061, %v4216, %v4220
        %v4222 = vshrl.u32 %v4024, 16
        %v4224 = vor.u32 %v4222, %v4212
        %v4226 = vshll.u32 %v4026, 16
        %v4228 = vrot.slane %v4226, 1
        %v4229 = vsel %vm4061, %v4224, %v4228
        %v4230 = vshrl.u32 %v4025, 16
        %v4232 = vor.u32 %v4230, %v4220
        %v4234 = vshll.u32 %v4027, 16
        %v4236 = vrot.slane %v4234, 1
        %v4237 = vsel %vm4061, %v4232, %v4236
        %v4238 = vshrl.u32 %v4026, 16
        %v4240 = vor.u32 %v4238, %v4228
        %v4242 = vshll.u32 %v4028, 16
        %v4244 = vrot.slane %v4242, 1
        %v4245 = vsel %vm4061, %v4240, %v4244
        %v4246 = vshrl.u32 %v4027, 16
        %v4248 = vor.u32 %v4246, %v4236
        %v4249 = vshrl.u32 %v4028, 16
        %v4251 = vor.u32 %v4249, %v4244
        %v4308 = vunpack.c.l.b16 %v4029
        %v4309 = vunpack.c.h.b16 %v4029
        %v4310 = vunpack.c.l.b16 %v4030
        %v4311 = vunpack.c.h.b16 %v4030
        %v4312 = vunpack.c.l.b16 %v4031
        %v4313 = vunpack.c.h.b16 %v4031
        %v4314 = vunpack.c.l.b16 %v4032
        %v4315 = vunpack.c.h.b16 %v4032
        %v4316 = vunpack.c.l.b16 %v4033
        %v4317 = vunpack.c.h.b16 %v4033
        %v4318 = vunpack.c.l.b16 %v4034
        %v4319 = vunpack.c.h.b16 %v4034
        %v4320 = vunpack.c.l.b16 %v4035
        %v4321 = vunpack.c.h.b16 %v4035
        %v4322 = vunpack.c.l.b16 %v4036
        %v4323 = vunpack.c.h.b16 %v4036
        %v4324 = vunpack.c.l.b16 %v4037
        %v4325 = vunpack.c.h.b16 %v4037
        %v4326 = vunpack.c.l.b16 %v4038
        %v4327 = vunpack.c.h.b16 %v4038
        %v4328 = vunpack.c.l.b16 %v4039
        %v4329 = vunpack.c.h.b16 %v4039
        %v4330 = vunpack.c.l.b16 %v4040
        %v4331 = vunpack.c.h.b16 %v4040
        %v4332 = vunpack.c.l.b16 %v4041
        %v4333 = vunpack.c.h.b16 %v4041
        %v4334 = vunpack.c.l.b16 %v4042
        %v4335 = vunpack.c.h.b16 %v4042
        %v4336 = vunpack.c.l.b16 %v4043
        %v4337 = vunpack.c.h.b16 %v4043
        %v4338 = vunpack.c.l.b16 %v4044
        %v4339 = vunpack.c.h.b16 %v4044
        %v4340 = vunpack.c.l.b16 %v4045
        %v4341 = vunpack.c.h.b16 %v4045
        %v4342 = vunpack.c.l.b16 %v4046
        %v4343 = vunpack.c.h.b16 %v4046
        %v4344 = vunpack.c.l.b16 %v4047
        %v4345 = vunpack.c.h.b16 %v4047
        %v4346 = vunpack.c.l.b16 %v4048
        %v4347 = vunpack.c.h.b16 %v4048
        %v4348 = vunpack.c.l.b16 %v4049
        %v4349 = vunpack.c.h.b16 %v4049
        %v4350 = vunpack.c.l.b16 %v4050
        %v4351 = vunpack.c.h.b16 %v4050
        %v4352 = vunpack.c.l.b16 %v4051
        %v4353 = vunpack.c.h.b16 %v4051
        %v4354 = vunpack.c.l.b16 %v4052
        %v4355 = vunpack.c.h.b16 %v4052
        %v4356 = vunpack.c.l.b16 %v4053
        %v4357 = vunpack.c.h.b16 %v4053
        %v4358 = vunpack.c.l.b16 %v4054
        %v4359 = vunpack.c.h.b16 %v4054
        %v4360 = vunpack.c.l.b16 %v4055
        %v4361 = vunpack.c.h.b16 %v4055
        %v4362 = vunpack.c.l.b16 %v4056
        %v4363 = vunpack.c.h.b16 %v4056
        %v4364 = vunpack.c.l.b16 %v4057
        %v4365 = vunpack.c.h.b16 %v4057
        %v4366 = vunpack.c.l.b16 %v4058
        %v4367 = vunpack.c.h.b16 %v4058
        %v4368 = vunpack.c.l.b16 %v4059
        %v4369 = vunpack.c.h.b16 %v4059
        %v4370 = vunpack.c.l.b16 %v4060
        %v4371 = vunpack.c.h.b16 %v4060
        %v4372 = vpack.c.b16 %v4310, %v4308
        %v4373 = vpack.c.b16 %v4311, %v4309
        %v4374 = vpack.c.b16 %v4314, %v4312
        %v4375 = vpack.c.b16 %v4315, %v4313
        %v4376 = vpack.c.b16 %v4318, %v4316
        %v4377 = vpack.c.b16 %v4319, %v4317
        %v4378 = vpack.c.b16 %v4322, %v4320
        %v4379 = vpack.c.b16 %v4323, %v4321
        %v4380 = vpack.c.b16 %v4326, %v4324
        %v4381 = vpack.c.b16 %v4327, %v4325
        %v4382 = vpack.c.b16 %v4330, %v4328
        %v4383 = vpack.c.b16 %v4331, %v4329
        %v4384 = vpack.c.b16 %v4334, %v4332
        %v4385 = vpack.c.b16 %v4335, %v4333
        %v4386 = vpack.c.b16 %v4338, %v4336
        %v4387 = vpack.c.b16 %v4339, %v4337
        %v4388 = vpack.c.b16 %v4342, %v4340
        %v4389 = vpack.c.b16 %v4343, %v4341
        %v4390 = vpack.c.b16 %v4346, %v4344
        %v4391 = vpack.c.b16 %v4347, %v4345
        %v4392 = vpack.c.b16 %v4350, %v4348
        %v4393 = vpack.c.b16 %v4351, %v4349
        %v4394 = vpack.c.b16 %v4354, %v4352
        %v4395 = vpack.c.b16 %v4355, %v4353
        %v4396 = vpack.c.b16 %v4358, %v4356
        %v4397 = vpack.c.b16 %v4359, %v4357
        %v4398 = vpack.c.b16 %v4362, %v4360
        %v4399 = vpack.c.b16 %v4363, %v4361
        %v4400 = vpack.c.b16 %v4366, %v4364
        %v4401 = vpack.c.b16 %v4367, %v4365
        %v4402 = vpack.c.b16 %v4370, %v4368
        %v4403 = vpack.c.b16 %v4371, %v4369
        %4436 = vmatpush.bf16.msra.mxu0 %v4386
        %4437 = vmatpush.bf16.msra.mxu0 %v4384
        %4438 = vmatpush.bf16.msra.mxu0 %v4382
        %4439 = vmatpush.bf16.msra.mxu0 %v4380
        %4440 = vmatpush.bf16.msra.mxu0 %v4378
        %4441 = vmatpush.bf16.msra.mxu0 %v4376
        %4442 = vmatpush.bf16.msra.mxu0 %v4374
        %4443 = vmatpush.bf16.msra.mxu0 %v4372
        %4444 = vmatmul.bf16.gmra.mxu0 %v4073
        %v4445 = vpop.f32.mrf.mxu0
        %v4446 = vadd.f32 0.0, %v4445
        %v4447 = vpop.f32.mrf.mxu0
        %v4448 = vadd.f32 0.0, %v4447
        %4449 = vmatmul.bf16.gmra.mxu0 %v4093
        %v4450 = vpop.f32.mrf.mxu0
        %v4451 = vadd.f32 0.0, %v4450
        %v4452 = vpop.f32.mrf.mxu0
        %v4453 = vadd.f32 0.0, %v4452
        %4454 = vmatmul.bf16.gmra.mxu0 %v4109
        %v4455 = vpop.f32.mrf.mxu0
        %v4456 = vadd.f32 0.0, %v4455
        %v4457 = vpop.f32.mrf.mxu0
        %v4458 = vadd.f32 0.0, %v4457
        %4459 = vmatmul.bf16.gmra.mxu0 %v4125
        %v4460 = vpop.f32.mrf.mxu0
        %v4461 = vadd.f32 0.0, %v4460
        %v4462 = vpop.f32.mrf.mxu0
        %v4463 = vadd.f32 0.0, %v4462
        %4464 = vmatmul.bf16.gmra.mxu0 %v4141
        %v4465 = vpop.f32.mrf.mxu0
        %v4466 = vadd.f32 0.0, %v4465
        %v4467 = vpop.f32.mrf.mxu0
        %v4468 = vadd.f32 0.0, %v4467
        %4469 = vmatmul.bf16.gmra.mxu0 %v4157
        %v4470 = vpop.f32.mrf.mxu0
        %v4471 = vadd.f32 0.0, %v4470
        %v4472 = vpop.f32.mrf.mxu0
        %v4473 = vadd.f32 0.0, %v4472
        %4474 = vmatmul.bf16.gmra.mxu0 %v4173
        %v4475 = vpop.f32.mrf.mxu0
        %v4476 = vadd.f32 0.0, %v4475
        %v4477 = vpop.f32.mrf.mxu0
        %v4478 = vadd.f32 0.0, %v4477
        %4479 = vmatmul.bf16.gmra.mxu0 %v4189
        %v4480 = vpop.f32.mrf.mxu0
        %v4481 = vadd.f32 0.0, %v4480
        %v4482 = vpop.f32.mrf.mxu0
        %v4483 = vadd.f32 0.0, %v4482
        %4484 = vmatmul.bf16.gmra.mxu0 %v4205
        %v4485 = vpop.f32.mrf.mxu0
        %v4486 = vadd.f32 0.0, %v4485
        %v4487 = vpop.f32.mrf.mxu0
        %v4488 = vadd.f32 0.0, %v4487
        %4489 = vmatmul.bf16.gmra.mxu0 %v4221
        %v4490 = vpop.f32.mrf.mxu0
        %v4491 = vadd.f32 0.0, %v4490
        %v4492 = vpop.f32.mrf.mxu0
        %v4493 = vadd.f32 0.0, %v4492
        %4494 = vmatmul.bf16.gmra.mxu0 %v4237
        %v4495 = vpop.f32.mrf.mxu0
        %v4496 = vadd.f32 0.0, %v4495
        %v4497 = vpop.f32.mrf.mxu0
        %v4498 = vadd.f32 0.0, %v4497
        %4499 = vmatmul.bf16.gmra.mxu0 %v4248
        %v4500 = vpop.f32.mrf.mxu0
        %v4501 = vadd.f32 0.0, %v4500
        %v4502 = vpop.f32.mrf.mxu0
        %4503 = vdwg.mxu0
        %4504 = vmatpush.bf16.msra.mxu0 %v4402
        %4505 = vmatpush.bf16.msra.mxu0 %v4400
        %4506 = vmatpush.bf16.msra.mxu0 %v4398
        %4507 = vmatpush.bf16.msra.mxu0 %v4396
        %4508 = vmatpush.bf16.msra.mxu0 %v4394
        %4509 = vmatpush.bf16.msra.mxu0 %v4392
        %4510 = vmatpush.bf16.msra.mxu0 %v4390
        %4511 = vmatpush.bf16.msra.mxu0 %v4388
        %4512 = vmatmul.bf16.gmra.mxu0 %v4085
        %v4513 = vpop.f32.mrf.mxu0
        %v4514 = vadd.f32 %v4446, %v4513
        %v4515 = vpop.f32.mrf.mxu0
        %v4516 = vadd.f32 %v4448, %v4515
        %4517 = vmatmul.bf16.gmra.mxu0 %v4101
        %v4518 = vpop.f32.mrf.mxu0
        %v4519 = vadd.f32 %v4451, %v4518
        %v4520 = vpop.f32.mrf.mxu0
        %v4521 = vadd.f32 %v4453, %v4520
        %4522 = vmatmul.bf16.gmra.mxu0 %v4117
        %v4523 = vpop.f32.mrf.mxu0
        %v4524 = vadd.f32 %v4456, %v4523
        %v4525 = vpop.f32.mrf.mxu0
        %v4526 = vadd.f32 %v4458, %v4525
        %4527 = vmatmul.bf16.gmra.mxu0 %v4133
        %v4528 = vpop.f32.mrf.mxu0
        %v4529 = vadd.f32 %v4461, %v4528
        %v4530 = vpop.f32.mrf.mxu0
        %v4531 = vadd.f32 %v4463, %v4530
        %4532 = vmatmul.bf16.gmra.mxu0 %v4149
        %v4533 = vpop.f32.mrf.mxu0
        %v4534 = vadd.f32 %v4466, %v4533
        %v4535 = vpop.f32.mrf.mxu0
        %v4536 = vadd.f32 %v4468, %v4535
        %4537 = vmatmul.bf16.gmra.mxu0 %v4165
        %v4538 = vpop.f32.mrf.mxu0
        %v4539 = vadd.f32 %v4471, %v4538
        %v4540 = vpop.f32.mrf.mxu0
        %v4541 = vadd.f32 %v4473, %v4540
        %4542 = vmatmul.bf16.gmra.mxu0 %v4181
        %v4543 = vpop.f32.mrf.mxu0
        %v4544 = vadd.f32 %v4476, %v4543
        %v4545 = vpop.f32.mrf.mxu0
        %v4546 = vadd.f32 %v4478, %v4545
        %4547 = vmatmul.bf16.gmra.mxu0 %v4197
        %v4548 = vpop.f32.mrf.mxu0
        %v4549 = vadd.f32 %v4481, %v4548
        %v4550 = vpop.f32.mrf.mxu0
        %v4551 = vadd.f32 %v4483, %v4550
        %4552 = vmatmul.bf16.gmra.mxu0 %v4213
        %v4553 = vpop.f32.mrf.mxu0
        %v4554 = vadd.f32 %v4486, %v4553
        %v4555 = vpop.f32.mrf.mxu0
        %v4556 = vadd.f32 %v4488, %v4555
        %4557 = vmatmul.bf16.gmra.mxu0 %v4229
        %v4558 = vpop.f32.mrf.mxu0
        %v4559 = vadd.f32 %v4491, %v4558
        %v4560 = vpop.f32.mrf.mxu0
        %v4561 = vadd.f32 %v4493, %v4560
        %4562 = vmatmul.bf16.gmra.mxu0 %v4245
        %v4563 = vpop.f32.mrf.mxu0
        %v4564 = vadd.f32 %v4496, %v4563
        %v4565 = vpop.f32.mrf.mxu0
        %v4566 = vadd.f32 %v4498, %v4565
        %4567 = vmatmul.bf16.gmra.mxu0 %v4251
        %v4568 = vpop.f32.mrf.mxu0
        %v4569 = vadd.f32 %v4501, %v4568
        %v4570 = vpop.f32.mrf.mxu0
        %4571 = vdwg.mxu0
        %4572 = vmatpush.bf16.msra.mxu0 %v4387
        %4573 = vmatpush.bf16.msra.mxu0 %v4385
        %4574 = vmatpush.bf16.msra.mxu0 %v4383
        %4575 = vmatpush.bf16.msra.mxu0 %v4381
        %4576 = vmatpush.bf16.msra.mxu0 %v4379
        %4577 = vmatpush.bf16.msra.mxu0 %v4377
        %4578 = vmatpush.bf16.msra.mxu0 %v4375
        %4579 = vmatpush.bf16.msra.mxu0 %v4373
        %4580 = vmatmul.bf16.gmra.mxu0 %v4073
        %v4581 = vpop.f32.mrf.mxu0
        %v4582 = vadd.f32 0.0, %v4581
        %v4583 = vpop.f32.mrf.mxu0
        %v4584 = vadd.f32 0.0, %v4583
        %4585 = vmatmul.bf16.gmra.mxu0 %v4093
        %v4586 = vpop.f32.mrf.mxu0
        %v4587 = vadd.f32 0.0, %v4586
        %v4588 = vpop.f32.mrf.mxu0
        %v4589 = vadd.f32 0.0, %v4588
        %4590 = vmatmul.bf16.gmra.mxu0 %v4109
        %v4591 = vpop.f32.mrf.mxu0
        %v4592 = vadd.f32 0.0, %v4591
        %v4593 = vpop.f32.mrf.mxu0
        %v4594 = vadd.f32 0.0, %v4593
        %4595 = vmatmul.bf16.gmra.mxu0 %v4125
        %v4596 = vpop.f32.mrf.mxu0
        %v4597 = vadd.f32 0.0, %v4596
        %v4598 = vpop.f32.mrf.mxu0
        %v4599 = vadd.f32 0.0, %v4598
        %4600 = vmatmul.bf16.gmra.mxu0 %v4141
        %v4601 = vpop.f32.mrf.mxu0
        %v4602 = vadd.f32 0.0, %v4601
        %v4603 = vpop.f32.mrf.mxu0
        %v4604 = vadd.f32 0.0, %v4603
        %4605 = vmatmul.bf16.gmra.mxu0 %v4157
        %v4606 = vpop.f32.mrf.mxu0
        %v4607 = vadd.f32 0.0, %v4606
        %v4608 = vpop.f32.mrf.mxu0
        %v4609 = vadd.f32 0.0, %v4608
        %4610 = vmatmul.bf16.gmra.mxu0 %v4173
        %v4611 = vpop.f32.mrf.mxu0
        %v4612 = vadd.f32 0.0, %v4611
        %v4613 = vpop.f32.mrf.mxu0
        %v4614 = vadd.f32 0.0, %v4613
        %4615 = vmatmul.bf16.gmra.mxu0 %v4189
        %v4616 = vpop.f32.mrf.mxu0
        %v4617 = vadd.f32 0.0, %v4616
        %v4618 = vpop.f32.mrf.mxu0
        %v4619 = vadd.f32 0.0, %v4618
        %4620 = vmatmul.bf16.gmra.mxu0 %v4205
        %v4621 = vpop.f32.mrf.mxu0
        %v4622 = vadd.f32 0.0, %v4621
        %v4623 = vpop.f32.mrf.mxu0
        %v4624 = vadd.f32 0.0, %v4623
        %4625 = vmatmul.bf16.gmra.mxu0 %v4221
        %v4626 = vpop.f32.mrf.mxu0
        %v4627 = vadd.f32 0.0, %v4626
        %v4628 = vpop.f32.mrf.mxu0
        %v4629 = vadd.f32 0.0, %v4628
        %4630 = vmatmul.bf16.gmra.mxu0 %v4237
        %v4631 = vpop.f32.mrf.mxu0
        %v4632 = vadd.f32 0.0, %v4631
        %v4633 = vpop.f32.mrf.mxu0
        %v4634 = vadd.f32 0.0, %v4633
        %4635 = vmatmul.bf16.gmra.mxu0 %v4248
        %v4636 = vpop.f32.mrf.mxu0
        %v4637 = vadd.f32 0.0, %v4636
        %v4638 = vpop.f32.mrf.mxu0
        %4639 = vdwg.mxu0
        %4640 = vmatpush.bf16.msra.mxu0 %v4403
        %4641 = vmatpush.bf16.msra.mxu0 %v4401
        %4642 = vmatpush.bf16.msra.mxu0 %v4399
        %4643 = vmatpush.bf16.msra.mxu0 %v4397
        %4644 = vmatpush.bf16.msra.mxu0 %v4395
        %4645 = vmatpush.bf16.msra.mxu0 %v4393
        %4646 = vmatpush.bf16.msra.mxu0 %v4391
        %4647 = vmatpush.bf16.msra.mxu0 %v4389
        %4648 = vmatmul.bf16.gmra.mxu0 %v4085
        %v4649 = vpop.f32.mrf.mxu0
        %v4650 = vadd.f32 %v4582, %v4649
        %v4651 = vpop.f32.mrf.mxu0
        %v4652 = vadd.f32 %v4584, %v4651
        %4653 = vmatmul.bf16.gmra.mxu0 %v4101
        %v4654 = vpop.f32.mrf.mxu0
        %v4655 = vadd.f32 %v4587, %v4654
        %v4656 = vpop.f32.mrf.mxu0
        %v4657 = vadd.f32 %v4589, %v4656
        %4658 = vmatmul.bf16.gmra.mxu0 %v4117
        %v4659 = vpop.f32.mrf.mxu0
        %v4660 = vadd.f32 %v4592, %v4659
        %v4661 = vpop.f32.mrf.mxu0
        %v4662 = vadd.f32 %v4594, %v4661
        %4663 = vmatmul.bf16.gmra.mxu0 %v4133
        %v4664 = vpop.f32.mrf.mxu0
        %v4665 = vadd.f32 %v4597, %v4664
        %v4666 = vpop.f32.mrf.mxu0
        %v4667 = vadd.f32 %v4599, %v4666
        %4668 = vmatmul.bf16.gmra.mxu0 %v4149
        %v4669 = vpop.f32.mrf.mxu0
        %v4670 = vadd.f32 %v4602, %v4669
        %v4671 = vpop.f32.mrf.mxu0
        %v4672 = vadd.f32 %v4604, %v4671
        %4673 = vmatmul.bf16.gmra.mxu0 %v4165
        %v4674 = vpop.f32.mrf.mxu0
        %v4675 = vadd.f32 %v4607, %v4674
        %v4676 = vpop.f32.mrf.mxu0
        %v4677 = vadd.f32 %v4609, %v4676
        %4678 = vmatmul.bf16.gmra.mxu0 %v4181
        %v4679 = vpop.f32.mrf.mxu0
        %v4680 = vadd.f32 %v4612, %v4679
        %v4681 = vpop.f32.mrf.mxu0
        %v4682 = vadd.f32 %v4614, %v4681
        %4683 = vmatmul.bf16.gmra.mxu0 %v4197
        %v4684 = vpop.f32.mrf.mxu0
        %v4685 = vadd.f32 %v4617, %v4684
        %v4686 = vpop.f32.mrf.mxu0
        %v4687 = vadd.f32 %v4619, %v4686
        %4688 = vmatmul.bf16.gmra.mxu0 %v4213
        %v4689 = vpop.f32.mrf.mxu0
        %v4690 = vadd.f32 %v4622, %v4689
        %v4691 = vpop.f32.mrf.mxu0
        %v4692 = vadd.f32 %v4624, %v4691
        %4693 = vmatmul.bf16.gmra.mxu0 %v4229
        %v4694 = vpop.f32.mrf.mxu0
        %v4695 = vadd.f32 %v4627, %v4694
        %v4696 = vpop.f32.mrf.mxu0
        %v4697 = vadd.f32 %v4629, %v4696
        %4698 = vmatmul.bf16.gmra.mxu0 %v4245
        %v4699 = vpop.f32.mrf.mxu0
        %v4700 = vadd.f32 %v4632, %v4699
        %v4701 = vpop.f32.mrf.mxu0
        %v4702 = vadd.f32 %v4634, %v4701
        %4703 = vmatmul.bf16.gmra.mxu0 %v4251
        %v4704 = vpop.f32.mrf.mxu0
        %v4705 = vadd.f32 %v4637, %v4704
        %v4706 = vpop.f32.mrf.mxu0
        %4707 = vdwg.mxu0
        %v4708 = vadd.f32 %v3911, %v4514
        %v4709 = vadd.f32 %v3912, %v4650
        %v4710 = vadd.f32 %v3913, %v4516
        %v4711 = vadd.f32 %v3914, %v4652
        %v4712 = vadd.f32 %v3915, %v4519
        %v4713 = vadd.f32 %v3916, %v4655
        %v4714 = vadd.f32 %v3917, %v4521
        %v4715 = vadd.f32 %v3918, %v4657
        %v4716 = vadd.f32 %v3919, %v4524
        %v4717 = vadd.f32 %v3920, %v4660
        %v4718 = vadd.f32 %v3921, %v4526
        %v4719 = vadd.f32 %v3922, %v4662
        %v4720 = vadd.f32 %v3923, %v4529
        %v4721 = vadd.f32 %v3924, %v4665
        %v4722 = vadd.f32 %v3925, %v4531
        %v4723 = vadd.f32 %v3926, %v4667
        %v4724 = vadd.f32 %v3927, %v4534
        %v4725 = vadd.f32 %v3928, %v4670
        %v4726 = vadd.f32 %v3929, %v4536
        %v4727 = vadd.f32 %v3930, %v4672
        %v4728 = vadd.f32 %v3931, %v4539
        %v4729 = vadd.f32 %v3932, %v4675
        %v4730 = vadd.f32 %v3933, %v4541
        %v4731 = vadd.f32 %v3934, %v4677
        %v4732 = vadd.f32 %v3935, %v4544
        %v4733 = vadd.f32 %v3936, %v4680
        %v4734 = vadd.f32 %v3937, %v4546
        %v4735 = vadd.f32 %v3938, %v4682
        %v4736 = vadd.f32 %v3939, %v4549
        %v4737 = vadd.f32 %v3940, %v4685
        %v4738 = vadd.f32 %v3941, %v4551
        %v4739 = vadd.f32 %v3942, %v4687
        %v4740 = vadd.f32 %v3943, %v4554
        %v4741 = vadd.f32 %v3944, %v4690
        %v4742 = vadd.f32 %v3945, %v4556
        %v4743 = vadd.f32 %v3946, %v4692
        %v4744 = vadd.f32 %v3947, %v4559
        %v4745 = vadd.f32 %v3948, %v4695
        %v4746 = vadd.f32 %v3949, %v4561
        %v4747 = vadd.f32 %v3950, %v4697
        %v4748 = vadd.f32 %v3951, %v4564
        %v4749 = vadd.f32 %v3952, %v4700
        %v4750 = vadd.f32 %v3953, %v4566
        %v4751 = vadd.f32 %v3954, %v4702
        %v4752 = vadd.f32 %v3955, %v4569
        %v4753 = vadd.f32 %v3956, %v4705
        %v4754 = vld [vmem:[#allocation2 + $0x30] sm:$0xfe]
        %v4755 = vld [vmem:[#allocation2 + $0x38] sm:$0xfe]
        %v4756 = vld [vmem:[#allocation2 + $0x40] sm:$0xff]
        %v4757 = vld [vmem:[#allocation2 + $0x48] sm:$0xff]
        %v4758 = vld [vmem:[#allocation2 + $0x50] sm:$0xff]
        %v4759 = vld [vmem:[#allocation2 + $0x58] sm:$0xff]
        %v4760 = vld [vmem:[#allocation2 + $0x60] sm:$0xff]
        %v4761 = vld [vmem:[#allocation2 + $0x68] sm:$0xff]
        %v4762 = vld [vmem:[#allocation2 + $0x70] sm:$0xff]
        %v4763 = vld [vmem:[#allocation2 + $0x78] sm:$0xff]
        %v4764 = vld [vmem:[#allocation2 + $0x80] sm:$0xff]
        %v4765 = vld [vmem:[#allocation2 + $0x88] sm:$0xff]
        %v4766 = vld [vmem:[#allocation2 + $0x90] sm:$0xff]
        %v4767 = vld [vmem:[#allocation2 + $0x98] sm:$0xff]
        %v4768 = vld [vmem:[#allocation2 + $0xa0] sm:$0xff]
        %v4769 = vld [vmem:[#allocation2 + $0xa8] sm:$0xff]
        %v4770 = vld [vmem:[#allocation2 + $0xb0] sm:$0xff]
        %v4771 = vld [vmem:[#allocation2 + $0xb8] sm:$0xff]
        %v4772 = vld [vmem:[#allocation2 + $0xc0] sm:$0xff]
        %v4773 = vld [vmem:[#allocation2 + $0xc8] sm:$0xff]
        %v4774 = vld [vmem:[#allocation2 + $0xd0] sm:$0xff]
        %v4775 = vld [vmem:[#allocation2 + $0xd8] sm:$0xff]
        %v4776 = vld [vmem:[#allocation2 + $0xe0] sm:$0xff]
        %v4777 = vld [vmem:[#allocation2 + $0xe8] sm:$0xff]
        %v4778 = vld [vmem:[#allocation2 + $0xf0] sm:$0xff]
        %v4779 = vld [vmem:[#allocation2 + $0xf8] sm:$0xff]
        %v4780 = vld [vmem:[#allocation2 + $0x100] sm:$0xff]
        %v4781 = vld [vmem:[#allocation2 + $0x108] sm:$0xff]
        %v4782 = vld [vmem:[#allocation2 + $0x110] sm:$0xff]
        %v4783 = vld [vmem:[#allocation2 + $0x118] sm:$0xff]
        %v4784 = vld [vmem:[#allocation2 + $0x120] sm:$0xff]
        %v4785 = vld [vmem:[#allocation2 + $0x128] sm:$0xff]
        %v4786 = vld [vmem:[#allocation2 + $0x130] sm:$0xff]
        %v4787 = vld [vmem:[#allocation2 + $0x138] sm:$0xff]
        %v4788 = vld [vmem:[#allocation2 + $0x140] sm:$0xff]
        %v4789 = vld [vmem:[#allocation2 + $0x148] sm:$0xff]
        %v4790 = vld [vmem:[#allocation2 + $0x150] sm:$0xff]
        %v4791 = vld [vmem:[#allocation2 + $0x158] sm:$0xff]
        %v4792 = vld [vmem:[#allocation2 + $0x160] sm:$0xff]
        %v4793 = vld [vmem:[#allocation2 + $0x168] sm:$0xff]
        %v4794 = vld [vmem:[#allocation2 + $0x170] sm:$0xff]
        %v4795 = vld [vmem:[#allocation2 + $0x178] sm:$0xff]
        %v4796 = vld [vmem:[#allocation2 + $0x180] sm:$0xff]
        %v4797 = vld [vmem:[#allocation2 + $0x188] sm:$0xff]
        %v4798 = vld [vmem:[#allocation2 + $0x190] sm:$0xff]
        %v4799 = vld [vmem:[#allocation2 + $0x198] sm:$0xff]
        %v4800 = vld [vmem:[#allocation2 + $0x1a0] sm:$0x1]
        %v4801 = vld [vmem:[#allocation2 + $0x1a8] sm:$0x1]
        %v4802 = vpack.c.bf16 %v4756, %v4754
        %v4803 = vpack.c.bf16 %v4757, %v4755
        %v4804 = vpack.c.bf16 %v4760, %v4758
        %v4805 = vpack.c.bf16 %v4761, %v4759
        %v4806 = vpack.c.bf16 %v4764, %v4762
        %v4807 = vpack.c.bf16 %v4765, %v4763
        %v4808 = vpack.c.bf16 %v4768, %v4766
        %v4809 = vpack.c.bf16 %v4769, %v4767
        %v4810 = vpack.c.bf16 %v4772, %v4770
        %v4811 = vpack.c.bf16 %v4773, %v4771
        %v4812 = vpack.c.bf16 %v4776, %v4774
        %v4813 = vpack.c.bf16 %v4777, %v4775
        %v4814 = vpack.c.bf16 %v4780, %v4778
        %v4815 = vpack.c.bf16 %v4781, %v4779
        %v4816 = vpack.c.bf16 %v4784, %v4782
        %v4817 = vpack.c.bf16 %v4785, %v4783
        %v4818 = vpack.c.bf16 %v4788, %v4786
        %v4819 = vpack.c.bf16 %v4789, %v4787
        %v4820 = vpack.c.bf16 %v4792, %v4790
        %v4821 = vpack.c.bf16 %v4793, %v4791
        %v4822 = vpack.c.bf16 %v4796, %v4794
        %v4823 = vpack.c.bf16 %v4797, %v4795
        %v4824 = vpack.c.bf16 %v4800, %v4798
        %v4825 = vpack.c.bf16 %v4801, %v4799
        %v4826 = vld [vmem:[%s280 + $0x600] sm:$0xff]
        %v4827 = vld [vmem:[%s280 + $0x608] sm:$0xff]
        %v4828 = vld [vmem:[%s280 + $0x610] sm:$0xff]
        %v4829 = vld [vmem:[%s280 + $0x618] sm:$0xff]
        %v4830 = vld [vmem:[%s280 + $0x620] sm:$0xff]
        %v4831 = vld [vmem:[%s280 + $0x628] sm:$0xff]
        %v4832 = vld [vmem:[%s280 + $0x630] sm:$0xff]
        %v4833 = vld [vmem:[%s280 + $0x638] sm:$0xff]
        %v4834 = vld [vmem:[%s280 + $0x640] sm:$0xff]
        %v4835 = vld [vmem:[%s280 + $0x648] sm:$0xff]
        %v4836 = vld [vmem:[%s280 + $0x650] sm:$0xff]
        %v4837 = vld [vmem:[%s280 + $0x658] sm:$0xff]
        %v4838 = vld [vmem:[%s280 + $0x660] sm:$0xff]
        %v4839 = vld [vmem:[%s280 + $0x668] sm:$0xff]
        %v4840 = vld [vmem:[%s280 + $0x670] sm:$0xff]
        %v4841 = vld [vmem:[%s280 + $0x678] sm:$0xff]
        %v4842 = vld [vmem:[%s280 + $0x680] sm:$0xff]
        %v4843 = vld [vmem:[%s280 + $0x688] sm:$0xff]
        %v4844 = vld [vmem:[%s280 + $0x690] sm:$0xff]
        %v4845 = vld [vmem:[%s280 + $0x698] sm:$0xff]
        %v4846 = vld [vmem:[%s280 + $0x6a0] sm:$0xff]
        %v4847 = vld [vmem:[%s280 + $0x6a8] sm:$0xff]
        %v4848 = vld [vmem:[%s280 + $0x6b0] sm:$0xff]
        %v4849 = vld [vmem:[%s280 + $0x6b8] sm:$0xff]
        %v4850 = vld [vmem:[%s280 + $0x6c0] sm:$0xff]
        %v4851 = vld [vmem:[%s280 + $0x6c8] sm:$0xff]
        %v4852 = vld [vmem:[%s280 + $0x6d0] sm:$0xff]
        %v4853 = vld [vmem:[%s280 + $0x6d8] sm:$0xff]
        %v4854 = vld [vmem:[%s280 + $0x6e0] sm:$0xff]
        %v4855 = vld [vmem:[%s280 + $0x6e8] sm:$0xff]
        %v4856 = vld [vmem:[%s280 + $0x6f0] sm:$0xff]
        %v4857 = vld [vmem:[%s280 + $0x6f8] sm:$0xff]
        %v4859 = vshrl.u32 %v4802, 16
        %v4861 = vshll.u32 %v4802, 16
        %v4863 = vrot.slane %v4861, 1
        %v4864 = vor.u32 %v4859, %v4863
        %v4866 = vshll.u32 %v4804, 16
        %v4868 = vrot.slane %v4866, 1
        %v4869 = vsel %vm4061, %v4864, %v4868
        %v4871 = vshrl.u32 %v4803, 16
        %v4873 = vshll.u32 %v4803, 16
        %v4875 = vrot.slane %v4873, 1
        %v4876 = vor.u32 %v4871, %v4875
        %v4878 = vshll.u32 %v4805, 16
        %v4880 = vrot.slane %v4878, 1
        %v4881 = vsel %vm4061, %v4876, %v4880
        %v4882 = vshrl.u32 %v4804, 16
        %v4884 = vor.u32 %v4882, %v4868
        %v4886 = vshll.u32 %v4806, 16
        %v4888 = vrot.slane %v4886, 1
        %v4889 = vsel %vm4061, %v4884, %v4888
        %v4890 = vshrl.u32 %v4805, 16
        %v4892 = vor.u32 %v4890, %v4880
        %v4894 = vshll.u32 %v4807, 16
        %v4896 = vrot.slane %v4894, 1
        %v4897 = vsel %vm4061, %v4892, %v4896
        %v4898 = vshrl.u32 %v4806, 16
        %v4900 = vor.u32 %v4898, %v4888
        %v4902 = vshll.u32 %v4808, 16
        %v4904 = vrot.slane %v4902, 1
        %v4905 = vsel %vm4061, %v4900, %v4904
        %v4906 = vshrl.u32 %v4807, 16
        %v4908 = vor.u32 %v4906, %v4896
        %v4910 = vshll.u32 %v4809, 16
        %v4912 = vrot.slane %v4910, 1
        %v4913 = vsel %vm4061, %v4908, %v4912
        %v4914 = vshrl.u32 %v4808, 16
        %v4916 = vor.u32 %v4914, %v4904
        %v4918 = vshll.u32 %v4810, 16
        %v4920 = vrot.slane %v4918, 1
        %v4921 = vsel %vm4061, %v4916, %v4920
        %v4922 = vshrl.u32 %v4809, 16
        %v4924 = vor.u32 %v4922, %v4912
        %v4926 = vshll.u32 %v4811, 16
        %v4928 = vrot.slane %v4926, 1
        %v4929 = vsel %vm4061, %v4924, %v4928
        %v4930 = vshrl.u32 %v4810, 16
        %v4932 = vor.u32 %v4930, %v4920
        %v4934 = vshll.u32 %v4812, 16
        %v4936 = vrot.slane %v4934, 1
        %v4937 = vsel %vm4061, %v4932, %v4936
        %v4938 = vshrl.u32 %v4811, 16
        %v4940 = vor.u32 %v4938, %v4928
        %v4942 = vshll.u32 %v4813, 16
        %v4944 = vrot.slane %v4942, 1
        %v4945 = vsel %vm4061, %v4940, %v4944
        %v4946 = vshrl.u32 %v4812, 16
        %v4948 = vor.u32 %v4946, %v4936
        %v4950 = vshll.u32 %v4814, 16
        %v4952 = vrot.slane %v4950, 1
        %v4953 = vsel %vm4061, %v4948, %v4952
        %v4954 = vshrl.u32 %v4813, 16
        %v4956 = vor.u32 %v4954, %v4944
        %v4958 = vshll.u32 %v4815, 16
        %v4960 = vrot.slane %v4958, 1
        %v4961 = vsel %vm4061, %v4956, %v4960
        %v4962 = vshrl.u32 %v4814, 16
        %v4964 = vor.u32 %v4962, %v4952
        %v4966 = vshll.u32 %v4816, 16
        %v4968 = vrot.slane %v4966, 1
        %v4969 = vsel %vm4061, %v4964, %v4968
        %v4970 = vshrl.u32 %v4815, 16
        %v4972 = vor.u32 %v4970, %v4960
        %v4974 = vshll.u32 %v4817, 16
        %v4976 = vrot.slane %v4974, 1
        %v4977 = vsel %vm4061, %v4972, %v4976
        %v4978 = vshrl.u32 %v4816, 16
        %v4980 = vor.u32 %v4978, %v4968
        %v4982 = vshll.u32 %v4818, 16
        %v4984 = vrot.slane %v4982, 1
        %v4985 = vsel %vm4061, %v4980, %v4984
        %v4986 = vshrl.u32 %v4817, 16
        %v4988 = vor.u32 %v4986, %v4976
        %v4990 = vshll.u32 %v4819, 16
        %v4992 = vrot.slane %v4990, 1
        %v4993 = vsel %vm4061, %v4988, %v4992
        %v4994 = vshrl.u32 %v4818, 16
        %v4996 = vor.u32 %v4994, %v4984
        %v4998 = vshll.u32 %v4820, 16
        %v5000 = vrot.slane %v4998, 1
        %v5001 = vsel %vm4061, %v4996, %v5000
        %v5002 = vshrl.u32 %v4819, 16
        %v5004 = vor.u32 %v5002, %v4992
        %v5006 = vshll.u32 %v4821, 16
        %v5008 = vrot.slane %v5006, 1
        %v5009 = vsel %vm4061, %v5004, %v5008
        %v5010 = vshrl.u32 %v4820, 16
        %v5012 = vor.u32 %v5010, %v5000
        %v5014 = vshll.u32 %v4822, 16
        %v5016 = vrot.slane %v5014, 1
        %v5017 = vsel %vm4061, %v5012, %v5016
        %v5018 = vshrl.u32 %v4821, 16
        %v5020 = vor.u32 %v5018, %v5008
        %v5022 = vshll.u32 %v4823, 16
        %v5024 = vrot.slane %v5022, 1
        %v5025 = vsel %vm4061, %v5020, %v5024
        %v5026 = vshrl.u32 %v4822, 16
        %v5028 = vor.u32 %v5026, %v5016
        %v5030 = vshll.u32 %v4824, 16
        %v5032 = vrot.slane %v5030, 1
        %v5033 = vsel %vm4061, %v5028, %v5032
        %v5034 = vshrl.u32 %v4823, 16
        %v5036 = vor.u32 %v5034, %v5024
        %v5038 = vshll.u32 %v4825, 16
        %v5040 = vrot.slane %v5038, 1
        %v5041 = vsel %vm4061, %v5036, %v5040
        %v5042 = vshrl.u32 %v4824, 16
        %v5044 = vor.u32 %v5042, %v5032
        %v5045 = vshrl.u32 %v4825, 16
        %v5047 = vor.u32 %v5045, %v5040
        %v5104 = vunpack.c.l.b16 %v4826
        %v5105 = vunpack.c.h.b16 %v4826
        %v5106 = vunpack.c.l.b16 %v4827
        %v5107 = vunpack.c.h.b16 %v4827
        %v5108 = vunpack.c.l.b16 %v4828
        %v5109 = vunpack.c.h.b16 %v4828
        %v5110 = vunpack.c.l.b16 %v4829
        %v5111 = vunpack.c.h.b16 %v4829
        %v5112 = vunpack.c.l.b16 %v4830
        %v5113 = vunpack.c.h.b16 %v4830
        %v5114 = vunpack.c.l.b16 %v4831
        %v5115 = vunpack.c.h.b16 %v4831
        %v5116 = vunpack.c.l.b16 %v4832
        %v5117 = vunpack.c.h.b16 %v4832
        %v5118 = vunpack.c.l.b16 %v4833
        %v5119 = vunpack.c.h.b16 %v4833
        %v5120 = vunpack.c.l.b16 %v4834
        %v5121 = vunpack.c.h.b16 %v4834
        %v5122 = vunpack.c.l.b16 %v4835
        %v5123 = vunpack.c.h.b16 %v4835
        %v5124 = vunpack.c.l.b16 %v4836
        %v5125 = vunpack.c.h.b16 %v4836
        %v5126 = vunpack.c.l.b16 %v4837
        %v5127 = vunpack.c.h.b16 %v4837
        %v5128 = vunpack.c.l.b16 %v4838
        %v5129 = vunpack.c.h.b16 %v4838
        %v5130 = vunpack.c.l.b16 %v4839
        %v5131 = vunpack.c.h.b16 %v4839
        %v5132 = vunpack.c.l.b16 %v4840
        %v5133 = vunpack.c.h.b16 %v4840
        %v5134 = vunpack.c.l.b16 %v4841
        %v5135 = vunpack.c.h.b16 %v4841
        %v5136 = vunpack.c.l.b16 %v4842
        %v5137 = vunpack.c.h.b16 %v4842
        %v5138 = vunpack.c.l.b16 %v4843
        %v5139 = vunpack.c.h.b16 %v4843
        %v5140 = vunpack.c.l.b16 %v4844
        %v5141 = vunpack.c.h.b16 %v4844
        %v5142 = vunpack.c.l.b16 %v4845
        %v5143 = vunpack.c.h.b16 %v4845
        %v5144 = vunpack.c.l.b16 %v4846
        %v5145 = vunpack.c.h.b16 %v4846
        %v5146 = vunpack.c.l.b16 %v4847
        %v5147 = vunpack.c.h.b16 %v4847
        %v5148 = vunpack.c.l.b16 %v4848
        %v5149 = vunpack.c.h.b16 %v4848
        %v5150 = vunpack.c.l.b16 %v4849
        %v5151 = vunpack.c.h.b16 %v4849
        %v5152 = vunpack.c.l.b16 %v4850
        %v5153 = vunpack.c.h.b16 %v4850
        %v5154 = vunpack.c.l.b16 %v4851
        %v5155 = vunpack.c.h.b16 %v4851
        %v5156 = vunpack.c.l.b16 %v4852
        %v5157 = vunpack.c.h.b16 %v4852
        %v5158 = vunpack.c.l.b16 %v4853
        %v5159 = vunpack.c.h.b16 %v4853
        %v5160 = vunpack.c.l.b16 %v4854
        %v5161 = vunpack.c.h.b16 %v4854
        %v5162 = vunpack.c.l.b16 %v4855
        %v5163 = vunpack.c.h.b16 %v4855
        %v5164 = vunpack.c.l.b16 %v4856
        %v5165 = vunpack.c.h.b16 %v4856
        %v5166 = vunpack.c.l.b16 %v4857
        %v5167 = vunpack.c.h.b16 %v4857
        %v5168 = vpack.c.b16 %v5106, %v5104
        %v5169 = vpack.c.b16 %v5107, %v5105
        %v5170 = vpack.c.b16 %v5110, %v5108
        %v5171 = vpack.c.b16 %v5111, %v5109
        %v5172 = vpack.c.b16 %v5114, %v5112
        %v5173 = vpack.c.b16 %v5115, %v5113
        %v5174 = vpack.c.b16 %v5118, %v5116
        %v5175 = vpack.c.b16 %v5119, %v5117
        %v5176 = vpack.c.b16 %v5122, %v5120
        %v5177 = vpack.c.b16 %v5123, %v5121
        %v5178 = vpack.c.b16 %v5126, %v5124
        %v5179 = vpack.c.b16 %v5127, %v5125
        %v5180 = vpack.c.b16 %v5130, %v5128
        %v5181 = vpack.c.b16 %v5131, %v5129
        %v5182 = vpack.c.b16 %v5134, %v5132
        %v5183 = vpack.c.b16 %v5135, %v5133
        %v5184 = vpack.c.b16 %v5138, %v5136
        %v5185 = vpack.c.b16 %v5139, %v5137
        %v5186 = vpack.c.b16 %v5142, %v5140
        %v5187 = vpack.c.b16 %v5143, %v5141
        %v5188 = vpack.c.b16 %v5146, %v5144
        %v5189 = vpack.c.b16 %v5147, %v5145
        %v5190 = vpack.c.b16 %v5150, %v5148
        %v5191 = vpack.c.b16 %v5151, %v5149
        %v5192 = vpack.c.b16 %v5154, %v5152
        %v5193 = vpack.c.b16 %v5155, %v5153
        %v5194 = vpack.c.b16 %v5158, %v5156
        %v5195 = vpack.c.b16 %v5159, %v5157
        %v5196 = vpack.c.b16 %v5162, %v5160
        %v5197 = vpack.c.b16 %v5163, %v5161
        %v5198 = vpack.c.b16 %v5166, %v5164
        %v5199 = vpack.c.b16 %v5167, %v5165
        %5232 = vmatpush.bf16.msra.mxu0 %v5182
        %5233 = vmatpush.bf16.msra.mxu0 %v5180
        %5234 = vmatpush.bf16.msra.mxu0 %v5178
        %5235 = vmatpush.bf16.msra.mxu0 %v5176
        %5236 = vmatpush.bf16.msra.mxu0 %v5174
        %5237 = vmatpush.bf16.msra.mxu0 %v5172
        %5238 = vmatpush.bf16.msra.mxu0 %v5170
        %5239 = vmatpush.bf16.msra.mxu0 %v5168
        %5240 = vmatmul.bf16.gmra.mxu0 %v4869
        %v5241 = vpop.f32.mrf.mxu0
        %v5242 = vadd.f32 0.0, %v5241
        %v5243 = vpop.f32.mrf.mxu0
        %v5244 = vadd.f32 0.0, %v5243
        %5245 = vmatmul.bf16.gmra.mxu0 %v4889
        %v5246 = vpop.f32.mrf.mxu0
        %v5247 = vadd.f32 0.0, %v5246
        %v5248 = vpop.f32.mrf.mxu0
        %v5249 = vadd.f32 0.0, %v5248
        %5250 = vmatmul.bf16.gmra.mxu0 %v4905
        %v5251 = vpop.f32.mrf.mxu0
        %v5252 = vadd.f32 0.0, %v5251
        %v5253 = vpop.f32.mrf.mxu0
        %v5254 = vadd.f32 0.0, %v5253
        %5255 = vmatmul.bf16.gmra.mxu0 %v4921
        %v5256 = vpop.f32.mrf.mxu0
        %v5257 = vadd.f32 0.0, %v5256
        %v5258 = vpop.f32.mrf.mxu0
        %v5259 = vadd.f32 0.0, %v5258
        %5260 = vmatmul.bf16.gmra.mxu0 %v4937
        %v5261 = vpop.f32.mrf.mxu0
        %v5262 = vadd.f32 0.0, %v5261
        %v5263 = vpop.f32.mrf.mxu0
        %v5264 = vadd.f32 0.0, %v5263
        %5265 = vmatmul.bf16.gmra.mxu0 %v4953
        %v5266 = vpop.f32.mrf.mxu0
        %v5267 = vadd.f32 0.0, %v5266
        %v5268 = vpop.f32.mrf.mxu0
        %v5269 = vadd.f32 0.0, %v5268
        %5270 = vmatmul.bf16.gmra.mxu0 %v4969
        %v5271 = vpop.f32.mrf.mxu0
        %v5272 = vadd.f32 0.0, %v5271
        %v5273 = vpop.f32.mrf.mxu0
        %v5274 = vadd.f32 0.0, %v5273
        %5275 = vmatmul.bf16.gmra.mxu0 %v4985
        %v5276 = vpop.f32.mrf.mxu0
        %v5277 = vadd.f32 0.0, %v5276
        %v5278 = vpop.f32.mrf.mxu0
        %v5279 = vadd.f32 0.0, %v5278
        %5280 = vmatmul.bf16.gmra.mxu0 %v5001
        %v5281 = vpop.f32.mrf.mxu0
        %v5282 = vadd.f32 0.0, %v5281
        %v5283 = vpop.f32.mrf.mxu0
        %v5284 = vadd.f32 0.0, %v5283
        %5285 = vmatmul.bf16.gmra.mxu0 %v5017
        %v5286 = vpop.f32.mrf.mxu0
        %v5287 = vadd.f32 0.0, %v5286
        %v5288 = vpop.f32.mrf.mxu0
        %v5289 = vadd.f32 0.0, %v5288
        %5290 = vmatmul.bf16.gmra.mxu0 %v5033
        %v5291 = vpop.f32.mrf.mxu0
        %v5292 = vadd.f32 0.0, %v5291
        %v5293 = vpop.f32.mrf.mxu0
        %v5294 = vadd.f32 0.0, %v5293
        %5295 = vmatmul.bf16.gmra.mxu0 %v5044
        %v5296 = vpop.f32.mrf.mxu0
        %v5297 = vadd.f32 0.0, %v5296
        %v5298 = vpop.f32.mrf.mxu0
        %5299 = vdwg.mxu0
        %5300 = vmatpush.bf16.msra.mxu0 %v5198
        %5301 = vmatpush.bf16.msra.mxu0 %v5196
        %5302 = vmatpush.bf16.msra.mxu0 %v5194
        %5303 = vmatpush.bf16.msra.mxu0 %v5192
        %5304 = vmatpush.bf16.msra.mxu0 %v5190
        %5305 = vmatpush.bf16.msra.mxu0 %v5188
        %5306 = vmatpush.bf16.msra.mxu0 %v5186
        %5307 = vmatpush.bf16.msra.mxu0 %v5184
        %5308 = vmatmul.bf16.gmra.mxu0 %v4881
        %v5309 = vpop.f32.mrf.mxu0
        %v5310 = vadd.f32 %v5242, %v5309
        %v5311 = vpop.f32.mrf.mxu0
        %v5312 = vadd.f32 %v5244, %v5311
        %5313 = vmatmul.bf16.gmra.mxu0 %v4897
        %v5314 = vpop.f32.mrf.mxu0
        %v5315 = vadd.f32 %v5247, %v5314
        %v5316 = vpop.f32.mrf.mxu0
        %v5317 = vadd.f32 %v5249, %v5316
        %5318 = vmatmul.bf16.gmra.mxu0 %v4913
        %v5319 = vpop.f32.mrf.mxu0
        %v5320 = vadd.f32 %v5252, %v5319
        %v5321 = vpop.f32.mrf.mxu0
        %v5322 = vadd.f32 %v5254, %v5321
        %5323 = vmatmul.bf16.gmra.mxu0 %v4929
        %v5324 = vpop.f32.mrf.mxu0
        %v5325 = vadd.f32 %v5257, %v5324
        %v5326 = vpop.f32.mrf.mxu0
        %v5327 = vadd.f32 %v5259, %v5326
        %5328 = vmatmul.bf16.gmra.mxu0 %v4945
        %v5329 = vpop.f32.mrf.mxu0
        %v5330 = vadd.f32 %v5262, %v5329
        %v5331 = vpop.f32.mrf.mxu0
        %v5332 = vadd.f32 %v5264, %v5331
        %5333 = vmatmul.bf16.gmra.mxu0 %v4961
        %v5334 = vpop.f32.mrf.mxu0
        %v5335 = vadd.f32 %v5267, %v5334
        %v5336 = vpop.f32.mrf.mxu0
        %v5337 = vadd.f32 %v5269, %v5336
        %5338 = vmatmul.bf16.gmra.mxu0 %v4977
        %v5339 = vpop.f32.mrf.mxu0
        %v5340 = vadd.f32 %v5272, %v5339
        %v5341 = vpop.f32.mrf.mxu0
        %v5342 = vadd.f32 %v5274, %v5341
        %5343 = vmatmul.bf16.gmra.mxu0 %v4993
        %v5344 = vpop.f32.mrf.mxu0
        %v5345 = vadd.f32 %v5277, %v5344
        %v5346 = vpop.f32.mrf.mxu0
        %v5347 = vadd.f32 %v5279, %v5346
        %5348 = vmatmul.bf16.gmra.mxu0 %v5009
        %v5349 = vpop.f32.mrf.mxu0
        %v5350 = vadd.f32 %v5282, %v5349
        %v5351 = vpop.f32.mrf.mxu0
        %v5352 = vadd.f32 %v5284, %v5351
        %5353 = vmatmul.bf16.gmra.mxu0 %v5025
        %v5354 = vpop.f32.mrf.mxu0
        %v5355 = vadd.f32 %v5287, %v5354
        %v5356 = vpop.f32.mrf.mxu0
        %v5357 = vadd.f32 %v5289, %v5356
        %5358 = vmatmul.bf16.gmra.mxu0 %v5041
        %v5359 = vpop.f32.mrf.mxu0
        %v5360 = vadd.f32 %v5292, %v5359
        %v5361 = vpop.f32.mrf.mxu0
        %v5362 = vadd.f32 %v5294, %v5361
        %5363 = vmatmul.bf16.gmra.mxu0 %v5047
        %v5364 = vpop.f32.mrf.mxu0
        %v5365 = vadd.f32 %v5297, %v5364
        %v5366 = vpop.f32.mrf.mxu0
        %5367 = vdwg.mxu0
        %5368 = vmatpush.bf16.msra.mxu0 %v5183
        %5369 = vmatpush.bf16.msra.mxu0 %v5181
        %5370 = vmatpush.bf16.msra.mxu0 %v5179
        %5371 = vmatpush.bf16.msra.mxu0 %v5177
        %5372 = vmatpush.bf16.msra.mxu0 %v5175
        %5373 = vmatpush.bf16.msra.mxu0 %v5173
        %5374 = vmatpush.bf16.msra.mxu0 %v5171
        %5375 = vmatpush.bf16.msra.mxu0 %v5169
        %5376 = vmatmul.bf16.gmra.mxu0 %v4869
        %v5377 = vpop.f32.mrf.mxu0
        %v5378 = vadd.f32 0.0, %v5377
        %v5379 = vpop.f32.mrf.mxu0
        %v5380 = vadd.f32 0.0, %v5379
        %5381 = vmatmul.bf16.gmra.mxu0 %v4889
        %v5382 = vpop.f32.mrf.mxu0
        %v5383 = vadd.f32 0.0, %v5382
        %v5384 = vpop.f32.mrf.mxu0
        %v5385 = vadd.f32 0.0, %v5384
        %5386 = vmatmul.bf16.gmra.mxu0 %v4905
        %v5387 = vpop.f32.mrf.mxu0
        %v5388 = vadd.f32 0.0, %v5387
        %v5389 = vpop.f32.mrf.mxu0
        %v5390 = vadd.f32 0.0, %v5389
        %5391 = vmatmul.bf16.gmra.mxu0 %v4921
        %v5392 = vpop.f32.mrf.mxu0
        %v5393 = vadd.f32 0.0, %v5392
        %v5394 = vpop.f32.mrf.mxu0
        %v5395 = vadd.f32 0.0, %v5394
        %5396 = vmatmul.bf16.gmra.mxu0 %v4937
        %v5397 = vpop.f32.mrf.mxu0
        %v5398 = vadd.f32 0.0, %v5397
        %v5399 = vpop.f32.mrf.mxu0
        %v5400 = vadd.f32 0.0, %v5399
        %5401 = vmatmul.bf16.gmra.mxu0 %v4953
        %v5402 = vpop.f32.mrf.mxu0
        %v5403 = vadd.f32 0.0, %v5402
        %v5404 = vpop.f32.mrf.mxu0
        %v5405 = vadd.f32 0.0, %v5404
        %5406 = vmatmul.bf16.gmra.mxu0 %v4969
        %v5407 = vpop.f32.mrf.mxu0
        %v5408 = vadd.f32 0.0, %v5407
        %v5409 = vpop.f32.mrf.mxu0
        %v5410 = vadd.f32 0.0, %v5409
        %5411 = vmatmul.bf16.gmra.mxu0 %v4985
        %v5412 = vpop.f32.mrf.mxu0
        %v5413 = vadd.f32 0.0, %v5412
        %v5414 = vpop.f32.mrf.mxu0
        %v5415 = vadd.f32 0.0, %v5414
        %5416 = vmatmul.bf16.gmra.mxu0 %v5001
        %v5417 = vpop.f32.mrf.mxu0
        %v5418 = vadd.f32 0.0, %v5417
        %v5419 = vpop.f32.mrf.mxu0
        %v5420 = vadd.f32 0.0, %v5419
        %5421 = vmatmul.bf16.gmra.mxu0 %v5017
        %v5422 = vpop.f32.mrf.mxu0
        %v5423 = vadd.f32 0.0, %v5422
        %v5424 = vpop.f32.mrf.mxu0
        %v5425 = vadd.f32 0.0, %v5424
        %5426 = vmatmul.bf16.gmra.mxu0 %v5033
        %v5427 = vpop.f32.mrf.mxu0
        %v5428 = vadd.f32 0.0, %v5427
        %v5429 = vpop.f32.mrf.mxu0
        %v5430 = vadd.f32 0.0, %v5429
        %5431 = vmatmul.bf16.gmra.mxu0 %v5044
        %v5432 = vpop.f32.mrf.mxu0
        %v5433 = vadd.f32 0.0, %v5432
        %v5434 = vpop.f32.mrf.mxu0
        %5435 = vdwg.mxu0
        %5436 = vmatpush.bf16.msra.mxu0 %v5199
        %5437 = vmatpush.bf16.msra.mxu0 %v5197
        %5438 = vmatpush.bf16.msra.mxu0 %v5195
        %5439 = vmatpush.bf16.msra.mxu0 %v5193
        %5440 = vmatpush.bf16.msra.mxu0 %v5191
        %5441 = vmatpush.bf16.msra.mxu0 %v5189
        %5442 = vmatpush.bf16.msra.mxu0 %v5187
        %5443 = vmatpush.bf16.msra.mxu0 %v5185
        %5444 = vmatmul.bf16.gmra.mxu0 %v4881
        %v5445 = vpop.f32.mrf.mxu0
        %v5446 = vadd.f32 %v5378, %v5445
        %v5447 = vpop.f32.mrf.mxu0
        %v5448 = vadd.f32 %v5380, %v5447
        %5449 = vmatmul.bf16.gmra.mxu0 %v4897
        %v5450 = vpop.f32.mrf.mxu0
        %v5451 = vadd.f32 %v5383, %v5450
        %v5452 = vpop.f32.mrf.mxu0
        %v5453 = vadd.f32 %v5385, %v5452
        %5454 = vmatmul.bf16.gmra.mxu0 %v4913
        %v5455 = vpop.f32.mrf.mxu0
        %v5456 = vadd.f32 %v5388, %v5455
        %v5457 = vpop.f32.mrf.mxu0
        %v5458 = vadd.f32 %v5390, %v5457
        %5459 = vmatmul.bf16.gmra.mxu0 %v4929
        %v5460 = vpop.f32.mrf.mxu0
        %v5461 = vadd.f32 %v5393, %v5460
        %v5462 = vpop.f32.mrf.mxu0
        %v5463 = vadd.f32 %v5395, %v5462
        %5464 = vmatmul.bf16.gmra.mxu0 %v4945
        %v5465 = vpop.f32.mrf.mxu0
        %v5466 = vadd.f32 %v5398, %v5465
        %v5467 = vpop.f32.mrf.mxu0
        %v5468 = vadd.f32 %v5400, %v5467
        %5469 = vmatmul.bf16.gmra.mxu0 %v4961
        %v5470 = vpop.f32.mrf.mxu0
        %v5471 = vadd.f32 %v5403, %v5470
        %v5472 = vpop.f32.mrf.mxu0
        %v5473 = vadd.f32 %v5405, %v5472
        %5474 = vmatmul.bf16.gmra.mxu0 %v4977
        %v5475 = vpop.f32.mrf.mxu0
        %v5476 = vadd.f32 %v5408, %v5475
        %v5477 = vpop.f32.mrf.mxu0
        %v5478 = vadd.f32 %v5410, %v5477
        %5479 = vmatmul.bf16.gmra.mxu0 %v4993
        %v5480 = vpop.f32.mrf.mxu0
        %v5481 = vadd.f32 %v5413, %v5480
        %v5482 = vpop.f32.mrf.mxu0
        %v5483 = vadd.f32 %v5415, %v5482
        %5484 = vmatmul.bf16.gmra.mxu0 %v5009
        %v5485 = vpop.f32.mrf.mxu0
        %v5486 = vadd.f32 %v5418, %v5485
        %v5487 = vpop.f32.mrf.mxu0
        %v5488 = vadd.f32 %v5420, %v5487
        %5489 = vmatmul.bf16.gmra.mxu0 %v5025
        %v5490 = vpop.f32.mrf.mxu0
        %v5491 = vadd.f32 %v5423, %v5490
        %v5492 = vpop.f32.mrf.mxu0
        %v5493 = vadd.f32 %v5425, %v5492
        %5494 = vmatmul.bf16.gmra.mxu0 %v5041
        %v5495 = vpop.f32.mrf.mxu0
        %v5496 = vadd.f32 %v5428, %v5495
        %v5497 = vpop.f32.mrf.mxu0
        %v5498 = vadd.f32 %v5430, %v5497
        %5499 = vmatmul.bf16.gmra.mxu0 %v5047
        %v5500 = vpop.f32.mrf.mxu0
        %v5501 = vadd.f32 %v5433, %v5500
        %v5502 = vpop.f32.mrf.mxu0
        %5503 = vdwg.mxu0
        %v5504 = vadd.f32 %v4708, %v5310
        %v5505 = vadd.f32 %v4709, %v5446
        %v5506 = vadd.f32 %v4710, %v5312
        %v5507 = vadd.f32 %v4711, %v5448
        %v5508 = vadd.f32 %v4712, %v5315
        %v5509 = vadd.f32 %v4713, %v5451
        %v5510 = vadd.f32 %v4714, %v5317
        %v5511 = vadd.f32 %v4715, %v5453
        %v5512 = vadd.f32 %v4716, %v5320
        %v5513 = vadd.f32 %v4717, %v5456
        %v5514 = vadd.f32 %v4718, %v5322
        %v5515 = vadd.f32 %v4719, %v5458
        %v5516 = vadd.f32 %v4720, %v5325
        %v5517 = vadd.f32 %v4721, %v5461
        %v5518 = vadd.f32 %v4722, %v5327
        %v5519 = vadd.f32 %v4723, %v5463
        %v5520 = vadd.f32 %v4724, %v5330
        %v5521 = vadd.f32 %v4725, %v5466
        %v5522 = vadd.f32 %v4726, %v5332
        %v5523 = vadd.f32 %v4727, %v5468
        %v5524 = vadd.f32 %v4728, %v5335
        %v5525 = vadd.f32 %v4729, %v5471
        %v5526 = vadd.f32 %v4730, %v5337
        %v5527 = vadd.f32 %v4731, %v5473
        %v5528 = vadd.f32 %v4732, %v5340
        %v5529 = vadd.f32 %v4733, %v5476
        %v5530 = vadd.f32 %v4734, %v5342
        %v5531 = vadd.f32 %v4735, %v5478
        %v5532 = vadd.f32 %v4736, %v5345
        %v5533 = vadd.f32 %v4737, %v5481
        %v5534 = vadd.f32 %v4738, %v5347
        %v5535 = vadd.f32 %v4739, %v5483
        %v5536 = vadd.f32 %v4740, %v5350
        %v5537 = vadd.f32 %v4741, %v5486
        %v5538 = vadd.f32 %v4742, %v5352
        %v5539 = vadd.f32 %v4743, %v5488
        %v5540 = vadd.f32 %v4744, %v5355
        %v5541 = vadd.f32 %v4745, %v5491
        %v5542 = vadd.f32 %v4746, %v5357
        %v5543 = vadd.f32 %v4747, %v5493
        %v5544 = vadd.f32 %v4748, %v5360
        %v5545 = vadd.f32 %v4749, %v5496
        %v5546 = vadd.f32 %v4750, %v5362
        %v5547 = vadd.f32 %v4751, %v5498
        %v5548 = vadd.f32 %v4752, %v5365
        %v5549 = vadd.f32 %v4753, %v5501
        %v5550 = vld [vmem:[#allocation2 + $0x30] sm:$0xfc]
        %v5551 = vld [vmem:[#allocation2 + $0x38] sm:$0xfc]
        %v5552 = vld [vmem:[#allocation2 + $0x1a0] sm:$0x3]
        %v5553 = vld [vmem:[#allocation2 + $0x1a8] sm:$0x3]
        %v5554 = vpack.c.bf16 %v4756, %v5550
        %v5555 = vpack.c.bf16 %v4757, %v5551
        %v5556 = vpack.c.bf16 %v5552, %v4798
        %v5557 = vpack.c.bf16 %v5553, %v4799
        %v5558 = vld [vmem:[%s280 + $0x700] sm:$0xff]
        %v5559 = vld [vmem:[%s280 + $0x708] sm:$0xff]
        %v5560 = vld [vmem:[%s280 + $0x710] sm:$0xff]
        %v5561 = vld [vmem:[%s280 + $0x718] sm:$0xff]
        %v5562 = vld [vmem:[%s280 + $0x720] sm:$0xff]
        %v5563 = vld [vmem:[%s280 + $0x728] sm:$0xff]
        %v5564 = vld [vmem:[%s280 + $0x730] sm:$0xff]
        %v5565 = vld [vmem:[%s280 + $0x738] sm:$0xff]
        %v5566 = vld [vmem:[%s280 + $0x740] sm:$0xff]
        %v5567 = vld [vmem:[%s280 + $0x748] sm:$0xff]
        %v5568 = vld [vmem:[%s280 + $0x750] sm:$0xff]
        %v5569 = vld [vmem:[%s280 + $0x758] sm:$0xff]
        %v5570 = vld [vmem:[%s280 + $0x760] sm:$0xff]
        %v5571 = vld [vmem:[%s280 + $0x768] sm:$0xff]
        %v5572 = vld [vmem:[%s280 + $0x770] sm:$0xff]
        %v5573 = vld [vmem:[%s280 + $0x778] sm:$0xff]
        %v5574 = vld [vmem:[%s280 + $0x780] sm:$0xff]
        %v5575 = vld [vmem:[%s280 + $0x788] sm:$0xff]
        %v5576 = vld [vmem:[%s280 + $0x790] sm:$0xff]
        %v5577 = vld [vmem:[%s280 + $0x798] sm:$0xff]
        %v5578 = vld [vmem:[%s280 + $0x7a0] sm:$0xff]
        %v5579 = vld [vmem:[%s280 + $0x7a8] sm:$0xff]
        %v5580 = vld [vmem:[%s280 + $0x7b0] sm:$0xff]
        %v5581 = vld [vmem:[%s280 + $0x7b8] sm:$0xff]
        %v5582 = vld [vmem:[%s280 + $0x7c0] sm:$0xff]
        %v5583 = vld [vmem:[%s280 + $0x7c8] sm:$0xff]
        %v5584 = vld [vmem:[%s280 + $0x7d0] sm:$0xff]
        %v5585 = vld [vmem:[%s280 + $0x7d8] sm:$0xff]
        %v5586 = vld [vmem:[%s280 + $0x7e0] sm:$0xff]
        %v5587 = vld [vmem:[%s280 + $0x7e8] sm:$0xff]
        %v5588 = vld [vmem:[%s280 + $0x7f0] sm:$0xff]
        %v5589 = vld [vmem:[%s280 + $0x7f8] sm:$0xff]
        %vm5614 = vcmask 1046528
        %v5615 = vrot.slane %v5554, 1
        %v5616 = vrot.slane %v4804, 1
        %v5617 = vsel %vm5614, %v5615, %v5616
        %v5618 = vrot.slane %v5555, 1
        %v5619 = vrot.slane %v4805, 1
        %v5620 = vsel %vm5614, %v5618, %v5619
        %v5621 = vrot.slane %v4806, 1
        %v5622 = vsel %vm5614, %v5616, %v5621
        %v5623 = vrot.slane %v4807, 1
        %v5624 = vsel %vm5614, %v5619, %v5623
        %v5625 = vrot.slane %v4808, 1
        %v5626 = vsel %vm5614, %v5621, %v5625
        %v5627 = vrot.slane %v4809, 1
        %v5628 = vsel %vm5614, %v5623, %v5627
        %v5629 = vrot.slane %v4810, 1
        %v5630 = vsel %vm5614, %v5625, %v5629
        %v5631 = vrot.slane %v4811, 1
        %v5632 = vsel %vm5614, %v5627, %v5631
        %v5633 = vrot.slane %v4812, 1
        %v5634 = vsel %vm5614, %v5629, %v5633
        %v5635 = vrot.slane %v4813, 1
        %v5636 = vsel %vm5614, %v5631, %v5635
        %v5637 = vrot.slane %v4814, 1
        %v5638 = vsel %vm5614, %v5633, %v5637
        %v5639 = vrot.slane %v4815, 1
        %v5640 = vsel %vm5614, %v5635, %v5639
        %v5641 = vrot.slane %v4816, 1
        %v5642 = vsel %vm5614, %v5637, %v5641
        %v5643 = vrot.slane %v4817, 1
        %v5644 = vsel %vm5614, %v5639, %v5643
        %v5645 = vrot.slane %v4818, 1
        %v5646 = vsel %vm5614, %v5641, %v5645
        %v5647 = vrot.slane %v4819, 1
        %v5648 = vsel %vm5614, %v5643, %v5647
        %v5649 = vrot.slane %v4820, 1
        %v5650 = vsel %vm5614, %v5645, %v5649
        %v5651 = vrot.slane %v4821, 1
        %v5652 = vsel %vm5614, %v5647, %v5651
        %v5653 = vrot.slane %v4822, 1
        %v5654 = vsel %vm5614, %v5649, %v5653
        %v5655 = vrot.slane %v4823, 1
        %v5656 = vsel %vm5614, %v5651, %v5655
        %v5657 = vrot.slane %v5556, 1
        %v5658 = vsel %vm5614, %v5653, %v5657
        %v5659 = vrot.slane %v5557, 1
        %v5660 = vsel %vm5614, %v5655, %v5659
        %v5717 = vunpack.c.l.b16 %v5558
        %v5718 = vunpack.c.h.b16 %v5558
        %v5719 = vunpack.c.l.b16 %v5559
        %v5720 = vunpack.c.h.b16 %v5559
        %v5721 = vunpack.c.l.b16 %v5560
        %v5722 = vunpack.c.h.b16 %v5560
        %v5723 = vunpack.c.l.b16 %v5561
        %v5724 = vunpack.c.h.b16 %v5561
        %v5725 = vunpack.c.l.b16 %v5562
        %v5726 = vunpack.c.h.b16 %v5562
        %v5727 = vunpack.c.l.b16 %v5563
        %v5728 = vunpack.c.h.b16 %v5563
        %v5729 = vunpack.c.l.b16 %v5564
        %v5730 = vunpack.c.h.b16 %v5564
        %v5731 = vunpack.c.l.b16 %v5565
        %v5732 = vunpack.c.h.b16 %v5565
        %v5733 = vunpack.c.l.b16 %v5566
        %v5734 = vunpack.c.h.b16 %v5566
        %v5735 = vunpack.c.l.b16 %v5567
        %v5736 = vunpack.c.h.b16 %v5567
        %v5737 = vunpack.c.l.b16 %v5568
        %v5738 = vunpack.c.h.b16 %v5568
        %v5739 = vunpack.c.l.b16 %v5569
        %v5740 = vunpack.c.h.b16 %v5569
        %v5741 = vunpack.c.l.b16 %v5570
        %v5742 = vunpack.c.h.b16 %v5570
        %v5743 = vunpack.c.l.b16 %v5571
        %v5744 = vunpack.c.h.b16 %v5571
        %v5745 = vunpack.c.l.b16 %v5572
        %v5746 = vunpack.c.h.b16 %v5572
        %v5747 = vunpack.c.l.b16 %v5573
        %v5748 = vunpack.c.h.b16 %v5573
        %v5749 = vunpack.c.l.b16 %v5574
        %v5750 = vunpack.c.h.b16 %v5574
        %v5751 = vunpack.c.l.b16 %v5575
        %v5752 = vunpack.c.h.b16 %v5575
        %v5753 = vunpack.c.l.b16 %v5576
        %v5754 = vunpack.c.h.b16 %v5576
        %v5755 = vunpack.c.l.b16 %v5577
        %v5756 = vunpack.c.h.b16 %v5577
        %v5757 = vunpack.c.l.b16 %v5578
        %v5758 = vunpack.c.h.b16 %v5578
        %v5759 = vunpack.c.l.b16 %v5579
        %v5760 = vunpack.c.h.b16 %v5579
        %v5761 = vunpack.c.l.b16 %v5580
        %v5762 = vunpack.c.h.b16 %v5580
        %v5763 = vunpack.c.l.b16 %v5581
        %v5764 = vunpack.c.h.b16 %v5581
        %v5765 = vunpack.c.l.b16 %v5582
        %v5766 = vunpack.c.h.b16 %v5582
        %v5767 = vunpack.c.l.b16 %v5583
        %v5768 = vunpack.c.h.b16 %v5583
        %v5769 = vunpack.c.l.b16 %v5584
        %v5770 = vunpack.c.h.b16 %v5584
        %v5771 = vunpack.c.l.b16 %v5585
        %v5772 = vunpack.c.h.b16 %v5585
        %v5773 = vunpack.c.l.b16 %v5586
        %v5774 = vunpack.c.h.b16 %v5586
        %v5775 = vunpack.c.l.b16 %v5587
        %v5776 = vunpack.c.h.b16 %v5587
        %v5777 = vunpack.c.l.b16 %v5588
        %v5778 = vunpack.c.h.b16 %v5588
        %v5779 = vunpack.c.l.b16 %v5589
        %v5780 = vunpack.c.h.b16 %v5589
        %v5781 = vpack.c.b16 %v5719, %v5717
        %v5782 = vpack.c.b16 %v5720, %v5718
        %v5783 = vpack.c.b16 %v5723, %v5721
        %v5784 = vpack.c.b16 %v5724, %v5722
        %v5785 = vpack.c.b16 %v5727, %v5725
        %v5786 = vpack.c.b16 %v5728, %v5726
        %v5787 = vpack.c.b16 %v5731, %v5729
        %v5788 = vpack.c.b16 %v5732, %v5730
        %v5789 = vpack.c.b16 %v5735, %v5733
        %v5790 = vpack.c.b16 %v5736, %v5734
        %v5791 = vpack.c.b16 %v5739, %v5737
        %v5792 = vpack.c.b16 %v5740, %v5738
        %v5793 = vpack.c.b16 %v5743, %v5741
        %v5794 = vpack.c.b16 %v5744, %v5742
        %v5795 = vpack.c.b16 %v5747, %v5745
        %v5796 = vpack.c.b16 %v5748, %v5746
        %v5797 = vpack.c.b16 %v5751, %v5749
        %v5798 = vpack.c.b16 %v5752, %v5750
        %v5799 = vpack.c.b16 %v5755, %v5753
        %v5800 = vpack.c.b16 %v5756, %v5754
        %v5801 = vpack.c.b16 %v5759, %v5757
        %v5802 = vpack.c.b16 %v5760, %v5758
        %v5803 = vpack.c.b16 %v5763, %v5761
        %v5804 = vpack.c.b16 %v5764, %v5762
        %v5805 = vpack.c.b16 %v5767, %v5765
        %v5806 = vpack.c.b16 %v5768, %v5766
        %v5807 = vpack.c.b16 %v5771, %v5769
        %v5808 = vpack.c.b16 %v5772, %v5770
        %v5809 = vpack.c.b16 %v5775, %v5773
        %v5810 = vpack.c.b16 %v5776, %v5774
        %v5811 = vpack.c.b16 %v5779, %v5777
        %v5812 = vpack.c.b16 %v5780, %v5778
        %5845 = vmatpush.bf16.msra.mxu0 %v5795
        %5846 = vmatpush.bf16.msra.mxu0 %v5793
        %5847 = vmatpush.bf16.msra.mxu0 %v5791
        %5848 = vmatpush.bf16.msra.mxu0 %v5789
        %5849 = vmatpush.bf16.msra.mxu0 %v5787
        %5850 = vmatpush.bf16.msra.mxu0 %v5785
        %5851 = vmatpush.bf16.msra.mxu0 %v5783
        %5852 = vmatpush.bf16.msra.mxu0 %v5781
        %5853 = vmatmul.bf16.gmra.mxu0 %v5617
        %v5854 = vpop.f32.mrf.mxu0
        %v5855 = vadd.f32 0.0, %v5854
        %v5856 = vpop.f32.mrf.mxu0
        %v5857 = vadd.f32 0.0, %v5856
        %5858 = vmatmul.bf16.gmra.mxu0 %v5622
        %v5859 = vpop.f32.mrf.mxu0
        %v5860 = vadd.f32 0.0, %v5859
        %v5861 = vpop.f32.mrf.mxu0
        %v5862 = vadd.f32 0.0, %v5861
        %5863 = vmatmul.bf16.gmra.mxu0 %v5626
        %v5864 = vpop.f32.mrf.mxu0
        %v5865 = vadd.f32 0.0, %v5864
        %v5866 = vpop.f32.mrf.mxu0
        %v5867 = vadd.f32 0.0, %v5866
        %5868 = vmatmul.bf16.gmra.mxu0 %v5630
        %v5869 = vpop.f32.mrf.mxu0
        %v5870 = vadd.f32 0.0, %v5869
        %v5871 = vpop.f32.mrf.mxu0
        %v5872 = vadd.f32 0.0, %v5871
        %5873 = vmatmul.bf16.gmra.mxu0 %v5634
        %v5874 = vpop.f32.mrf.mxu0
        %v5875 = vadd.f32 0.0, %v5874
        %v5876 = vpop.f32.mrf.mxu0
        %v5877 = vadd.f32 0.0, %v5876
        %5878 = vmatmul.bf16.gmra.mxu0 %v5638
        %v5879 = vpop.f32.mrf.mxu0
        %v5880 = vadd.f32 0.0, %v5879
        %v5881 = vpop.f32.mrf.mxu0
        %v5882 = vadd.f32 0.0, %v5881
        %5883 = vmatmul.bf16.gmra.mxu0 %v5642
        %v5884 = vpop.f32.mrf.mxu0
        %v5885 = vadd.f32 0.0, %v5884
        %v5886 = vpop.f32.mrf.mxu0
        %v5887 = vadd.f32 0.0, %v5886
        %5888 = vmatmul.bf16.gmra.mxu0 %v5646
        %v5889 = vpop.f32.mrf.mxu0
        %v5890 = vadd.f32 0.0, %v5889
        %v5891 = vpop.f32.mrf.mxu0
        %v5892 = vadd.f32 0.0, %v5891
        %5893 = vmatmul.bf16.gmra.mxu0 %v5650
        %v5894 = vpop.f32.mrf.mxu0
        %v5895 = vadd.f32 0.0, %v5894
        %v5896 = vpop.f32.mrf.mxu0
        %v5897 = vadd.f32 0.0, %v5896
        %5898 = vmatmul.bf16.gmra.mxu0 %v5654
        %v5899 = vpop.f32.mrf.mxu0
        %v5900 = vadd.f32 0.0, %v5899
        %v5901 = vpop.f32.mrf.mxu0
        %v5902 = vadd.f32 0.0, %v5901
        %5903 = vmatmul.bf16.gmra.mxu0 %v5658
        %v5904 = vpop.f32.mrf.mxu0
        %v5905 = vadd.f32 0.0, %v5904
        %v5906 = vpop.f32.mrf.mxu0
        %v5907 = vadd.f32 0.0, %v5906
        %5908 = vmatmul.bf16.gmra.mxu0 %v5657
        %v5909 = vpop.f32.mrf.mxu0
        %v5910 = vadd.f32 0.0, %v5909
        %v5911 = vpop.f32.mrf.mxu0
        %5912 = vdwg.mxu0
        %5913 = vmatpush.bf16.msra.mxu0 %v5811
        %5914 = vmatpush.bf16.msra.mxu0 %v5809
        %5915 = vmatpush.bf16.msra.mxu0 %v5807
        %5916 = vmatpush.bf16.msra.mxu0 %v5805
        %5917 = vmatpush.bf16.msra.mxu0 %v5803
        %5918 = vmatpush.bf16.msra.mxu0 %v5801
        %5919 = vmatpush.bf16.msra.mxu0 %v5799
        %5920 = vmatpush.bf16.msra.mxu0 %v5797
        %5921 = vmatmul.bf16.gmra.mxu0 %v5620
        %v5922 = vpop.f32.mrf.mxu0
        %v5923 = vadd.f32 %v5855, %v5922
        %v5924 = vpop.f32.mrf.mxu0
        %v5925 = vadd.f32 %v5857, %v5924
        %5926 = vmatmul.bf16.gmra.mxu0 %v5624
        %v5927 = vpop.f32.mrf.mxu0
        %v5928 = vadd.f32 %v5860, %v5927
        %v5929 = vpop.f32.mrf.mxu0
        %v5930 = vadd.f32 %v5862, %v5929
        %5931 = vmatmul.bf16.gmra.mxu0 %v5628
        %v5932 = vpop.f32.mrf.mxu0
        %v5933 = vadd.f32 %v5865, %v5932
        %v5934 = vpop.f32.mrf.mxu0
        %v5935 = vadd.f32 %v5867, %v5934
        %5936 = vmatmul.bf16.gmra.mxu0 %v5632
        %v5937 = vpop.f32.mrf.mxu0
        %v5938 = vadd.f32 %v5870, %v5937
        %v5939 = vpop.f32.mrf.mxu0
        %v5940 = vadd.f32 %v5872, %v5939
        %5941 = vmatmul.bf16.gmra.mxu0 %v5636
        %v5942 = vpop.f32.mrf.mxu0
        %v5943 = vadd.f32 %v5875, %v5942
        %v5944 = vpop.f32.mrf.mxu0
        %v5945 = vadd.f32 %v5877, %v5944
        %5946 = vmatmul.bf16.gmra.mxu0 %v5640
        %v5947 = vpop.f32.mrf.mxu0
        %v5948 = vadd.f32 %v5880, %v5947
        %v5949 = vpop.f32.mrf.mxu0
        %v5950 = vadd.f32 %v5882, %v5949
        %5951 = vmatmul.bf16.gmra.mxu0 %v5644
        %v5952 = vpop.f32.mrf.mxu0
        %v5953 = vadd.f32 %v5885, %v5952
        %v5954 = vpop.f32.mrf.mxu0
        %v5955 = vadd.f32 %v5887, %v5954
        %5956 = vmatmul.bf16.gmra.mxu0 %v5648
        %v5957 = vpop.f32.mrf.mxu0
        %v5958 = vadd.f32 %v5890, %v5957
        %v5959 = vpop.f32.mrf.mxu0
        %v5960 = vadd.f32 %v5892, %v5959
        %5961 = vmatmul.bf16.gmra.mxu0 %v5652
        %v5962 = vpop.f32.mrf.mxu0
        %v5963 = vadd.f32 %v5895, %v5962
        %v5964 = vpop.f32.mrf.mxu0
        %v5965 = vadd.f32 %v5897, %v5964
        %5966 = vmatmul.bf16.gmra.mxu0 %v5656
        %v5967 = vpop.f32.mrf.mxu0
        %v5968 = vadd.f32 %v5900, %v5967
        %v5969 = vpop.f32.mrf.mxu0
        %v5970 = vadd.f32 %v5902, %v5969
        %5971 = vmatmul.bf16.gmra.mxu0 %v5660
        %v5972 = vpop.f32.mrf.mxu0
        %v5973 = vadd.f32 %v5905, %v5972
        %v5974 = vpop.f32.mrf.mxu0
        %v5975 = vadd.f32 %v5907, %v5974
        %5976 = vmatmul.bf16.gmra.mxu0 %v5659
        %v5977 = vpop.f32.mrf.mxu0
        %v5978 = vadd.f32 %v5910, %v5977
        %v5979 = vpop.f32.mrf.mxu0
        %5980 = vdwg.mxu0
        %5981 = vmatpush.bf16.msra.mxu0 %v5796
        %5982 = vmatpush.bf16.msra.mxu0 %v5794
        %5983 = vmatpush.bf16.msra.mxu0 %v5792
        %5984 = vmatpush.bf16.msra.mxu0 %v5790
        %5985 = vmatpush.bf16.msra.mxu0 %v5788
        %5986 = vmatpush.bf16.msra.mxu0 %v5786
        %5987 = vmatpush.bf16.msra.mxu0 %v5784
        %5988 = vmatpush.bf16.msra.mxu0 %v5782
        %5989 = vmatmul.bf16.gmra.mxu0 %v5617
        %v5990 = vpop.f32.mrf.mxu0
        %v5991 = vadd.f32 0.0, %v5990
        %v5992 = vpop.f32.mrf.mxu0
        %v5993 = vadd.f32 0.0, %v5992
        %5994 = vmatmul.bf16.gmra.mxu0 %v5622
        %v5995 = vpop.f32.mrf.mxu0
        %v5996 = vadd.f32 0.0, %v5995
        %v5997 = vpop.f32.mrf.mxu0
        %v5998 = vadd.f32 0.0, %v5997
        %5999 = vmatmul.bf16.gmra.mxu0 %v5626
        %v6000 = vpop.f32.mrf.mxu0
        %v6001 = vadd.f32 0.0, %v6000
        %v6002 = vpop.f32.mrf.mxu0
        %v6003 = vadd.f32 0.0, %v6002
        %6004 = vmatmul.bf16.gmra.mxu0 %v5630
        %v6005 = vpop.f32.mrf.mxu0
        %v6006 = vadd.f32 0.0, %v6005
        %v6007 = vpop.f32.mrf.mxu0
        %v6008 = vadd.f32 0.0, %v6007
        %6009 = vmatmul.bf16.gmra.mxu0 %v5634
        %v6010 = vpop.f32.mrf.mxu0
        %v6011 = vadd.f32 0.0, %v6010
        %v6012 = vpop.f32.mrf.mxu0
        %v6013 = vadd.f32 0.0, %v6012
        %6014 = vmatmul.bf16.gmra.mxu0 %v5638
        %v6015 = vpop.f32.mrf.mxu0
        %v6016 = vadd.f32 0.0, %v6015
        %v6017 = vpop.f32.mrf.mxu0
        %v6018 = vadd.f32 0.0, %v6017
        %6019 = vmatmul.bf16.gmra.mxu0 %v5642
        %v6020 = vpop.f32.mrf.mxu0
        %v6021 = vadd.f32 0.0, %v6020
        %v6022 = vpop.f32.mrf.mxu0
        %v6023 = vadd.f32 0.0, %v6022
        %6024 = vmatmul.bf16.gmra.mxu0 %v5646
        %v6025 = vpop.f32.mrf.mxu0
        %v6026 = vadd.f32 0.0, %v6025
        %v6027 = vpop.f32.mrf.mxu0
        %v6028 = vadd.f32 0.0, %v6027
        %6029 = vmatmul.bf16.gmra.mxu0 %v5650
        %v6030 = vpop.f32.mrf.mxu0
        %v6031 = vadd.f32 0.0, %v6030
        %v6032 = vpop.f32.mrf.mxu0
        %v6033 = vadd.f32 0.0, %v6032
        %6034 = vmatmul.bf16.gmra.mxu0 %v5654
        %v6035 = vpop.f32.mrf.mxu0
        %v6036 = vadd.f32 0.0, %v6035
        %v6037 = vpop.f32.mrf.mxu0
        %v6038 = vadd.f32 0.0, %v6037
        %6039 = vmatmul.bf16.gmra.mxu0 %v5658
        %v6040 = vpop.f32.mrf.mxu0
        %v6041 = vadd.f32 0.0, %v6040
        %v6042 = vpop.f32.mrf.mxu0
        %v6043 = vadd.f32 0.0, %v6042
        %6044 = vmatmul.bf16.gmra.mxu0 %v5657
        %v6045 = vpop.f32.mrf.mxu0
        %v6046 = vadd.f32 0.0, %v6045
        %v6047 = vpop.f32.mrf.mxu0
        %6048 = vdwg.mxu0
        %6049 = vmatpush.bf16.msra.mxu0 %v5812
        %6050 = vmatpush.bf16.msra.mxu0 %v5810
        %6051 = vmatpush.bf16.msra.mxu0 %v5808
        %6052 = vmatpush.bf16.msra.mxu0 %v5806
        %6053 = vmatpush.bf16.msra.mxu0 %v5804
        %6054 = vmatpush.bf16.msra.mxu0 %v5802
        %6055 = vmatpush.bf16.msra.mxu0 %v5800
        %6056 = vmatpush.bf16.msra.mxu0 %v5798
        %6057 = vmatmul.bf16.gmra.mxu0 %v5620
        %v6058 = vpop.f32.mrf.mxu0
        %v6059 = vadd.f32 %v5991, %v6058
        %v6060 = vpop.f32.mrf.mxu0
        %v6061 = vadd.f32 %v5993, %v6060
        %6062 = vmatmul.bf16.gmra.mxu0 %v5624
        %v6063 = vpop.f32.mrf.mxu0
        %v6064 = vadd.f32 %v5996, %v6063
        %v6065 = vpop.f32.mrf.mxu0
        %v6066 = vadd.f32 %v5998, %v6065
        %6067 = vmatmul.bf16.gmra.mxu0 %v5628
        %v6068 = vpop.f32.mrf.mxu0
        %v6069 = vadd.f32 %v6001, %v6068
        %v6070 = vpop.f32.mrf.mxu0
        %v6071 = vadd.f32 %v6003, %v6070
        %6072 = vmatmul.bf16.gmra.mxu0 %v5632
        %v6073 = vpop.f32.mrf.mxu0
        %v6074 = vadd.f32 %v6006, %v6073
        %v6075 = vpop.f32.mrf.mxu0
        %v6076 = vadd.f32 %v6008, %v6075
        %6077 = vmatmul.bf16.gmra.mxu0 %v5636
        %v6078 = vpop.f32.mrf.mxu0
        %v6079 = vadd.f32 %v6011, %v6078
        %v6080 = vpop.f32.mrf.mxu0
        %v6081 = vadd.f32 %v6013, %v6080
        %6082 = vmatmul.bf16.gmra.mxu0 %v5640
        %v6083 = vpop.f32.mrf.mxu0
        %v6084 = vadd.f32 %v6016, %v6083
        %v6085 = vpop.f32.mrf.mxu0
        %v6086 = vadd.f32 %v6018, %v6085
        %6087 = vmatmul.bf16.gmra.mxu0 %v5644
        %v6088 = vpop.f32.mrf.mxu0
        %v6089 = vadd.f32 %v6021, %v6088
        %v6090 = vpop.f32.mrf.mxu0
        %v6091 = vadd.f32 %v6023, %v6090
        %6092 = vmatmul.bf16.gmra.mxu0 %v5648
        %v6093 = vpop.f32.mrf.mxu0
        %v6094 = vadd.f32 %v6026, %v6093
        %v6095 = vpop.f32.mrf.mxu0
        %v6096 = vadd.f32 %v6028, %v6095
        %6097 = vmatmul.bf16.gmra.mxu0 %v5652
        %v6098 = vpop.f32.mrf.mxu0
        %v6099 = vadd.f32 %v6031, %v6098
        %v6100 = vpop.f32.mrf.mxu0
        %v6101 = vadd.f32 %v6033, %v6100
        %6102 = vmatmul.bf16.gmra.mxu0 %v5656
        %v6103 = vpop.f32.mrf.mxu0
        %v6104 = vadd.f32 %v6036, %v6103
        %v6105 = vpop.f32.mrf.mxu0
        %v6106 = vadd.f32 %v6038, %v6105
        %6107 = vmatmul.bf16.gmra.mxu0 %v5660
        %v6108 = vpop.f32.mrf.mxu0
        %v6109 = vadd.f32 %v6041, %v6108
        %v6110 = vpop.f32.mrf.mxu0
        %v6111 = vadd.f32 %v6043, %v6110
        %6112 = vmatmul.bf16.gmra.mxu0 %v5659
        %v6113 = vpop.f32.mrf.mxu0
        %v6114 = vadd.f32 %v6046, %v6113
        %v6115 = vpop.f32.mrf.mxu0
        %6116 = vdwg.mxu0
        %v6117 = vadd.f32 %v5504, %v5923
        %v6118 = vadd.f32 %v5505, %v6059
        %v6119 = vadd.f32 %v5506, %v5925
        %v6120 = vadd.f32 %v5507, %v6061
        %v6121 = vadd.f32 %v5508, %v5928
        %v6122 = vadd.f32 %v5509, %v6064
        %v6123 = vadd.f32 %v5510, %v5930
        %v6124 = vadd.f32 %v5511, %v6066
        %v6125 = vadd.f32 %v5512, %v5933
        %v6126 = vadd.f32 %v5513, %v6069
        %v6127 = vadd.f32 %v5514, %v5935
        %v6128 = vadd.f32 %v5515, %v6071
        %v6129 = vadd.f32 %v5516, %v5938
        %v6130 = vadd.f32 %v5517, %v6074
        %v6131 = vadd.f32 %v5518, %v5940
        %v6132 = vadd.f32 %v5519, %v6076
        %v6133 = vadd.f32 %v5520, %v5943
        %v6134 = vadd.f32 %v5521, %v6079
        %v6135 = vadd.f32 %v5522, %v5945
        %v6136 = vadd.f32 %v5523, %v6081
        %v6137 = vadd.f32 %v5524, %v5948
        %v6138 = vadd.f32 %v5525, %v6084
        %v6139 = vadd.f32 %v5526, %v5950
        %v6140 = vadd.f32 %v5527, %v6086
        %v6141 = vadd.f32 %v5528, %v5953
        %v6142 = vadd.f32 %v5529, %v6089
        %v6143 = vadd.f32 %v5530, %v5955
        %v6144 = vadd.f32 %v5531, %v6091
        %v6145 = vadd.f32 %v5532, %v5958
        %v6146 = vadd.f32 %v5533, %v6094
        %v6147 = vadd.f32 %v5534, %v5960
        %v6148 = vadd.f32 %v5535, %v6096
        %v6149 = vadd.f32 %v5536, %v5963
        %v6150 = vadd.f32 %v5537, %v6099
        %v6151 = vadd.f32 %v5538, %v5965
        %v6152 = vadd.f32 %v5539, %v6101
        %v6153 = vadd.f32 %v5540, %v5968
        %v6154 = vadd.f32 %v5541, %v6104
        %v6155 = vadd.f32 %v5542, %v5970
        %v6156 = vadd.f32 %v5543, %v6106
        %v6157 = vadd.f32 %v5544, %v5973
        %v6158 = vadd.f32 %v5545, %v6109
        %v6159 = vadd.f32 %v5546, %v5975
        %v6160 = vadd.f32 %v5547, %v6111
        %v6161 = vadd.f32 %v5548, %v5978
        %v6162 = vadd.f32 %v5549, %v6114
        %v6163 = vld [vmem:[#allocation2 + $0x30] sm:$0xf8]
        %v6164 = vld [vmem:[#allocation2 + $0x38] sm:$0xf8]
        %v6165 = vld [vmem:[#allocation2 + $0x1a0] sm:$0x7]
        %v6166 = vld [vmem:[#allocation2 + $0x1a8] sm:$0x7]
        %v6167 = vpack.c.bf16 %v4756, %v6163
        %v6168 = vpack.c.bf16 %v4757, %v6164
        %v6169 = vpack.c.bf16 %v6165, %v4798
        %v6170 = vpack.c.bf16 %v6166, %v4799
        %v6171 = vld [vmem:[%s280 + $0x800] sm:$0xff]
        %v6172 = vld [vmem:[%s280 + $0x808] sm:$0xff]
        %v6173 = vld [vmem:[%s280 + $0x810] sm:$0xff]
        %v6174 = vld [vmem:[%s280 + $0x818] sm:$0xff]
        %v6175 = vld [vmem:[%s280 + $0x820] sm:$0xff]
        %v6176 = vld [vmem:[%s280 + $0x828] sm:$0xff]
        %v6177 = vld [vmem:[%s280 + $0x830] sm:$0xff]
        %v6178 = vld [vmem:[%s280 + $0x838] sm:$0xff]
        %v6179 = vld [vmem:[%s280 + $0x840] sm:$0xff]
        %v6180 = vld [vmem:[%s280 + $0x848] sm:$0xff]
        %v6181 = vld [vmem:[%s280 + $0x850] sm:$0xff]
        %v6182 = vld [vmem:[%s280 + $0x858] sm:$0xff]
        %v6183 = vld [vmem:[%s280 + $0x860] sm:$0xff]
        %v6184 = vld [vmem:[%s280 + $0x868] sm:$0xff]
        %v6185 = vld [vmem:[%s280 + $0x870] sm:$0xff]
        %v6186 = vld [vmem:[%s280 + $0x878] sm:$0xff]
        %v6187 = vld [vmem:[%s280 + $0x880] sm:$0xff]
        %v6188 = vld [vmem:[%s280 + $0x888] sm:$0xff]
        %v6189 = vld [vmem:[%s280 + $0x890] sm:$0xff]
        %v6190 = vld [vmem:[%s280 + $0x898] sm:$0xff]
        %v6191 = vld [vmem:[%s280 + $0x8a0] sm:$0xff]
        %v6192 = vld [vmem:[%s280 + $0x8a8] sm:$0xff]
        %v6193 = vld [vmem:[%s280 + $0x8b0] sm:$0xff]
        %v6194 = vld [vmem:[%s280 + $0x8b8] sm:$0xff]
        %v6195 = vld [vmem:[%s280 + $0x8c0] sm:$0xff]
        %v6196 = vld [vmem:[%s280 + $0x8c8] sm:$0xff]
        %v6197 = vld [vmem:[%s280 + $0x8d0] sm:$0xff]
        %v6198 = vld [vmem:[%s280 + $0x8d8] sm:$0xff]
        %v6199 = vld [vmem:[%s280 + $0x8e0] sm:$0xff]
        %v6200 = vld [vmem:[%s280 + $0x8e8] sm:$0xff]
        %v6201 = vld [vmem:[%s280 + $0x8f0] sm:$0xff]
        %v6202 = vld [vmem:[%s280 + $0x8f8] sm:$0xff]
        %vm6203 = vsmask.f32 6400
        %v6205 = vshrl.u32 %v6167, 16
        %v6207 = vrot.slane %v6205, 1
        %v6208 = vshll.u32 %v6167, 16
        %v6210 = vrot.slane %v6208, 2
        %v6211 = vor.u32 %v6207, %v6210
        %v6212 = vrot.slane %v4882, 1
        %v6213 = vrot.slane %v4866, 2
        %v6214 = vor.u32 %v6212, %v6213
        %v6215 = vsel %vm6203, %v6211, %v6214
        %v6217 = vshrl.u32 %v6168, 16
        %v6219 = vrot.slane %v6217, 1
        %v6220 = vshll.u32 %v6168, 16
        %v6222 = vrot.slane %v6220, 2
        %v6223 = vor.u32 %v6219, %v6222
        %v6224 = vrot.slane %v4890, 1
        %v6225 = vrot.slane %v4878, 2
        %v6226 = vor.u32 %v6224, %v6225
        %v6227 = vsel %vm6203, %v6223, %v6226
        %v6228 = vrot.slane %v4898, 1
        %v6229 = vrot.slane %v4886, 2
        %v6230 = vor.u32 %v6228, %v6229
        %v6231 = vsel %vm6203, %v6214, %v6230
        %v6232 = vrot.slane %v4906, 1
        %v6233 = vrot.slane %v4894, 2
        %v6234 = vor.u32 %v6232, %v6233
        %v6235 = vsel %vm6203, %v6226, %v6234
        %v6236 = vrot.slane %v4914, 1
        %v6237 = vrot.slane %v4902, 2
        %v6238 = vor.u32 %v6236, %v6237
        %v6239 = vsel %vm6203, %v6230, %v6238
        %v6240 = vrot.slane %v4922, 1
        %v6241 = vrot.slane %v4910, 2
        %v6242 = vor.u32 %v6240, %v6241
        %v6243 = vsel %vm6203, %v6234, %v6242
        %v6244 = vrot.slane %v4930, 1
        %v6245 = vrot.slane %v4918, 2
        %v6246 = vor.u32 %v6244, %v6245
        %v6247 = vsel %vm6203, %v6238, %v6246
        %v6248 = vrot.slane %v4938, 1
        %v6249 = vrot.slane %v4926, 2
        %v6250 = vor.u32 %v6248, %v6249
        %v6251 = vsel %vm6203, %v6242, %v6250
        %v6252 = vrot.slane %v4946, 1
        %v6253 = vrot.slane %v4934, 2
        %v6254 = vor.u32 %v6252, %v6253
        %v6255 = vsel %vm6203, %v6246, %v6254
        %v6256 = vrot.slane %v4954, 1
        %v6257 = vrot.slane %v4942, 2
        %v6258 = vor.u32 %v6256, %v6257
        %v6259 = vsel %vm6203, %v6250, %v6258
        %v6260 = vrot.slane %v4962, 1
        %v6261 = vrot.slane %v4950, 2
        %v6262 = vor.u32 %v6260, %v6261
        %v6263 = vsel %vm6203, %v6254, %v6262
        %v6264 = vrot.slane %v4970, 1
        %v6265 = vrot.slane %v4958, 2
        %v6266 = vor.u32 %v6264, %v6265
        %v6267 = vsel %vm6203, %v6258, %v6266
        %v6268 = vrot.slane %v4978, 1
        %v6269 = vrot.slane %v4966, 2
        %v6270 = vor.u32 %v6268, %v6269
        %v6271 = vsel %vm6203, %v6262, %v6270
        %v6272 = vrot.slane %v4986, 1
        %v6273 = vrot.slane %v4974, 2
        %v6274 = vor.u32 %v6272, %v6273
        %v6275 = vsel %vm6203, %v6266, %v6274
        %v6276 = vrot.slane %v4994, 1
        %v6277 = vrot.slane %v4982, 2
        %v6278 = vor.u32 %v6276, %v6277
        %v6279 = vsel %vm6203, %v6270, %v6278
        %v6280 = vrot.slane %v5002, 1
        %v6281 = vrot.slane %v4990, 2
        %v6282 = vor.u32 %v6280, %v6281
        %v6283 = vsel %vm6203, %v6274, %v6282
        %v6284 = vrot.slane %v5010, 1
        %v6285 = vrot.slane %v4998, 2
        %v6286 = vor.u32 %v6284, %v6285
        %v6287 = vsel %vm6203, %v6278, %v6286
        %v6288 = vrot.slane %v5018, 1
        %v6289 = vrot.slane %v5006, 2
        %v6290 = vor.u32 %v6288, %v6289
        %v6291 = vsel %vm6203, %v6282, %v6290
        %v6292 = vrot.slane %v5026, 1
        %v6293 = vrot.slane %v5014, 2
        %v6294 = vor.u32 %v6292, %v6293
        %v6295 = vsel %vm6203, %v6286, %v6294
        %v6296 = vrot.slane %v5034, 1
        %v6297 = vrot.slane %v5022, 2
        %v6298 = vor.u32 %v6296, %v6297
        %v6299 = vsel %vm6203, %v6290, %v6298
        %v6301 = vshrl.u32 %v6169, 16
        %v6303 = vrot.slane %v6301, 1
        %v6304 = vshll.u32 %v6169, 16
        %v6306 = vrot.slane %v6304, 2
        %v6307 = vor.u32 %v6303, %v6306
        %v6308 = vsel %vm6203, %v6294, %v6307
        %v6310 = vshrl.u32 %v6170, 16
        %v6312 = vrot.slane %v6310, 1
        %v6313 = vshll.u32 %v6170, 16
        %v6315 = vrot.slane %v6313, 2
        %v6316 = vor.u32 %v6312, %v6315
        %v6317 = vsel %vm6203, %v6298, %v6316
        %v6374 = vunpack.c.l.b16 %v6171
        %v6375 = vunpack.c.h.b16 %v6171
        %v6376 = vunpack.c.l.b16 %v6172
        %v6377 = vunpack.c.h.b16 %v6172
        %v6378 = vunpack.c.l.b16 %v6173
        %v6379 = vunpack.c.h.b16 %v6173
        %v6380 = vunpack.c.l.b16 %v6174
        %v6381 = vunpack.c.h.b16 %v6174
        %v6382 = vunpack.c.l.b16 %v6175
        %v6383 = vunpack.c.h.b16 %v6175
        %v6384 = vunpack.c.l.b16 %v6176
        %v6385 = vunpack.c.h.b16 %v6176
        %v6386 = vunpack.c.l.b16 %v6177
        %v6387 = vunpack.c.h.b16 %v6177
        %v6388 = vunpack.c.l.b16 %v6178
        %v6389 = vunpack.c.h.b16 %v6178
        %v6390 = vunpack.c.l.b16 %v6179
        %v6391 = vunpack.c.h.b16 %v6179
        %v6392 = vunpack.c.l.b16 %v6180
        %v6393 = vunpack.c.h.b16 %v6180
        %v6394 = vunpack.c.l.b16 %v6181
        %v6395 = vunpack.c.h.b16 %v6181
        %v6396 = vunpack.c.l.b16 %v6182
        %v6397 = vunpack.c.h.b16 %v6182
        %v6398 = vunpack.c.l.b16 %v6183
        %v6399 = vunpack.c.h.b16 %v6183
        %v6400 = vunpack.c.l.b16 %v6184
        %v6401 = vunpack.c.h.b16 %v6184
        %v6402 = vunpack.c.l.b16 %v6185
        %v6403 = vunpack.c.h.b16 %v6185
        %v6404 = vunpack.c.l.b16 %v6186
        %v6405 = vunpack.c.h.b16 %v6186
        %v6406 = vunpack.c.l.b16 %v6187
        %v6407 = vunpack.c.h.b16 %v6187
        %v6408 = vunpack.c.l.b16 %v6188
        %v6409 = vunpack.c.h.b16 %v6188
        %v6410 = vunpack.c.l.b16 %v6189
        %v6411 = vunpack.c.h.b16 %v6189
        %v6412 = vunpack.c.l.b16 %v6190
        %v6413 = vunpack.c.h.b16 %v6190
        %v6414 = vunpack.c.l.b16 %v6191
        %v6415 = vunpack.c.h.b16 %v6191
        %v6416 = vunpack.c.l.b16 %v6192
        %v6417 = vunpack.c.h.b16 %v6192
        %v6418 = vunpack.c.l.b16 %v6193
        %v6419 = vunpack.c.h.b16 %v6193
        %v6420 = vunpack.c.l.b16 %v6194
        %v6421 = vunpack.c.h.b16 %v6194
        %v6422 = vunpack.c.l.b16 %v6195
        %v6423 = vunpack.c.h.b16 %v6195
        %v6424 = vunpack.c.l.b16 %v6196
        %v6425 = vunpack.c.h.b16 %v6196
        %v6426 = vunpack.c.l.b16 %v6197
        %v6427 = vunpack.c.h.b16 %v6197
        %v6428 = vunpack.c.l.b16 %v6198
        %v6429 = vunpack.c.h.b16 %v6198
        %v6430 = vunpack.c.l.b16 %v6199
        %v6431 = vunpack.c.h.b16 %v6199
        %v6432 = vunpack.c.l.b16 %v6200
        %v6433 = vunpack.c.h.b16 %v6200
        %v6434 = vunpack.c.l.b16 %v6201
        %v6435 = vunpack.c.h.b16 %v6201
        %v6436 = vunpack.c.l.b16 %v6202
        %v6437 = vunpack.c.h.b16 %v6202
        %v6438 = vpack.c.b16 %v6376, %v6374
        %v6439 = vpack.c.b16 %v6377, %v6375
        %v6440 = vpack.c.b16 %v6380, %v6378
        %v6441 = vpack.c.b16 %v6381, %v6379
        %v6442 = vpack.c.b16 %v6384, %v6382
        %v6443 = vpack.c.b16 %v6385, %v6383
        %v6444 = vpack.c.b16 %v6388, %v6386
        %v6445 = vpack.c.b16 %v6389, %v6387
        %v6446 = vpack.c.b16 %v6392, %v6390
        %v6447 = vpack.c.b16 %v6393, %v6391
        %v6448 = vpack.c.b16 %v6396, %v6394
        %v6449 = vpack.c.b16 %v6397, %v6395
        %v6450 = vpack.c.b16 %v6400, %v6398
        %v6451 = vpack.c.b16 %v6401, %v6399
        %v6452 = vpack.c.b16 %v6404, %v6402
        %v6453 = vpack.c.b16 %v6405, %v6403
        %v6454 = vpack.c.b16 %v6408, %v6406
        %v6455 = vpack.c.b16 %v6409, %v6407
        %v6456 = vpack.c.b16 %v6412, %v6410
        %v6457 = vpack.c.b16 %v6413, %v6411
        %v6458 = vpack.c.b16 %v6416, %v6414
        %v6459 = vpack.c.b16 %v6417, %v6415
        %v6460 = vpack.c.b16 %v6420, %v6418
        %v6461 = vpack.c.b16 %v6421, %v6419
        %v6462 = vpack.c.b16 %v6424, %v6422
        %v6463 = vpack.c.b16 %v6425, %v6423
        %v6464 = vpack.c.b16 %v6428, %v6426
        %v6465 = vpack.c.b16 %v6429, %v6427
        %v6466 = vpack.c.b16 %v6432, %v6430
        %v6467 = vpack.c.b16 %v6433, %v6431
        %v6468 = vpack.c.b16 %v6436, %v6434
        %v6469 = vpack.c.b16 %v6437, %v6435
        %6502 = vmatpush.bf16.msra.mxu0 %v6452
        %6503 = vmatpush.bf16.msra.mxu0 %v6450
        %6504 = vmatpush.bf16.msra.mxu0 %v6448
        %6505 = vmatpush.bf16.msra.mxu0 %v6446
        %6506 = vmatpush.bf16.msra.mxu0 %v6444
        %6507 = vmatpush.bf16.msra.mxu0 %v6442
        %6508 = vmatpush.bf16.msra.mxu0 %v6440
        %6509 = vmatpush.bf16.msra.mxu0 %v6438
        %6510 = vmatmul.bf16.gmra.mxu0 %v6215
        %v6511 = vpop.f32.mrf.mxu0
        %v6512 = vadd.f32 0.0, %v6511
        %v6513 = vpop.f32.mrf.mxu0
        %v6514 = vadd.f32 0.0, %v6513
        %6515 = vmatmul.bf16.gmra.mxu0 %v6231
        %v6516 = vpop.f32.mrf.mxu0
        %v6517 = vadd.f32 0.0, %v6516
        %v6518 = vpop.f32.mrf.mxu0
        %v6519 = vadd.f32 0.0, %v6518
        %6520 = vmatmul.bf16.gmra.mxu0 %v6239
        %v6521 = vpop.f32.mrf.mxu0
        %v6522 = vadd.f32 0.0, %v6521
        %v6523 = vpop.f32.mrf.mxu0
        %v6524 = vadd.f32 0.0, %v6523
        %6525 = vmatmul.bf16.gmra.mxu0 %v6247
        %v6526 = vpop.f32.mrf.mxu0
        %v6527 = vadd.f32 0.0, %v6526
        %v6528 = vpop.f32.mrf.mxu0
        %v6529 = vadd.f32 0.0, %v6528
        %6530 = vmatmul.bf16.gmra.mxu0 %v6255
        %v6531 = vpop.f32.mrf.mxu0
        %v6532 = vadd.f32 0.0, %v6531
        %v6533 = vpop.f32.mrf.mxu0
        %v6534 = vadd.f32 0.0, %v6533
        %6535 = vmatmul.bf16.gmra.mxu0 %v6263
        %v6536 = vpop.f32.mrf.mxu0
        %v6537 = vadd.f32 0.0, %v6536
        %v6538 = vpop.f32.mrf.mxu0
        %v6539 = vadd.f32 0.0, %v6538
        %6540 = vmatmul.bf16.gmra.mxu0 %v6271
        %v6541 = vpop.f32.mrf.mxu0
        %v6542 = vadd.f32 0.0, %v6541
        %v6543 = vpop.f32.mrf.mxu0
        %v6544 = vadd.f32 0.0, %v6543
        %6545 = vmatmul.bf16.gmra.mxu0 %v6279
        %v6546 = vpop.f32.mrf.mxu0
        %v6547 = vadd.f32 0.0, %v6546
        %v6548 = vpop.f32.mrf.mxu0
        %v6549 = vadd.f32 0.0, %v6548
        %6550 = vmatmul.bf16.gmra.mxu0 %v6287
        %v6551 = vpop.f32.mrf.mxu0
        %v6552 = vadd.f32 0.0, %v6551
        %v6553 = vpop.f32.mrf.mxu0
        %v6554 = vadd.f32 0.0, %v6553
        %6555 = vmatmul.bf16.gmra.mxu0 %v6295
        %v6556 = vpop.f32.mrf.mxu0
        %v6557 = vadd.f32 0.0, %v6556
        %v6558 = vpop.f32.mrf.mxu0
        %v6559 = vadd.f32 0.0, %v6558
        %6560 = vmatmul.bf16.gmra.mxu0 %v6308
        %v6561 = vpop.f32.mrf.mxu0
        %v6562 = vadd.f32 0.0, %v6561
        %v6563 = vpop.f32.mrf.mxu0
        %v6564 = vadd.f32 0.0, %v6563
        %6565 = vmatmul.bf16.gmra.mxu0 %v6307
        %v6566 = vpop.f32.mrf.mxu0
        %v6567 = vadd.f32 0.0, %v6566
        %v6568 = vpop.f32.mrf.mxu0
        %6569 = vdwg.mxu0
        %6570 = vmatpush.bf16.msra.mxu0 %v6468
        %6571 = vmatpush.bf16.msra.mxu0 %v6466
        %6572 = vmatpush.bf16.msra.mxu0 %v6464
        %6573 = vmatpush.bf16.msra.mxu0 %v6462
        %6574 = vmatpush.bf16.msra.mxu0 %v6460
        %6575 = vmatpush.bf16.msra.mxu0 %v6458
        %6576 = vmatpush.bf16.msra.mxu0 %v6456
        %6577 = vmatpush.bf16.msra.mxu0 %v6454
        %6578 = vmatmul.bf16.gmra.mxu0 %v6227
        %v6579 = vpop.f32.mrf.mxu0
        %v6580 = vadd.f32 %v6512, %v6579
        %v6581 = vpop.f32.mrf.mxu0
        %v6582 = vadd.f32 %v6514, %v6581
        %6583 = vmatmul.bf16.gmra.mxu0 %v6235
        %v6584 = vpop.f32.mrf.mxu0
        %v6585 = vadd.f32 %v6517, %v6584
        %v6586 = vpop.f32.mrf.mxu0
        %v6587 = vadd.f32 %v6519, %v6586
        %6588 = vmatmul.bf16.gmra.mxu0 %v6243
        %v6589 = vpop.f32.mrf.mxu0
        %v6590 = vadd.f32 %v6522, %v6589
        %v6591 = vpop.f32.mrf.mxu0
        %v6592 = vadd.f32 %v6524, %v6591
        %6593 = vmatmul.bf16.gmra.mxu0 %v6251
        %v6594 = vpop.f32.mrf.mxu0
        %v6595 = vadd.f32 %v6527, %v6594
        %v6596 = vpop.f32.mrf.mxu0
        %v6597 = vadd.f32 %v6529, %v6596
        %6598 = vmatmul.bf16.gmra.mxu0 %v6259
        %v6599 = vpop.f32.mrf.mxu0
        %v6600 = vadd.f32 %v6532, %v6599
        %v6601 = vpop.f32.mrf.mxu0
        %v6602 = vadd.f32 %v6534, %v6601
        %6603 = vmatmul.bf16.gmra.mxu0 %v6267
        %v6604 = vpop.f32.mrf.mxu0
        %v6605 = vadd.f32 %v6537, %v6604
        %v6606 = vpop.f32.mrf.mxu0
        %v6607 = vadd.f32 %v6539, %v6606
        %6608 = vmatmul.bf16.gmra.mxu0 %v6275
        %v6609 = vpop.f32.mrf.mxu0
        %v6610 = vadd.f32 %v6542, %v6609
        %v6611 = vpop.f32.mrf.mxu0
        %v6612 = vadd.f32 %v6544, %v6611
        %6613 = vmatmul.bf16.gmra.mxu0 %v6283
        %v6614 = vpop.f32.mrf.mxu0
        %v6615 = vadd.f32 %v6547, %v6614
        %v6616 = vpop.f32.mrf.mxu0
        %v6617 = vadd.f32 %v6549, %v6616
        %6618 = vmatmul.bf16.gmra.mxu0 %v6291
        %v6619 = vpop.f32.mrf.mxu0
        %v6620 = vadd.f32 %v6552, %v6619
        %v6621 = vpop.f32.mrf.mxu0
        %v6622 = vadd.f32 %v6554, %v6621
        %6623 = vmatmul.bf16.gmra.mxu0 %v6299
        %v6624 = vpop.f32.mrf.mxu0
        %v6625 = vadd.f32 %v6557, %v6624
        %v6626 = vpop.f32.mrf.mxu0
        %v6627 = vadd.f32 %v6559, %v6626
        %6628 = vmatmul.bf16.gmra.mxu0 %v6317
        %v6629 = vpop.f32.mrf.mxu0
        %v6630 = vadd.f32 %v6562, %v6629
        %v6631 = vpop.f32.mrf.mxu0
        %v6632 = vadd.f32 %v6564, %v6631
        %6633 = vmatmul.bf16.gmra.mxu0 %v6316
        %v6634 = vpop.f32.mrf.mxu0
        %v6635 = vadd.f32 %v6567, %v6634
        %v6636 = vpop.f32.mrf.mxu0
        %6637 = vdwg.mxu0
        %6638 = vmatpush.bf16.msra.mxu0 %v6453
        %6639 = vmatpush.bf16.msra.mxu0 %v6451
        %6640 = vmatpush.bf16.msra.mxu0 %v6449
        %6641 = vmatpush.bf16.msra.mxu0 %v6447
        %6642 = vmatpush.bf16.msra.mxu0 %v6445
        %6643 = vmatpush.bf16.msra.mxu0 %v6443
        %6644 = vmatpush.bf16.msra.mxu0 %v6441
        %6645 = vmatpush.bf16.msra.mxu0 %v6439
        %6646 = vmatmul.bf16.gmra.mxu0 %v6215
        %v6647 = vpop.f32.mrf.mxu0
        %v6648 = vadd.f32 0.0, %v6647
        %v6649 = vpop.f32.mrf.mxu0
        %v6650 = vadd.f32 0.0, %v6649
        %6651 = vmatmul.bf16.gmra.mxu0 %v6231
        %v6652 = vpop.f32.mrf.mxu0
        %v6653 = vadd.f32 0.0, %v6652
        %v6654 = vpop.f32.mrf.mxu0
        %v6655 = vadd.f32 0.0, %v6654
        %6656 = vmatmul.bf16.gmra.mxu0 %v6239
        %v6657 = vpop.f32.mrf.mxu0
        %v6658 = vadd.f32 0.0, %v6657
        %v6659 = vpop.f32.mrf.mxu0
        %v6660 = vadd.f32 0.0, %v6659
        %6661 = vmatmul.bf16.gmra.mxu0 %v6247
        %v6662 = vpop.f32.mrf.mxu0
        %v6663 = vadd.f32 0.0, %v6662
        %v6664 = vpop.f32.mrf.mxu0
        %v6665 = vadd.f32 0.0, %v6664
        %6666 = vmatmul.bf16.gmra.mxu0 %v6255
        %v6667 = vpop.f32.mrf.mxu0
        %v6668 = vadd.f32 0.0, %v6667
        %v6669 = vpop.f32.mrf.mxu0
        %v6670 = vadd.f32 0.0, %v6669
        %6671 = vmatmul.bf16.gmra.mxu0 %v6263
        %v6672 = vpop.f32.mrf.mxu0
        %v6673 = vadd.f32 0.0, %v6672
        %v6674 = vpop.f32.mrf.mxu0
        %v6675 = vadd.f32 0.0, %v6674
        %6676 = vmatmul.bf16.gmra.mxu0 %v6271
        %v6677 = vpop.f32.mrf.mxu0
        %v6678 = vadd.f32 0.0, %v6677
        %v6679 = vpop.f32.mrf.mxu0
        %v6680 = vadd.f32 0.0, %v6679
        %6681 = vmatmul.bf16.gmra.mxu0 %v6279
        %v6682 = vpop.f32.mrf.mxu0
        %v6683 = vadd.f32 0.0, %v6682
        %v6684 = vpop.f32.mrf.mxu0
        %v6685 = vadd.f32 0.0, %v6684
        %6686 = vmatmul.bf16.gmra.mxu0 %v6287
        %v6687 = vpop.f32.mrf.mxu0
        %v6688 = vadd.f32 0.0, %v6687
        %v6689 = vpop.f32.mrf.mxu0
        %v6690 = vadd.f32 0.0, %v6689
        %6691 = vmatmul.bf16.gmra.mxu0 %v6295
        %v6692 = vpop.f32.mrf.mxu0
        %v6693 = vadd.f32 0.0, %v6692
        %v6694 = vpop.f32.mrf.mxu0
        %v6695 = vadd.f32 0.0, %v6694
        %6696 = vmatmul.bf16.gmra.mxu0 %v6308
        %v6697 = vpop.f32.mrf.mxu0
        %v6698 = vadd.f32 0.0, %v6697
        %v6699 = vpop.f32.mrf.mxu0
        %v6700 = vadd.f32 0.0, %v6699
        %6701 = vmatmul.bf16.gmra.mxu0 %v6307
        %v6702 = vpop.f32.mrf.mxu0
        %v6703 = vadd.f32 0.0, %v6702
        %v6704 = vpop.f32.mrf.mxu0
        %6705 = vdwg.mxu0
        %6706 = vmatpush.bf16.msra.mxu0 %v6469
        %6707 = vmatpush.bf16.msra.mxu0 %v6467
        %6708 = vmatpush.bf16.msra.mxu0 %v6465
        %6709 = vmatpush.bf16.msra.mxu0 %v6463
        %6710 = vmatpush.bf16.msra.mxu0 %v6461
        %6711 = vmatpush.bf16.msra.mxu0 %v6459
        %6712 = vmatpush.bf16.msra.mxu0 %v6457
        %6713 = vmatpush.bf16.msra.mxu0 %v6455
        %6714 = vmatmul.bf16.gmra.mxu0 %v6227
        %v6715 = vpop.f32.mrf.mxu0
        %v6716 = vadd.f32 %v6648, %v6715
        %v6717 = vpop.f32.mrf.mxu0
        %v6718 = vadd.f32 %v6650, %v6717
        %6719 = vmatmul.bf16.gmra.mxu0 %v6235
        %v6720 = vpop.f32.mrf.mxu0
        %v6721 = vadd.f32 %v6653, %v6720
        %v6722 = vpop.f32.mrf.mxu0
        %v6723 = vadd.f32 %v6655, %v6722
        %6724 = vmatmul.bf16.gmra.mxu0 %v6243
        %v6725 = vpop.f32.mrf.mxu0
        %v6726 = vadd.f32 %v6658, %v6725
        %v6727 = vpop.f32.mrf.mxu0
        %v6728 = vadd.f32 %v6660, %v6727
        %6729 = vmatmul.bf16.gmra.mxu0 %v6251
        %v6730 = vpop.f32.mrf.mxu0
        %v6731 = vadd.f32 %v6663, %v6730
        %v6732 = vpop.f32.mrf.mxu0
        %v6733 = vadd.f32 %v6665, %v6732
        %6734 = vmatmul.bf16.gmra.mxu0 %v6259
        %v6735 = vpop.f32.mrf.mxu0
        %v6736 = vadd.f32 %v6668, %v6735
        %v6737 = vpop.f32.mrf.mxu0
        %v6738 = vadd.f32 %v6670, %v6737
        %6739 = vmatmul.bf16.gmra.mxu0 %v6267
        %v6740 = vpop.f32.mrf.mxu0
        %v6741 = vadd.f32 %v6673, %v6740
        %v6742 = vpop.f32.mrf.mxu0
        %v6743 = vadd.f32 %v6675, %v6742
        %6744 = vmatmul.bf16.gmra.mxu0 %v6275
        %v6745 = vpop.f32.mrf.mxu0
        %v6746 = vadd.f32 %v6678, %v6745
        %v6747 = vpop.f32.mrf.mxu0
        %v6748 = vadd.f32 %v6680, %v6747
        %6749 = vmatmul.bf16.gmra.mxu0 %v6283
        %v6750 = vpop.f32.mrf.mxu0
        %v6751 = vadd.f32 %v6683, %v6750
        %v6752 = vpop.f32.mrf.mxu0
        %v6753 = vadd.f32 %v6685, %v6752
        %6754 = vmatmul.bf16.gmra.mxu0 %v6291
        %v6755 = vpop.f32.mrf.mxu0
        %v6756 = vadd.f32 %v6688, %v6755
        %v6757 = vpop.f32.mrf.mxu0
        %v6758 = vadd.f32 %v6690, %v6757
        %6759 = vmatmul.bf16.gmra.mxu0 %v6299
        %v6760 = vpop.f32.mrf.mxu0
        %v6761 = vadd.f32 %v6693, %v6760
        %v6762 = vpop.f32.mrf.mxu0
        %v6763 = vadd.f32 %v6695, %v6762
        %6764 = vmatmul.bf16.gmra.mxu0 %v6317
        %v6765 = vpop.f32.mrf.mxu0
        %v6766 = vadd.f32 %v6698, %v6765
        %v6767 = vpop.f32.mrf.mxu0
        %v6768 = vadd.f32 %v6700, %v6767
        %6769 = vmatmul.bf16.gmra.mxu0 %v6316
        %v6770 = vpop.f32.mrf.mxu0
        %v6771 = vadd.f32 %v6703, %v6770
        %v6772 = vpop.f32.mrf.mxu0
        %6773 = vdwg.mxu0
        %v6774 = vadd.f32 %v6117, %v6580
        %v6775 = vadd.f32 %v6118, %v6716
        %v6776 = vadd.f32 %v6119, %v6582
        %v6777 = vadd.f32 %v6120, %v6718
        %v6778 = vadd.f32 %v6121, %v6585
        %v6779 = vadd.f32 %v6122, %v6721
        %v6780 = vadd.f32 %v6123, %v6587
        %v6781 = vadd.f32 %v6124, %v6723
        %v6782 = vadd.f32 %v6125, %v6590
        %v6783 = vadd.f32 %v6126, %v6726
        %v6784 = vadd.f32 %v6127, %v6592
        %v6785 = vadd.f32 %v6128, %v6728
        %v6786 = vadd.f32 %v6129, %v6595
        %v6787 = vadd.f32 %v6130, %v6731
        %v6788 = vadd.f32 %v6131, %v6597
        %v6789 = vadd.f32 %v6132, %v6733
        %v6790 = vadd.f32 %v6133, %v6600
        %v6791 = vadd.f32 %v6134, %v6736
        %v6792 = vadd.f32 %v6135, %v6602
        %v6793 = vadd.f32 %v6136, %v6738
        %v6794 = vadd.f32 %v6137, %v6605
        %v6795 = vadd.f32 %v6138, %v6741
        %v6796 = vadd.f32 %v6139, %v6607
        %v6797 = vadd.f32 %v6140, %v6743
        %v6798 = vadd.f32 %v6141, %v6610
        %v6799 = vadd.f32 %v6142, %v6746
        %v6800 = vadd.f32 %v6143, %v6612
        %v6801 = vadd.f32 %v6144, %v6748
        %v6802 = vadd.f32 %v6145, %v6615
        %v6803 = vadd.f32 %v6146, %v6751
        %v6804 = vadd.f32 %v6147, %v6617
        %v6805 = vadd.f32 %v6148, %v6753
        %v6806 = vadd.f32 %v6149, %v6620
        %v6807 = vadd.f32 %v6150, %v6756
        %v6808 = vadd.f32 %v6151, %v6622
        %v6809 = vadd.f32 %v6152, %v6758
        %v6810 = vadd.f32 %v6153, %v6625
        %v6811 = vadd.f32 %v6154, %v6761
        %v6812 = vadd.f32 %v6155, %v6627
        %v6813 = vadd.f32 %v6156, %v6763
        %v6814 = vadd.f32 %v6157, %v6630
        %v6815 = vadd.f32 %v6158, %v6766
        %v6816 = vadd.f32 %v6159, %v6632
        %v6817 = vadd.f32 %v6160, %v6768
        %v6818 = vadd.f32 %v6161, %v6635
        %v6819 = vadd.f32 %v6162, %v6771
        %v6820 = vld [vmem:[%s3 + $0x20] sm:$0xff]
        %v6821 = vld [vmem:[%s3 + $0x28] sm:$0xff]
        %v6822 = vld [vmem:[%s3 + $0x30] sm:$0xff]
        %v6823 = vld [vmem:[%s3 + $0x38] sm:$0xff]
        %v6824 = vld [vmem:[%s3 + $0x40] sm:$0xff]
        %v6825 = vld [vmem:[%s3 + $0x48] sm:$0xff]
        %v6826 = vld [vmem:[%s3 + $0x50] sm:$0xff]
        %v6827 = vld [vmem:[%s3 + $0x58] sm:$0xff]
        %v6828 = vld [vmem:[%s3 + $0x60] sm:$0xff]
        %v6829 = vld [vmem:[%s3 + $0x68] sm:$0xff]
        %v6830 = vld [vmem:[%s3 + $0x70] sm:$0xff]
        %v6831 = vld [vmem:[%s3 + $0x78] sm:$0xff]
        %v6832 = vld [vmem:[%s3 + $0x80] sm:$0xff]
        %v6833 = vld [vmem:[%s3 + $0x88] sm:$0xff]
        %v6834 = vld [vmem:[%s3 + $0x90] sm:$0xff]
        %v6835 = vld [vmem:[%s3 + $0x98] sm:$0xff]
        %v6836 = vld [vmem:[%s3 + $0xa0] sm:$0xff]
        %v6837 = vld [vmem:[%s3 + $0xa8] sm:$0xff]
        %v6838 = vld [vmem:[%s3 + $0xb0] sm:$0xff]
        %v6839 = vld [vmem:[%s3 + $0xb8] sm:$0xff]
        %v6840 = vld [vmem:[%s3 + $0xc0] sm:$0xff]
        %v6841 = vld [vmem:[%s3 + $0xc8] sm:$0xff]
        %v6842 = vld [vmem:[%s3 + $0xd0] sm:$0xff]
        %v6843 = vld [vmem:[%s3 + $0xd8] sm:$0xff]
        %v6844 = vld [vmem:[%s3 + $0xe0] sm:$0xff]
        %v6845 = vld [vmem:[%s3 + $0xe8] sm:$0xff]
        %v6846 = vld [vmem:[%s3 + $0xf0] sm:$0xff]
        %v6847 = vld [vmem:[%s3 + $0xf8] sm:$0xff]
        %v6848 = vld [vmem:[%s3 + $0x100] sm:$0xff]
        %v6849 = vld [vmem:[%s3 + $0x108] sm:$0xff]
        %v6850 = vld [vmem:[%s3 + $0x110] sm:$0xff]
        %v6851 = vld [vmem:[%s3 + $0x118] sm:$0xff]
        %v6852 = vld [vmem:[%s3 + $0x120] sm:$0xff]
        %v6853 = vld [vmem:[%s3 + $0x128] sm:$0xff]
        %v6854 = vld [vmem:[%s3 + $0x130] sm:$0xff]
        %v6855 = vld [vmem:[%s3 + $0x138] sm:$0xff]
        %v6856 = vld [vmem:[%s3 + $0x140] sm:$0xff]
        %v6857 = vld [vmem:[%s3 + $0x148] sm:$0xff]
        %v6858 = vld [vmem:[%s3 + $0x150] sm:$0xff]
        %v6859 = vld [vmem:[%s3 + $0x158] sm:$0xff]
        %v6860 = vld [vmem:[%s3 + $0x160] sm:$0xff]
        %v6861 = vld [vmem:[%s3 + $0x168] sm:$0xff]
        %v6862 = vld [vmem:[%s3 + $0x170] sm:$0xff]
        %v6863 = vld [vmem:[%s3 + $0x178] sm:$0xff]
        %v6864 = vld [vmem:[%s3 + $0x180] sm:$0xff]
        %v6865 = vld [vmem:[%s3 + $0x188] sm:$0xff]
        %v6866 = vmul.f32 %v6774, %v6820
        %v6867 = vmul.f32 %v6775, %v6821
        %v6868 = vmul.f32 %v6776, %v6822
        %v6869 = vmul.f32 %v6777, %v6823
        %v6870 = vmul.f32 %v6778, %v6824
        %v6871 = vmul.f32 %v6779, %v6825
        %v6872 = vmul.f32 %v6780, %v6826
        %v6873 = vmul.f32 %v6781, %v6827
        %v6874 = vmul.f32 %v6782, %v6828
        %v6875 = vmul.f32 %v6783, %v6829
        %v6876 = vmul.f32 %v6784, %v6830
        %v6877 = vmul.f32 %v6785, %v6831
        %v6878 = vmul.f32 %v6786, %v6832
        %v6879 = vmul.f32 %v6787, %v6833
        %v6880 = vmul.f32 %v6788, %v6834
        %v6881 = vmul.f32 %v6789, %v6835
        %v6882 = vmul.f32 %v6790, %v6836
        %v6883 = vmul.f32 %v6791, %v6837
        %v6884 = vmul.f32 %v6792, %v6838
        %v6885 = vmul.f32 %v6793, %v6839
        %v6886 = vmul.f32 %v6794, %v6840
        %v6887 = vmul.f32 %v6795, %v6841
        %v6888 = vmul.f32 %v6796, %v6842
        %v6889 = vmul.f32 %v6797, %v6843
        %v6890 = vmul.f32 %v6798, %v6844
        %v6891 = vmul.f32 %v6799, %v6845
        %v6892 = vmul.f32 %v6800, %v6846
        %v6893 = vmul.f32 %v6801, %v6847
        %v6894 = vmul.f32 %v6802, %v6848
        %v6895 = vmul.f32 %v6803, %v6849
        %v6896 = vmul.f32 %v6804, %v6850
        %v6897 = vmul.f32 %v6805, %v6851
        %v6898 = vmul.f32 %v6806, %v6852
        %v6899 = vmul.f32 %v6807, %v6853
        %v6900 = vmul.f32 %v6808, %v6854
        %v6901 = vmul.f32 %v6809, %v6855
        %v6902 = vmul.f32 %v6810, %v6856
        %v6903 = vmul.f32 %v6811, %v6857
        %v6904 = vmul.f32 %v6812, %v6858
        %v6905 = vmul.f32 %v6813, %v6859
        %v6906 = vmul.f32 %v6814, %v6860
        %v6907 = vmul.f32 %v6815, %v6861
        %v6908 = vmul.f32 %v6816, %v6862
        %v6909 = vmul.f32 %v6817, %v6863
        %v6910 = vmul.f32 %v6818, %v6864
        %v6911 = vmul.f32 %v6819, %v6865
        %v6912 = vadd.f32 %v6866, %v6868
        %v6913 = vadd.f32 %v6912, %v6870
        %v6914 = vadd.f32 %v6913, %v6872
        %v6915 = vadd.f32 %v6914, %v6874
        %v6916 = vadd.f32 %v6915, %v6876
        %v6917 = vadd.f32 %v6916, %v6878
        %v6918 = vadd.f32 %v6917, %v6880
        %v6919 = vadd.f32 %v6918, %v6882
        %v6920 = vadd.f32 %v6919, %v6884
        %v6921 = vadd.f32 %v6920, %v6886
        %v6922 = vadd.f32 %v6921, %v6888
        %v6923 = vadd.f32 %v6922, %v6890
        %v6924 = vadd.f32 %v6923, %v6892
        %v6925 = vadd.f32 %v6924, %v6894
        %v6926 = vadd.f32 %v6925, %v6896
        %v6927 = vadd.f32 %v6926, %v6898
        %v6928 = vadd.f32 %v6927, %v6900
        %v6929 = vadd.f32 %v6928, %v6902
        %v6930 = vadd.f32 %v6929, %v6904
        %v6931 = vadd.f32 %v6930, %v6906
        %v6932 = vadd.f32 %v6931, %v6908
        %v6933 = vadd.f32 %v6932, %v6910
        %v6934 = vrot.slane %v6933, 4
        %v6935 = vadd.f32 %v6933, %v6934
        %v6936 = vrot.slane %v6935, 2
        %v6937 = vadd.f32 %v6935, %v6936
        %v6938 = vrot.slane %v6937, 1
        %v6939 = vadd.f32 %v6937, %v6938
        %v6940 = vadd.f32 %v6867, %v6869
        %v6941 = vadd.f32 %v6940, %v6871
        %v6942 = vadd.f32 %v6941, %v6873
        %v6943 = vadd.f32 %v6942, %v6875
        %v6944 = vadd.f32 %v6943, %v6877
        %v6945 = vadd.f32 %v6944, %v6879
        %v6946 = vadd.f32 %v6945, %v6881
        %v6947 = vadd.f32 %v6946, %v6883
        %v6948 = vadd.f32 %v6947, %v6885
        %v6949 = vadd.f32 %v6948, %v6887
        %v6950 = vadd.f32 %v6949, %v6889
        %v6951 = vadd.f32 %v6950, %v6891
        %v6952 = vadd.f32 %v6951, %v6893
        %v6953 = vadd.f32 %v6952, %v6895
        %v6954 = vadd.f32 %v6953, %v6897
        %v6955 = vadd.f32 %v6954, %v6899
        %v6956 = vadd.f32 %v6955, %v6901
        %v6957 = vadd.f32 %v6956, %v6903
        %v6958 = vadd.f32 %v6957, %v6905
        %v6959 = vadd.f32 %v6958, %v6907
        %v6960 = vadd.f32 %v6959, %v6909
        %v6961 = vadd.f32 %v6960, %v6911
        %v6962 = vrot.slane %v6961, 4
        %v6963 = vadd.f32 %v6961, %v6962
        %v6964 = vrot.slane %v6963, 2
        %v6965 = vadd.f32 %v6963, %v6964
        %v6966 = vrot.slane %v6965, 1
        %v6967 = vadd.f32 %v6965, %v6966
        %v6968 = vmul.f32 %v6939, 0.0078125
        %v6969 = vmul.f32 %v6967, 0.0078125
        %v6970 = vmul.f32 %v6866, %v6774
        %v6971 = vmul.f32 %v6867, %v6775
        %v6972 = vmul.f32 %v6868, %v6776
        %v6973 = vmul.f32 %v6869, %v6777
        %v6974 = vmul.f32 %v6870, %v6778
        %v6975 = vmul.f32 %v6871, %v6779
        %v6976 = vmul.f32 %v6872, %v6780
        %v6977 = vmul.f32 %v6873, %v6781
        %v6978 = vmul.f32 %v6874, %v6782
        %v6979 = vmul.f32 %v6875, %v6783
        %v6980 = vmul.f32 %v6876, %v6784
        %v6981 = vmul.f32 %v6877, %v6785
        %v6982 = vmul.f32 %v6878, %v6786
        %v6983 = vmul.f32 %v6879, %v6787
        %v6984 = vmul.f32 %v6880, %v6788
        %v6985 = vmul.f32 %v6881, %v6789
        %v6986 = vmul.f32 %v6882, %v6790
        %v6987 = vmul.f32 %v6883, %v6791
        %v6988 = vmul.f32 %v6884, %v6792
        %v6989 = vmul.f32 %v6885, %v6793
        %v6990 = vmul.f32 %v6886, %v6794
        %v6991 = vmul.f32 %v6887, %v6795
        %v6992 = vmul.f32 %v6888, %v6796
        %v6993 = vmul.f32 %v6889, %v6797
        %v6994 = vmul.f32 %v6890, %v6798
        %v6995 = vmul.f32 %v6891, %v6799
        %v6996 = vmul.f32 %v6892, %v6800
        %v6997 = vmul.f32 %v6893, %v6801
        %v6998 = vmul.f32 %v6894, %v6802
        %v6999 = vmul.f32 %v6895, %v6803
        %v7000 = vmul.f32 %v6896, %v6804
        %v7001 = vmul.f32 %v6897, %v6805
        %v7002 = vmul.f32 %v6898, %v6806
        %v7003 = vmul.f32 %v6899, %v6807
        %v7004 = vmul.f32 %v6900, %v6808
        %v7005 = vmul.f32 %v6901, %v6809
        %v7006 = vmul.f32 %v6902, %v6810
        %v7007 = vmul.f32 %v6903, %v6811
        %v7008 = vmul.f32 %v6904, %v6812
        %v7009 = vmul.f32 %v6905, %v6813
        %v7010 = vmul.f32 %v6906, %v6814
        %v7011 = vmul.f32 %v6907, %v6815
        %v7012 = vmul.f32 %v6908, %v6816
        %v7013 = vmul.f32 %v6909, %v6817
        %v7014 = vmul.f32 %v6910, %v6818
        %v7015 = vmul.f32 %v6911, %v6819
        %v7016 = vadd.f32 %v6970, %v6972
        %v7017 = vadd.f32 %v7016, %v6974
        %v7018 = vadd.f32 %v7017, %v6976
        %v7019 = vadd.f32 %v7018, %v6978
        %v7020 = vadd.f32 %v7019, %v6980
        %v7021 = vadd.f32 %v7020, %v6982
        %v7022 = vadd.f32 %v7021, %v6984
        %v7023 = vadd.f32 %v7022, %v6986
        %v7024 = vadd.f32 %v7023, %v6988
        %v7025 = vadd.f32 %v7024, %v6990
        %v7026 = vadd.f32 %v7025, %v6992
        %v7027 = vadd.f32 %v7026, %v6994
        %v7028 = vadd.f32 %v7027, %v6996
        %v7029 = vadd.f32 %v7028, %v6998
        %v7030 = vadd.f32 %v7029, %v7000
        %v7031 = vadd.f32 %v7030, %v7002
        %v7032 = vadd.f32 %v7031, %v7004
        %v7033 = vadd.f32 %v7032, %v7006
        %v7034 = vadd.f32 %v7033, %v7008
        %v7035 = vadd.f32 %v7034, %v7010
        %v7036 = vadd.f32 %v7035, %v7012
        %v7037 = vadd.f32 %v7036, %v7014
        %v7038 = vrot.slane %v7037, 4
        %v7039 = vadd.f32 %v7037, %v7038
        %v7040 = vrot.slane %v7039, 2
        %v7041 = vadd.f32 %v7039, %v7040
        %v7042 = vrot.slane %v7041, 1
        %v7043 = vadd.f32 %v7041, %v7042
        %v7044 = vadd.f32 %v6971, %v6973
        %v7045 = vadd.f32 %v7044, %v6975
        %v7046 = vadd.f32 %v7045, %v6977
        %v7047 = vadd.f32 %v7046, %v6979
        %v7048 = vadd.f32 %v7047, %v6981
        %v7049 = vadd.f32 %v7048, %v6983
        %v7050 = vadd.f32 %v7049, %v6985
        %v7051 = vadd.f32 %v7050, %v6987
        %v7052 = vadd.f32 %v7051, %v6989
        %v7053 = vadd.f32 %v7052, %v6991
        %v7054 = vadd.f32 %v7053, %v6993
        %v7055 = vadd.f32 %v7054, %v6995
        %v7056 = vadd.f32 %v7055, %v6997
        %v7057 = vadd.f32 %v7056, %v6999
        %v7058 = vadd.f32 %v7057, %v7001
        %v7059 = vadd.f32 %v7058, %v7003
        %v7060 = vadd.f32 %v7059, %v7005
        %v7061 = vadd.f32 %v7060, %v7007
        %v7062 = vadd.f32 %v7061, %v7009
        %v7063 = vadd.f32 %v7062, %v7011
        %v7064 = vadd.f32 %v7063, %v7013
        %v7065 = vadd.f32 %v7064, %v7015
        %v7066 = vrot.slane %v7065, 4
        %v7067 = vadd.f32 %v7065, %v7066
        %v7068 = vrot.slane %v7067, 2
        %v7069 = vadd.f32 %v7067, %v7068
        %v7070 = vrot.slane %v7069, 1
        %v7071 = vadd.f32 %v7069, %v7070
        %v7072 = vmul.f32 %v7043, 0.0078125
        %v7073 = vmul.f32 %v7071, 0.0078125
        %v7074 = vmul.f32 %v6968, %v6968
        %v7075 = vmul.f32 %v6969, %v6969
        %v7076 = vsub.f32 %v7072, %v7074
        %v7077 = vsub.f32 %v7073, %v7075
        %v7078 = vmax.f32 %v7076, 0.0
        %v7079 = vmax.f32 %v7077, 0.0
        %v7080 = vsub.f32 %v6774, %v6968
        %v7081 = vsub.f32 %v6775, %v6969
        %v7082 = vsub.f32 %v6776, %v6968
        %v7083 = vsub.f32 %v6777, %v6969
        %v7084 = vsub.f32 %v6778, %v6968
        %v7085 = vsub.f32 %v6779, %v6969
        %v7086 = vsub.f32 %v6780, %v6968
        %v7087 = vsub.f32 %v6781, %v6969
        %v7088 = vsub.f32 %v6782, %v6968
        %v7089 = vsub.f32 %v6783, %v6969
        %v7090 = vsub.f32 %v6784, %v6968
        %v7091 = vsub.f32 %v6785, %v6969
        %v7092 = vsub.f32 %v6786, %v6968
        %v7093 = vsub.f32 %v6787, %v6969
        %v7094 = vsub.f32 %v6788, %v6968
        %v7095 = vsub.f32 %v6789, %v6969
        %v7096 = vsub.f32 %v6790, %v6968
        %v7097 = vsub.f32 %v6791, %v6969
        %v7098 = vsub.f32 %v6792, %v6968
        %v7099 = vsub.f32 %v6793, %v6969
        %v7100 = vsub.f32 %v6794, %v6968
        %v7101 = vsub.f32 %v6795, %v6969
        %v7102 = vsub.f32 %v6796, %v6968
        %v7103 = vsub.f32 %v6797, %v6969
        %v7104 = vsub.f32 %v6798, %v6968
        %v7105 = vsub.f32 %v6799, %v6969
        %v7106 = vsub.f32 %v6800, %v6968
        %v7107 = vsub.f32 %v6801, %v6969
        %v7108 = vsub.f32 %v6802, %v6968
        %v7109 = vsub.f32 %v6803, %v6969
        %v7110 = vsub.f32 %v6804, %v6968
        %v7111 = vsub.f32 %v6805, %v6969
        %v7112 = vsub.f32 %v6806, %v6968
        %v7113 = vsub.f32 %v6807, %v6969
        %v7114 = vsub.f32 %v6808, %v6968
        %v7115 = vsub.f32 %v6809, %v6969
        %v7116 = vsub.f32 %v6810, %v6968
        %v7117 = vsub.f32 %v6811, %v6969
        %v7118 = vsub.f32 %v6812, %v6968
        %v7119 = vsub.f32 %v6813, %v6969
        %v7120 = vsub.f32 %v6814, %v6968
        %v7121 = vsub.f32 %v6815, %v6969
        %v7122 = vsub.f32 %v6816, %v6968
        %v7123 = vsub.f32 %v6817, %v6969
        %v7124 = vsub.f32 %v6818, %v6968
        %v7125 = vsub.f32 %v6819, %v6969
        %v7126 = vadd.f32 %v7078, 1e-05
        %v7127 = vadd.f32 %v7079, 1e-05
        %v7128 = vrsqrt.pop %v7126
        %v7129 = vmul.f32 %v7128, %v7126
        %v7130 = vmul.f32 %v7129, %v7128
        %v7131 = vmul.f32 0.5, %v7130
        %v7132 = vsub.f32 1.5, %v7131
        %v7133 = vmul.f32 %v7128, %v7132
        %vm7134 = vweird.f32 %v7126
        %vm7135 = vweird.f32 %v7128
        %vm7136 = vmor %vm7134, %vm7135
        %v7137 = vsel %vm7136, %v7128, %v7133
        %v7138 = vrsqrt.pop %v7127
        %v7139 = vmul.f32 %v7138, %v7127
        %v7140 = vmul.f32 %v7139, %v7138
        %v7141 = vmul.f32 0.5, %v7140
        %v7142 = vsub.f32 1.5, %v7141
        %v7143 = vmul.f32 %v7138, %v7142
        %vm7144 = vweird.f32 %v7127
        %vm7145 = vweird.f32 %v7138
        %vm7146 = vmor %vm7144, %vm7145
        %v7147 = vsel %vm7146, %v7138, %v7143
        %v7148 = vmul.f32 %v7080, %v7137
        %v7149 = vmul.f32 %v7081, %v7147
        %v7150 = vmul.f32 %v7082, %v7137
        %v7151 = vmul.f32 %v7083, %v7147
        %v7152 = vmul.f32 %v7084, %v7137
        %v7153 = vmul.f32 %v7085, %v7147
        %v7154 = vmul.f32 %v7086, %v7137
        %v7155 = vmul.f32 %v7087, %v7147
        %v7156 = vmul.f32 %v7088, %v7137
        %v7157 = vmul.f32 %v7089, %v7147
        %v7158 = vmul.f32 %v7090, %v7137
        %v7159 = vmul.f32 %v7091, %v7147
        %v7160 = vmul.f32 %v7092, %v7137
        %v7161 = vmul.f32 %v7093, %v7147
        %v7162 = vmul.f32 %v7094, %v7137
        %v7163 = vmul.f32 %v7095, %v7147
        %v7164 = vmul.f32 %v7096, %v7137
        %v7165 = vmul.f32 %v7097, %v7147
        %v7166 = vmul.f32 %v7098, %v7137
        %v7167 = vmul.f32 %v7099, %v7147
        %v7168 = vmul.f32 %v7100, %v7137
        %v7169 = vmul.f32 %v7101, %v7147
        %v7170 = vmul.f32 %v7102, %v7137
        %v7171 = vmul.f32 %v7103, %v7147
        %v7172 = vmul.f32 %v7104, %v7137
        %v7173 = vmul.f32 %v7105, %v7147
        %v7174 = vmul.f32 %v7106, %v7137
        %v7175 = vmul.f32 %v7107, %v7147
        %v7176 = vmul.f32 %v7108, %v7137
        %v7177 = vmul.f32 %v7109, %v7147
        %v7178 = vmul.f32 %v7110, %v7137
        %v7179 = vmul.f32 %v7111, %v7147
        %v7180 = vmul.f32 %v7112, %v7137
        %v7181 = vmul.f32 %v7113, %v7147
        %v7182 = vmul.f32 %v7114, %v7137
        %v7183 = vmul.f32 %v7115, %v7147
        %v7184 = vmul.f32 %v7116, %v7137
        %v7185 = vmul.f32 %v7117, %v7147
        %v7186 = vmul.f32 %v7118, %v7137
        %v7187 = vmul.f32 %v7119, %v7147
        %v7188 = vmul.f32 %v7120, %v7137
        %v7189 = vmul.f32 %v7121, %v7147
        %v7190 = vmul.f32 %v7122, %v7137
        %v7191 = vmul.f32 %v7123, %v7147
        %v7192 = vmul.f32 %v7124, %v7137
        %v7193 = vmul.f32 %v7125, %v7147
        %v7194 = vld [vmem:[%s290] ss:$2 sm:$0x3]
        %v7196 = vperm.slane %v7194, 0
        %v7197 = vperm.slane %v7194, 1
        %v7200 = vmul.f32 %v7148, %v7196
        %v7201 = vmul.f32 %v7149, %v7197
        %v7202 = vmul.f32 %v7150, %v7196
        %v7203 = vmul.f32 %v7151, %v7197
        %v7204 = vmul.f32 %v7152, %v7196
        %v7205 = vmul.f32 %v7153, %v7197
        %v7206 = vmul.f32 %v7154, %v7196
        %v7207 = vmul.f32 %v7155, %v7197
        %v7208 = vmul.f32 %v7156, %v7196
        %v7209 = vmul.f32 %v7157, %v7197
        %v7210 = vmul.f32 %v7158, %v7196
        %v7211 = vmul.f32 %v7159, %v7197
        %v7212 = vmul.f32 %v7160, %v7196
        %v7213 = vmul.f32 %v7161, %v7197
        %v7214 = vmul.f32 %v7162, %v7196
        %v7215 = vmul.f32 %v7163, %v7197
        %v7216 = vmul.f32 %v7164, %v7196
        %v7217 = vmul.f32 %v7165, %v7197
        %v7218 = vmul.f32 %v7166, %v7196
        %v7219 = vmul.f32 %v7167, %v7197
        %v7220 = vmul.f32 %v7168, %v7196
        %v7221 = vmul.f32 %v7169, %v7197
        %v7222 = vmul.f32 %v7170, %v7196
        %v7223 = vmul.f32 %v7171, %v7197
        %v7224 = vmul.f32 %v7172, %v7196
        %v7225 = vmul.f32 %v7173, %v7197
        %v7226 = vmul.f32 %v7174, %v7196
        %v7227 = vmul.f32 %v7175, %v7197
        %v7228 = vmul.f32 %v7176, %v7196
        %v7229 = vmul.f32 %v7177, %v7197
        %v7230 = vmul.f32 %v7178, %v7196
        %v7231 = vmul.f32 %v7179, %v7197
        %v7232 = vmul.f32 %v7180, %v7196
        %v7233 = vmul.f32 %v7181, %v7197
        %v7234 = vmul.f32 %v7182, %v7196
        %v7235 = vmul.f32 %v7183, %v7197
        %v7236 = vmul.f32 %v7184, %v7196
        %v7237 = vmul.f32 %v7185, %v7197
        %v7238 = vmul.f32 %v7186, %v7196
        %v7239 = vmul.f32 %v7187, %v7197
        %v7240 = vmul.f32 %v7188, %v7196
        %v7241 = vmul.f32 %v7189, %v7197
        %v7242 = vmul.f32 %v7190, %v7196
        %v7243 = vmul.f32 %v7191, %v7197
        %v7244 = vmul.f32 %v7192, %v7196
        %v7245 = vmul.f32 %v7193, %v7197
        %s7246 = scalar_lea.vmem %s290, 1 [#allocation6]
        %v7247 = vld [vmem:[%s7246] ss:$2 sm:$0x3]
        %v7249 = vperm.slane %v7247, 0
        %v7250 = vperm.slane %v7247, 1
        %v7253 = vadd.f32 %v7200, %v7249
        %v7254 = vadd.f32 %v7201, %v7250
        %v7255 = vadd.f32 %v7202, %v7249
        %v7256 = vadd.f32 %v7203, %v7250
        %v7257 = vadd.f32 %v7204, %v7249
        %v7258 = vadd.f32 %v7205, %v7250
        %v7259 = vadd.f32 %v7206, %v7249
        %v7260 = vadd.f32 %v7207, %v7250
        %v7261 = vadd.f32 %v7208, %v7249
        %v7262 = vadd.f32 %v7209, %v7250
        %v7263 = vadd.f32 %v7210, %v7249
        %v7264 = vadd.f32 %v7211, %v7250
        %v7265 = vadd.f32 %v7212, %v7249
        %v7266 = vadd.f32 %v7213, %v7250
        %v7267 = vadd.f32 %v7214, %v7249
        %v7268 = vadd.f32 %v7215, %v7250
        %v7269 = vadd.f32 %v7216, %v7249
        %v7270 = vadd.f32 %v7217, %v7250
        %v7271 = vadd.f32 %v7218, %v7249
        %v7272 = vadd.f32 %v7219, %v7250
        %v7273 = vadd.f32 %v7220, %v7249
        %v7274 = vadd.f32 %v7221, %v7250
        %v7275 = vadd.f32 %v7222, %v7249
        %v7276 = vadd.f32 %v7223, %v7250
        %v7277 = vadd.f32 %v7224, %v7249
        %v7278 = vadd.f32 %v7225, %v7250
        %v7279 = vadd.f32 %v7226, %v7249
        %v7280 = vadd.f32 %v7227, %v7250
        %v7281 = vadd.f32 %v7228, %v7249
        %v7282 = vadd.f32 %v7229, %v7250
        %v7283 = vadd.f32 %v7230, %v7249
        %v7284 = vadd.f32 %v7231, %v7250
        %v7285 = vadd.f32 %v7232, %v7249
        %v7286 = vadd.f32 %v7233, %v7250
        %v7287 = vadd.f32 %v7234, %v7249
        %v7288 = vadd.f32 %v7235, %v7250
        %v7289 = vadd.f32 %v7236, %v7249
        %v7290 = vadd.f32 %v7237, %v7250
        %v7291 = vadd.f32 %v7238, %v7249
        %v7292 = vadd.f32 %v7239, %v7250
        %v7293 = vadd.f32 %v7240, %v7249
        %v7294 = vadd.f32 %v7241, %v7250
        %v7295 = vadd.f32 %v7242, %v7249
        %v7296 = vadd.f32 %v7243, %v7250
        %v7297 = vadd.f32 %v7244, %v7249
        %v7298 = vadd.f32 %v7245, %v7250
        %s7299 = scalar_select %p507, 1, 0
        %s7300 = scvt.s32.f32 %s7299
        %v7301 = vld [vmem:[#allocation3] sm:$0xff]
        %v7302 = vld [vmem:[#allocation3 + $0x8] sm:$0xff]
        %v7303 = vld [vmem:[#allocation3 + $0x10] sm:$0xff]
        %v7304 = vld [vmem:[#allocation3 + $0x18] sm:$0xff]
        %v7305 = vld [vmem:[#allocation3 + $0x20] sm:$0xff]
        %v7306 = vld [vmem:[#allocation3 + $0x28] sm:$0xff]
        %v7307 = vld [vmem:[#allocation3 + $0x30] sm:$0xff]
        %v7308 = vld [vmem:[#allocation3 + $0x38] sm:$0xff]
        %v7309 = vld [vmem:[#allocation3 + $0x40] sm:$0xff]
        %v7310 = vld [vmem:[#allocation3 + $0x48] sm:$0xff]
        %v7311 = vld [vmem:[#allocation3 + $0x50] sm:$0xff]
        %v7312 = vld [vmem:[#allocation3 + $0x58] sm:$0xff]
        %v7313 = vld [vmem:[#allocation3 + $0x60] sm:$0xff]
        %v7314 = vld [vmem:[#allocation3 + $0x68] sm:$0xff]
        %v7315 = vld [vmem:[#allocation3 + $0x70] sm:$0xff]
        %v7316 = vld [vmem:[#allocation3 + $0x78] sm:$0xff]
        %v7317 = vld [vmem:[#allocation3 + $0x80] sm:$0xff]
        %v7318 = vld [vmem:[#allocation3 + $0x88] sm:$0xff]
        %v7319 = vld [vmem:[#allocation3 + $0x90] sm:$0xff]
        %v7320 = vld [vmem:[#allocation3 + $0x98] sm:$0xff]
        %v7321 = vld [vmem:[#allocation3 + $0xa0] sm:$0xff]
        %v7322 = vld [vmem:[#allocation3 + $0xa8] sm:$0xff]
        %v7323 = vld [vmem:[#allocation3 + $0xb0] sm:$0xff]
        %v7324 = vld [vmem:[#allocation3 + $0xb8] sm:$0xff]
        %v7325 = vld [vmem:[#allocation3 + $0xc0] sm:$0xff]
        %v7326 = vld [vmem:[#allocation3 + $0xc8] sm:$0xff]
        %v7327 = vld [vmem:[#allocation3 + $0xd0] sm:$0xff]
        %v7328 = vld [vmem:[#allocation3 + $0xd8] sm:$0xff]
        %v7329 = vld [vmem:[#allocation3 + $0xe0] sm:$0xff]
        %v7330 = vld [vmem:[#allocation3 + $0xe8] sm:$0xff]
        %v7331 = vld [vmem:[#allocation3 + $0xf0] sm:$0xff]
        %v7332 = vld [vmem:[#allocation3 + $0xf8] sm:$0xff]
        %v7333 = vld [vmem:[#allocation3 + $0x100] sm:$0xff]
        %v7334 = vld [vmem:[#allocation3 + $0x108] sm:$0xff]
        %v7335 = vld [vmem:[#allocation3 + $0x110] sm:$0xff]
        %v7336 = vld [vmem:[#allocation3 + $0x118] sm:$0xff]
        %v7337 = vld [vmem:[#allocation3 + $0x120] sm:$0xff]
        %v7338 = vld [vmem:[#allocation3 + $0x128] sm:$0xff]
        %v7339 = vld [vmem:[#allocation3 + $0x130] sm:$0xff]
        %v7340 = vld [vmem:[#allocation3 + $0x138] sm:$0xff]
        %v7341 = vld [vmem:[#allocation3 + $0x140] sm:$0xff]
        %v7342 = vld [vmem:[#allocation3 + $0x148] sm:$0xff]
        %v7343 = vld [vmem:[#allocation3 + $0x150] sm:$0xff]
        %v7344 = vld [vmem:[#allocation3 + $0x158] sm:$0xff]
        %v7345 = vld [vmem:[#allocation3 + $0x160] sm:$0xff]
        %v7346 = vld [vmem:[#allocation3 + $0x168] sm:$0xff]
        %v7347 = vstv %s7300
        %v7348 = vmul.f32 %v7347, %v7301
        %v7349 = vmul.f32 %v7347, %v7302
        %v7350 = vmul.f32 %v7347, %v7303
        %v7351 = vmul.f32 %v7347, %v7304
        %v7352 = vmul.f32 %v7347, %v7305
        %v7353 = vmul.f32 %v7347, %v7306
        %v7354 = vmul.f32 %v7347, %v7307
        %v7355 = vmul.f32 %v7347, %v7308
        %v7356 = vmul.f32 %v7347, %v7309
        %v7357 = vmul.f32 %v7347, %v7310
        %v7358 = vmul.f32 %v7347, %v7311
        %v7359 = vmul.f32 %v7347, %v7312
        %v7360 = vmul.f32 %v7347, %v7313
        %v7361 = vmul.f32 %v7347, %v7314
        %v7362 = vmul.f32 %v7347, %v7315
        %v7363 = vmul.f32 %v7347, %v7316
        %v7364 = vmul.f32 %v7347, %v7317
        %v7365 = vmul.f32 %v7347, %v7318
        %v7366 = vmul.f32 %v7347, %v7319
        %v7367 = vmul.f32 %v7347, %v7320
        %v7368 = vmul.f32 %v7347, %v7321
        %v7369 = vmul.f32 %v7347, %v7322
        %v7370 = vmul.f32 %v7347, %v7323
        %v7371 = vmul.f32 %v7347, %v7324
        %v7372 = vmul.f32 %v7347, %v7325
        %v7373 = vmul.f32 %v7347, %v7326
        %v7374 = vmul.f32 %v7347, %v7327
        %v7375 = vmul.f32 %v7347, %v7328
        %v7376 = vmul.f32 %v7347, %v7329
        %v7377 = vmul.f32 %v7347, %v7330
        %v7378 = vmul.f32 %v7347, %v7331
        %v7379 = vmul.f32 %v7347, %v7332
        %v7380 = vmul.f32 %v7347, %v7333
        %v7381 = vmul.f32 %v7347, %v7334
        %v7382 = vmul.f32 %v7347, %v7335
        %v7383 = vmul.f32 %v7347, %v7336
        %v7384 = vmul.f32 %v7347, %v7337
        %v7385 = vmul.f32 %v7347, %v7338
        %v7386 = vmul.f32 %v7347, %v7339
        %v7387 = vmul.f32 %v7347, %v7340
        %v7388 = vmul.f32 %v7347, %v7341
        %v7389 = vmul.f32 %v7347, %v7342
        %v7390 = vmul.f32 %v7347, %v7343
        %v7391 = vmul.f32 %v7347, %v7344
        %v7392 = vmul.f32 %v7347, %v7345
        %v7393 = vmul.f32 %v7347, %v7346
        %v7394 = vadd.f32 %v7253, %v7348
        %v7395 = vadd.f32 %v7254, %v7349
        %v7396 = vadd.f32 %v7255, %v7350
        %v7397 = vadd.f32 %v7256, %v7351
        %v7398 = vadd.f32 %v7257, %v7352
        %v7399 = vadd.f32 %v7258, %v7353
        %v7400 = vadd.f32 %v7259, %v7354
        %v7401 = vadd.f32 %v7260, %v7355
        %v7402 = vadd.f32 %v7261, %v7356
        %v7403 = vadd.f32 %v7262, %v7357
        %v7404 = vadd.f32 %v7263, %v7358
        %v7405 = vadd.f32 %v7264, %v7359
        %v7406 = vadd.f32 %v7265, %v7360
        %v7407 = vadd.f32 %v7266, %v7361
        %v7408 = vadd.f32 %v7267, %v7362
        %v7409 = vadd.f32 %v7268, %v7363
        %v7410 = vadd.f32 %v7269, %v7364
        %v7411 = vadd.f32 %v7270, %v7365
        %v7412 = vadd.f32 %v7271, %v7366
        %v7413 = vadd.f32 %v7272, %v7367
        %v7414 = vadd.f32 %v7273, %v7368
        %v7415 = vadd.f32 %v7274, %v7369
        %v7416 = vadd.f32 %v7275, %v7370
        %v7417 = vadd.f32 %v7276, %v7371
        %v7418 = vadd.f32 %v7277, %v7372
        %v7419 = vadd.f32 %v7278, %v7373
        %v7420 = vadd.f32 %v7279, %v7374
        %v7421 = vadd.f32 %v7280, %v7375
        %v7422 = vadd.f32 %v7281, %v7376
        %v7423 = vadd.f32 %v7282, %v7377
        %v7424 = vadd.f32 %v7283, %v7378
        %v7425 = vadd.f32 %v7284, %v7379
        %v7426 = vadd.f32 %v7285, %v7380
        %v7427 = vadd.f32 %v7286, %v7381
        %v7428 = vadd.f32 %v7287, %v7382
        %v7429 = vadd.f32 %v7288, %v7383
        %v7430 = vadd.f32 %v7289, %v7384
        %v7431 = vadd.f32 %v7290, %v7385
        %v7432 = vadd.f32 %v7291, %v7386
        %v7433 = vadd.f32 %v7292, %v7387
        %v7434 = vadd.f32 %v7293, %v7388
        %v7435 = vadd.f32 %v7294, %v7389
        %v7436 = vadd.f32 %v7295, %v7390
        %v7437 = vadd.f32 %v7296, %v7391
        %v7438 = vadd.f32 %v7297, %v7392
        %v7439 = vadd.f32 %v7298, %v7393
        %v7440 = vmax.f32 %v7394, 0.0
        %v7441 = vmax.f32 %v7395, 0.0
        %v7442 = vmax.f32 %v7396, 0.0
        %v7443 = vmax.f32 %v7397, 0.0
        %v7444 = vmax.f32 %v7398, 0.0
        %v7445 = vmax.f32 %v7399, 0.0
        %v7446 = vmax.f32 %v7400, 0.0
        %v7447 = vmax.f32 %v7401, 0.0
        %v7448 = vmax.f32 %v7402, 0.0
        %v7449 = vmax.f32 %v7403, 0.0
        %v7450 = vmax.f32 %v7404, 0.0
        %v7451 = vmax.f32 %v7405, 0.0
        %v7452 = vmax.f32 %v7406, 0.0
        %v7453 = vmax.f32 %v7407, 0.0
        %v7454 = vmax.f32 %v7408, 0.0
        %v7455 = vmax.f32 %v7409, 0.0
        %v7456 = vmax.f32 %v7410, 0.0
        %v7457 = vmax.f32 %v7411, 0.0
        %v7458 = vmax.f32 %v7412, 0.0
        %v7459 = vmax.f32 %v7413, 0.0
        %v7460 = vmax.f32 %v7414, 0.0
        %v7461 = vmax.f32 %v7415, 0.0
        %v7462 = vmax.f32 %v7416, 0.0
        %v7463 = vmax.f32 %v7417, 0.0
        %v7464 = vmax.f32 %v7418, 0.0
        %v7465 = vmax.f32 %v7419, 0.0
        %v7466 = vmax.f32 %v7420, 0.0
        %v7467 = vmax.f32 %v7421, 0.0
        %v7468 = vmax.f32 %v7422, 0.0
        %v7469 = vmax.f32 %v7423, 0.0
        %v7470 = vmax.f32 %v7424, 0.0
        %v7471 = vmax.f32 %v7425, 0.0
        %v7472 = vmax.f32 %v7426, 0.0
        %v7473 = vmax.f32 %v7427, 0.0
        %v7474 = vmax.f32 %v7428, 0.0
        %v7475 = vmax.f32 %v7429, 0.0
        %v7476 = vmax.f32 %v7430, 0.0
        %v7477 = vmax.f32 %v7431, 0.0
        %v7478 = vmax.f32 %v7432, 0.0
        %v7479 = vmax.f32 %v7433, 0.0
        %v7480 = vmax.f32 %v7434, 0.0
        %v7481 = vmax.f32 %v7435, 0.0
        %v7482 = vmax.f32 %v7436, 0.0
        %v7483 = vmax.f32 %v7437, 0.0
        %v7484 = vmax.f32 %v7438, 0.0
        %v7485 = vmax.f32 %v7439, 0.0
        %v7486 = vmul.f32 %v7440, %v6820
        %v7487 = vmul.f32 %v7441, %v6821
        %v7488 = vmul.f32 %v7442, %v6822
        %v7489 = vmul.f32 %v7443, %v6823
        %v7490 = vmul.f32 %v7444, %v6824
        %v7491 = vmul.f32 %v7445, %v6825
        %v7492 = vmul.f32 %v7446, %v6826
        %v7493 = vmul.f32 %v7447, %v6827
        %v7494 = vmul.f32 %v7448, %v6828
        %v7495 = vmul.f32 %v7449, %v6829
        %v7496 = vmul.f32 %v7450, %v6830
        %v7497 = vmul.f32 %v7451, %v6831
        %v7498 = vmul.f32 %v7452, %v6832
        %v7499 = vmul.f32 %v7453, %v6833
        %v7500 = vmul.f32 %v7454, %v6834
        %v7501 = vmul.f32 %v7455, %v6835
        %v7502 = vmul.f32 %v7456, %v6836
        %v7503 = vmul.f32 %v7457, %v6837
        %v7504 = vmul.f32 %v7458, %v6838
        %v7505 = vmul.f32 %v7459, %v6839
        %v7506 = vmul.f32 %v7460, %v6840
        %v7507 = vmul.f32 %v7461, %v6841
        %v7508 = vmul.f32 %v7462, %v6842
        %v7509 = vmul.f32 %v7463, %v6843
        %v7510 = vmul.f32 %v7464, %v6844
        %v7511 = vmul.f32 %v7465, %v6845
        %v7512 = vmul.f32 %v7466, %v6846
        %v7513 = vmul.f32 %v7467, %v6847
        %v7514 = vmul.f32 %v7468, %v6848
        %v7515 = vmul.f32 %v7469, %v6849
        %v7516 = vmul.f32 %v7470, %v6850
        %v7517 = vmul.f32 %v7471, %v6851
        %v7518 = vmul.f32 %v7472, %v6852
        %v7519 = vmul.f32 %v7473, %v6853
        %v7520 = vmul.f32 %v7474, %v6854
        %v7521 = vmul.f32 %v7475, %v6855
        %v7522 = vmul.f32 %v7476, %v6856
        %v7523 = vmul.f32 %v7477, %v6857
        %v7524 = vmul.f32 %v7478, %v6858
        %v7525 = vmul.f32 %v7479, %v6859
        %v7526 = vmul.f32 %v7480, %v6860
        %v7527 = vmul.f32 %v7481, %v6861
        %v7528 = vmul.f32 %v7482, %v6862
        %v7529 = vmul.f32 %v7483, %v6863
        %v7530 = vmul.f32 %v7484, %v6864
        %v7531 = vmul.f32 %v7485, %v6865
        %7532 = vst [vmem:[#allocation2 + $0x20] sm:$0xff] %v7486
        %7533 = vst [vmem:[#allocation2 + $0x28] sm:$0xff] %v7487
        %7534 = vst [vmem:[#allocation2 + $0x30] sm:$0xff] %v7488
        %7535 = vst [vmem:[#allocation2 + $0x38] sm:$0xff] %v7489
        %7536 = vst [vmem:[#allocation2 + $0x40] sm:$0xff] %v7490
        %7537 = vst [vmem:[#allocation2 + $0x48] sm:$0xff] %v7491
        %7538 = vst [vmem:[#allocation2 + $0x50] sm:$0xff] %v7492
        %7539 = vst [vmem:[#allocation2 + $0x58] sm:$0xff] %v7493
        %7540 = vst [vmem:[#allocation2 + $0x60] sm:$0xff] %v7494
        %7541 = vst [vmem:[#allocation2 + $0x68] sm:$0xff] %v7495
        %7542 = vst [vmem:[#allocation2 + $0x70] sm:$0xff] %v7496
        %7543 = vst [vmem:[#allocation2 + $0x78] sm:$0xff] %v7497
        %7544 = vst [vmem:[#allocation2 + $0x80] sm:$0xff] %v7498
        %7545 = vst [vmem:[#allocation2 + $0x88] sm:$0xff] %v7499
        %7546 = vst [vmem:[#allocation2 + $0x90] sm:$0xff] %v7500
        %7547 = vst [vmem:[#allocation2 + $0x98] sm:$0xff] %v7501
        %7548 = vst [vmem:[#allocation2 + $0xa0] sm:$0xff] %v7502
        %7549 = vst [vmem:[#allocation2 + $0xa8] sm:$0xff] %v7503
        %7550 = vst [vmem:[#allocation2 + $0xb0] sm:$0xff] %v7504
        %7551 = vst [vmem:[#allocation2 + $0xb8] sm:$0xff] %v7505
        %7552 = vst [vmem:[#allocation2 + $0xc0] sm:$0xff] %v7506
        %7553 = vst [vmem:[#allocation2 + $0xc8] sm:$0xff] %v7507
        %7554 = vst [vmem:[#allocation2 + $0xd0] sm:$0xff] %v7508
        %7555 = vst [vmem:[#allocation2 + $0xd8] sm:$0xff] %v7509
        %7556 = vst [vmem:[#allocation2 + $0xe0] sm:$0xff] %v7510
        %7557 = vst [vmem:[#allocation2 + $0xe8] sm:$0xff] %v7511
        %7558 = vst [vmem:[#allocation2 + $0xf0] sm:$0xff] %v7512
        %7559 = vst [vmem:[#allocation2 + $0xf8] sm:$0xff] %v7513
        %7560 = vst [vmem:[#allocation2 + $0x100] sm:$0xff] %v7514
        %7561 = vst [vmem:[#allocation2 + $0x108] sm:$0xff] %v7515
        %7562 = vst [vmem:[#allocation2 + $0x110] sm:$0xff] %v7516
        %7563 = vst [vmem:[#allocation2 + $0x118] sm:$0xff] %v7517
        %7564 = vst [vmem:[#allocation2 + $0x120] sm:$0xff] %v7518
        %7565 = vst [vmem:[#allocation2 + $0x128] sm:$0xff] %v7519
        %7566 = vst [vmem:[#allocation2 + $0x130] sm:$0xff] %v7520
        %7567 = vst [vmem:[#allocation2 + $0x138] sm:$0xff] %v7521
        %7568 = vst [vmem:[#allocation2 + $0x140] sm:$0xff] %v7522
        %7569 = vst [vmem:[#allocation2 + $0x148] sm:$0xff] %v7523
        %7570 = vst [vmem:[#allocation2 + $0x150] sm:$0xff] %v7524
        %7571 = vst [vmem:[#allocation2 + $0x158] sm:$0xff] %v7525
        %7572 = vst [vmem:[#allocation2 + $0x160] sm:$0xff] %v7526
        %7573 = vst [vmem:[#allocation2 + $0x168] sm:$0xff] %v7527
        %7574 = vst [vmem:[#allocation2 + $0x170] sm:$0xff] %v7528
        %7575 = vst [vmem:[#allocation2 + $0x178] sm:$0xff] %v7529
        %7576 = vst [vmem:[#allocation2 + $0x180] sm:$0xff] %v7530
        %7577 = vst [vmem:[#allocation2 + $0x188] sm:$0xff] %v7531
        %p7578 = scmp.eq.s32.totalorder %s24, 22
        // Predicated region
        $region69: #{chess_model_forward.3} parent=43 // pred_check
          %p7579 = pneg %p7578
        $region70: #{chess_model_forward.3} parent=43 // pred_check_branch
          %7581 = sbr.rel (%p7579) target = $region72
        $region71: #{chess_model_forward.3} parent=43 // pred_region
          %v7582 = vld [vmem:[#allocation2] sm:$0xff]
          %v7583 = vld [vmem:[#allocation2 + $0x8] sm:$0xff]
          %v7584 = vld [vmem:[#allocation2 + $0x10] sm:$0xff]
          %v7585 = vld [vmem:[#allocation2 + $0x18] sm:$0xff]
          %v7586 = vld [vmem:[#allocation2 + $0x20] sm:$0xff]
          %v7587 = vld [vmem:[#allocation2 + $0x28] sm:$0xff]
          %v7588 = vld [vmem:[#allocation2 + $0x30] sm:$0xff]
          %v7589 = vld [vmem:[#allocation2 + $0x38] sm:$0xff]
          %v7590 = vld [vmem:[#allocation2 + $0x40] sm:$0xff]
          %v7591 = vld [vmem:[#allocation2 + $0x48] sm:$0xff]
          %v7592 = vld [vmem:[#allocation2 + $0x50] sm:$0xff]
          %v7593 = vld [vmem:[#allocation2 + $0x58] sm:$0xff]
          %v7594 = vld [vmem:[#allocation2 + $0x60] sm:$0xff]
          %v7595 = vld [vmem:[#allocation2 + $0x68] sm:$0xff]
          %v7596 = vld [vmem:[#allocation2 + $0x70] sm:$0xff]
          %v7597 = vld [vmem:[#allocation2 + $0x78] sm:$0xff]
          %v7598 = vld [vmem:[#allocation2 + $0x80] sm:$0xff]
          %v7599 = vld [vmem:[#allocation2 + $0x88] sm:$0xff]
          %v7600 = vld [vmem:[#allocation2 + $0x90] sm:$0xff]
          %v7601 = vld [vmem:[#allocation2 + $0x98] sm:$0xff]
          %v7602 = vld [vmem:[#allocation2 + $0xa0] sm:$0xff]
          %v7603 = vld [vmem:[#allocation2 + $0xa8] sm:$0xff]
          %v7604 = vld [vmem:[#allocation2 + $0xb0] sm:$0xff]
          %v7605 = vld [vmem:[#allocation2 + $0xb8] sm:$0xff]
          %v7606 = vld [vmem:[#allocation2 + $0xc0] sm:$0xff]
          %v7607 = vld [vmem:[#allocation2 + $0xc8] sm:$0xff]
          %v7608 = vld [vmem:[#allocation2 + $0xd0] sm:$0xff]
          %v7609 = vld [vmem:[#allocation2 + $0xd8] sm:$0xff]
          %v7610 = vld [vmem:[#allocation2 + $0xe0] sm:$0xff]
          %v7611 = vld [vmem:[#allocation2 + $0xe8] sm:$0xff]
          %v7612 = vld [vmem:[#allocation2 + $0xf0] sm:$0xff]
          %v7613 = vld [vmem:[#allocation2 + $0xf8] sm:$0xff]
          %v7614 = vld [vmem:[#allocation2 + $0x100] sm:$0xff]
          %v7615 = vld [vmem:[#allocation2 + $0x108] sm:$0xff]
          %v7616 = vld [vmem:[#allocation2 + $0x110] sm:$0xff]
          %v7617 = vld [vmem:[#allocation2 + $0x118] sm:$0xff]
          %v7618 = vld [vmem:[#allocation2 + $0x120] sm:$0xff]
          %v7619 = vld [vmem:[#allocation2 + $0x128] sm:$0xff]
          %v7620 = vld [vmem:[#allocation2 + $0x130] sm:$0xff]
          %v7621 = vld [vmem:[#allocation2 + $0x138] sm:$0xff]
          %v7622 = vld [vmem:[#allocation2 + $0x140] sm:$0xff]
          %v7623 = vld [vmem:[#allocation2 + $0x148] sm:$0xff]
          %v7624 = vld [vmem:[#allocation2 + $0x150] sm:$0xff]
          %v7625 = vld [vmem:[#allocation2 + $0x158] sm:$0xff]
          %v7626 = vld [vmem:[#allocation2 + $0x160] sm:$0xff]
          %v7627 = vld [vmem:[#allocation2 + $0x168] sm:$0xff]
          %v7628 = vld [vmem:[#allocation2 + $0x170] sm:$0xff]
          %v7629 = vld [vmem:[#allocation2 + $0x178] sm:$0xff]
          %v7630 = vld [vmem:[#allocation2 + $0x180] sm:$0xff]
          %v7631 = vld [vmem:[#allocation2 + $0x188] sm:$0xff]
          %v7632 = vld [vmem:[#allocation2 + $0x190] sm:$0xff]
          %v7633 = vld [vmem:[#allocation2 + $0x198] sm:$0xff]
          %v7634 = vld [vmem:[#allocation2 + $0x1a0] sm:$0xff]
          %v7635 = vld [vmem:[#allocation2 + $0x1a8] sm:$0xff]
          %v7636 = vpack.c.bf16 %v7584, %v7582
          %v7637 = vpack.c.bf16 %v7585, %v7583
          %v7638 = vpack.c.bf16 %v7588, %v7586
          %v7639 = vpack.c.bf16 %v7589, %v7587
          %v7640 = vpack.c.bf16 %v7592, %v7590
          %v7641 = vpack.c.bf16 %v7593, %v7591
          %v7642 = vpack.c.bf16 %v7596, %v7594
          %v7643 = vpack.c.bf16 %v7597, %v7595
          %v7644 = vpack.c.bf16 %v7600, %v7598
          %v7645 = vpack.c.bf16 %v7601, %v7599
          %v7646 = vpack.c.bf16 %v7604, %v7602
          %v7647 = vpack.c.bf16 %v7605, %v7603
          %v7648 = vpack.c.bf16 %v7608, %v7606
          %v7649 = vpack.c.bf16 %v7609, %v7607
          %v7650 = vpack.c.bf16 %v7612, %v7610
          %v7651 = vpack.c.bf16 %v7613, %v7611
          %v7652 = vpack.c.bf16 %v7616, %v7614
          %v7653 = vpack.c.bf16 %v7617, %v7615
          %v7654 = vpack.c.bf16 %v7620, %v7618
          %v7655 = vpack.c.bf16 %v7621, %v7619
          %v7656 = vpack.c.bf16 %v7624, %v7622
          %v7657 = vpack.c.bf16 %v7625, %v7623
          %v7658 = vpack.c.bf16 %v7628, %v7626
          %v7659 = vpack.c.bf16 %v7629, %v7627
          %v7660 = vpack.c.bf16 %v7632, %v7630
          %v7661 = vpack.c.bf16 %v7633, %v7631
          %v7662 = vpack.c.bf16 %v7634, %v7634
          %v7663 = vpack.c.bf16 %v7635, %v7635
          %v7664 = vld [vmem:[#allocation8] sm:$0xf]
          %v7665 = vld [vmem:[#allocation8 + $0x4] sm:$0xf]
          %v7666 = vld [vmem:[#allocation8 + $0x8] sm:$0xf]
          %v7667 = vld [vmem:[#allocation8 + $0xc] sm:$0xf]
          %v7668 = vld [vmem:[#allocation8 + $0x10] sm:$0xf]
          %v7669 = vld [vmem:[#allocation8 + $0x14] sm:$0xf]
          %v7670 = vld [vmem:[#allocation8 + $0x18] sm:$0xf]
          %v7671 = vld [vmem:[#allocation8 + $0x1c] sm:$0xf]
          %v7672 = vld [vmem:[#allocation8 + $0x20] sm:$0xf]
          %v7673 = vld [vmem:[#allocation8 + $0x24] sm:$0xf]
          %v7674 = vld [vmem:[#allocation8 + $0x28] sm:$0xf]
          %v7675 = vld [vmem:[#allocation8 + $0x2c] sm:$0xf]
          %v7676 = vld [vmem:[#allocation8 + $0x30] sm:$0xf]
          %v7677 = vld [vmem:[#allocation8 + $0x34] sm:$0xf]
          %v7678 = vld [vmem:[#allocation8 + $0x38] sm:$0xf]
          %v7679 = vld [vmem:[#allocation8 + $0x3c] sm:$0xf]
          %v7680 = vld [vmem:[#allocation8 + $0x40] sm:$0xf]
          %v7681 = vld [vmem:[#allocation8 + $0x44] sm:$0xf]
          %v7682 = vld [vmem:[#allocation8 + $0x48] sm:$0xf]
          %v7683 = vld [vmem:[#allocation8 + $0x4c] sm:$0xf]
          %v7684 = vld [vmem:[#allocation8 + $0x50] sm:$0xf]
          %v7685 = vld [vmem:[#allocation8 + $0x54] sm:$0xf]
          %v7686 = vld [vmem:[#allocation8 + $0x58] sm:$0xf]
          %v7687 = vld [vmem:[#allocation8 + $0x5c] sm:$0xf]
          %v7688 = vld [vmem:[#allocation8 + $0x60] sm:$0xf]
          %v7689 = vld [vmem:[#allocation8 + $0x64] sm:$0xf]
          %v7690 = vld [vmem:[#allocation8 + $0x68] sm:$0xf]
          %v7691 = vld [vmem:[#allocation8 + $0x6c] sm:$0xf]
          %v7692 = vld [vmem:[#allocation8 + $0x70] sm:$0xf]
          %v7693 = vld [vmem:[#allocation8 + $0x74] sm:$0xf]
          %v7694 = vld [vmem:[#allocation8 + $0x78] sm:$0xf]
          %v7695 = vld [vmem:[#allocation8 + $0x7c] sm:$0xf]
          %v7728 = vunpack.c.l.b16 %v7664
          %v7729 = vunpack.c.l.b16 %v7665
          %v7730 = vunpack.c.l.b16 %v7666
          %v7731 = vunpack.c.l.b16 %v7667
          %v7732 = vunpack.c.l.b16 %v7668
          %v7733 = vunpack.c.l.b16 %v7669
          %v7734 = vunpack.c.l.b16 %v7670
          %v7735 = vunpack.c.l.b16 %v7671
          %v7736 = vunpack.c.l.b16 %v7672
          %v7737 = vunpack.c.l.b16 %v7673
          %v7738 = vunpack.c.l.b16 %v7674
          %v7739 = vunpack.c.l.b16 %v7675
          %v7740 = vunpack.c.l.b16 %v7676
          %v7741 = vunpack.c.l.b16 %v7677
          %v7742 = vunpack.c.l.b16 %v7678
          %v7743 = vunpack.c.l.b16 %v7679
          %v7744 = vunpack.c.l.b16 %v7680
          %v7745 = vunpack.c.l.b16 %v7681
          %v7746 = vunpack.c.l.b16 %v7682
          %v7747 = vunpack.c.l.b16 %v7683
          %v7748 = vunpack.c.l.b16 %v7684
          %v7749 = vunpack.c.l.b16 %v7685
          %v7750 = vunpack.c.l.b16 %v7686
          %v7751 = vunpack.c.l.b16 %v7687
          %v7752 = vunpack.c.l.b16 %v7688
          %v7753 = vunpack.c.l.b16 %v7689
          %v7754 = vunpack.c.l.b16 %v7690
          %v7755 = vunpack.c.l.b16 %v7691
          %v7756 = vunpack.c.l.b16 %v7692
          %v7757 = vunpack.c.l.b16 %v7693
          %v7758 = vunpack.c.l.b16 %v7694
          %v7759 = vunpack.c.l.b16 %v7695
          %v7760 = vpack.c.b16 %v7729, %v7728
          %v7761 = vpack.c.b16 %v7731, %v7730
          %v7762 = vpack.c.b16 %v7733, %v7732
          %v7763 = vpack.c.b16 %v7735, %v7734
          %v7764 = vpack.c.b16 %v7737, %v7736
          %v7765 = vpack.c.b16 %v7739, %v7738
          %v7766 = vpack.c.b16 %v7741, %v7740
          %v7767 = vpack.c.b16 %v7743, %v7742
          %v7768 = vpack.c.b16 %v7745, %v7744
          %v7769 = vpack.c.b16 %v7747, %v7746
          %v7770 = vpack.c.b16 %v7749, %v7748
          %v7771 = vpack.c.b16 %v7751, %v7750
          %v7772 = vpack.c.b16 %v7753, %v7752
          %v7773 = vpack.c.b16 %v7755, %v7754
          %v7774 = vpack.c.b16 %v7757, %v7756
          %v7775 = vpack.c.b16 %v7759, %v7758
          %7792 = vmatpush.bf16.msra.mxu0 %v7767
          %7793 = vmatpush.bf16.msra.mxu0 %v7766
          %7794 = vmatpush.bf16.msra.mxu0 %v7765
          %7795 = vmatpush.bf16.msra.mxu0 %v7764
          %7796 = vmatpush.bf16.msra.mxu0 %v7763
          %7797 = vmatpush.bf16.msra.mxu0 %v7762
          %7798 = vmatpush.bf16.msra.mxu0 %v7761
          %7799 = vmatpush.bf16.msra.mxu0 %v7760
          %7800 = vmatmul.bf16.gmra.mxu0 %v7636
          %v7801 = vpop.f32.mrf.mxu0
          %v7802 = vadd.f32 0.0, %v7801
          %v7803 = vpop.f32.mrf.mxu0
          %v7804 = vadd.f32 0.0, %v7803
          %7805 = vmatmul.bf16.gmra.mxu0 %v7638
          %v7806 = vpop.f32.mrf.mxu0
          %v7807 = vadd.f32 0.0, %v7806
          %v7808 = vpop.f32.mrf.mxu0
          %v7809 = vadd.f32 0.0, %v7808
          %7810 = vmatmul.bf16.gmra.mxu0 %v7640
          %v7811 = vpop.f32.mrf.mxu0
          %v7812 = vadd.f32 0.0, %v7811
          %v7813 = vpop.f32.mrf.mxu0
          %v7814 = vadd.f32 0.0, %v7813
          %7815 = vmatmul.bf16.gmra.mxu0 %v7642
          %v7816 = vpop.f32.mrf.mxu0
          %v7817 = vadd.f32 0.0, %v7816
          %v7818 = vpop.f32.mrf.mxu0
          %v7819 = vadd.f32 0.0, %v7818
          %7820 = vmatmul.bf16.gmra.mxu0 %v7644
          %v7821 = vpop.f32.mrf.mxu0
          %v7822 = vadd.f32 0.0, %v7821
          %v7823 = vpop.f32.mrf.mxu0
          %v7824 = vadd.f32 0.0, %v7823
          %7825 = vmatmul.bf16.gmra.mxu0 %v7646
          %v7826 = vpop.f32.mrf.mxu0
          %v7827 = vadd.f32 0.0, %v7826
          %v7828 = vpop.f32.mrf.mxu0
          %v7829 = vadd.f32 0.0, %v7828
          %7830 = vmatmul.bf16.gmra.mxu0 %v7648
          %v7831 = vpop.f32.mrf.mxu0
          %v7832 = vadd.f32 0.0, %v7831
          %v7833 = vpop.f32.mrf.mxu0
          %v7834 = vadd.f32 0.0, %v7833
          %7835 = vmatmul.bf16.gmra.mxu0 %v7650
          %v7836 = vpop.f32.mrf.mxu0
          %v7837 = vadd.f32 0.0, %v7836
          %v7838 = vpop.f32.mrf.mxu0
          %v7839 = vadd.f32 0.0, %v7838
          %7840 = vmatmul.bf16.gmra.mxu0 %v7652
          %v7841 = vpop.f32.mrf.mxu0
          %v7842 = vadd.f32 0.0, %v7841
          %v7843 = vpop.f32.mrf.mxu0
          %v7844 = vadd.f32 0.0, %v7843
          %7845 = vmatmul.bf16.gmra.mxu0 %v7654
          %v7846 = vpop.f32.mrf.mxu0
          %v7847 = vadd.f32 0.0, %v7846
          %v7848 = vpop.f32.mrf.mxu0
          %v7849 = vadd.f32 0.0, %v7848
          %7850 = vmatmul.bf16.gmra.mxu0 %v7656
          %v7851 = vpop.f32.mrf.mxu0
          %v7852 = vadd.f32 0.0, %v7851
          %v7853 = vpop.f32.mrf.mxu0
          %v7854 = vadd.f32 0.0, %v7853
          %7855 = vmatmul.bf16.gmra.mxu0 %v7658
          %v7856 = vpop.f32.mrf.mxu0
          %v7857 = vadd.f32 0.0, %v7856
          %v7858 = vpop.f32.mrf.mxu0
          %v7859 = vadd.f32 0.0, %v7858
          %7860 = vmatmul.bf16.gmra.mxu0 %v7660
          %v7861 = vpop.f32.mrf.mxu0
          %v7862 = vadd.f32 0.0, %v7861
          %v7863 = vpop.f32.mrf.mxu0
          %v7864 = vadd.f32 0.0, %v7863
          %7865 = vmatmul.bf16.gmra.mxu0 %v7662
          %v7866 = vpop.f32.mrf.mxu0
          %v7867 = vadd.f32 0.0, %v7866
          %v7868 = vpop.f32.mrf.mxu0
          %7869 = vdwg.mxu0
          %7870 = vmatpush.bf16.msra.mxu0 %v7775
          %7871 = vmatpush.bf16.msra.mxu0 %v7774
          %7872 = vmatpush.bf16.msra.mxu0 %v7773
          %7873 = vmatpush.bf16.msra.mxu0 %v7772
          %7874 = vmatpush.bf16.msra.mxu0 %v7771
          %7875 = vmatpush.bf16.msra.mxu0 %v7770
          %7876 = vmatpush.bf16.msra.mxu0 %v7769
          %7877 = vmatpush.bf16.msra.mxu0 %v7768
          %7878 = vmatmul.bf16.gmra.mxu0 %v7637
          %v7879 = vpop.f32.mrf.mxu0
          %v7880 = vadd.f32 %v7802, %v7879
          %v7881 = vpop.f32.mrf.mxu0
          %v7882 = vadd.f32 %v7804, %v7881
          %7883 = vmatmul.bf16.gmra.mxu0 %v7639
          %v7884 = vpop.f32.mrf.mxu0
          %v7885 = vadd.f32 %v7807, %v7884
          %v7886 = vpop.f32.mrf.mxu0
          %v7887 = vadd.f32 %v7809, %v7886
          %7888 = vmatmul.bf16.gmra.mxu0 %v7641
          %v7889 = vpop.f32.mrf.mxu0
          %v7890 = vadd.f32 %v7812, %v7889
          %v7891 = vpop.f32.mrf.mxu0
          %v7892 = vadd.f32 %v7814, %v7891
          %7893 = vmatmul.bf16.gmra.mxu0 %v7643
          %v7894 = vpop.f32.mrf.mxu0
          %v7895 = vadd.f32 %v7817, %v7894
          %v7896 = vpop.f32.mrf.mxu0
          %v7897 = vadd.f32 %v7819, %v7896
          %7898 = vmatmul.bf16.gmra.mxu0 %v7645
          %v7899 = vpop.f32.mrf.mxu0
          %v7900 = vadd.f32 %v7822, %v7899
          %v7901 = vpop.f32.mrf.mxu0
          %v7902 = vadd.f32 %v7824, %v7901
          %7903 = vmatmul.bf16.gmra.mxu0 %v7647
          %v7904 = vpop.f32.mrf.mxu0
          %v7905 = vadd.f32 %v7827, %v7904
          %v7906 = vpop.f32.mrf.mxu0
          %v7907 = vadd.f32 %v7829, %v7906
          %7908 = vmatmul.bf16.gmra.mxu0 %v7649
          %v7909 = vpop.f32.mrf.mxu0
          %v7910 = vadd.f32 %v7832, %v7909
          %v7911 = vpop.f32.mrf.mxu0
          %v7912 = vadd.f32 %v7834, %v7911
          %7913 = vmatmul.bf16.gmra.mxu0 %v7651
          %v7914 = vpop.f32.mrf.mxu0
          %v7915 = vadd.f32 %v7837, %v7914
          %v7916 = vpop.f32.mrf.mxu0
          %v7917 = vadd.f32 %v7839, %v7916
          %7918 = vmatmul.bf16.gmra.mxu0 %v7653
          %v7919 = vpop.f32.mrf.mxu0
          %v7920 = vadd.f32 %v7842, %v7919
          %v7921 = vpop.f32.mrf.mxu0
          %v7922 = vadd.f32 %v7844, %v7921
          %7923 = vmatmul.bf16.gmra.mxu0 %v7655
          %v7924 = vpop.f32.mrf.mxu0
          %v7925 = vadd.f32 %v7847, %v7924
          %v7926 = vpop.f32.mrf.mxu0
          %v7927 = vadd.f32 %v7849, %v7926
          %7928 = vmatmul.bf16.gmra.mxu0 %v7657
          %v7929 = vpop.f32.mrf.mxu0
          %v7930 = vadd.f32 %v7852, %v7929
          %v7931 = vpop.f32.mrf.mxu0
          %v7932 = vadd.f32 %v7854, %v7931
          %7933 = vmatmul.bf16.gmra.mxu0 %v7659
          %v7934 = vpop.f32.mrf.mxu0
          %v7935 = vadd.f32 %v7857, %v7934
          %v7936 = vpop.f32.mrf.mxu0
          %v7937 = vadd.f32 %v7859, %v7936
          %7938 = vmatmul.bf16.gmra.mxu0 %v7661
          %v7939 = vpop.f32.mrf.mxu0
          %v7940 = vadd.f32 %v7862, %v7939
          %v7941 = vpop.f32.mrf.mxu0
          %v7942 = vadd.f32 %v7864, %v7941
          %7943 = vmatmul.bf16.gmra.mxu0 %v7663
          %v7944 = vpop.f32.mrf.mxu0
          %v7945 = vadd.f32 %v7867, %v7944
          %v7946 = vpop.f32.mrf.mxu0
          %7947 = vdwg.mxu0
          %v7948 = vld [vmem:[%s3] sm:$0xff]
          %v7949 = vld [vmem:[%s3 + $0x10] sm:$0xff]
          %v7950 = vld [vmem:[%s3 + $0x20] sm:$0xff]
          %v7951 = vld [vmem:[%s3 + $0x30] sm:$0xff]
          %v7952 = vld [vmem:[%s3 + $0x40] sm:$0xff]
          %v7953 = vld [vmem:[%s3 + $0x50] sm:$0xff]
          %v7954 = vld [vmem:[%s3 + $0x60] sm:$0xff]
          %v7955 = vld [vmem:[%s3 + $0x70] sm:$0xff]
          %v7956 = vld [vmem:[%s3 + $0x80] sm:$0xff]
          %v7957 = vld [vmem:[%s3 + $0x90] sm:$0xff]
          %v7958 = vld [vmem:[%s3 + $0xa0] sm:$0xff]
          %v7959 = vld [vmem:[%s3 + $0xb0] sm:$0xff]
          %v7960 = vld [vmem:[%s3 + $0xc0] sm:$0xff]
          %v7961 = vld [vmem:[%s3 + $0xd0] sm:$0xff]
          %v7962 = vld [vmem:[%s3 + $0xe0] sm:$0xff]
          %v7963 = vld [vmem:[%s3 + $0xf0] sm:$0xff]
          %v7964 = vld [vmem:[%s3 + $0x100] sm:$0xff]
          %v7965 = vld [vmem:[%s3 + $0x110] sm:$0xff]
          %v7966 = vld [vmem:[%s3 + $0x120] sm:$0xff]
          %v7967 = vld [vmem:[%s3 + $0x130] sm:$0xff]
          %v7968 = vld [vmem:[%s3 + $0x140] sm:$0xff]
          %v7969 = vld [vmem:[%s3 + $0x150] sm:$0xff]
          %v7970 = vld [vmem:[%s3 + $0x160] sm:$0xff]
          %v7971 = vld [vmem:[%s3 + $0x170] sm:$0xff]
          %v7972 = vld [vmem:[%s3 + $0x180] sm:$0xff]
          %v7973 = vld [vmem:[%s3 + $0x190] sm:$0xff]
          %v7974 = vld [vmem:[%s3 + $0x1a0] sm:$0xff]
          %v7975 = vmul.f32 %v7880, %v7948
          %v7976 = vmul.f32 %v7882, %v7949
          %v7977 = vmul.f32 %v7885, %v7950
          %v7978 = vmul.f32 %v7887, %v7951
          %v7979 = vmul.f32 %v7890, %v7952
          %v7980 = vmul.f32 %v7892, %v7953
          %v7981 = vmul.f32 %v7895, %v7954
          %v7982 = vmul.f32 %v7897, %v7955
          %v7983 = vmul.f32 %v7900, %v7956
          %v7984 = vmul.f32 %v7902, %v7957
          %v7985 = vmul.f32 %v7905, %v7958
          %v7986 = vmul.f32 %v7907, %v7959
          %v7987 = vmul.f32 %v7910, %v7960
          %v7988 = vmul.f32 %v7912, %v7961
          %v7989 = vmul.f32 %v7915, %v7962
          %v7990 = vmul.f32 %v7917, %v7963
          %v7991 = vmul.f32 %v7920, %v7964
          %v7992 = vmul.f32 %v7922, %v7965
          %v7993 = vmul.f32 %v7925, %v7966
          %v7994 = vmul.f32 %v7927, %v7967
          %v7995 = vmul.f32 %v7930, %v7968
          %v7996 = vmul.f32 %v7932, %v7969
          %v7997 = vmul.f32 %v7935, %v7970
          %v7998 = vmul.f32 %v7937, %v7971
          %v7999 = vmul.f32 %v7940, %v7972
          %v8000 = vmul.f32 %v7942, %v7973
          %v8001 = vmul.f32 %v7945, %v7974
          %v8002 = vadd.f32 %v7975, %v7976
          %v8003 = vadd.f32 %v8002, %v7977
          %v8004 = vadd.f32 %v8003, %v7978
          %v8005 = vadd.f32 %v8004, %v7979
          %v8006 = vadd.f32 %v8005, %v7980
          %v8007 = vadd.f32 %v8006, %v7981
          %v8008 = vadd.f32 %v8007, %v7982
          %v8009 = vadd.f32 %v8008, %v7983
          %v8010 = vadd.f32 %v8009, %v7984
          %v8011 = vadd.f32 %v8010, %v7985
          %v8012 = vadd.f32 %v8011, %v7986
          %v8013 = vadd.f32 %v8012, %v7987
          %v8014 = vadd.f32 %v8013, %v7988
          %v8015 = vadd.f32 %v8014, %v7989
          %v8016 = vadd.f32 %v8015, %v7990
          %v8017 = vadd.f32 %v8016, %v7991
          %v8018 = vadd.f32 %v8017, %v7992
          %v8019 = vadd.f32 %v8018, %v7993
          %v8020 = vadd.f32 %v8019, %v7994
          %v8021 = vadd.f32 %v8020, %v7995
          %v8022 = vadd.f32 %v8021, %v7996
          %v8023 = vadd.f32 %v8022, %v7997
          %v8024 = vadd.f32 %v8023, %v7998
          %v8025 = vadd.f32 %v8024, %v7999
          %v8026 = vadd.f32 %v8025, %v8000
          %v8027 = vadd.f32 %v8026, %v8001
          %v8028 = vrot.slane %v8027, 4
          %v8029 = vadd.f32 %v8027, %v8028
          %v8030 = vrot.slane %v8029, 2
          %v8031 = vadd.f32 %v8029, %v8030
          %v8032 = vrot.slane %v8031, 1
          %v8033 = vadd.f32 %v8031, %v8032
          %v8034 = vmul.f32 %v8033, 0.0078125
          %v8035 = vmul.f32 %v7975, %v7880
          %v8036 = vmul.f32 %v7976, %v7882
          %v8037 = vmul.f32 %v7977, %v7885
          %v8038 = vmul.f32 %v7978, %v7887
          %v8039 = vmul.f32 %v7979, %v7890
          %v8040 = vmul.f32 %v7980, %v7892
          %v8041 = vmul.f32 %v7981, %v7895
          %v8042 = vmul.f32 %v7982, %v7897
          %v8043 = vmul.f32 %v7983, %v7900
          %v8044 = vmul.f32 %v7984, %v7902
          %v8045 = vmul.f32 %v7985, %v7905
          %v8046 = vmul.f32 %v7986, %v7907
          %v8047 = vmul.f32 %v7987, %v7910
          %v8048 = vmul.f32 %v7988, %v7912
          %v8049 = vmul.f32 %v7989, %v7915
          %v8050 = vmul.f32 %v7990, %v7917
          %v8051 = vmul.f32 %v7991, %v7920
          %v8052 = vmul.f32 %v7992, %v7922
          %v8053 = vmul.f32 %v7993, %v7925
          %v8054 = vmul.f32 %v7994, %v7927
          %v8055 = vmul.f32 %v7995, %v7930
          %v8056 = vmul.f32 %v7996, %v7932
          %v8057 = vmul.f32 %v7997, %v7935
          %v8058 = vmul.f32 %v7998, %v7937
          %v8059 = vmul.f32 %v7999, %v7940
          %v8060 = vmul.f32 %v8000, %v7942
          %v8061 = vmul.f32 %v8001, %v7945
          %v8062 = vadd.f32 %v8035, %v8036
          %v8063 = vadd.f32 %v8062, %v8037
          %v8064 = vadd.f32 %v8063, %v8038
          %v8065 = vadd.f32 %v8064, %v8039
          %v8066 = vadd.f32 %v8065, %v8040
          %v8067 = vadd.f32 %v8066, %v8041
          %v8068 = vadd.f32 %v8067, %v8042
          %v8069 = vadd.f32 %v8068, %v8043
          %v8070 = vadd.f32 %v8069, %v8044
          %v8071 = vadd.f32 %v8070, %v8045
          %v8072 = vadd.f32 %v8071, %v8046
          %v8073 = vadd.f32 %v8072, %v8047
          %v8074 = vadd.f32 %v8073, %v8048
          %v8075 = vadd.f32 %v8074, %v8049
          %v8076 = vadd.f32 %v8075, %v8050
          %v8077 = vadd.f32 %v8076, %v8051
          %v8078 = vadd.f32 %v8077, %v8052
          %v8079 = vadd.f32 %v8078, %v8053
          %v8080 = vadd.f32 %v8079, %v8054
          %v8081 = vadd.f32 %v8080, %v8055
          %v8082 = vadd.f32 %v8081, %v8056
          %v8083 = vadd.f32 %v8082, %v8057
          %v8084 = vadd.f32 %v8083, %v8058
          %v8085 = vadd.f32 %v8084, %v8059
          %v8086 = vadd.f32 %v8085, %v8060
          %v8087 = vadd.f32 %v8086, %v8061
          %v8088 = vrot.slane %v8087, 4
          %v8089 = vadd.f32 %v8087, %v8088
          %v8090 = vrot.slane %v8089, 2
          %v8091 = vadd.f32 %v8089, %v8090
          %v8092 = vrot.slane %v8091, 1
          %v8093 = vadd.f32 %v8091, %v8092
          %v8094 = vmul.f32 %v8093, 0.0078125
          %v8095 = vmul.f32 %v8034, %v8034
          %v8096 = vsub.f32 %v8094, %v8095
          %v8097 = vmax.f32 %v8096, 0.0
          %v8098 = vsub.f32 %v7880, %v8034
          %v8099 = vsub.f32 %v7882, %v8034
          %v8100 = vsub.f32 %v7885, %v8034
          %v8101 = vsub.f32 %v7887, %v8034
          %v8102 = vsub.f32 %v7890, %v8034
          %v8103 = vsub.f32 %v7892, %v8034
          %v8104 = vsub.f32 %v7895, %v8034
          %v8105 = vsub.f32 %v7897, %v8034
          %v8106 = vsub.f32 %v7900, %v8034
          %v8107 = vsub.f32 %v7902, %v8034
          %v8108 = vsub.f32 %v7905, %v8034
          %v8109 = vsub.f32 %v7907, %v8034
          %v8110 = vsub.f32 %v7910, %v8034
          %v8111 = vsub.f32 %v7912, %v8034
          %v8112 = vsub.f32 %v7915, %v8034
          %v8113 = vsub.f32 %v7917, %v8034
          %v8114 = vsub.f32 %v7920, %v8034
          %v8115 = vsub.f32 %v7922, %v8034
          %v8116 = vsub.f32 %v7925, %v8034
          %v8117 = vsub.f32 %v7927, %v8034
          %v8118 = vsub.f32 %v7930, %v8034
          %v8119 = vsub.f32 %v7932, %v8034
          %v8120 = vsub.f32 %v7935, %v8034
          %v8121 = vsub.f32 %v7937, %v8034
          %v8122 = vsub.f32 %v7940, %v8034
          %v8123 = vsub.f32 %v7942, %v8034
          %v8124 = vsub.f32 %v7945, %v8034
          %v8125 = vadd.f32 %v8097, 1e-05
          %v8126 = vrsqrt.pop %v8125
          %v8127 = vmul.f32 %v8126, %v8125
          %v8128 = vmul.f32 %v8127, %v8126
          %v8129 = vmul.f32 0.5, %v8128
          %v8130 = vsub.f32 1.5, %v8129
          %v8131 = vmul.f32 %v8126, %v8130
          %vm8132 = vweird.f32 %v8125
          %vm8133 = vweird.f32 %v8126
          %vm8134 = vmor %vm8132, %vm8133
          %v8135 = vsel %vm8134, %v8126, %v8131
          %v8136 = vmul.f32 %v8098, %v8135
          %v8137 = vmul.f32 %v8099, %v8135
          %v8138 = vmul.f32 %v8100, %v8135
          %v8139 = vmul.f32 %v8101, %v8135
          %v8140 = vmul.f32 %v8102, %v8135
          %v8141 = vmul.f32 %v8103, %v8135
          %v8142 = vmul.f32 %v8104, %v8135
          %v8143 = vmul.f32 %v8105, %v8135
          %v8144 = vmul.f32 %v8106, %v8135
          %v8145 = vmul.f32 %v8107, %v8135
          %v8146 = vmul.f32 %v8108, %v8135
          %v8147 = vmul.f32 %v8109, %v8135
          %v8148 = vmul.f32 %v8110, %v8135
          %v8149 = vmul.f32 %v8111, %v8135
          %v8150 = vmul.f32 %v8112, %v8135
          %v8151 = vmul.f32 %v8113, %v8135
          %v8152 = vmul.f32 %v8114, %v8135
          %v8153 = vmul.f32 %v8115, %v8135
          %v8154 = vmul.f32 %v8116, %v8135
          %v8155 = vmul.f32 %v8117, %v8135
          %v8156 = vmul.f32 %v8118, %v8135
          %v8157 = vmul.f32 %v8119, %v8135
          %v8158 = vmul.f32 %v8120, %v8135
          %v8159 = vmul.f32 %v8121, %v8135
          %v8160 = vmul.f32 %v8122, %v8135
          %v8161 = vmul.f32 %v8123, %v8135
          %v8162 = vmul.f32 %v8124, %v8135
          %v8163 = vld [vmem:[#allocation9] sm:$0x1]
          %v8164 = vperm.slane %v8163, 0
          %v8165 = vmul.f32 %v8136, %v8164
          %v8166 = vmul.f32 %v8137, %v8164
          %v8167 = vmul.f32 %v8138, %v8164
          %v8168 = vmul.f32 %v8139, %v8164
          %v8169 = vmul.f32 %v8140, %v8164
          %v8170 = vmul.f32 %v8141, %v8164
          %v8171 = vmul.f32 %v8142, %v8164
          %v8172 = vmul.f32 %v8143, %v8164
          %v8173 = vmul.f32 %v8144, %v8164
          %v8174 = vmul.f32 %v8145, %v8164
          %v8175 = vmul.f32 %v8146, %v8164
          %v8176 = vmul.f32 %v8147, %v8164
          %v8177 = vmul.f32 %v8148, %v8164
          %v8178 = vmul.f32 %v8149, %v8164
          %v8179 = vmul.f32 %v8150, %v8164
          %v8180 = vmul.f32 %v8151, %v8164
          %v8181 = vmul.f32 %v8152, %v8164
          %v8182 = vmul.f32 %v8153, %v8164
          %v8183 = vmul.f32 %v8154, %v8164
          %v8184 = vmul.f32 %v8155, %v8164
          %v8185 = vmul.f32 %v8156, %v8164
          %v8186 = vmul.f32 %v8157, %v8164
          %v8187 = vmul.f32 %v8158, %v8164
          %v8188 = vmul.f32 %v8159, %v8164
          %v8189 = vmul.f32 %v8160, %v8164
          %v8190 = vmul.f32 %v8161, %v8164
          %v8191 = vmul.f32 %v8162, %v8164
          %v8192 = vld [vmem:[#allocation9 + $0x1] sm:$0x1]
          %v8193 = vperm.slane %v8192, 0
          %v8194 = vadd.f32 %v8165, %v8193
          %v8195 = vadd.f32 %v8166, %v8193
          %v8196 = vadd.f32 %v8167, %v8193
          %v8197 = vadd.f32 %v8168, %v8193
          %v8198 = vadd.f32 %v8169, %v8193
          %v8199 = vadd.f32 %v8170, %v8193
          %v8200 = vadd.f32 %v8171, %v8193
          %v8201 = vadd.f32 %v8172, %v8193
          %v8202 = vadd.f32 %v8173, %v8193
          %v8203 = vadd.f32 %v8174, %v8193
          %v8204 = vadd.f32 %v8175, %v8193
          %v8205 = vadd.f32 %v8176, %v8193
          %v8206 = vadd.f32 %v8177, %v8193
          %v8207 = vadd.f32 %v8178, %v8193
          %v8208 = vadd.f32 %v8179, %v8193
          %v8209 = vadd.f32 %v8180, %v8193
          %v8210 = vadd.f32 %v8181, %v8193
          %v8211 = vadd.f32 %v8182, %v8193
          %v8212 = vadd.f32 %v8183, %v8193
          %v8213 = vadd.f32 %v8184, %v8193
          %v8214 = vadd.f32 %v8185, %v8193
          %v8215 = vadd.f32 %v8186, %v8193
          %v8216 = vadd.f32 %v8187, %v8193
          %v8217 = vadd.f32 %v8188, %v8193
          %v8218 = vadd.f32 %v8189, %v8193
          %v8219 = vadd.f32 %v8190, %v8193
          %v8220 = vadd.f32 %v8191, %v8193
          %v8221 = vmax.f32 %v8194, 0.0
          %v8222 = vmax.f32 %v8195, 0.0
          %v8223 = vmax.f32 %v8196, 0.0
          %v8224 = vmax.f32 %v8197, 0.0
          %v8225 = vmax.f32 %v8198, 0.0
          %v8226 = vmax.f32 %v8199, 0.0
          %v8227 = vmax.f32 %v8200, 0.0
          %v8228 = vmax.f32 %v8201, 0.0
          %v8229 = vmax.f32 %v8202, 0.0
          %v8230 = vmax.f32 %v8203, 0.0
          %v8231 = vmax.f32 %v8204, 0.0
          %v8232 = vmax.f32 %v8205, 0.0
          %v8233 = vmax.f32 %v8206, 0.0
          %v8234 = vmax.f32 %v8207, 0.0
          %v8235 = vmax.f32 %v8208, 0.0
          %v8236 = vmax.f32 %v8209, 0.0
          %v8237 = vmax.f32 %v8210, 0.0
          %v8238 = vmax.f32 %v8211, 0.0
          %v8239 = vmax.f32 %v8212, 0.0
          %v8240 = vmax.f32 %v8213, 0.0
          %v8241 = vmax.f32 %v8214, 0.0
          %v8242 = vmax.f32 %v8215, 0.0
          %v8243 = vmax.f32 %v8216, 0.0
          %v8244 = vmax.f32 %v8217, 0.0
          %v8245 = vmax.f32 %v8218, 0.0
          %v8246 = vmax.f32 %v8219, 0.0
          %v8247 = vmax.f32 %v8220, 0.0
          %v8248 = vmul.f32 %v8221, %v7948
          %v8249 = vmul.f32 %v8222, %v7949
          %v8250 = vmul.f32 %v8223, %v7950
          %v8251 = vmul.f32 %v8224, %v7951
          %v8252 = vmul.f32 %v8225, %v7952
          %v8253 = vmul.f32 %v8226, %v7953
          %v8254 = vmul.f32 %v8227, %v7954
          %v8255 = vmul.f32 %v8228, %v7955
          %v8256 = vmul.f32 %v8229, %v7956
          %v8257 = vmul.f32 %v8230, %v7957
          %v8258 = vmul.f32 %v8231, %v7958
          %v8259 = vmul.f32 %v8232, %v7959
          %v8260 = vmul.f32 %v8233, %v7960
          %v8261 = vmul.f32 %v8234, %v7961
          %v8262 = vmul.f32 %v8235, %v7962
          %v8263 = vmul.f32 %v8236, %v7963
          %v8264 = vmul.f32 %v8237, %v7964
          %v8265 = vmul.f32 %v8238, %v7965
          %v8266 = vmul.f32 %v8239, %v7966
          %v8267 = vmul.f32 %v8240, %v7967
          %v8268 = vmul.f32 %v8241, %v7968
          %v8269 = vmul.f32 %v8242, %v7969
          %v8270 = vmul.f32 %v8243, %v7970
          %v8271 = vmul.f32 %v8244, %v7971
          %v8272 = vmul.f32 %v8245, %v7972
          %v8273 = vmul.f32 %v8246, %v7973
          %v8274 = vmul.f32 %v8247, %v7974
          %8275 = vst [vmem:[%s6] sm:$0xff] %v8248
          %8276 = vst [vmem:[%s6 + $0x8] sm:$0xff] %v8249
          %8277 = vst [vmem:[%s6 + $0x10] sm:$0xff] %v8250
          %8278 = vst [vmem:[%s6 + $0x18] sm:$0xff] %v8251
          %8279 = vst [vmem:[%s6 + $0x20] sm:$0xff] %v8252
          %8280 = vst [vmem:[%s6 + $0x28] sm:$0xff] %v8253
          %8281 = vst [vmem:[%s6 + $0x30] sm:$0xff] %v8254
          %8282 = vst [vmem:[%s6 + $0x38] sm:$0xff] %v8255
          %8283 = vst [vmem:[%s6 + $0x40] sm:$0xff] %v8256
          %8284 = vst [vmem:[%s6 + $0x48] sm:$0xff] %v8257
          %8285 = vst [vmem:[%s6 + $0x50] sm:$0xff] %v8258
          %8286 = vst [vmem:[%s6 + $0x58] sm:$0xff] %v8259
          %8287 = vst [vmem:[%s6 + $0x60] sm:$0xff] %v8260
          %8288 = vst [vmem:[%s6 + $0x68] sm:$0xff] %v8261
          %8289 = vst [vmem:[%s6 + $0x70] sm:$0xff] %v8262
          %8290 = vst [vmem:[%s6 + $0x78] sm:$0xff] %v8263
          %8291 = vst [vmem:[%s6 + $0x80] sm:$0xff] %v8264
          %8292 = vst [vmem:[%s6 + $0x88] sm:$0xff] %v8265
          %8293 = vst [vmem:[%s6 + $0x90] sm:$0xff] %v8266
          %8294 = vst [vmem:[%s6 + $0x98] sm:$0xff] %v8267
          %8295 = vst [vmem:[%s6 + $0xa0] sm:$0xff] %v8268
          %8296 = vst [vmem:[%s6 + $0xa8] sm:$0xff] %v8269
          %8297 = vst [vmem:[%s6 + $0xb0] sm:$0xff] %v8270
          %8298 = vst [vmem:[%s6 + $0xb8] sm:$0xff] %v8271
          %8299 = vst [vmem:[%s6 + $0xc0] sm:$0xff] %v8272
          %8300 = vst [vmem:[%s6 + $0xc8] sm:$0xff] %v8273
          %8301 = vst [vmem:[%s6 + $0xd0] sm:$0xff] %v8274
        $region72: #{chess_model_forward.3} parent=43 // pred_fallthru
          _
        // Predicated region
        $region73: #{chess_model_forward.3} parent=43 // pred_check
          %p8302 = pneg %p173
        $region74: #{chess_model_forward.3} parent=43 // pred_check_branch
          %8304 = sbr.rel (%p8302) target = $region76
        $region75: #{chess_model_forward.3} parent=43 // pred_region
          _
        $region76: #{chess_model_forward.3} parent=43 // pred_fallthru
          _
        // Predicated region
        $region77: #{chess_model_forward.3} parent=43 // pred_check
          %p8305 = pneg %p173
        $region78: #{chess_model_forward.3} parent=43 // pred_check_branch
          %8307 = sbr.rel (%p8305) target = $region80
        $region79: #{chess_model_forward.3} parent=43 // pred_region
          _
        $region80: #{chess_model_forward.3} parent=43 // pred_fallthru
          _
      $region44: #{chess_model_forward.3} parent=5 // pred_fallthru
        _
      %p8308 = scmp.le.s32.totalorder 2, %s19
      // Predicated region
      $region81: #{chess_model_forward.3} parent=5 // pred_check
        %p8309 = pneg %p8308
      $region82: #{chess_model_forward.3} parent=5 // pred_check_branch
        %8311 = sbr.rel (%p8309) target = $region84
      $region83: #{chess_model_forward.3} parent=5 // pred_region
        %s8312 = ssub.s32 %s19, 2
      $region84: #{chess_model_forward.3} parent=5 // pred_fallthru
        _
    $region6: #{chess_model_forward.3} parent=1 // loop_footer
      %s23 = sadd.s32 1, %s19
    $region7: #{chess_model_forward.3} parent=1 // loop_footer_branch
      %18 = sbr.rel target = $region3
    $region8: #{chess_model_forward.3} parent=1 // loop_exit
      _
    %8313 = vsyncpa [#allocation5], 1
    %s8314 = scalar_lea.sflag [#allocation5], 1
    %8315 = vsyncpa %s8314, 1
    %8316 = vsyncpa [#allocation7], 1
    %s8317 = scalar_lea.sflag [#allocation7], 1
    %8318 = vsyncpa %s8317, 1
    %8319 = vsyncpa [#allocation10], 1

</llo_original>
